<compile_context>
chip_gen: v7x
topology: tpu7x:2x2x1
jax: 0.10.0
libtpu: 0.0.40
codegen_flags: <defaults>
</compile_context>

<pallas_src>
import jax
import jax.numpy as jnp
from jax.experimental import pallas as pl
from jax.experimental.pallas import tpu as pltpu

N_CLASS = 4          # model.num_classes
HEAD_HIDDEN = 10     # nn.Linear(n_class, 10) -> ReLU -> nn.Linear(10, 1)
FC_IN = 12           # channels entering avg_pool_12 / fc_12

# (in_channels, out_channels) for conv_0 .. conv_11 (all 3x3, stride 1, pad 1)
CONV_PLAN = [
    (3, 8), (8, 8), (8, 8),          # conv_0..2  (sequential)
    (8, 4), (8, 4), (8, 4),          # conv_3..5  (inception branch, concat -> 12)
    (12, 4), (12, 4), (12, 4),       # conv_6..8  (concat -> 12)
    (12, 4), (12, 4), (12, 4),       # conv_9..11 (concat -> 12)
]

# Fused conv layers: (merged torch conv indices, H, W, Cin, Cout, padded_out_lanes)
# padded_out=True  -> the layer's output is emitted directly in the next layer's
#                     zero-padded lane layout (no pool in between).
LAYER_GEOM = [
    ((0,),        16, 16, 3,  8,  True),
    ((1,),        16, 16, 8,  8,  True),
    ((2,),        16, 16, 8,  8,  False),   # max-pool follows
    ((3, 4, 5),    8,  8, 8,  12, False),   # max-pool follows
    ((6, 7, 8),    4,  4, 12, 12, False),   # max-pool follows
    ((9, 10, 11),  2,  2, 12, 12, False),   # global avg-pool follows
]


# ----------------------------------------------------------------------------
# Pallas kernel: full per-module forward, grid = (module,)
# ----------------------------------------------------------------------------
def _fused_kernel(
    x0, m0, b0, m1, b1, m2, b2, m3, b3, m4, b4, m5, b5,
    msk16, msk8, msk4, msk2,
    sh0, sw0, sh1, sw1, sh2, sw2,
    ah, aw, fcw, fcb, hw1, hb1, hw2, hb2,
    out_ref,
    buf1, buf2, buf3, buf4, buf5,
):
    def conv(src_ref, m_ref, b_ref, msk_ref):
        # src_ref: (batch*H + 2, (W+2)*Cin) with W-pad lanes zero; rows 0 / last
        # are dont-care (their contribution is masked out before the matmul).
        nh = src_ref.shape[0] - 2
        acc = None
        for dh in range(3):                       # vertical tap
            x = src_ref[dh:dh + nh, :]
            if dh == 0:                           # row above: invalid on first row
                x = x * msk_ref[0]                # of every image
            elif dh == 2:                         # row below: invalid on last row
                x = x * msk_ref[1]
            t = jnp.dot(x, m_ref[0, dh], preferred_element_type=jnp.float32)
            acc = t if acc is None else acc + t
        # bias + ReLU; MySign gate already folded into m_ref / b_ref.
        return jnp.maximum(acc + b_ref[0], 0.0)

    def pool(x, sh_ref, sw_ref):
        # 2x2 max-pool as 0/1 selection matmuls (even/odd rows, even/odd cols).
        rows = jnp.maximum(
            jnp.dot(sh_ref[0], x, preferred_element_type=jnp.float32),
            jnp.dot(sh_ref[1], x, preferred_element_type=jnp.float32))
        return jnp.maximum(
            jnp.dot(rows, sw_ref[0], preferred_element_type=jnp.float32),
            jnp.dot(rows, sw_ref[1], preferred_element_type=jnp.float32))

    def emplace(buf_ref, val):
        # Keep the two border rows finite/zero, then write the interior rows.
        buf_ref[...] = jnp.zeros_like(buf_ref)
        buf_ref[1:1 + val.shape[0], :] = val

    h = conv(x0, m0, b0, msk16)                   # conv_0        (16x16, ->8)
    emplace(buf1, h)
    h = conv(buf1, m1, b1, msk16)                 # conv_1
    emplace(buf2, h)
    h = conv(buf2, m2, b2, msk16)                 # conv_2
    emplace(buf3, pool(h, sh0, sw0))              # max-pool -> 8x8
    h = conv(buf3, m3, b3, msk8)                  # conv_3/4/5 merged (->12)
    emplace(buf4, pool(h, sh1, sw1))              # max-pool -> 4x4
    h = conv(buf4, m4, b4, msk4)                  # conv_6/7/8 merged
    emplace(buf5, pool(h, sh2, sw2))              # max-pool -> 2x2
    h = conv(buf5, m5, b5, msk2)                  # conv_9/10/11 merged

    # global average pool (2x2) -> (batch, 12), then fc_12 -> relu -> head.
    feat = jnp.dot(ah[...], h, preferred_element_type=jnp.float32)
    feat = jnp.dot(feat, aw[...], preferred_element_type=jnp.float32)
    pred = jnp.maximum(
        jnp.dot(feat, fcw[...], preferred_element_type=jnp.float32) + fcb[...], 0.0)
    hid = jnp.maximum(
        jnp.dot(pred, hw1[0], preferred_element_type=jnp.float32) + hb1[0], 0.0)
    z = jnp.dot(hid, hw2[0], preferred_element_type=jnp.float32) + hb2[0]
    out_ref[0] = jax.nn.sigmoid(z)                # (batch, 1) for this module


# ----------------------------------------------------------------------------
# Wrapper-side constant/parameter preprocessing (cheap XLA, runs under jit)
# ----------------------------------------------------------------------------
def _conv_matmats(w, b, gate, width, padded_out):
    """Per-dh Toeplitz conv matrices for the (batch*H, (W+2)*C) layout.

    w: (3,3,Cin,Cout); b: (Cout,); gate: (Cout,) in {0,1} (MySign, pre-folded).
    Returns (3, (W+2)*Cin, Rout) and (1, Rout) with Rout = (W+2 or W)*Cout.
    """
    wg = w * gate
    bg = b * gate
    cout = w.shape[3]
    per_dh = []
    for dh in range(3):
        acc = None
        for dw in range(3):
            p = jnp.eye(width + 2, width, k=-dw, dtype=jnp.float32)
            if padded_out:
                p = jnp.pad(p, ((0, 0), (1, 1)))       # emit padded lane layout
            blk = jnp.kron(p, wg[dh, dw])
            acc = blk if acc is None else acc + blk
        per_dh.append(acc)
    mats = jnp.stack(per_dh, axis=0)
    bias = jnp.tile(bg, width)
    if padded_out:
        z = jnp.zeros((cout,), jnp.float32)
        bias = jnp.concatenate([z, bias, z])
    return mats, bias.reshape(1, -1)


def _stack_layer(params, geom):
    """Stack the gated conv matrices of one fused layer over the N_CLASS modules."""
    ls, _, width, _, _, padded = geom
    w = jnp.concatenate([params["convs"][i][0] for i in ls], axis=-1)
    b = jnp.concatenate([params["convs"][i][1] for i in ls], axis=0)
    mats, biases = [], []
    for m in range(N_CLASS):
        gate = jnp.concatenate(
            [(params["masks"][m][i] > 0).astype(jnp.float32) for i in ls], axis=0)
        mm, bb = _conv_matmats(w, b, gate, width, padded)
        mats.append(mm)
        biases.append(bb)
    return jnp.stack(mats, axis=0), jnp.stack(biases, axis=0)


def _row_masks(n, h):
    """(2, n*h, 1) masks zeroing the top/bottom conv tap at image boundaries."""
    r = jnp.arange(n * h)
    top = (r % h != 0).astype(jnp.float32).reshape(-1, 1)
    bot = (r % h != h - 1).astype(jnp.float32).reshape(-1, 1)
    return jnp.stack([top, bot], axis=0)


def _pool_mats(n, h, w, c):
    """Selection matrices for a 2x2 max-pool in the (n*h, w*c) layout.

    Returns SH (2, n*h/2, n*h) picking even/odd rows and SW (2, w*c, (w/2+2)*c)
    picking even/odd columns and emitting the next layer's W-padded lane layout.
    """
    nh = n * h
    i = jnp.arange(nh // 2)[:, None]
    j = jnp.arange(nh)[None, :]
    sh = jnp.stack([(j == 2 * i).astype(jnp.float32),
                    (j == 2 * i + 1).astype(jnp.float32)], axis=0)
    wi = jnp.arange(w)[:, None]
    wo = jnp.arange(w // 2)[None, :]
    eye_c = jnp.eye(c, dtype=jnp.float32)
    sw_e = jnp.kron(jnp.pad((wi == 2 * wo).astype(jnp.float32), ((0, 0), (1, 1))), eye_c)
    sw_o = jnp.kron(jnp.pad((wi == 2 * wo + 1).astype(jnp.float32), ((0, 0), (1, 1))), eye_c)
    return sh, jnp.stack([sw_e, sw_o], axis=0)


def _layout_input(x_nchw):
    """NCHW -> (batch*H + 2, (W+2)*Cin) zero-padded slab (image-major rows)."""
    n, c, h, w = x_nchw.shape
    x = jnp.transpose(x_nchw, (0, 2, 3, 1)).astype(jnp.float32)   # NHWC
    x = jnp.pad(x, ((0, 0), (0, 0), (1, 1), (0, 0)))              # W zero-pad
    x = x.reshape(n * h, (w + 2) * c)
    return jnp.pad(x, ((1, 1), (0, 0)))                           # border rows


# ----------------------------------------------------------------------------
# Model forward (mirrors GradSplitter.forward, all modules in one pallas_call)
# ----------------------------------------------------------------------------
def grad_splitter_forward(x_nchw, params):
    n, cin, hh, ww = x_nchw.shape
    assert (cin, hh, ww) == (3, 16, 16), "demo config expects 3x16x16 inputs"

    x0 = _layout_input(x_nchw)
    layer_mats = [_stack_layer(params, g) for g in LAYER_GEOM]
    row_masks = {h: _row_masks(n, h) for h in (16, 8, 4, 2)}
    sh0, sw0 = _pool_mats(n, 16, 16, 8)
    sh1, sw1 = _pool_mats(n, 8, 8, 12)
    sh2, sw2 = _pool_mats(n, 4, 4, 12)
    ah = jnp.kron(jnp.eye(n, dtype=jnp.float32), jnp.full((1, 2), 0.5, jnp.float32))
    aw = jnp.kron(jnp.full((2, 1), 0.5, jnp.float32), jnp.eye(FC_IN, dtype=jnp.float32))
    fcw = params["fcw"].astype(jnp.float32)
    fcb = params["fcb"].reshape(1, N_CLASS).astype(jnp.float32)
    hw1 = jnp.stack([params["heads"][m][0] for m in range(N_CLASS)], axis=0)
    hb1 = jnp.stack([params["heads"][m][1] for m in range(N_CLASS)],
                    axis=0).reshape(N_CLASS, 1, HEAD_HIDDEN)
    hw2 = jnp.stack([params["heads"][m][2] for m in range(N_CLASS)], axis=0)
    hb2 = jnp.stack([params["heads"][m][3] for m in range(N_CLASS)],
                    axis=0).reshape(N_CLASS, 1, 1)

    args, specs = [], []

    def add(a, per_module=False):
        nd = a.ndim
        if per_module:
            spec = pl.BlockSpec((1,) + a.shape[1:],
                                lambda m, _nd=nd: (m,) + (0,) * (_nd - 1))
        else:  # module-independent: full block, constant index -> stays resident
            spec = pl.BlockSpec(a.shape, lambda m, _nd=nd: (0,) * _nd)
        args.append(a)
        specs.append(spec)

    add(x0)
    for mm, bb in layer_mats:
        add(mm, per_module=True)
        add(bb, per_module=True)
    for h in (16, 8, 4, 2):
        add(row_masks[h])
    for s in (sh0, sw0, sh1, sw1, sh2, sw2):
        add(s)
    add(ah); add(aw); add(fcw); add(fcb)
    add(hw1, per_module=True); add(hb1, per_module=True)
    add(hw2, per_module=True); add(hb2, per_module=True)

    scratch = [
        pltpu.VMEM((n * 16 + 2, 18 * 8), jnp.float32),   # conv_1 input slab
        pltpu.VMEM((n * 16 + 2, 18 * 8), jnp.float32),   # conv_2 input slab
        pltpu.VMEM((n * 8 + 2, 10 * 8), jnp.float32),    # conv_3/4/5 input slab
        pltpu.VMEM((n * 4 + 2, 6 * 12), jnp.float32),    # conv_6/7/8 input slab
        pltpu.VMEM((n * 2 + 2, 4 * 12), jnp.float32),    # conv_9/10/11 input slab
    ]

    out = pl.pallas_call(
        _fused_kernel,
        out_shape=jax.ShapeDtypeStruct((N_CLASS, n, 1), jnp.float32),
        grid_spec=pltpu.PrefetchScalarGridSpec(
            num_scalar_prefetch=0,
            grid=(N_CLASS,),
            in_specs=specs,
            out_specs=pl.BlockSpec((1, n, 1), lambda m: (m, 0, 0)),
            scratch_shapes=scratch,
        ),
        compiler_params=pltpu.CompilerParams(
            dimension_semantics=("parallel",)),
    )(*args)
    return out[:, :, 0].T                                  # (batch, n_class)


# ----------------------------------------------------------------------------
# Pure-JAX reference (mirrors the PyTorch module) for in-script verification
# ----------------------------------------------------------------------------
def _reference_forward(x_nchw, params):
    x = jnp.transpose(x_nchw, (0, 2, 3, 1)).astype(jnp.float32)

    def conv_relu(h, idx):
        w, b = params["convs"][idx]
        out = jax.lax.conv_general_dilated(
            h, w, window_strides=(1, 1), padding="SAME",
            dimension_numbers=("NHWC", "HWIO", "NHWC"))
        return jnp.maximum(out + b, 0.0)

    def maxpool2(h):
        b, hh, ww, c = h.shape
        return h.reshape(b, hh // 2, 2, ww // 2, 2, c).max(axis=(2, 4))

    preds = []
    for m in range(N_CLASS):
        def gated(h, idxs):
            outs = []
            for i in idxs:
                g = (params["masks"][m][i] > 0).astype(jnp.float32)
                outs.append(conv_relu(h, i) * g)
            return outs[0] if len(outs) == 1 else jnp.concatenate(outs, axis=-1)

        h = gated(x, (0,))
        h = gated(h, (1,))
        h = gated(h, (2,))
        h = maxpool2(h)
        h = gated(h, (3, 4, 5))
        h = maxpool2(h)
        h = gated(h, (6, 7, 8))
        h = maxpool2(h)
        h = gated(h, (9, 10, 11))
        feat = jnp.mean(h, axis=(1, 2))
        pred = jnp.maximum(feat @ params["fcw"] + params["fcb"], 0.0)
        w1, b1, w2, b2 = params["heads"][m]
        hid = jnp.maximum(pred @ w1 + b1, 0.0)
        preds.append(jax.nn.sigmoid(hid @ w2 + b2))
    return jnp.concatenate(preds, axis=1)


# ----------------------------------------------------------------------------
# Deterministic synthetic parameters ('random' module_init_type)
# ----------------------------------------------------------------------------
def init_params(key):
    keys = iter(jax.random.split(key, 128))
    convs = []
    for cin, cout in CONV_PLAN:
        w = jax.random.normal(next(keys), (3, 3, cin, cout), jnp.float32) * 0.1
        b = jax.random.normal(next(keys), (cout,), jnp.float32) * 0.05
        convs.append((w, b))
    fcw = jax.random.normal(next(keys), (FC_IN, N_CLASS), jnp.float32) * 0.1
    fcb = jax.random.normal(next(keys), (N_CLASS,), jnp.float32) * 0.05
    masks, heads = [], []
    for _ in range(N_CLASS):
        masks.append([jax.random.normal(next(keys), (cout,), jnp.float32)
                      for (_, cout) in CONV_PLAN])
        w1 = jax.random.normal(next(keys), (N_CLASS, HEAD_HIDDEN), jnp.float32) * 0.3
        b1 = jax.random.normal(next(keys), (HEAD_HIDDEN,), jnp.float32) * 0.05
        w2 = jax.random.normal(next(keys), (HEAD_HIDDEN, 1), jnp.float32) * 0.3
        b2 = jax.random.normal(next(keys), (1,), jnp.float32) * 0.05
        heads.append((w1, b1, w2, b2))
    return {"convs": convs, "fcw": fcw, "fcb": fcb, "masks": masks, "heads": heads}


if __name__ == "__main__":
    key = jax.random.PRNGKey(0)
    k_x, k_p = jax.random.split(key)
    x = jax.random.normal(k_x, (2, 3, 16, 16), jnp.float32)   # NCHW input
    params = init_params(k_p)

    fwd = jax.jit(grad_splitter_forward)
    out = jax.block_until_ready(fwd(x, params))

    assert out.shape == (2, N_CLASS), out.shape
    assert bool(jnp.all(jnp.isfinite(out)))

    ref = jax.block_until_ready(jax.jit(_reference_forward)(x, params))
    max_err = float(jnp.max(jnp.abs(out - ref)))
    assert max_err < 5e-3, f"kernel vs reference mismatch: {max_err}"

    print("KERNEL_OK")
</pallas_src>

<mosaic_0001>
module attributes {stable_mosaic.version = 11 : i64} {
  func.func @_fused_kernel(%arg0: i32, %arg1: memref<34x54xf32, #tpu.memory_space<vmem>>, %arg2: memref<1x3x54x144xf32, #tpu.memory_space<vmem>>, %arg3: memref<1x1x144xf32, #tpu.memory_space<vmem>>, %arg4: memref<1x3x144x144xf32, #tpu.memory_space<vmem>>, %arg5: memref<1x1x144xf32, #tpu.memory_space<vmem>>, %arg6: memref<1x3x144x128xf32, #tpu.memory_space<vmem>>, %arg7: memref<1x1x128xf32, #tpu.memory_space<vmem>>, %arg8: memref<1x3x80x96xf32, #tpu.memory_space<vmem>>, %arg9: memref<1x1x96xf32, #tpu.memory_space<vmem>>, %arg10: memref<1x3x72x48xf32, #tpu.memory_space<vmem>>, %arg11: memref<1x1x48xf32, #tpu.memory_space<vmem>>, %arg12: memref<1x3x48x24xf32, #tpu.memory_space<vmem>>, %arg13: memref<1x1x24xf32, #tpu.memory_space<vmem>>, %arg14: memref<2x32x1xf32, #tpu.memory_space<vmem>>, %arg15: memref<2x16x1xf32, #tpu.memory_space<vmem>>, %arg16: memref<2x8x1xf32, #tpu.memory_space<vmem>>, %arg17: memref<2x4x1xf32, #tpu.memory_space<vmem>>, %arg18: memref<2x16x32xf32, #tpu.memory_space<vmem>>, %arg19: memref<2x128x80xf32, #tpu.memory_space<vmem>>, %arg20: memref<2x8x16xf32, #tpu.memory_space<vmem>>, %arg21: memref<2x96x72xf32, #tpu.memory_space<vmem>>, %arg22: memref<2x4x8xf32, #tpu.memory_space<vmem>>, %arg23: memref<2x48x48xf32, #tpu.memory_space<vmem>>, %arg24: memref<2x4xf32, #tpu.memory_space<vmem>>, %arg25: memref<24x12xf32, #tpu.memory_space<vmem>>, %arg26: memref<12x4xf32, #tpu.memory_space<vmem>>, %arg27: memref<1x4xf32, #tpu.memory_space<vmem>>, %arg28: memref<1x4x10xf32, #tpu.memory_space<vmem>>, %arg29: memref<1x1x10xf32, #tpu.memory_space<vmem>>, %arg30: memref<1x10x1xf32, #tpu.memory_space<vmem>>, %arg31: memref<1x1x1xf32, #tpu.memory_space<vmem>>, %arg32: memref<1x2x1xf32, #tpu.memory_space<vmem>>, %arg33: memref<34x144xf32, #tpu.memory_space<vmem>>, %arg34: memref<34x144xf32, #tpu.memory_space<vmem>>, %arg35: memref<18x80xf32, #tpu.memory_space<vmem>>, %arg36: memref<10x72xf32, #tpu.memory_space<vmem>>, %arg37: memref<6x48xf32, #tpu.memory_space<vmem>>) attributes {dimension_semantics = [#tpu.dimension_semantics<parallel>], iteration_bounds = array<i64: 4>, scalar_prefetch = 0 : i64, scratch_operands = 5 : i64, tpu.core_type = #tpu.core_type<tc>, window_params = [{pipeline_mode = #tpu.pipeline_mode<synchronous>, transform_indices = @transform_0, window_bounds = array<i64: 34, 54>}, {transform_indices = @transform_1, window_bounds = array<i64: 1, 3, 54, 144>}, {transform_indices = @transform_2, window_bounds = array<i64: 1, 1, 144>}, {transform_indices = @transform_3, window_bounds = array<i64: 1, 3, 144, 144>}, {transform_indices = @transform_4, window_bounds = array<i64: 1, 1, 144>}, {transform_indices = @transform_5, window_bounds = array<i64: 1, 3, 144, 128>}, {transform_indices = @transform_6, window_bounds = array<i64: 1, 1, 128>}, {transform_indices = @transform_7, window_bounds = array<i64: 1, 3, 80, 96>}, {transform_indices = @transform_8, window_bounds = array<i64: 1, 1, 96>}, {transform_indices = @transform_9, window_bounds = array<i64: 1, 3, 72, 48>}, {transform_indices = @transform_10, window_bounds = array<i64: 1, 1, 48>}, {transform_indices = @transform_11, window_bounds = array<i64: 1, 3, 48, 24>}, {transform_indices = @transform_12, window_bounds = array<i64: 1, 1, 24>}, {pipeline_mode = #tpu.pipeline_mode<synchronous>, transform_indices = @transform_13, window_bounds = array<i64: 2, 32, 1>}, {pipeline_mode = #tpu.pipeline_mode<synchronous>, transform_indices = @transform_14, window_bounds = array<i64: 2, 16, 1>}, {pipeline_mode = #tpu.pipeline_mode<synchronous>, transform_indices = @transform_15, window_bounds = array<i64: 2, 8, 1>}, {pipeline_mode = #tpu.pipeline_mode<synchronous>, transform_indices = @transform_16, window_bounds = array<i64: 2, 4, 1>}, {pipeline_mode = #tpu.pipeline_mode<synchronous>, transform_indices = @transform_17, window_bounds = array<i64: 2, 16, 32>}, {pipeline_mode = #tpu.pipeline_mode<synchronous>, transform_indices = @transform_18, window_bounds = array<i64: 2, 128, 80>}, {pipeline_mode = #tpu.pipeline_mode<synchronous>, transform_indices = @transform_19, window_bounds = array<i64: 2, 8, 16>}, {pipeline_mode = #tpu.pipeline_mode<synchronous>, transform_indices = @transform_20, window_bounds = array<i64: 2, 96, 72>}, {pipeline_mode = #tpu.pipeline_mode<synchronous>, transform_indices = @transform_21, window_bounds = array<i64: 2, 4, 8>}, {pipeline_mode = #tpu.pipeline_mode<synchronous>, transform_indices = @transform_22, window_bounds = array<i64: 2, 48, 48>}, {pipeline_mode = #tpu.pipeline_mode<synchronous>, transform_indices = @transform_23, window_bounds = array<i64: 2, 4>}, {pipeline_mode = #tpu.pipeline_mode<synchronous>, transform_indices = @transform_24, window_bounds = array<i64: 24, 12>}, {pipeline_mode = #tpu.pipeline_mode<synchronous>, transform_indices = @transform_25, window_bounds = array<i64: 12, 4>}, {pipeline_mode = #tpu.pipeline_mode<synchronous>, transform_indices = @transform_26, window_bounds = array<i64: 1, 4>}, {transform_indices = @transform_27, window_bounds = array<i64: 1, 4, 10>}, {transform_indices = @transform_28, window_bounds = array<i64: 1, 1, 10>}, {transform_indices = @transform_29, window_bounds = array<i64: 1, 10, 1>}, {transform_indices = @transform_30, window_bounds = array<i64: 1, 1, 1>}, {transform_indices = @transform_31, window_bounds = array<i64: 1, 2, 1>}]} {
    %c0 = arith.constant 0 : index
    %c0_0 = arith.constant 0 : index
    %0 = vector.load %arg1[%c0, %c0_0] : memref<34x54xf32, #tpu.memory_space<vmem>>, vector<32x54xf32>
    %c0_1 = arith.constant 0 : index
    %c0_2 = arith.constant 0 : index
    %c0_3 = arith.constant 0 : index
    %1 = vector.load %arg14[%c0_1, %c0_2, %c0_3] : memref<2x32x1xf32, #tpu.memory_space<vmem>>, vector<1x32x1xf32>
    %2 = vector.shape_cast %1 : vector<1x32x1xf32> to vector<32x1xf32>
    %3 = vector.broadcast %2 : vector<32x1xf32> to vector<32x54xf32>
    %4 = arith.mulf %0, %3 : vector<32x54xf32>
    %c0_4 = arith.constant 0 : index
    %c0_5 = arith.constant 0 : index
    %c0_6 = arith.constant 0 : index
    %c0_7 = arith.constant 0 : index
    %5 = vector.load %arg2[%c0_4, %c0_5, %c0_6, %c0_7] : memref<1x3x54x144xf32, #tpu.memory_space<vmem>>, vector<1x1x54x144xf32>
    %6 = vector.shape_cast %5 : vector<1x1x54x144xf32> to vector<54x144xf32>
    %cst = arith.constant dense<0.000000e+00> : vector<32x144xf32>
    %7 = tpu.matmul %4, %6, %cst {dimension_numbers = #tpu.dot_dimension_numbers<[1], [0], [0], [1], [0, 0, 1, 1], [], []>} : vector<32x54xf32>, vector<54x144xf32>, vector<32x144xf32> -> vector<32x144xf32>
    %c1 = arith.constant 1 : index
    %c0_8 = arith.constant 0 : index
    %8 = vector.load %arg1[%c1, %c0_8] : memref<34x54xf32, #tpu.memory_space<vmem>>, vector<32x54xf32>
    %c0_9 = arith.constant 0 : index
    %c1_10 = arith.constant 1 : index
    %c0_11 = arith.constant 0 : index
    %c0_12 = arith.constant 0 : index
    %9 = vector.load %arg2[%c0_9, %c1_10, %c0_11, %c0_12] : memref<1x3x54x144xf32, #tpu.memory_space<vmem>>, vector<1x1x54x144xf32>
    %10 = vector.shape_cast %9 : vector<1x1x54x144xf32> to vector<54x144xf32>
    %cst_13 = arith.constant dense<0.000000e+00> : vector<32x144xf32>
    %11 = tpu.matmul %8, %10, %cst_13 {dimension_numbers = #tpu.dot_dimension_numbers<[1], [0], [0], [1], [0, 0, 1, 1], [], []>} : vector<32x54xf32>, vector<54x144xf32>, vector<32x144xf32> -> vector<32x144xf32>
    %12 = arith.addf %7, %11 : vector<32x144xf32>
    %c2 = arith.constant 2 : index
    %c0_14 = arith.constant 0 : index
    %13 = vector.load %arg1[%c2, %c0_14] : memref<34x54xf32, #tpu.memory_space<vmem>>, vector<32x54xf32>
    %c1_15 = arith.constant 1 : index
    %c0_16 = arith.constant 0 : index
    %c0_17 = arith.constant 0 : index
    %14 = vector.load %arg14[%c1_15, %c0_16, %c0_17] : memref<2x32x1xf32, #tpu.memory_space<vmem>>, vector<1x32x1xf32>
    %15 = vector.shape_cast %14 : vector<1x32x1xf32> to vector<32x1xf32>
    %16 = vector.broadcast %15 : vector<32x1xf32> to vector<32x54xf32>
    %17 = arith.mulf %13, %16 : vector<32x54xf32>
    %c0_18 = arith.constant 0 : index
    %c2_19 = arith.constant 2 : index
    %c0_20 = arith.constant 0 : index
    %c0_21 = arith.constant 0 : index
    %18 = vector.load %arg2[%c0_18, %c2_19, %c0_20, %c0_21] : memref<1x3x54x144xf32, #tpu.memory_space<vmem>>, vector<1x1x54x144xf32>
    %19 = vector.shape_cast %18 : vector<1x1x54x144xf32> to vector<54x144xf32>
    %cst_22 = arith.constant dense<0.000000e+00> : vector<32x144xf32>
    %20 = tpu.matmul %17, %19, %cst_22 {dimension_numbers = #tpu.dot_dimension_numbers<[1], [0], [0], [1], [0, 0, 1, 1], [], []>} : vector<32x54xf32>, vector<54x144xf32>, vector<32x144xf32> -> vector<32x144xf32>
    %21 = arith.addf %12, %20 : vector<32x144xf32>
    %c0_23 = arith.constant 0 : index
    %c0_24 = arith.constant 0 : index
    %c0_25 = arith.constant 0 : index
    %22 = vector.load %arg3[%c0_23, %c0_24, %c0_25] : memref<1x1x144xf32, #tpu.memory_space<vmem>>, vector<1x1x144xf32>
    %23 = vector.shape_cast %22 : vector<1x1x144xf32> to vector<1x144xf32>
    %24 = vector.broadcast %23 : vector<1x144xf32> to vector<32x144xf32>
    %25 = arith.addf %21, %24 : vector<32x144xf32>
    %cst_26 = arith.constant 0.000000e+00 : f32
    %26 = vector.broadcast %cst_26 : f32 to vector<32x144xf32>
    %27 = arith.maximumf %25, %26 : vector<32x144xf32>
    %cst_27 = arith.constant 0.000000e+00 : f32
    %28 = vector.broadcast %cst_27 : f32 to vector<34x144xf32>
    %c0_28 = arith.constant 0 : index
    %c0_29 = arith.constant 0 : index
    %29 = vector.load %arg33[%c0_28, %c0_29] : memref<34x144xf32, #tpu.memory_space<vmem>>, vector<34x144xf32>
    tpu.vector_store %arg33[%c0_28, %c0_29], %28 {strides = array<i32>} : memref<34x144xf32, #tpu.memory_space<vmem>>, vector<34x144xf32>,
    %c1_30 = arith.constant 1 : index
    %c0_31 = arith.constant 0 : index
    %30 = vector.load %arg33[%c1_30, %c0_31] : memref<34x144xf32, #tpu.memory_space<vmem>>, vector<32x144xf32>
    tpu.vector_store %arg33[%c1_30, %c0_31], %27 {strides = array<i32>} : memref<34x144xf32, #tpu.memory_space<vmem>>, vector<32x144xf32>,
    %c0_32 = arith.constant 0 : index
    %c0_33 = arith.constant 0 : index
    %31 = vector.load %arg33[%c0_32, %c0_33] : memref<34x144xf32, #tpu.memory_space<vmem>>, vector<32x144xf32>
    %c0_34 = arith.constant 0 : index
    %c0_35 = arith.constant 0 : index
    %c0_36 = arith.constant 0 : index
    %32 = vector.load %arg14[%c0_34, %c0_35, %c0_36] : memref<2x32x1xf32, #tpu.memory_space<vmem>>, vector<1x32x1xf32>
    %33 = vector.shape_cast %32 : vector<1x32x1xf32> to vector<32x1xf32>
    %34 = vector.broadcast %33 : vector<32x1xf32> to vector<32x144xf32>
    %35 = arith.mulf %31, %34 : vector<32x144xf32>
    %c0_37 = arith.constant 0 : index
    %c0_38 = arith.constant 0 : index
    %c0_39 = arith.constant 0 : index
    %c0_40 = arith.constant 0 : index
    %36 = vector.load %arg4[%c0_37, %c0_38, %c0_39, %c0_40] : memref<1x3x144x144xf32, #tpu.memory_space<vmem>>, vector<1x1x144x144xf32>
    %37 = vector.shape_cast %36 : vector<1x1x144x144xf32> to vector<144x144xf32>
    %cst_41 = arith.constant dense<0.000000e+00> : vector<32x144xf32>
    %38 = tpu.matmul %35, %37, %cst_41 {dimension_numbers = #tpu.dot_dimension_numbers<[1], [0], [0], [1], [0, 0, 1, 1], [], []>} : vector<32x144xf32>, vector<144x144xf32>, vector<32x144xf32> -> vector<32x144xf32>
    %c1_42 = arith.constant 1 : index
    %c0_43 = arith.constant 0 : index
    %39 = vector.load %arg33[%c1_42, %c0_43] : memref<34x144xf32, #tpu.memory_space<vmem>>, vector<32x144xf32>
    %c0_44 = arith.constant 0 : index
    %c1_45 = arith.constant 1 : index
    %c0_46 = arith.constant 0 : index
    %c0_47 = arith.constant 0 : index
    %40 = vector.load %arg4[%c0_44, %c1_45, %c0_46, %c0_47] : memref<1x3x144x144xf32, #tpu.memory_space<vmem>>, vector<1x1x144x144xf32>
    %41 = vector.shape_cast %40 : vector<1x1x144x144xf32> to vector<144x144xf32>
    %cst_48 = arith.constant dense<0.000000e+00> : vector<32x144xf32>
    %42 = tpu.matmul %39, %41, %cst_48 {dimension_numbers = #tpu.dot_dimension_numbers<[1], [0], [0], [1], [0, 0, 1, 1], [], []>} : vector<32x144xf32>, vector<144x144xf32>, vector<32x144xf32> -> vector<32x144xf32>
    %43 = arith.addf %38, %42 : vector<32x144xf32>
    %c2_49 = arith.constant 2 : index
    %c0_50 = arith.constant 0 : index
    %44 = vector.load %arg33[%c2_49, %c0_50] : memref<34x144xf32, #tpu.memory_space<vmem>>, vector<32x144xf32>
    %c1_51 = arith.constant 1 : index
    %c0_52 = arith.constant 0 : index
    %c0_53 = arith.constant 0 : index
    %45 = vector.load %arg14[%c1_51, %c0_52, %c0_53] : memref<2x32x1xf32, #tpu.memory_space<vmem>>, vector<1x32x1xf32>
    %46 = vector.shape_cast %45 : vector<1x32x1xf32> to vector<32x1xf32>
    %47 = vector.broadcast %46 : vector<32x1xf32> to vector<32x144xf32>
    %48 = arith.mulf %44, %47 : vector<32x144xf32>
    %c0_54 = arith.constant 0 : index
    %c2_55 = arith.constant 2 : index
    %c0_56 = arith.constant 0 : index
    %c0_57 = arith.constant 0 : index
    %49 = vector.load %arg4[%c0_54, %c2_55, %c0_56, %c0_57] : memref<1x3x144x144xf32, #tpu.memory_space<vmem>>, vector<1x1x144x144xf32>
    %50 = vector.shape_cast %49 : vector<1x1x144x144xf32> to vector<144x144xf32>
    %cst_58 = arith.constant dense<0.000000e+00> : vector<32x144xf32>
    %51 = tpu.matmul %48, %50, %cst_58 {dimension_numbers = #tpu.dot_dimension_numbers<[1], [0], [0], [1], [0, 0, 1, 1], [], []>} : vector<32x144xf32>, vector<144x144xf32>, vector<32x144xf32> -> vector<32x144xf32>
    %52 = arith.addf %43, %51 : vector<32x144xf32>
    %c0_59 = arith.constant 0 : index
    %c0_60 = arith.constant 0 : index
    %c0_61 = arith.constant 0 : index
    %53 = vector.load %arg5[%c0_59, %c0_60, %c0_61] : memref<1x1x144xf32, #tpu.memory_space<vmem>>, vector<1x1x144xf32>
    %54 = vector.shape_cast %53 : vector<1x1x144xf32> to vector<1x144xf32>
    %55 = vector.broadcast %54 : vector<1x144xf32> to vector<32x144xf32>
    %56 = arith.addf %52, %55 : vector<32x144xf32>
    %cst_62 = arith.constant 0.000000e+00 : f32
    %57 = vector.broadcast %cst_62 : f32 to vector<32x144xf32>
    %58 = arith.maximumf %56, %57 : vector<32x144xf32>
    %cst_63 = arith.constant 0.000000e+00 : f32
    %59 = vector.broadcast %cst_63 : f32 to vector<34x144xf32>
    %c0_64 = arith.constant 0 : index
    %c0_65 = arith.constant 0 : index
    %60 = vector.load %arg34[%c0_64, %c0_65] : memref<34x144xf32, #tpu.memory_space<vmem>>, vector<34x144xf32>
    tpu.vector_store %arg34[%c0_64, %c0_65], %59 {strides = array<i32>} : memref<34x144xf32, #tpu.memory_space<vmem>>, vector<34x144xf32>,
    %c1_66 = arith.constant 1 : index
    %c0_67 = arith.constant 0 : index
    %61 = vector.load %arg34[%c1_66, %c0_67] : memref<34x144xf32, #tpu.memory_space<vmem>>, vector<32x144xf32>
    tpu.vector_store %arg34[%c1_66, %c0_67], %58 {strides = array<i32>} : memref<34x144xf32, #tpu.memory_space<vmem>>, vector<32x144xf32>,
    %c0_68 = arith.constant 0 : index
    %c0_69 = arith.constant 0 : index
    %62 = vector.load %arg34[%c0_68, %c0_69] : memref<34x144xf32, #tpu.memory_space<vmem>>, vector<32x144xf32>
    %c0_70 = arith.constant 0 : index
    %c0_71 = arith.constant 0 : index
    %c0_72 = arith.constant 0 : index
    %63 = vector.load %arg14[%c0_70, %c0_71, %c0_72] : memref<2x32x1xf32, #tpu.memory_space<vmem>>, vector<1x32x1xf32>
    %64 = vector.shape_cast %63 : vector<1x32x1xf32> to vector<32x1xf32>
    %65 = vector.broadcast %64 : vector<32x1xf32> to vector<32x144xf32>
    %66 = arith.mulf %62, %65 : vector<32x144xf32>
    %c0_73 = arith.constant 0 : index
    %c0_74 = arith.constant 0 : index
    %c0_75 = arith.constant 0 : index
    %c0_76 = arith.constant 0 : index
    %67 = vector.load %arg6[%c0_73, %c0_74, %c0_75, %c0_76] : memref<1x3x144x128xf32, #tpu.memory_space<vmem>>, vector<1x1x144x128xf32>
    %68 = vector.shape_cast %67 : vector<1x1x144x128xf32> to vector<144x128xf32>
    %cst_77 = arith.constant dense<0.000000e+00> : vector<32x128xf32>
    %69 = tpu.matmul %66, %68, %cst_77 {dimension_numbers = #tpu.dot_dimension_numbers<[1], [0], [0], [1], [0, 0, 1, 1], [], []>} : vector<32x144xf32>, vector<144x128xf32>, vector<32x128xf32> -> vector<32x128xf32>
    %c1_78 = arith.constant 1 : index
    %c0_79 = arith.constant 0 : index
    %70 = vector.load %arg34[%c1_78, %c0_79] : memref<34x144xf32, #tpu.memory_space<vmem>>, vector<32x144xf32>
    %c0_80 = arith.constant 0 : index
    %c1_81 = arith.constant 1 : index
    %c0_82 = arith.constant 0 : index
    %c0_83 = arith.constant 0 : index
    %71 = vector.load %arg6[%c0_80, %c1_81, %c0_82, %c0_83] : memref<1x3x144x128xf32, #tpu.memory_space<vmem>>, vector<1x1x144x128xf32>
    %72 = vector.shape_cast %71 : vector<1x1x144x128xf32> to vector<144x128xf32>
    %cst_84 = arith.constant dense<0.000000e+00> : vector<32x128xf32>
    %73 = tpu.matmul %70, %72, %cst_84 {dimension_numbers = #tpu.dot_dimension_numbers<[1], [0], [0], [1], [0, 0, 1, 1], [], []>} : vector<32x144xf32>, vector<144x128xf32>, vector<32x128xf32> -> vector<32x128xf32>
    %74 = arith.addf %69, %73 : vector<32x128xf32>
    %c2_85 = arith.constant 2 : index
    %c0_86 = arith.constant 0 : index
    %75 = vector.load %arg34[%c2_85, %c0_86] : memref<34x144xf32, #tpu.memory_space<vmem>>, vector<32x144xf32>
    %c1_87 = arith.constant 1 : index
    %c0_88 = arith.constant 0 : index
    %c0_89 = arith.constant 0 : index
    %76 = vector.load %arg14[%c1_87, %c0_88, %c0_89] : memref<2x32x1xf32, #tpu.memory_space<vmem>>, vector<1x32x1xf32>
    %77 = vector.shape_cast %76 : vector<1x32x1xf32> to vector<32x1xf32>
    %78 = vector.broadcast %77 : vector<32x1xf32> to vector<32x144xf32>
    %79 = arith.mulf %75, %78 : vector<32x144xf32>
    %c0_90 = arith.constant 0 : index
    %c2_91 = arith.constant 2 : index
    %c0_92 = arith.constant 0 : index
    %c0_93 = arith.constant 0 : index
    %80 = vector.load %arg6[%c0_90, %c2_91, %c0_92, %c0_93] : memref<1x3x144x128xf32, #tpu.memory_space<vmem>>, vector<1x1x144x128xf32>
    %81 = vector.shape_cast %80 : vector<1x1x144x128xf32> to vector<144x128xf32>
    %cst_94 = arith.constant dense<0.000000e+00> : vector<32x128xf32>
    %82 = tpu.matmul %79, %81, %cst_94 {dimension_numbers = #tpu.dot_dimension_numbers<[1], [0], [0], [1], [0, 0, 1, 1], [], []>} : vector<32x144xf32>, vector<144x128xf32>, vector<32x128xf32> -> vector<32x128xf32>
    %83 = arith.addf %74, %82 : vector<32x128xf32>
    %c0_95 = arith.constant 0 : index
    %c0_96 = arith.constant 0 : index
    %c0_97 = arith.constant 0 : index
    %84 = vector.load %arg7[%c0_95, %c0_96, %c0_97] : memref<1x1x128xf32, #tpu.memory_space<vmem>>, vector<1x1x128xf32>
    %85 = vector.shape_cast %84 : vector<1x1x128xf32> to vector<1x128xf32>
    %86 = vector.broadcast %85 : vector<1x128xf32> to vector<32x128xf32>
    %87 = arith.addf %83, %86 : vector<32x128xf32>
    %cst_98 = arith.constant 0.000000e+00 : f32
    %88 = vector.broadcast %cst_98 : f32 to vector<32x128xf32>
    %89 = arith.maximumf %87, %88 : vector<32x128xf32>
    %c0_99 = arith.constant 0 : index
    %c0_100 = arith.constant 0 : index
    %c0_101 = arith.constant 0 : index
    %90 = vector.load %arg18[%c0_99, %c0_100, %c0_101] : memref<2x16x32xf32, #tpu.memory_space<vmem>>, vector<1x16x32xf32>
    %91 = vector.shape_cast %90 : vector<1x16x32xf32> to vector<16x32xf32>
    %cst_102 = arith.constant dense<0.000000e+00> : vector<16x128xf32>
    %92 = tpu.matmul %91, %89, %cst_102 {dimension_numbers = #tpu.dot_dimension_numbers<[1], [0], [0], [1], [0, 0, 1, 1], [], []>} : vector<16x32xf32>, vector<32x128xf32>, vector<16x128xf32> -> vector<16x128xf32>
    %c1_103 = arith.constant 1 : index
    %c0_104 = arith.constant 0 : index
    %c0_105 = arith.constant 0 : index
    %93 = vector.load %arg18[%c1_103, %c0_104, %c0_105] : memref<2x16x32xf32, #tpu.memory_space<vmem>>, vector<1x16x32xf32>
    %94 = vector.shape_cast %93 : vector<1x16x32xf32> to vector<16x32xf32>
    %cst_106 = arith.constant dense<0.000000e+00> : vector<16x128xf32>
    %95 = tpu.matmul %94, %89, %cst_106 {dimension_numbers = #tpu.dot_dimension_numbers<[1], [0], [0], [1], [0, 0, 1, 1], [], []>} : vector<16x32xf32>, vector<32x128xf32>, vector<16x128xf32> -> vector<16x128xf32>
    %96 = arith.maximumf %92, %95 : vector<16x128xf32>
    %c0_107 = arith.constant 0 : index
    %c0_108 = arith.constant 0 : index
    %c0_109 = arith.constant 0 : index
    %97 = vector.load %arg19[%c0_107, %c0_108, %c0_109] : memref<2x128x80xf32, #tpu.memory_space<vmem>>, vector<1x128x80xf32>
    %98 = vector.shape_cast %97 : vector<1x128x80xf32> to vector<128x80xf32>
    %cst_110 = arith.constant dense<0.000000e+00> : vector<16x80xf32>
    %99 = tpu.matmul %96, %98, %cst_110 {dimension_numbers = #tpu.dot_dimension_numbers<[1], [0], [0], [1], [0, 0, 1, 1], [], []>} : vector<16x128xf32>, vector<128x80xf32>, vector<16x80xf32> -> vector<16x80xf32>
    %c1_111 = arith.constant 1 : index
    %c0_112 = arith.constant 0 : index
    %c0_113 = arith.constant 0 : index
    %100 = vector.load %arg19[%c1_111, %c0_112, %c0_113] : memref<2x128x80xf32, #tpu.memory_space<vmem>>, vector<1x128x80xf32>
    %101 = vector.shape_cast %100 : vector<1x128x80xf32> to vector<128x80xf32>
    %cst_114 = arith.constant dense<0.000000e+00> : vector<16x80xf32>
    %102 = tpu.matmul %96, %101, %cst_114 {dimension_numbers = #tpu.dot_dimension_numbers<[1], [0], [0], [1], [0, 0, 1, 1], [], []>} : vector<16x128xf32>, vector<128x80xf32>, vector<16x80xf32> -> vector<16x80xf32>
    %103 = arith.maximumf %99, %102 : vector<16x80xf32>
    %cst_115 = arith.constant 0.000000e+00 : f32
    %104 = vector.broadcast %cst_115 : f32 to vector<18x80xf32>
    %c0_116 = arith.constant 0 : index
    %c0_117 = arith.constant 0 : index
    %105 = vector.load %arg35[%c0_116, %c0_117] : memref<18x80xf32, #tpu.memory_space<vmem>>, vector<18x80xf32>
    tpu.vector_store %arg35[%c0_116, %c0_117], %104 {strides = array<i32>} : memref<18x80xf32, #tpu.memory_space<vmem>>, vector<18x80xf32>,
    %c1_118 = arith.constant 1 : index
    %c0_119 = arith.constant 0 : index
    %106 = vector.load %arg35[%c1_118, %c0_119] : memref<18x80xf32, #tpu.memory_space<vmem>>, vector<16x80xf32>
    tpu.vector_store %arg35[%c1_118, %c0_119], %103 {strides = array<i32>} : memref<18x80xf32, #tpu.memory_space<vmem>>, vector<16x80xf32>,
    %c0_120 = arith.constant 0 : index
    %c0_121 = arith.constant 0 : index
    %107 = vector.load %arg35[%c0_120, %c0_121] : memref<18x80xf32, #tpu.memory_space<vmem>>, vector<16x80xf32>
    %c0_122 = arith.constant 0 : index
    %c0_123 = arith.constant 0 : index
    %c0_124 = arith.constant 0 : index
    %108 = vector.load %arg15[%c0_122, %c0_123, %c0_124] : memref<2x16x1xf32, #tpu.memory_space<vmem>>, vector<1x16x1xf32>
    %109 = vector.shape_cast %108 : vector<1x16x1xf32> to vector<16x1xf32>
    %110 = vector.broadcast %109 : vector<16x1xf32> to vector<16x80xf32>
    %111 = arith.mulf %107, %110 : vector<16x80xf32>
    %c0_125 = arith.constant 0 : index
    %c0_126 = arith.constant 0 : index
    %c0_127 = arith.constant 0 : index
    %c0_128 = arith.constant 0 : index
    %112 = vector.load %arg8[%c0_125, %c0_126, %c0_127, %c0_128] : memref<1x3x80x96xf32, #tpu.memory_space<vmem>>, vector<1x1x80x96xf32>
    %113 = vector.shape_cast %112 : vector<1x1x80x96xf32> to vector<80x96xf32>
    %cst_129 = arith.constant dense<0.000000e+00> : vector<16x96xf32>
    %114 = tpu.matmul %111, %113, %cst_129 {dimension_numbers = #tpu.dot_dimension_numbers<[1], [0], [0], [1], [0, 0, 1, 1], [], []>} : vector<16x80xf32>, vector<80x96xf32>, vector<16x96xf32> -> vector<16x96xf32>
    %c1_130 = arith.constant 1 : index
    %c0_131 = arith.constant 0 : index
    %115 = vector.load %arg35[%c1_130, %c0_131] : memref<18x80xf32, #tpu.memory_space<vmem>>, vector<16x80xf32>
    %c0_132 = arith.constant 0 : index
    %c1_133 = arith.constant 1 : index
    %c0_134 = arith.constant 0 : index
    %c0_135 = arith.constant 0 : index
    %116 = vector.load %arg8[%c0_132, %c1_133, %c0_134, %c0_135] : memref<1x3x80x96xf32, #tpu.memory_space<vmem>>, vector<1x1x80x96xf32>
    %117 = vector.shape_cast %116 : vector<1x1x80x96xf32> to vector<80x96xf32>
    %cst_136 = arith.constant dense<0.000000e+00> : vector<16x96xf32>
    %118 = tpu.matmul %115, %117, %cst_136 {dimension_numbers = #tpu.dot_dimension_numbers<[1], [0], [0], [1], [0, 0, 1, 1], [], []>} : vector<16x80xf32>, vector<80x96xf32>, vector<16x96xf32> -> vector<16x96xf32>
    %119 = arith.addf %114, %118 : vector<16x96xf32>
    %c2_137 = arith.constant 2 : index
    %c0_138 = arith.constant 0 : index
    %120 = vector.load %arg35[%c2_137, %c0_138] : memref<18x80xf32, #tpu.memory_space<vmem>>, vector<16x80xf32>
    %c1_139 = arith.constant 1 : index
    %c0_140 = arith.constant 0 : index
    %c0_141 = arith.constant 0 : index
    %121 = vector.load %arg15[%c1_139, %c0_140, %c0_141] : memref<2x16x1xf32, #tpu.memory_space<vmem>>, vector<1x16x1xf32>
    %122 = vector.shape_cast %121 : vector<1x16x1xf32> to vector<16x1xf32>
    %123 = vector.broadcast %122 : vector<16x1xf32> to vector<16x80xf32>
    %124 = arith.mulf %120, %123 : vector<16x80xf32>
    %c0_142 = arith.constant 0 : index
    %c2_143 = arith.constant 2 : index
    %c0_144 = arith.constant 0 : index
    %c0_145 = arith.constant 0 : index
    %125 = vector.load %arg8[%c0_142, %c2_143, %c0_144, %c0_145] : memref<1x3x80x96xf32, #tpu.memory_space<vmem>>, vector<1x1x80x96xf32>
    %126 = vector.shape_cast %125 : vector<1x1x80x96xf32> to vector<80x96xf32>
    %cst_146 = arith.constant dense<0.000000e+00> : vector<16x96xf32>
    %127 = tpu.matmul %124, %126, %cst_146 {dimension_numbers = #tpu.dot_dimension_numbers<[1], [0], [0], [1], [0, 0, 1, 1], [], []>} : vector<16x80xf32>, vector<80x96xf32>, vector<16x96xf32> -> vector<16x96xf32>
    %128 = arith.addf %119, %127 : vector<16x96xf32>
    %c0_147 = arith.constant 0 : index
    %c0_148 = arith.constant 0 : index
    %c0_149 = arith.constant 0 : index
    %129 = vector.load %arg9[%c0_147, %c0_148, %c0_149] : memref<1x1x96xf32, #tpu.memory_space<vmem>>, vector<1x1x96xf32>
    %130 = vector.shape_cast %129 : vector<1x1x96xf32> to vector<1x96xf32>
    %131 = vector.broadcast %130 : vector<1x96xf32> to vector<16x96xf32>
    %132 = arith.addf %128, %131 : vector<16x96xf32>
    %cst_150 = arith.constant 0.000000e+00 : f32
    %133 = vector.broadcast %cst_150 : f32 to vector<16x96xf32>
    %134 = arith.maximumf %132, %133 : vector<16x96xf32>
    %c0_151 = arith.constant 0 : index
    %c0_152 = arith.constant 0 : index
    %c0_153 = arith.constant 0 : index
    %135 = vector.load %arg20[%c0_151, %c0_152, %c0_153] : memref<2x8x16xf32, #tpu.memory_space<vmem>>, vector<1x8x16xf32>
    %136 = vector.shape_cast %135 : vector<1x8x16xf32> to vector<8x16xf32>
    %cst_154 = arith.constant dense<0.000000e+00> : vector<8x96xf32>
    %137 = tpu.matmul %136, %134, %cst_154 {dimension_numbers = #tpu.dot_dimension_numbers<[1], [0], [0], [1], [0, 0, 1, 1], [], []>} : vector<8x16xf32>, vector<16x96xf32>, vector<8x96xf32> -> vector<8x96xf32>
    %c1_155 = arith.constant 1 : index
    %c0_156 = arith.constant 0 : index
    %c0_157 = arith.constant 0 : index
    %138 = vector.load %arg20[%c1_155, %c0_156, %c0_157] : memref<2x8x16xf32, #tpu.memory_space<vmem>>, vector<1x8x16xf32>
    %139 = vector.shape_cast %138 : vector<1x8x16xf32> to vector<8x16xf32>
    %cst_158 = arith.constant dense<0.000000e+00> : vector<8x96xf32>
    %140 = tpu.matmul %139, %134, %cst_158 {dimension_numbers = #tpu.dot_dimension_numbers<[1], [0], [0], [1], [0, 0, 1, 1], [], []>} : vector<8x16xf32>, vector<16x96xf32>, vector<8x96xf32> -> vector<8x96xf32>
    %141 = arith.maximumf %137, %140 : vector<8x96xf32>
    %c0_159 = arith.constant 0 : index
    %c0_160 = arith.constant 0 : index
    %c0_161 = arith.constant 0 : index
    %142 = vector.load %arg21[%c0_159, %c0_160, %c0_161] : memref<2x96x72xf32, #tpu.memory_space<vmem>>, vector<1x96x72xf32>
    %143 = vector.shape_cast %142 : vector<1x96x72xf32> to vector<96x72xf32>
    %cst_162 = arith.constant dense<0.000000e+00> : vector<8x72xf32>
    %144 = tpu.matmul %141, %143, %cst_162 {dimension_numbers = #tpu.dot_dimension_numbers<[1], [0], [0], [1], [0, 0, 1, 1], [], []>} : vector<8x96xf32>, vector<96x72xf32>, vector<8x72xf32> -> vector<8x72xf32>
    %c1_163 = arith.constant 1 : index
    %c0_164 = arith.constant 0 : index
    %c0_165 = arith.constant 0 : index
    %145 = vector.load %arg21[%c1_163, %c0_164, %c0_165] : memref<2x96x72xf32, #tpu.memory_space<vmem>>, vector<1x96x72xf32>
    %146 = vector.shape_cast %145 : vector<1x96x72xf32> to vector<96x72xf32>
    %cst_166 = arith.constant dense<0.000000e+00> : vector<8x72xf32>
    %147 = tpu.matmul %141, %146, %cst_166 {dimension_numbers = #tpu.dot_dimension_numbers<[1], [0], [0], [1], [0, 0, 1, 1], [], []>} : vector<8x96xf32>, vector<96x72xf32>, vector<8x72xf32> -> vector<8x72xf32>
    %148 = arith.maximumf %144, %147 : vector<8x72xf32>
    %cst_167 = arith.constant 0.000000e+00 : f32
    %149 = vector.broadcast %cst_167 : f32 to vector<10x72xf32>
    %c0_168 = arith.constant 0 : index
    %c0_169 = arith.constant 0 : index
    %150 = vector.load %arg36[%c0_168, %c0_169] : memref<10x72xf32, #tpu.memory_space<vmem>>, vector<10x72xf32>
    tpu.vector_store %arg36[%c0_168, %c0_169], %149 {strides = array<i32>} : memref<10x72xf32, #tpu.memory_space<vmem>>, vector<10x72xf32>,
    %c1_170 = arith.constant 1 : index
    %c0_171 = arith.constant 0 : index
    %151 = vector.load %arg36[%c1_170, %c0_171] : memref<10x72xf32, #tpu.memory_space<vmem>>, vector<8x72xf32>
    tpu.vector_store %arg36[%c1_170, %c0_171], %148 {strides = array<i32>} : memref<10x72xf32, #tpu.memory_space<vmem>>, vector<8x72xf32>,
    %c0_172 = arith.constant 0 : index
    %c0_173 = arith.constant 0 : index
    %152 = vector.load %arg36[%c0_172, %c0_173] : memref<10x72xf32, #tpu.memory_space<vmem>>, vector<8x72xf32>
    %c0_174 = arith.constant 0 : index
    %c0_175 = arith.constant 0 : index
    %c0_176 = arith.constant 0 : index
    %153 = vector.load %arg16[%c0_174, %c0_175, %c0_176] : memref<2x8x1xf32, #tpu.memory_space<vmem>>, vector<1x8x1xf32>
    %154 = vector.shape_cast %153 : vector<1x8x1xf32> to vector<8x1xf32>
    %155 = vector.broadcast %154 : vector<8x1xf32> to vector<8x72xf32>
    %156 = arith.mulf %152, %155 : vector<8x72xf32>
    %c0_177 = arith.constant 0 : index
    %c0_178 = arith.constant 0 : index
    %c0_179 = arith.constant 0 : index
    %c0_180 = arith.constant 0 : index
    %157 = vector.load %arg10[%c0_177, %c0_178, %c0_179, %c0_180] : memref<1x3x72x48xf32, #tpu.memory_space<vmem>>, vector<1x1x72x48xf32>
    %158 = vector.shape_cast %157 : vector<1x1x72x48xf32> to vector<72x48xf32>
    %cst_181 = arith.constant dense<0.000000e+00> : vector<8x48xf32>
    %159 = tpu.matmul %156, %158, %cst_181 {dimension_numbers = #tpu.dot_dimension_numbers<[1], [0], [0], [1], [0, 0, 1, 1], [], []>} : vector<8x72xf32>, vector<72x48xf32>, vector<8x48xf32> -> vector<8x48xf32>
    %c1_182 = arith.constant 1 : index
    %c0_183 = arith.constant 0 : index
    %160 = vector.load %arg36[%c1_182, %c0_183] : memref<10x72xf32, #tpu.memory_space<vmem>>, vector<8x72xf32>
    %c0_184 = arith.constant 0 : index
    %c1_185 = arith.constant 1 : index
    %c0_186 = arith.constant 0 : index
    %c0_187 = arith.constant 0 : index
    %161 = vector.load %arg10[%c0_184, %c1_185, %c0_186, %c0_187] : memref<1x3x72x48xf32, #tpu.memory_space<vmem>>, vector<1x1x72x48xf32>
    %162 = vector.shape_cast %161 : vector<1x1x72x48xf32> to vector<72x48xf32>
    %cst_188 = arith.constant dense<0.000000e+00> : vector<8x48xf32>
    %163 = tpu.matmul %160, %162, %cst_188 {dimension_numbers = #tpu.dot_dimension_numbers<[1], [0], [0], [1], [0, 0, 1, 1], [], []>} : vector<8x72xf32>, vector<72x48xf32>, vector<8x48xf32> -> vector<8x48xf32>
    %164 = arith.addf %159, %163 : vector<8x48xf32>
    %c2_189 = arith.constant 2 : index
    %c0_190 = arith.constant 0 : index
    %165 = vector.load %arg36[%c2_189, %c0_190] : memref<10x72xf32, #tpu.memory_space<vmem>>, vector<8x72xf32>
    %c1_191 = arith.constant 1 : index
    %c0_192 = arith.constant 0 : index
    %c0_193 = arith.constant 0 : index
    %166 = vector.load %arg16[%c1_191, %c0_192, %c0_193] : memref<2x8x1xf32, #tpu.memory_space<vmem>>, vector<1x8x1xf32>
    %167 = vector.shape_cast %166 : vector<1x8x1xf32> to vector<8x1xf32>
    %168 = vector.broadcast %167 : vector<8x1xf32> to vector<8x72xf32>
    %169 = arith.mulf %165, %168 : vector<8x72xf32>
    %c0_194 = arith.constant 0 : index
    %c2_195 = arith.constant 2 : index
    %c0_196 = arith.constant 0 : index
    %c0_197 = arith.constant 0 : index
    %170 = vector.load %arg10[%c0_194, %c2_195, %c0_196, %c0_197] : memref<1x3x72x48xf32, #tpu.memory_space<vmem>>, vector<1x1x72x48xf32>
    %171 = vector.shape_cast %170 : vector<1x1x72x48xf32> to vector<72x48xf32>
    %cst_198 = arith.constant dense<0.000000e+00> : vector<8x48xf32>
    %172 = tpu.matmul %169, %171, %cst_198 {dimension_numbers = #tpu.dot_dimension_numbers<[1], [0], [0], [1], [0, 0, 1, 1], [], []>} : vector<8x72xf32>, vector<72x48xf32>, vector<8x48xf32> -> vector<8x48xf32>
    %173 = arith.addf %164, %172 : vector<8x48xf32>
    %c0_199 = arith.constant 0 : index
    %c0_200 = arith.constant 0 : index
    %c0_201 = arith.constant 0 : index
    %174 = vector.load %arg11[%c0_199, %c0_200, %c0_201] : memref<1x1x48xf32, #tpu.memory_space<vmem>>, vector<1x1x48xf32>
    %175 = vector.shape_cast %174 : vector<1x1x48xf32> to vector<1x48xf32>
    %176 = vector.broadcast %175 : vector<1x48xf32> to vector<8x48xf32>
    %177 = arith.addf %173, %176 : vector<8x48xf32>
    %cst_202 = arith.constant 0.000000e+00 : f32
    %178 = vector.broadcast %cst_202 : f32 to vector<8x48xf32>
    %179 = arith.maximumf %177, %178 : vector<8x48xf32>
    %c0_203 = arith.constant 0 : index
    %c0_204 = arith.constant 0 : index
    %c0_205 = arith.constant 0 : index
    %180 = vector.load %arg22[%c0_203, %c0_204, %c0_205] : memref<2x4x8xf32, #tpu.memory_space<vmem>>, vector<1x4x8xf32>
    %181 = vector.shape_cast %180 : vector<1x4x8xf32> to vector<4x8xf32>
    %cst_206 = arith.constant dense<0.000000e+00> : vector<4x48xf32>
    %182 = tpu.matmul %181, %179, %cst_206 {dimension_numbers = #tpu.dot_dimension_numbers<[1], [0], [0], [1], [0, 0, 1, 1], [], []>} : vector<4x8xf32>, vector<8x48xf32>, vector<4x48xf32> -> vector<4x48xf32>
    %c1_207 = arith.constant 1 : index
    %c0_208 = arith.constant 0 : index
    %c0_209 = arith.constant 0 : index
    %183 = vector.load %arg22[%c1_207, %c0_208, %c0_209] : memref<2x4x8xf32, #tpu.memory_space<vmem>>, vector<1x4x8xf32>
    %184 = vector.shape_cast %183 : vector<1x4x8xf32> to vector<4x8xf32>
    %cst_210 = arith.constant dense<0.000000e+00> : vector<4x48xf32>
    %185 = tpu.matmul %184, %179, %cst_210 {dimension_numbers = #tpu.dot_dimension_numbers<[1], [0], [0], [1], [0, 0, 1, 1], [], []>} : vector<4x8xf32>, vector<8x48xf32>, vector<4x48xf32> -> vector<4x48xf32>
    %186 = arith.maximumf %182, %185 : vector<4x48xf32>
    %c0_211 = arith.constant 0 : index
    %c0_212 = arith.constant 0 : index
    %c0_213 = arith.constant 0 : index
    %187 = vector.load %arg23[%c0_211, %c0_212, %c0_213] : memref<2x48x48xf32, #tpu.memory_space<vmem>>, vector<1x48x48xf32>
    %188 = vector.shape_cast %187 : vector<1x48x48xf32> to vector<48x48xf32>
    %cst_214 = arith.constant dense<0.000000e+00> : vector<4x48xf32>
    %189 = tpu.matmul %186, %188, %cst_214 {dimension_numbers = #tpu.dot_dimension_numbers<[1], [0], [0], [1], [0, 0, 1, 1], [], []>} : vector<4x48xf32>, vector<48x48xf32>, vector<4x48xf32> -> vector<4x48xf32>
    %c1_215 = arith.constant 1 : index
    %c0_216 = arith.constant 0 : index
    %c0_217 = arith.constant 0 : index
    %190 = vector.load %arg23[%c1_215, %c0_216, %c0_217] : memref<2x48x48xf32, #tpu.memory_space<vmem>>, vector<1x48x48xf32>
    %191 = vector.shape_cast %190 : vector<1x48x48xf32> to vector<48x48xf32>
    %cst_218 = arith.constant dense<0.000000e+00> : vector<4x48xf32>
    %192 = tpu.matmul %186, %191, %cst_218 {dimension_numbers = #tpu.dot_dimension_numbers<[1], [0], [0], [1], [0, 0, 1, 1], [], []>} : vector<4x48xf32>, vector<48x48xf32>, vector<4x48xf32> -> vector<4x48xf32>
    %193 = arith.maximumf %189, %192 : vector<4x48xf32>
    %cst_219 = arith.constant 0.000000e+00 : f32
    %194 = vector.broadcast %cst_219 : f32 to vector<6x48xf32>
    %c0_220 = arith.constant 0 : index
    %c0_221 = arith.constant 0 : index
    %195 = vector.load %arg37[%c0_220, %c0_221] : memref<6x48xf32, #tpu.memory_space<vmem>>, vector<6x48xf32>
    tpu.vector_store %arg37[%c0_220, %c0_221], %194 {strides = array<i32>} : memref<6x48xf32, #tpu.memory_space<vmem>>, vector<6x48xf32>,
    %c1_222 = arith.constant 1 : index
    %c0_223 = arith.constant 0 : index
    %196 = vector.load %arg37[%c1_222, %c0_223] : memref<6x48xf32, #tpu.memory_space<vmem>>, vector<4x48xf32>
    tpu.vector_store %arg37[%c1_222, %c0_223], %193 {strides = array<i32>} : memref<6x48xf32, #tpu.memory_space<vmem>>, vector<4x48xf32>,
    %c0_224 = arith.constant 0 : index
    %c0_225 = arith.constant 0 : index
    %197 = vector.load %arg37[%c0_224, %c0_225] : memref<6x48xf32, #tpu.memory_space<vmem>>, vector<4x48xf32>
    %c0_226 = arith.constant 0 : index
    %c0_227 = arith.constant 0 : index
    %c0_228 = arith.constant 0 : index
    %198 = vector.load %arg17[%c0_226, %c0_227, %c0_228] : memref<2x4x1xf32, #tpu.memory_space<vmem>>, vector<1x4x1xf32>
    %199 = vector.shape_cast %198 : vector<1x4x1xf32> to vector<4x1xf32>
    %200 = vector.broadcast %199 : vector<4x1xf32> to vector<4x48xf32>
    %201 = arith.mulf %197, %200 : vector<4x48xf32>
    %c0_229 = arith.constant 0 : index
    %c0_230 = arith.constant 0 : index
    %c0_231 = arith.constant 0 : index
    %c0_232 = arith.constant 0 : index
    %202 = vector.load %arg12[%c0_229, %c0_230, %c0_231, %c0_232] : memref<1x3x48x24xf32, #tpu.memory_space<vmem>>, vector<1x1x48x24xf32>
    %203 = vector.shape_cast %202 : vector<1x1x48x24xf32> to vector<48x24xf32>
    %cst_233 = arith.constant dense<0.000000e+00> : vector<4x24xf32>
    %204 = tpu.matmul %201, %203, %cst_233 {dimension_numbers = #tpu.dot_dimension_numbers<[1], [0], [0], [1], [0, 0, 1, 1], [], []>} : vector<4x48xf32>, vector<48x24xf32>, vector<4x24xf32> -> vector<4x24xf32>
    %c1_234 = arith.constant 1 : index
    %c0_235 = arith.constant 0 : index
    %205 = vector.load %arg37[%c1_234, %c0_235] : memref<6x48xf32, #tpu.memory_space<vmem>>, vector<4x48xf32>
    %c0_236 = arith.constant 0 : index
    %c1_237 = arith.constant 1 : index
    %c0_238 = arith.constant 0 : index
    %c0_239 = arith.constant 0 : index
    %206 = vector.load %arg12[%c0_236, %c1_237, %c0_238, %c0_239] : memref<1x3x48x24xf32, #tpu.memory_space<vmem>>, vector<1x1x48x24xf32>
    %207 = vector.shape_cast %206 : vector<1x1x48x24xf32> to vector<48x24xf32>
    %cst_240 = arith.constant dense<0.000000e+00> : vector<4x24xf32>
    %208 = tpu.matmul %205, %207, %cst_240 {dimension_numbers = #tpu.dot_dimension_numbers<[1], [0], [0], [1], [0, 0, 1, 1], [], []>} : vector<4x48xf32>, vector<48x24xf32>, vector<4x24xf32> -> vector<4x24xf32>
    %209 = arith.addf %204, %208 : vector<4x24xf32>
    %c2_241 = arith.constant 2 : index
    %c0_242 = arith.constant 0 : index
    %210 = vector.load %arg37[%c2_241, %c0_242] : memref<6x48xf32, #tpu.memory_space<vmem>>, vector<4x48xf32>
    %c1_243 = arith.constant 1 : index
    %c0_244 = arith.constant 0 : index
    %c0_245 = arith.constant 0 : index
    %211 = vector.load %arg17[%c1_243, %c0_244, %c0_245] : memref<2x4x1xf32, #tpu.memory_space<vmem>>, vector<1x4x1xf32>
    %212 = vector.shape_cast %211 : vector<1x4x1xf32> to vector<4x1xf32>
    %213 = vector.broadcast %212 : vector<4x1xf32> to vector<4x48xf32>
    %214 = arith.mulf %210, %213 : vector<4x48xf32>
    %c0_246 = arith.constant 0 : index
    %c2_247 = arith.constant 2 : index
    %c0_248 = arith.constant 0 : index
    %c0_249 = arith.constant 0 : index
    %215 = vector.load %arg12[%c0_246, %c2_247, %c0_248, %c0_249] : memref<1x3x48x24xf32, #tpu.memory_space<vmem>>, vector<1x1x48x24xf32>
    %216 = vector.shape_cast %215 : vector<1x1x48x24xf32> to vector<48x24xf32>
    %cst_250 = arith.constant dense<0.000000e+00> : vector<4x24xf32>
    %217 = tpu.matmul %214, %216, %cst_250 {dimension_numbers = #tpu.dot_dimension_numbers<[1], [0], [0], [1], [0, 0, 1, 1], [], []>} : vector<4x48xf32>, vector<48x24xf32>, vector<4x24xf32> -> vector<4x24xf32>
    %218 = arith.addf %209, %217 : vector<4x24xf32>
    %c0_251 = arith.constant 0 : index
    %c0_252 = arith.constant 0 : index
    %c0_253 = arith.constant 0 : index
    %219 = vector.load %arg13[%c0_251, %c0_252, %c0_253] : memref<1x1x24xf32, #tpu.memory_space<vmem>>, vector<1x1x24xf32>
    %220 = vector.shape_cast %219 : vector<1x1x24xf32> to vector<1x24xf32>
    %221 = vector.broadcast %220 : vector<1x24xf32> to vector<4x24xf32>
    %222 = arith.addf %218, %221 : vector<4x24xf32>
    %cst_254 = arith.constant 0.000000e+00 : f32
    %223 = vector.broadcast %cst_254 : f32 to vector<4x24xf32>
    %224 = arith.maximumf %222, %223 : vector<4x24xf32>
    %c0_255 = arith.constant 0 : index
    %c0_256 = arith.constant 0 : index
    %225 = vector.load %arg24[%c0_255, %c0_256] : memref<2x4xf32, #tpu.memory_space<vmem>>, vector<2x4xf32>
    %cst_257 = arith.constant dense<0.000000e+00> : vector<2x24xf32>
    %226 = tpu.matmul %225, %224, %cst_257 {dimension_numbers = #tpu.dot_dimension_numbers<[1], [0], [0], [1], [0, 0, 1, 1], [], []>} : vector<2x4xf32>, vector<4x24xf32>, vector<2x24xf32> -> vector<2x24xf32>
    %c0_258 = arith.constant 0 : index
    %c0_259 = arith.constant 0 : index
    %227 = vector.load %arg25[%c0_258, %c0_259] : memref<24x12xf32, #tpu.memory_space<vmem>>, vector<24x12xf32>
    %cst_260 = arith.constant dense<0.000000e+00> : vector<2x12xf32>
    %228 = tpu.matmul %226, %227, %cst_260 {dimension_numbers = #tpu.dot_dimension_numbers<[1], [0], [0], [1], [0, 0, 1, 1], [], []>} : vector<2x24xf32>, vector<24x12xf32>, vector<2x12xf32> -> vector<2x12xf32>
    %c0_261 = arith.constant 0 : index
    %c0_262 = arith.constant 0 : index
    %229 = vector.load %arg26[%c0_261, %c0_262] : memref<12x4xf32, #tpu.memory_space<vmem>>, vector<12x4xf32>
    %cst_263 = arith.constant dense<0.000000e+00> : vector<2x4xf32>
    %230 = tpu.matmul %228, %229, %cst_263 {dimension_numbers = #tpu.dot_dimension_numbers<[1], [0], [0], [1], [0, 0, 1, 1], [], []>} : vector<2x12xf32>, vector<12x4xf32>, vector<2x4xf32> -> vector<2x4xf32>
    %c0_264 = arith.constant 0 : index
    %c0_265 = arith.constant 0 : index
    %231 = vector.load %arg27[%c0_264, %c0_265] : memref<1x4xf32, #tpu.memory_space<vmem>>, vector<1x4xf32>
    %232 = vector.broadcast %231 : vector<1x4xf32> to vector<2x4xf32>
    %233 = arith.addf %230, %232 : vector<2x4xf32>
    %cst_266 = arith.constant 0.000000e+00 : f32
    %234 = vector.broadcast %cst_266 : f32 to vector<2x4xf32>
    %235 = arith.maximumf %233, %234 : vector<2x4xf32>
    %c0_267 = arith.constant 0 : index
    %c0_268 = arith.constant 0 : index
    %c0_269 = arith.constant 0 : index
    %236 = vector.load %arg28[%c0_267, %c0_268, %c0_269] : memref<1x4x10xf32, #tpu.memory_space<vmem>>, vector<1x4x10xf32>
    %237 = vector.shape_cast %236 : vector<1x4x10xf32> to vector<4x10xf32>
    %cst_270 = arith.constant dense<0.000000e+00> : vector<2x10xf32>
    %238 = tpu.matmul %235, %237, %cst_270 {dimension_numbers = #tpu.dot_dimension_numbers<[1], [0], [0], [1], [0, 0, 1, 1], [], []>} : vector<2x4xf32>, vector<4x10xf32>, vector<2x10xf32> -> vector<2x10xf32>
    %c0_271 = arith.constant 0 : index
    %c0_272 = arith.constant 0 : index
    %c0_273 = arith.constant 0 : index
    %239 = vector.load %arg29[%c0_271, %c0_272, %c0_273] : memref<1x1x10xf32, #tpu.memory_space<vmem>>, vector<1x1x10xf32>
    %240 = vector.shape_cast %239 : vector<1x1x10xf32> to vector<1x10xf32>
    %241 = vector.broadcast %240 : vector<1x10xf32> to vector<2x10xf32>
    %242 = arith.addf %238, %241 : vector<2x10xf32>
    %cst_274 = arith.constant 0.000000e+00 : f32
    %243 = vector.broadcast %cst_274 : f32 to vector<2x10xf32>
    %244 = arith.maximumf %242, %243 : vector<2x10xf32>
    %c0_275 = arith.constant 0 : index
    %c0_276 = arith.constant 0 : index
    %c0_277 = arith.constant 0 : index
    %245 = vector.load %arg30[%c0_275, %c0_276, %c0_277] : memref<1x10x1xf32, #tpu.memory_space<vmem>>, vector<1x10x1xf32>
    %246 = vector.shape_cast %245 : vector<1x10x1xf32> to vector<10x1xf32>
    %cst_278 = arith.constant dense<0.000000e+00> : vector<2x1xf32>
    %247 = tpu.matmul %244, %246, %cst_278 {dimension_numbers = #tpu.dot_dimension_numbers<[1], [0], [0], [1], [0, 0, 1, 1], [], []>} : vector<2x10xf32>, vector<10x1xf32>, vector<2x1xf32> -> vector<2x1xf32>
    %c0_279 = arith.constant 0 : index
    %c0_280 = arith.constant 0 : index
    %c0_281 = arith.constant 0 : index
    %248 = vector.load %arg31[%c0_279, %c0_280, %c0_281] : memref<1x1x1xf32, #tpu.memory_space<vmem>>, vector<1x1x1xf32>
    %249 = vector.shape_cast %248 : vector<1x1x1xf32> to vector<1x1xf32>
    %250 = vector.broadcast %249 : vector<1x1xf32> to vector<2x1xf32>
    %251 = arith.addf %247, %250 : vector<2x1xf32>
    %252 = arith.negf %251 : vector<2x1xf32>
    %253 = math.exp %252 : vector<2x1xf32>
    %cst_282 = arith.constant 1.000000e+00 : f32
    %254 = vector.broadcast %cst_282 : f32 to vector<2x1xf32>
    %255 = arith.addf %254, %253 : vector<2x1xf32>
    %256 = arith.divf %254, %255 : vector<2x1xf32>
    %c0_283 = arith.constant 0 : index
    %c0_284 = arith.constant 0 : index
    %c0_285 = arith.constant 0 : index
    %257 = vector.load %arg32[%c0_283, %c0_284, %c0_285] : memref<1x2x1xf32, #tpu.memory_space<vmem>>, vector<1x2x1xf32>
    %258 = vector.shape_cast %257 : vector<1x2x1xf32> to vector<2x1xf32>
    %259 = vector.shape_cast %256 : vector<2x1xf32> to vector<1x2x1xf32>
    tpu.vector_store %arg32[%c0_283, %c0_284, %c0_285], %259 {strides = array<i32>} : memref<1x2x1xf32, #tpu.memory_space<vmem>>, vector<1x2x1xf32>,
    return
  }
  func.func @transform_0(%arg0: i32) -> (i32, i32) {
    %c0_i32 = arith.constant 0 : i32
    %c0_i32_0 = arith.constant 0 : i32
    %c0_i32_1 = arith.constant 0 : i32
    return %c0_i32, %c0_i32_0 : i32, i32
  }
  func.func @transform_1(%arg0: i32) -> (i32, i32, i32, i32) {
    %c0_i32 = arith.constant 0 : i32
    %c0_i32_0 = arith.constant 0 : i32
    %c0_i32_1 = arith.constant 0 : i32
    %c0_i32_2 = arith.constant 0 : i32
    return %arg0, %c0_i32, %c0_i32_0, %c0_i32_1 : i32, i32, i32, i32
  }
  func.func @transform_2(%arg0: i32) -> (i32, i32, i32) {
    %c0_i32 = arith.constant 0 : i32
    %c0_i32_0 = arith.constant 0 : i32
    %c0_i32_1 = arith.constant 0 : i32
    return %arg0, %c0_i32, %c0_i32_0 : i32, i32, i32
  }
  func.func @transform_3(%arg0: i32) -> (i32, i32, i32, i32) {
    %c0_i32 = arith.constant 0 : i32
    %c0_i32_0 = arith.constant 0 : i32
    %c0_i32_1 = arith.constant 0 : i32
    %c0_i32_2 = arith.constant 0 : i32
    return %arg0, %c0_i32, %c0_i32_0, %c0_i32_1 : i32, i32, i32, i32
  }
  func.func @transform_4(%arg0: i32) -> (i32, i32, i32) {
    %c0_i32 = arith.constant 0 : i32
    %c0_i32_0 = arith.constant 0 : i32
    %c0_i32_1 = arith.constant 0 : i32
    return %arg0, %c0_i32, %c0_i32_0 : i32, i32, i32
  }
  func.func @transform_5(%arg0: i32) -> (i32, i32, i32, i32) {
    %c0_i32 = arith.constant 0 : i32
    %c0_i32_0 = arith.constant 0 : i32
    %c0_i32_1 = arith.constant 0 : i32
    %c0_i32_2 = arith.constant 0 : i32
    return %arg0, %c0_i32, %c0_i32_0, %c0_i32_1 : i32, i32, i32, i32
  }
  func.func @transform_6(%arg0: i32) -> (i32, i32, i32) {
    %c0_i32 = arith.constant 0 : i32
    %c0_i32_0 = arith.constant 0 : i32
    %c0_i32_1 = arith.constant 0 : i32
    return %arg0, %c0_i32, %c0_i32_0 : i32, i32, i32
  }
  func.func @transform_7(%arg0: i32) -> (i32, i32, i32, i32) {
    %c0_i32 = arith.constant 0 : i32
    %c0_i32_0 = arith.constant 0 : i32
    %c0_i32_1 = arith.constant 0 : i32
    %c0_i32_2 = arith.constant 0 : i32
    return %arg0, %c0_i32, %c0_i32_0, %c0_i32_1 : i32, i32, i32, i32
  }
  func.func @transform_8(%arg0: i32) -> (i32, i32, i32) {
    %c0_i32 = arith.constant 0 : i32
    %c0_i32_0 = arith.constant 0 : i32
    %c0_i32_1 = arith.constant 0 : i32
    return %arg0, %c0_i32, %c0_i32_0 : i32, i32, i32
  }
  func.func @transform_9(%arg0: i32) -> (i32, i32, i32, i32) {
    %c0_i32 = arith.constant 0 : i32
    %c0_i32_0 = arith.constant 0 : i32
    %c0_i32_1 = arith.constant 0 : i32
    %c0_i32_2 = arith.constant 0 : i32
    return %arg0, %c0_i32, %c0_i32_0, %c0_i32_1 : i32, i32, i32, i32
  }
  func.func @transform_10(%arg0: i32) -> (i32, i32, i32) {
    %c0_i32 = arith.constant 0 : i32
    %c0_i32_0 = arith.constant 0 : i32
    %c0_i32_1 = arith.constant 0 : i32
    return %arg0, %c0_i32, %c0_i32_0 : i32, i32, i32
  }
  func.func @transform_11(%arg0: i32) -> (i32, i32, i32, i32) {
    %c0_i32 = arith.constant 0 : i32
    %c0_i32_0 = arith.constant 0 : i32
    %c0_i32_1 = arith.constant 0 : i32
    %c0_i32_2 = arith.constant 0 : i32
    return %arg0, %c0_i32, %c0_i32_0, %c0_i32_1 : i32, i32, i32, i32
  }
  func.func @transform_12(%arg0: i32) -> (i32, i32, i32) {
    %c0_i32 = arith.constant 0 : i32
    %c0_i32_0 = arith.constant 0 : i32
    %c0_i32_1 = arith.constant 0 : i32
    return %arg0, %c0_i32, %c0_i32_0 : i32, i32, i32
  }
  func.func @transform_13(%arg0: i32) -> (i32, i32, i32) {
    %c0_i32 = arith.constant 0 : i32
    %c0_i32_0 = arith.constant 0 : i32
    %c0_i32_1 = arith.constant 0 : i32
    %c0_i32_2 = arith.constant 0 : i32
    return %c0_i32, %c0_i32_0, %c0_i32_1 : i32, i32, i32
  }
  func.func @transform_14(%arg0: i32) -> (i32, i32, i32) {
    %c0_i32 = arith.constant 0 : i32
    %c0_i32_0 = arith.constant 0 : i32
    %c0_i32_1 = arith.constant 0 : i32
    %c0_i32_2 = arith.constant 0 : i32
    return %c0_i32, %c0_i32_0, %c0_i32_1 : i32, i32, i32
  }
  func.func @transform_15(%arg0: i32) -> (i32, i32, i32) {
    %c0_i32 = arith.constant 0 : i32
    %c0_i32_0 = arith.constant 0 : i32
    %c0_i32_1 = arith.constant 0 : i32
    %c0_i32_2 = arith.constant 0 : i32
    return %c0_i32, %c0_i32_0, %c0_i32_1 : i32, i32, i32
  }
  func.func @transform_16(%arg0: i32) -> (i32, i32, i32) {
    %c0_i32 = arith.constant 0 : i32
    %c0_i32_0 = arith.constant 0 : i32
    %c0_i32_1 = arith.constant 0 : i32
    %c0_i32_2 = arith.constant 0 : i32
    return %c0_i32, %c0_i32_0, %c0_i32_1 : i32, i32, i32
  }
  func.func @transform_17(%arg0: i32) -> (i32, i32, i32) {
    %c0_i32 = arith.constant 0 : i32
    %c0_i32_0 = arith.constant 0 : i32
    %c0_i32_1 = arith.constant 0 : i32
    %c0_i32_2 = arith.constant 0 : i32
    return %c0_i32, %c0_i32_0, %c0_i32_1 : i32, i32, i32
  }
  func.func @transform_18(%arg0: i32) -> (i32, i32, i32) {
    %c0_i32 = arith.constant 0 : i32
    %c0_i32_0 = arith.constant 0 : i32
    %c0_i32_1 = arith.constant 0 : i32
    %c0_i32_2 = arith.constant 0 : i32
    return %c0_i32, %c0_i32_0, %c0_i32_1 : i32, i32, i32
  }
  func.func @transform_19(%arg0: i32) -> (i32, i32, i32) {
    %c0_i32 = arith.constant 0 : i32
    %c0_i32_0 = arith.constant 0 : i32
    %c0_i32_1 = arith.constant 0 : i32
    %c0_i32_2 = arith.constant 0 : i32
    return %c0_i32, %c0_i32_0, %c0_i32_1 : i32, i32, i32
  }
  func.func @transform_20(%arg0: i32) -> (i32, i32, i32) {
    %c0_i32 = arith.constant 0 : i32
    %c0_i32_0 = arith.constant 0 : i32
    %c0_i32_1 = arith.constant 0 : i32
    %c0_i32_2 = arith.constant 0 : i32
    return %c0_i32, %c0_i32_0, %c0_i32_1 : i32, i32, i32
  }
  func.func @transform_21(%arg0: i32) -> (i32, i32, i32) {
    %c0_i32 = arith.constant 0 : i32
    %c0_i32_0 = arith.constant 0 : i32
    %c0_i32_1 = arith.constant 0 : i32
    %c0_i32_2 = arith.constant 0 : i32
    return %c0_i32, %c0_i32_0, %c0_i32_1 : i32, i32, i32
  }
  func.func @transform_22(%arg0: i32) -> (i32, i32, i32) {
    %c0_i32 = arith.constant 0 : i32
    %c0_i32_0 = arith.constant 0 : i32
    %c0_i32_1 = arith.constant 0 : i32
    %c0_i32_2 = arith.constant 0 : i32
    return %c0_i32, %c0_i32_0, %c0_i32_1 : i32, i32, i32
  }
  func.func @transform_23(%arg0: i32) -> (i32, i32) {
    %c0_i32 = arith.constant 0 : i32
    %c0_i32_0 = arith.constant 0 : i32
    %c0_i32_1 = arith.constant 0 : i32
    return %c0_i32, %c0_i32_0 : i32, i32
  }
  func.func @transform_24(%arg0: i32) -> (i32, i32) {
    %c0_i32 = arith.constant 0 : i32
    %c0_i32_0 = arith.constant 0 : i32
    %c0_i32_1 = arith.constant 0 : i32
    return %c0_i32, %c0_i32_0 : i32, i32
  }
  func.func @transform_25(%arg0: i32) -> (i32, i32) {
    %c0_i32 = arith.constant 0 : i32
    %c0_i32_0 = arith.constant 0 : i32
    %c0_i32_1 = arith.constant 0 : i32
    return %c0_i32, %c0_i32_0 : i32, i32
  }
  func.func @transform_26(%arg0: i32) -> (i32, i32) {
    %c0_i32 = arith.constant 0 : i32
    %c0_i32_0 = arith.constant 0 : i32
    %c0_i32_1 = arith.constant 0 : i32
    return %c0_i32, %c0_i32_0 : i32, i32
  }
  func.func @transform_27(%arg0: i32) -> (i32, i32, i32) {
    %c0_i32 = arith.constant 0 : i32
    %c0_i32_0 = arith.constant 0 : i32
    %c0_i32_1 = arith.constant 0 : i32
    return %arg0, %c0_i32, %c0_i32_0 : i32, i32, i32
  }
  func.func @transform_28(%arg0: i32) -> (i32, i32, i32) {
    %c0_i32 = arith.constant 0 : i32
    %c0_i32_0 = arith.constant 0 : i32
    %c0_i32_1 = arith.constant 0 : i32
    return %arg0, %c0_i32, %c0_i32_0 : i32, i32, i32
  }
  func.func @transform_29(%arg0: i32) -> (i32, i32, i32) {
    %c0_i32 = arith.constant 0 : i32
    %c0_i32_0 = arith.constant 0 : i32
    %c0_i32_1 = arith.constant 0 : i32
    return %arg0, %c0_i32, %c0_i32_0 : i32, i32, i32
  }
  func.func @transform_30(%arg0: i32) -> (i32, i32, i32) {
    %c0_i32 = arith.constant 0 : i32
    %c0_i32_0 = arith.constant 0 : i32
    %c0_i32_1 = arith.constant 0 : i32
    return %arg0, %c0_i32, %c0_i32_0 : i32, i32, i32
  }
  func.func @transform_31(%arg0: i32) -> (i32, i32, i32) {
    %c0_i32 = arith.constant 0 : i32
    %c0_i32_0 = arith.constant 0 : i32
    %c0_i32_1 = arith.constant 0 : i32
    return %arg0, %c0_i32, %c0_i32_0 : i32, i32, i32
  }
}

</mosaic_0001>

<llo_original>
// kernel: tile.143
$region0: #{tile.143}
  #allocation0 [shape = 's32[1]{0}', space=sflag, size = 0x4, scoped, tag = 'scoped memory for tile.143']
  %s0 = inlined_call_operand.vmem [shape: f32[8], index: 0, kind: input, shape index: {}]
  %s1 = inlined_call_operand.vmem [shape: f32[16,8], index: 1, kind: output, shape index: {}]
  // Predicated region
  $region2: #{tile.143} parent=0 // pred_check
    _
  $region3: #{tile.143} parent=0 // pred_check_branch
    %3 = sbr.rel (0) target = $region5
  $region4: #{tile.143} parent=0 // pred_region
    _
  $region5: #{tile.143} parent=0 // pred_fallthru
    _
  %v4 = vld [vmem:[%s0] ss:$0 sm:$0xff]
  %5 = vst [vmem:[%s1] sm:$0xff] %v4
  %s6 = scalar_lea.vmem %s1, 8
  %7 = vst [vmem:[%s6] sm:$0xff] %v4

// kernel: tile.144
$region0: #{tile.144}
  %s0 = inlined_call_operand.vmem [shape: f32[16,8], index: 0, kind: input, shape index: {}]
  %s1 = inlined_call_operand.vmem [shape: f32[128], index: 1, kind: output, shape index: {}]
  $region1: #{tile.144} parent=0
    #allocation0 [shape = 'u8[4096]{0}', space=vmem, size = 0x1000, scoped, tag = 'scoped mem for output reshape']
    %v2 = vld [vmem:[%s0] sm:$0x1]
    %vm3 = vcmask 64512
    %4 = vst.msk [vmem:[#allocation0] sm:$0x1] %vm3, %v2
    %s5 = scalar_lea.vmem %s0, 15
    %v6 = vld [vmem:[%s5] sm:$0x1]
    %7 = vrot.lane.b32.xlu0 %v6, 120
    %v8 = vpop.permute.xlu0 %7
    %vm9 = vcmask 1048512
    %10 = vst.msk [vmem:[#allocation0] sm:$0x1] %vm9, %v8
    %s11 = scalar_lea.vmem %s0, 14
    %v12 = vld [vmem:[%s11] sm:$0x1]
    %13 = vrot.lane.b32.xlu0 %v12, 112
    %v14 = vpop.permute.xlu0 %13
    %vm15 = vcmask 982912
    %16 = vst.msk [vmem:[#allocation0] sm:$0x1] %vm15, %v14
    %s17 = scalar_lea.vmem %s0, 13
    %v18 = vld [vmem:[%s17] sm:$0x1]
    %19 = vrot.lane.b32.xlu0 %v18, 104
    %v20 = vpop.permute.xlu0 %19
    %vm21 = vcmask 917312
    %22 = vst.msk [vmem:[#allocation0] sm:$0x1] %vm21, %v20
    %s23 = scalar_lea.vmem %s0, 12
    %v24 = vld [vmem:[%s23] sm:$0x1]
    %25 = vrot.lane.b32.xlu0 %v24, 96
    %v26 = vpop.permute.xlu0 %25
    %vm27 = vcmask 851712
    %28 = vst.msk [vmem:[#allocation0] sm:$0x1] %vm27, %v26
    %s29 = scalar_lea.vmem %s0, 11
    %v30 = vld [vmem:[%s29] sm:$0x1]
    %31 = vrot.lane.b32.xlu0 %v30, 88
    %v32 = vpop.permute.xlu0 %31
    %vm33 = vcmask 786112
    %34 = vst.msk [vmem:[#allocation0] sm:$0x1] %vm33, %v32
    %s35 = scalar_lea.vmem %s0, 10
    %v36 = vld [vmem:[%s35] sm:$0x1]
    %37 = vrot.lane.b32.xlu0 %v36, 80
    %v38 = vpop.permute.xlu0 %37
    %vm39 = vcmask 720512
    %40 = vst.msk [vmem:[#allocation0] sm:$0x1] %vm39, %v38
    %s41 = scalar_lea.vmem %s0, 9
    %v42 = vld [vmem:[%s41] sm:$0x1]
    %43 = vrot.lane.b32.xlu0 %v42, 72
    %v44 = vpop.permute.xlu0 %43
    %vm45 = vcmask 654912
    %46 = vst.msk [vmem:[#allocation0] sm:$0x1] %vm45, %v44
    %s47 = scalar_lea.vmem %s0, 8
    %v48 = vld [vmem:[%s47] sm:$0x1]
    %49 = vrot.lane.b32.xlu0 %v48, 64
    %v50 = vpop.permute.xlu0 %49
    %vm51 = vcmask 589312
    %52 = vst.msk [vmem:[#allocation0] sm:$0x1] %vm51, %v50
    %s53 = scalar_lea.vmem %s0, 7
    %v54 = vld [vmem:[%s53] sm:$0x1]
    %55 = vrot.lane.b32.xlu0 %v54, 56
    %v56 = vpop.permute.xlu0 %55
    %vm57 = vcmask 523712
    %58 = vst.msk [vmem:[#allocation0] sm:$0x1] %vm57, %v56
    %s59 = scalar_lea.vmem %s0, 6
    %v60 = vld [vmem:[%s59] sm:$0x1]
    %61 = vrot.lane.b32.xlu0 %v60, 48
    %v62 = vpop.permute.xlu0 %61
    %vm63 = vcmask 458112
    %64 = vst.msk [vmem:[#allocation0] sm:$0x1] %vm63, %v62
    %s65 = scalar_lea.vmem %s0, 5
    %v66 = vld [vmem:[%s65] sm:$0x1]
    %67 = vrot.lane.b32.xlu0 %v66, 40
    %v68 = vpop.permute.xlu0 %67
    %vm69 = vcmask 392512
    %70 = vst.msk [vmem:[#allocation0] sm:$0x1] %vm69, %v68
    %s71 = scalar_lea.vmem %s0, 4
    %v72 = vld [vmem:[%s71] sm:$0x1]
    %73 = vrot.lane.b32.xlu0 %v72, 32
    %v74 = vpop.permute.xlu0 %73
    %vm75 = vcmask 326912
    %76 = vst.msk [vmem:[#allocation0] sm:$0x1] %vm75, %v74
    %s77 = scalar_lea.vmem %s0, 3
    %v78 = vld [vmem:[%s77] sm:$0x1]
    %79 = vrot.lane.b32.xlu0 %v78, 24
    %v80 = vpop.permute.xlu0 %79
    %vm81 = vcmask 261312
    %82 = vst.msk [vmem:[#allocation0] sm:$0x1] %vm81, %v80
    %s83 = scalar_lea.vmem %s0, 2
    %v84 = vld [vmem:[%s83] sm:$0x1]
    %85 = vrot.lane.b32.xlu0 %v84, 16
    %v86 = vpop.permute.xlu0 %85
    %vm87 = vcmask 195712
    %88 = vst.msk [vmem:[#allocation0] sm:$0x1] %vm87, %v86
    %s89 = scalar_lea.vmem %s0, 1
    %v90 = vld [vmem:[%s89] sm:$0x1]
    %91 = vrot.lane.b32.xlu0 %v90, 8
    %v92 = vpop.permute.xlu0 %91
    %vm93 = vcmask 130112
    %94 = vst.msk [vmem:[#allocation0] sm:$0x1] %vm93, %v92
    %s96 = sshllo.u32 0, 1
    %v98 = vld [vmem:[#allocation0] sm:%s96]
    %s99 = sshllo.u32 0, 1
    %100 = vst [vmem:[%s1] sm:%s99] %v98

// kernel: tile.179
$region0: #{tile.179}
  %s0 = inlined_call_operand.vmem [shape: f32[16,8], index: 0, kind: input, shape index: {}]
  %s1 = inlined_call_operand.vmem [shape: f32[1,1,128], index: 1, kind: output, shape index: {}]
  $region1: #{tile.179} parent=0
    #allocation0 [shape = 'u8[4096]{0}', space=vmem, size = 0x1000, scoped, tag = 'scoped mem for output reshape']
    %v2 = vld [vmem:[%s0] sm:$0x1]
    %vm3 = vcmask 64512
    %4 = vst.msk [vmem:[#allocation0] sm:$0x1] %vm3, %v2
    %s5 = scalar_lea.vmem %s0, 15
    %v6 = vld [vmem:[%s5] sm:$0x1]
    %7 = vrot.lane.b32.xlu0 %v6, 120
    %v8 = vpop.permute.xlu0 %7
    %vm9 = vcmask 1048512
    %10 = vst.msk [vmem:[#allocation0] sm:$0x1] %vm9, %v8
    %s11 = scalar_lea.vmem %s0, 14
    %v12 = vld [vmem:[%s11] sm:$0x1]
    %13 = vrot.lane.b32.xlu0 %v12, 112
    %v14 = vpop.permute.xlu0 %13
    %vm15 = vcmask 982912
    %16 = vst.msk [vmem:[#allocation0] sm:$0x1] %vm15, %v14
    %s17 = scalar_lea.vmem %s0, 13
    %v18 = vld [vmem:[%s17] sm:$0x1]
    %19 = vrot.lane.b32.xlu0 %v18, 104
    %v20 = vpop.permute.xlu0 %19
    %vm21 = vcmask 917312
    %22 = vst.msk [vmem:[#allocation0] sm:$0x1] %vm21, %v20
    %s23 = scalar_lea.vmem %s0, 12
    %v24 = vld [vmem:[%s23] sm:$0x1]
    %25 = vrot.lane.b32.xlu0 %v24, 96
    %v26 = vpop.permute.xlu0 %25
    %vm27 = vcmask 851712
    %28 = vst.msk [vmem:[#allocation0] sm:$0x1] %vm27, %v26
    %s29 = scalar_lea.vmem %s0, 11
    %v30 = vld [vmem:[%s29] sm:$0x1]
    %31 = vrot.lane.b32.xlu0 %v30, 88
    %v32 = vpop.permute.xlu0 %31
    %vm33 = vcmask 786112
    %34 = vst.msk [vmem:[#allocation0] sm:$0x1] %vm33, %v32
    %s35 = scalar_lea.vmem %s0, 10
    %v36 = vld [vmem:[%s35] sm:$0x1]
    %37 = vrot.lane.b32.xlu0 %v36, 80
    %v38 = vpop.permute.xlu0 %37
    %vm39 = vcmask 720512
    %40 = vst.msk [vmem:[#allocation0] sm:$0x1] %vm39, %v38
    %s41 = scalar_lea.vmem %s0, 9
    %v42 = vld [vmem:[%s41] sm:$0x1]
    %43 = vrot.lane.b32.xlu0 %v42, 72
    %v44 = vpop.permute.xlu0 %43
    %vm45 = vcmask 654912
    %46 = vst.msk [vmem:[#allocation0] sm:$0x1] %vm45, %v44
    %s47 = scalar_lea.vmem %s0, 8
    %v48 = vld [vmem:[%s47] sm:$0x1]
    %49 = vrot.lane.b32.xlu0 %v48, 64
    %v50 = vpop.permute.xlu0 %49
    %vm51 = vcmask 589312
    %52 = vst.msk [vmem:[#allocation0] sm:$0x1] %vm51, %v50
    %s53 = scalar_lea.vmem %s0, 7
    %v54 = vld [vmem:[%s53] sm:$0x1]
    %55 = vrot.lane.b32.xlu0 %v54, 56
    %v56 = vpop.permute.xlu0 %55
    %vm57 = vcmask 523712
    %58 = vst.msk [vmem:[#allocation0] sm:$0x1] %vm57, %v56
    %s59 = scalar_lea.vmem %s0, 6
    %v60 = vld [vmem:[%s59] sm:$0x1]
    %61 = vrot.lane.b32.xlu0 %v60, 48
    %v62 = vpop.permute.xlu0 %61
    %vm63 = vcmask 458112
    %64 = vst.msk [vmem:[#allocation0] sm:$0x1] %vm63, %v62
    %s65 = scalar_lea.vmem %s0, 5
    %v66 = vld [vmem:[%s65] sm:$0x1]
    %67 = vrot.lane.b32.xlu0 %v66, 40
    %v68 = vpop.permute.xlu0 %67
    %vm69 = vcmask 392512
    %70 = vst.msk [vmem:[#allocation0] sm:$0x1] %vm69, %v68
    %s71 = scalar_lea.vmem %s0, 4
    %v72 = vld [vmem:[%s71] sm:$0x1]
    %73 = vrot.lane.b32.xlu0 %v72, 32
    %v74 = vpop.permute.xlu0 %73
    %vm75 = vcmask 326912
    %76 = vst.msk [vmem:[#allocation0] sm:$0x1] %vm75, %v74
    %s77 = scalar_lea.vmem %s0, 3
    %v78 = vld [vmem:[%s77] sm:$0x1]
    %79 = vrot.lane.b32.xlu0 %v78, 24
    %v80 = vpop.permute.xlu0 %79
    %vm81 = vcmask 261312
    %82 = vst.msk [vmem:[#allocation0] sm:$0x1] %vm81, %v80
    %s83 = scalar_lea.vmem %s0, 2
    %v84 = vld [vmem:[%s83] sm:$0x1]
    %85 = vrot.lane.b32.xlu0 %v84, 16
    %v86 = vpop.permute.xlu0 %85
    %vm87 = vcmask 195712
    %88 = vst.msk [vmem:[#allocation0] sm:$0x1] %vm87, %v86
    %s89 = scalar_lea.vmem %s0, 1
    %v90 = vld [vmem:[%s89] sm:$0x1]
    %91 = vrot.lane.b32.xlu0 %v90, 8
    %v92 = vpop.permute.xlu0 %91
    %vm93 = vcmask 130112
    %94 = vst.msk [vmem:[#allocation0] sm:$0x1] %vm93, %v92
    %s96 = sshllo.u32 0, 1
    %v98 = vld [vmem:[#allocation0] sm:%s96]
    %s99 = sshllo.u32 0, 1
    %100 = vst [vmem:[%s1] sm:%s99] %v98

// kernel: tile.195
$region0: #{tile.195}
  #allocation0 [shape = 's32[1]{0}', space=sflag, size = 0x4, scoped, tag = 'scoped memory for tile.195']
  %s0 = inlined_call_operand.vmem [shape: f32[12], index: 0, kind: input, shape index: {}]
  %s1 = inlined_call_operand.vmem [shape: f32[8,12], index: 1, kind: output, shape index: {}]
  // Predicated region
  $region2: #{tile.195} parent=0 // pred_check
    _
  $region3: #{tile.195} parent=0 // pred_check_branch
    %3 = sbr.rel (0) target = $region5
  $region4: #{tile.195} parent=0 // pred_region
    _
  $region5: #{tile.195} parent=0 // pred_fallthru
    _
  %v4 = vld [vmem:[%s0] ss:$0 sm:$0xff]
  %5 = vst [vmem:[%s1] sm:$0xff] %v4

// kernel: tile.199
$region0: #{tile.199}
  %s0 = inlined_call_operand.vmem [shape: f32[8,12], index: 0, kind: input, shape index: {}]
  %s1 = inlined_call_operand.vmem [shape: f32[1,1,96], index: 1, kind: output, shape index: {}]
  $region1: #{tile.199} parent=0
    #allocation0 [shape = 'u8[4096]{0}', space=vmem, size = 0x1000, scoped, tag = 'scoped mem for output reshape']
    %v2 = vld [vmem:[%s0] sm:$0x1]
    %vm3 = vcmask 97280
    %4 = vst.msk [vmem:[#allocation0] sm:$0x1] %vm3, %v2
    %s5 = scalar_lea.vmem %s0, 7
    %v6 = vld [vmem:[%s5] sm:$0x1]
    %7 = vrot.lane.b32.xlu0 %v6, 84
    %v8 = vpop.permute.xlu0 %7
    %vm9 = vcmask 786080
    %10 = vst.msk [vmem:[#allocation0] sm:$0x1] %vm9, %v8
    %s11 = scalar_lea.vmem %s0, 6
    %v12 = vld [vmem:[%s11] sm:$0x1]
    %13 = vrot.lane.b32.xlu0 %v12, 72
    %v14 = vpop.permute.xlu0 %13
    %vm15 = vcmask 687680
    %16 = vst.msk [vmem:[#allocation0] sm:$0x1] %vm15, %v14
    %s17 = scalar_lea.vmem %s0, 5
    %v18 = vld [vmem:[%s17] sm:$0x1]
    %19 = vrot.lane.b32.xlu0 %v18, 60
    %v20 = vpop.permute.xlu0 %19
    %vm21 = vcmask 589280
    %22 = vst.msk [vmem:[#allocation0] sm:$0x1] %vm21, %v20
    %s23 = scalar_lea.vmem %s0, 4
    %v24 = vld [vmem:[%s23] sm:$0x1]
    %25 = vrot.lane.b32.xlu0 %v24, 48
    %v26 = vpop.permute.xlu0 %25
    %vm27 = vcmask 490880
    %28 = vst.msk [vmem:[#allocation0] sm:$0x1] %vm27, %v26
    %s29 = scalar_lea.vmem %s0, 3
    %v30 = vld [vmem:[%s29] sm:$0x1]
    %31 = vrot.lane.b32.xlu0 %v30, 36
    %v32 = vpop.permute.xlu0 %31
    %vm33 = vcmask 392480
    %34 = vst.msk [vmem:[#allocation0] sm:$0x1] %vm33, %v32
    %s35 = scalar_lea.vmem %s0, 2
    %v36 = vld [vmem:[%s35] sm:$0x1]
    %37 = vrot.lane.b32.xlu0 %v36, 24
    %v38 = vpop.permute.xlu0 %37
    %vm39 = vcmask 294080
    %40 = vst.msk [vmem:[#allocation0] sm:$0x1] %vm39, %v38
    %s41 = scalar_lea.vmem %s0, 1
    %v42 = vld [vmem:[%s41] sm:$0x1]
    %43 = vrot.lane.b32.xlu0 %v42, 12
    %v44 = vpop.permute.xlu0 %43
    %vm45 = vcmask 195680
    %46 = vst.msk [vmem:[#allocation0] sm:$0x1] %vm45, %v44
    %s48 = sshllo.u32 0, 1
    %v50 = vld [vmem:[#allocation0] sm:%s48]
    %s51 = sshllo.u32 0, 1
    %52 = vst [vmem:[%s1] sm:%s51] %v50

// kernel: tile.215
$region0: #{tile.215}
  #allocation0 [shape = 's32[1]{0}', space=sflag, size = 0x4, scoped, tag = 'scoped memory for tile.215']
  %s0 = inlined_call_operand.vmem [shape: f32[12], index: 0, kind: input, shape index: {}]
  %s1 = inlined_call_operand.vmem [shape: f32[4,12], index: 1, kind: output, shape index: {}]
  // Predicated region
  $region2: #{tile.215} parent=0 // pred_check
    _
  $region3: #{tile.215} parent=0 // pred_check_branch
    %3 = sbr.rel (0) target = $region5
  $region4: #{tile.215} parent=0 // pred_region
    _
  $region5: #{tile.215} parent=0 // pred_fallthru
    _
  %v4 = vld [vmem:[%s0] ss:$0 sm:$0xff]
  %5 = vst [vmem:[%s1] sm:$0xf] %v4

// kernel: tile.219
$region0: #{tile.219}
  %s0 = inlined_call_operand.vmem [shape: f32[4,12], index: 0, kind: input, shape index: {}]
  %s1 = inlined_call_operand.vmem [shape: f32[1,1,48], index: 1, kind: output, shape index: {}]
  $region1: #{tile.219} parent=0
    #allocation0 [shape = 'u8[4096]{0}', space=vmem, size = 0x1000, scoped, tag = 'scoped mem for output reshape']
    #allocation1 [shape = 'u8[4096]{0}', space=vmem, size = 0x1000, scoped, tag = 'scoped mem for input reshape']
    %s3 = sshllo.u32 0, 4
    %v4 = vld [vmem:[%s0] sm:%s3]
    %5 = vst [vmem:[#allocation1] sm:%s3] %v4
    %v6 = vld [vmem:[#allocation1] sm:$0x1]
    %vm7 = vcmask 97280
    %8 = vst.msk [vmem:[#allocation0] sm:$0x1] %vm7, %v6
    %s9 = scalar_lea.vmem [#allocation1], 3
    %v10 = vld [vmem:[%s9] sm:$0x1]
    %11 = vrot.lane.b32.xlu0 %v10, 36
    %v12 = vpop.permute.xlu0 %11
    %vm13 = vcmask 392480
    %14 = vst.msk [vmem:[#allocation0] sm:$0x1] %vm13, %v12
    %s15 = scalar_lea.vmem [#allocation1], 2
    %v16 = vld [vmem:[%s15] sm:$0x1]
    %17 = vrot.lane.b32.xlu0 %v16, 24
    %v18 = vpop.permute.xlu0 %17
    %vm19 = vcmask 294080
    %20 = vst.msk [vmem:[#allocation0] sm:$0x1] %vm19, %v18
    %s21 = scalar_lea.vmem [#allocation1], 1
    %v22 = vld [vmem:[%s21] sm:$0x1]
    %23 = vrot.lane.b32.xlu0 %v22, 12
    %v24 = vpop.permute.xlu0 %23
    %vm25 = vcmask 195680
    %26 = vst.msk [vmem:[#allocation0] sm:$0x1] %vm25, %v24
    %s28 = sshllo.u32 0, 1
    %v30 = vld [vmem:[#allocation0] sm:%s28]
    %s31 = sshllo.u32 0, 1
    %32 = vst [vmem:[%s1] sm:%s31] %v30

// kernel: tile.235
$region0: #{tile.235}
  #allocation0 [shape = 's32[1]{0}', space=sflag, size = 0x4, scoped, tag = 'scoped memory for tile.235']
  %s0 = inlined_call_operand.vmem [shape: f32[12], index: 0, kind: input, shape index: {}]
  %s1 = inlined_call_operand.vmem [shape: f32[2,12], index: 1, kind: output, shape index: {}]
  // Predicated region
  $region2: #{tile.235} parent=0 // pred_check
    _
  $region3: #{tile.235} parent=0 // pred_check_branch
    %3 = sbr.rel (0) target = $region5
  $region4: #{tile.235} parent=0 // pred_region
    _
  $region5: #{tile.235} parent=0 // pred_fallthru
    _
  %v4 = vld [vmem:[%s0] ss:$0 sm:$0xff]
  %5 = vst [vmem:[%s1] sm:$0x3] %v4

// kernel: tile.239
$region0: #{tile.239}
  %s0 = inlined_call_operand.vmem [shape: f32[2,12], index: 0, kind: input, shape index: {}]
  %s1 = inlined_call_operand.vmem [shape: f32[1,1,24], index: 1, kind: output, shape index: {}]
  $region1: #{tile.239} parent=0
    #allocation0 [shape = 'u8[4096]{0}', space=vmem, size = 0x1000, scoped, tag = 'scoped mem for output reshape']
    #allocation1 [shape = 'u8[4096]{0}', space=vmem, size = 0x1000, scoped, tag = 'scoped mem for input reshape']
    %s3 = sshllo.u32 0, 2
    %v4 = vld [vmem:[%s0] sm:%s3]
    %5 = vst [vmem:[#allocation1] sm:%s3] %v4
    %v6 = vld [vmem:[#allocation1] sm:$0x1]
    %vm7 = vcmask 97280
    %8 = vst.msk [vmem:[#allocation0] sm:$0x1] %vm7, %v6
    %s9 = scalar_lea.vmem [#allocation1], 1
    %v10 = vld [vmem:[%s9] sm:$0x1]
    %11 = vrot.lane.b32.xlu0 %v10, 12
    %v12 = vpop.permute.xlu0 %11
    %vm13 = vcmask 195680
    %14 = vst.msk [vmem:[#allocation0] sm:$0x1] %vm13, %v12
    %s16 = sshllo.u32 0, 1
    %v18 = vld [vmem:[#allocation0] sm:%s16]
    %s19 = sshllo.u32 0, 1
    %20 = vst [vmem:[%s1] sm:%s19] %v18

// kernel: grad_splitter_forward.1
$region0: #{grad_splitter_forward.1}
  #allocation0 [shape = 'u32[]', space=smem, size = 0x4, offset = 0x4, fixed_abs, tag = 'smem constant byte address 0x4 - core index']
  #allocation1 [shape = 'u32[144,128]{1,0:T(1,128)}', space=vmem, size = 0x12000, scoped, tag = 'internal scratch']
  #allocation2 [shape = 'f32[34,144]{1,0:T(8,128)}', space=vmem, size = 0xa000, scoped, tag = 'scratch operand']
  #allocation3 [shape = 'f32[34,144]{1,0:T(8,128)}', space=vmem, size = 0xa000, scoped, tag = 'scratch operand']
  #allocation4 [shape = 'f32[18,80]{1,0:T(8,128)}', space=vmem, size = 0x3000, scoped, tag = 'scratch operand']
  #allocation5 [shape = 'f32[10,72]{1,0:T(8,128)}', space=vmem, size = 0x2000, scoped, tag = 'scratch operand']
  #allocation6 [shape = 'f32[6,48]{1,0:T(8,128)}', space=vmem, size = 0x1000, scoped, tag = 'scratch operand']
  %s0 = inlined_call_operand.smem [shape: u32[32], index: -1, kind: input, shape index: {}]
  %s1 = sld [smem:[%s0]]
  %s2 = scalar_lea.smem %s0, 1
  %s3 = sld [smem:[%s2]]
  %s4 = scalar_lea.smem %s0, 2
  %s5 = sld [smem:[%s4]]
  %s6 = scalar_lea.smem %s0, 3
  %s7 = sld [smem:[%s6]]
  %s8 = scalar_lea.smem %s0, 4
  %s9 = sld [smem:[%s8]]
  %s10 = scalar_lea.smem %s0, 5
  %s11 = sld [smem:[%s10]]
  %s12 = scalar_lea.smem %s0, 6
  %s13 = sld [smem:[%s12]]
  %s14 = scalar_lea.smem %s0, 7
  %s15 = sld [smem:[%s14]]
  %s16 = scalar_lea.smem %s0, 8
  %s17 = sld [smem:[%s16]]
  %s18 = scalar_lea.smem %s0, 9
  %s19 = sld [smem:[%s18]]
  %s20 = scalar_lea.smem %s0, 10
  %s21 = sld [smem:[%s20]]
  %s22 = scalar_lea.smem %s0, 11
  %s23 = sld [smem:[%s22]]
  %s24 = scalar_lea.smem %s0, 12
  %s25 = sld [smem:[%s24]]
  %s26 = scalar_lea.smem %s0, 13
  %s27 = sld [smem:[%s26]]
  %s28 = scalar_lea.smem %s0, 14
  %s29 = sld [smem:[%s28]]
  %s30 = scalar_lea.smem %s0, 15
  %s31 = sld [smem:[%s30]]
  %s32 = scalar_lea.smem %s0, 16
  %s33 = sld [smem:[%s32]]
  %s34 = scalar_lea.smem %s0, 17
  %s35 = sld [smem:[%s34]]
  %s36 = scalar_lea.smem %s0, 18
  %s37 = sld [smem:[%s36]]
  %s38 = scalar_lea.smem %s0, 19
  %s39 = sld [smem:[%s38]]
  %s40 = scalar_lea.smem %s0, 20
  %s41 = sld [smem:[%s40]]
  %s42 = scalar_lea.smem %s0, 21
  %s43 = sld [smem:[%s42]]
  %s44 = scalar_lea.smem %s0, 22
  %s45 = sld [smem:[%s44]]
  %s46 = scalar_lea.smem %s0, 23
  %s47 = sld [smem:[%s46]]
  %s48 = scalar_lea.smem %s0, 24
  %s49 = sld [smem:[%s48]]
  %s50 = scalar_lea.smem %s0, 25
  %s51 = sld [smem:[%s50]]
  %s52 = scalar_lea.smem %s0, 26
  %s53 = sld [smem:[%s52]]
  %s54 = scalar_lea.smem %s0, 27
  %s55 = sld [smem:[%s54]]
  %s56 = scalar_lea.smem %s0, 28
  %s57 = sld [smem:[%s56]]
  %s58 = scalar_lea.smem %s0, 29
  %s59 = sld [smem:[%s58]]
  %s60 = scalar_lea.smem %s0, 30
  %s61 = sld [smem:[%s60]]
  %s62 = scalar_lea.smem %s0, 31
  %s63 = sld [smem:[%s62]]
  %s64 = sld [smem:[#allocation0]]
  $region157: #{grad_splitter_forward.1} parent=0
    _
  %s66 = ssub.s32 1, %s64
  %s67 = scalar_select 0, %s66, %s64
  loop: start=0, step=1, limit=6
  $region2: #{grad_splitter_forward.1} parent=0 // loop_pre_header
    _
  $region3: #{grad_splitter_forward.1} parent=0 // loop_header
    %s69 = sphi 0, %s73
    %p70 = scmp.ge.s32.totalorder %s69, 6
    %s77 = sphi 0, %s77
    %s79 = sphi 0, %s77
    %s80 = sphi 0, %s79
    %s94 = sphi 0, %s80
    %s100 = sphi 0, %s102
    %s103 = sphi 0, %s100
    %s104 = sphi 0, %s103
    %s120 = sphi 0, %s104
    %s126 = sphi 0, %s128
    %s129 = sphi 0, %s126
    %s130 = sphi 0, %s129
    %s146 = sphi 0, %s130
    %s152 = sphi 0, %s154
    %s155 = sphi 0, %s152
    %s156 = sphi 0, %s155
    %s172 = sphi 0, %s156
    %s178 = sphi 0, %s180
    %s181 = sphi 0, %s178
    %s182 = sphi 0, %s181
    %s198 = sphi 0, %s182
    %s204 = sphi 0, %s206
    %s207 = sphi 0, %s204
    %s208 = sphi 0, %s207
    %s224 = sphi 0, %s208
    %s230 = sphi 0, %s232
    %s233 = sphi 0, %s230
    %s234 = sphi 0, %s233
    %s250 = sphi 0, %s234
    %s256 = sphi 0, %s258
    %s259 = sphi 0, %s256
    %s260 = sphi 0, %s259
    %s276 = sphi 0, %s260
    %s282 = sphi 0, %s284
    %s285 = sphi 0, %s282
    %s286 = sphi 0, %s285
    %s302 = sphi 0, %s286
    %s308 = sphi 0, %s310
    %s311 = sphi 0, %s308
    %s312 = sphi 0, %s311
    %s328 = sphi 0, %s312
    %s334 = sphi 0, %s336
    %s337 = sphi 0, %s334
    %s338 = sphi 0, %s337
    %s354 = sphi 0, %s338
    %s360 = sphi 0, %s362
    %s363 = sphi 0, %s360
    %s364 = sphi 0, %s363
    %s380 = sphi 0, %s364
    %s386 = sphi 0, %s388
    %s389 = sphi 0, %s386
    %s390 = sphi 0, %s389
    %s406 = sphi 0, %s390
    %s410 = sphi 0, %s410
    %s412 = sphi 0, %s410
    %s413 = sphi 0, %s412
    %s427 = sphi 0, %s413
    %s431 = sphi 0, %s431
    %s433 = sphi 0, %s431
    %s434 = sphi 0, %s433
    %s448 = sphi 0, %s434
    %s452 = sphi 0, %s452
    %s454 = sphi 0, %s452
    %s455 = sphi 0, %s454
    %s469 = sphi 0, %s455
    %s473 = sphi 0, %s473
    %s475 = sphi 0, %s473
    %s476 = sphi 0, %s475
    %s490 = sphi 0, %s476
    %s494 = sphi 0, %s494
    %s496 = sphi 0, %s494
    %s497 = sphi 0, %s496
    %s511 = sphi 0, %s497
    %s515 = sphi 0, %s515
    %s517 = sphi 0, %s515
    %s518 = sphi 0, %s517
    %s532 = sphi 0, %s518
    %s536 = sphi 0, %s536
    %s538 = sphi 0, %s536
    %s539 = sphi 0, %s538
    %s553 = sphi 0, %s539
    %s557 = sphi 0, %s557
    %s559 = sphi 0, %s557
    %s560 = sphi 0, %s559
    %s574 = sphi 0, %s560
    %s578 = sphi 0, %s578
    %s580 = sphi 0, %s578
    %s581 = sphi 0, %s580
    %s595 = sphi 0, %s581
    %s599 = sphi 0, %s599
    %s601 = sphi 0, %s599
    %s602 = sphi 0, %s601
    %s616 = sphi 0, %s602
    %s620 = sphi 0, %s620
    %s622 = sphi 0, %s620
    %s623 = sphi 0, %s622
    %s637 = sphi 0, %s623
    %s641 = sphi 0, %s641
    %s643 = sphi 0, %s641
    %s644 = sphi 0, %s643
    %s658 = sphi 0, %s644
    %s662 = sphi 0, %s662
    %s664 = sphi 0, %s662
    %s665 = sphi 0, %s664
    %s679 = sphi 0, %s665
    %s683 = sphi 0, %s683
    %s685 = sphi 0, %s683
    %s686 = sphi 0, %s685
    %s700 = sphi 0, %s686
    %s706 = sphi 0, %s708
    %s709 = sphi 0, %s706
    %s710 = sphi 0, %s709
    %s726 = sphi 0, %s710
    %s732 = sphi 0, %s734
    %s735 = sphi 0, %s732
    %s736 = sphi 0, %s735
    %s752 = sphi 0, %s736
    %s758 = sphi 0, %s760
    %s761 = sphi 0, %s758
    %s762 = sphi 0, %s761
    %s778 = sphi 0, %s762
    %s784 = sphi 0, %s786
    %s787 = sphi 0, %s784
    %s788 = sphi 0, %s787
    %s804 = sphi 0, %s788
    %s810 = sphi 0, %s812
    %s813 = sphi 0, %s810
    %s814 = sphi 0, %s813
    %s830 = sphi 0, %s814
  $region4: #{grad_splitter_forward.1} parent=0 // loop_header_branch
    %72 = sbr.rel (%p70) target = $region8
  $region5: #{grad_splitter_forward.1} parent=0 // loop_body
    %s74 = ssub.s32 %s69, 1
    %s75 = ssub.s32 %s69, 2
    %s76 = sadd.s32 %s69, 1
    %s78 = sadd.s32 %s77, 1
    %p81 = scmp.eq.s32.totalorder %s69, 3
    %p82 = scmp.ne.s32.totalorder %s77, %s79
    %p83 = scmp.eq.s32.totalorder %s69, 0
    %p84 = por %p82, %p83
    %p85 = scmp.ne.s32.totalorder %s77, %s79
    %p86 = scmp.eq.s32.totalorder %s74, 3
    %p87 = por %p85, %p86
    %p88 = scmp.ne.s32.totalorder %s79, %s80
    %p89 = scmp.eq.s32.totalorder %s74, 0
    %p90 = por %p88, %p89
    %p91 = scmp.ne.s32.totalorder %s79, %s80
    %p92 = scmp.eq.s32.totalorder %s75, 3
    %p93 = por %p91, %p92
    %p95 = scmp.ne.s32.totalorder %s80, %s94
    %p96 = scmp.eq.s32.totalorder %s75, 0
    %p97 = por %p95, %p96
    %s98 = ssub.s32 %s69, %s76
    %p99 = scmp.eq.s32.totalorder %s98, 0
    %s101 = sadd.s32 %s100, 1
    %s102 = scalar_select %p99, %s100, %s101
    %p105 = pneg %p99
    %p106 = scmp.eq.s32.totalorder %s69, 3
    %p107 = por %p105, %p106
    %p108 = scmp.ne.s32.totalorder %s100, %s103
    %p109 = scmp.eq.s32.totalorder %s69, 0
    %p110 = por %p108, %p109
    %p111 = scmp.ne.s32.totalorder %s100, %s103
    %p112 = scmp.eq.s32.totalorder %s74, 3
    %p113 = por %p111, %p112
    %p114 = scmp.ne.s32.totalorder %s103, %s104
    %p115 = scmp.eq.s32.totalorder %s74, 0
    %p116 = por %p114, %p115
    %p117 = scmp.ne.s32.totalorder %s103, %s104
    %p118 = scmp.eq.s32.totalorder %s75, 3
    %p119 = por %p117, %p118
    %p121 = scmp.ne.s32.totalorder %s104, %s120
    %p122 = scmp.eq.s32.totalorder %s75, 0
    %p123 = por %p121, %p122
    %s124 = ssub.s32 %s69, %s76
    %p125 = scmp.eq.s32.totalorder %s124, 0
    %s127 = sadd.s32 %s126, 1
    %s128 = scalar_select %p125, %s126, %s127
    %p131 = pneg %p125
    %p132 = scmp.eq.s32.totalorder %s69, 3
    %p133 = por %p131, %p132
    %p134 = scmp.ne.s32.totalorder %s126, %s129
    %p135 = scmp.eq.s32.totalorder %s69, 0
    %p136 = por %p134, %p135
    %p137 = scmp.ne.s32.totalorder %s126, %s129
    %p138 = scmp.eq.s32.totalorder %s74, 3
    %p139 = por %p137, %p138
    %p140 = scmp.ne.s32.totalorder %s129, %s130
    %p141 = scmp.eq.s32.totalorder %s74, 0
    %p142 = por %p140, %p141
    %p143 = scmp.ne.s32.totalorder %s129, %s130
    %p144 = scmp.eq.s32.totalorder %s75, 3
    %p145 = por %p143, %p144
    %p147 = scmp.ne.s32.totalorder %s130, %s146
    %p148 = scmp.eq.s32.totalorder %s75, 0
    %p149 = por %p147, %p148
    %s150 = ssub.s32 %s69, %s76
    %p151 = scmp.eq.s32.totalorder %s150, 0
    %s153 = sadd.s32 %s152, 1
    %s154 = scalar_select %p151, %s152, %s153
    %p157 = pneg %p151
    %p158 = scmp.eq.s32.totalorder %s69, 3
    %p159 = por %p157, %p158
    %p160 = scmp.ne.s32.totalorder %s152, %s155
    %p161 = scmp.eq.s32.totalorder %s69, 0
    %p162 = por %p160, %p161
    %p163 = scmp.ne.s32.totalorder %s152, %s155
    %p164 = scmp.eq.s32.totalorder %s74, 3
    %p165 = por %p163, %p164
    %p166 = scmp.ne.s32.totalorder %s155, %s156
    %p167 = scmp.eq.s32.totalorder %s74, 0
    %p168 = por %p166, %p167
    %p169 = scmp.ne.s32.totalorder %s155, %s156
    %p170 = scmp.eq.s32.totalorder %s75, 3
    %p171 = por %p169, %p170
    %p173 = scmp.ne.s32.totalorder %s156, %s172
    %p174 = scmp.eq.s32.totalorder %s75, 0
    %p175 = por %p173, %p174
    %s176 = ssub.s32 %s69, %s76
    %p177 = scmp.eq.s32.totalorder %s176, 0
    %s179 = sadd.s32 %s178, 1
    %s180 = scalar_select %p177, %s178, %s179
    %p183 = pneg %p177
    %p184 = scmp.eq.s32.totalorder %s69, 3
    %p185 = por %p183, %p184
    %p186 = scmp.ne.s32.totalorder %s178, %s181
    %p187 = scmp.eq.s32.totalorder %s69, 0
    %p188 = por %p186, %p187
    %p189 = scmp.ne.s32.totalorder %s178, %s181
    %p190 = scmp.eq.s32.totalorder %s74, 3
    %p191 = por %p189, %p190
    %p192 = scmp.ne.s32.totalorder %s181, %s182
    %p193 = scmp.eq.s32.totalorder %s74, 0
    %p194 = por %p192, %p193
    %p195 = scmp.ne.s32.totalorder %s181, %s182
    %p196 = scmp.eq.s32.totalorder %s75, 3
    %p197 = por %p195, %p196
    %p199 = scmp.ne.s32.totalorder %s182, %s198
    %p200 = scmp.eq.s32.totalorder %s75, 0
    %p201 = por %p199, %p200
    %s202 = ssub.s32 %s69, %s76
    %p203 = scmp.eq.s32.totalorder %s202, 0
    %s205 = sadd.s32 %s204, 1
    %s206 = scalar_select %p203, %s204, %s205
    %p209 = pneg %p203
    %p210 = scmp.eq.s32.totalorder %s69, 3
    %p211 = por %p209, %p210
    %p212 = scmp.ne.s32.totalorder %s204, %s207
    %p213 = scmp.eq.s32.totalorder %s69, 0
    %p214 = por %p212, %p213
    %p215 = scmp.ne.s32.totalorder %s204, %s207
    %p216 = scmp.eq.s32.totalorder %s74, 3
    %p217 = por %p215, %p216
    %p218 = scmp.ne.s32.totalorder %s207, %s208
    %p219 = scmp.eq.s32.totalorder %s74, 0
    %p220 = por %p218, %p219
    %p221 = scmp.ne.s32.totalorder %s207, %s208
    %p222 = scmp.eq.s32.totalorder %s75, 3
    %p223 = por %p221, %p222
    %p225 = scmp.ne.s32.totalorder %s208, %s224
    %p226 = scmp.eq.s32.totalorder %s75, 0
    %p227 = por %p225, %p226
    %s228 = ssub.s32 %s69, %s76
    %p229 = scmp.eq.s32.totalorder %s228, 0
    %s231 = sadd.s32 %s230, 1
    %s232 = scalar_select %p229, %s230, %s231
    %p235 = pneg %p229
    %p236 = scmp.eq.s32.totalorder %s69, 3
    %p237 = por %p235, %p236
    %p238 = scmp.ne.s32.totalorder %s230, %s233
    %p239 = scmp.eq.s32.totalorder %s69, 0
    %p240 = por %p238, %p239
    %p241 = scmp.ne.s32.totalorder %s230, %s233
    %p242 = scmp.eq.s32.totalorder %s74, 3
    %p243 = por %p241, %p242
    %p244 = scmp.ne.s32.totalorder %s233, %s234
    %p245 = scmp.eq.s32.totalorder %s74, 0
    %p246 = por %p244, %p245
    %p247 = scmp.ne.s32.totalorder %s233, %s234
    %p248 = scmp.eq.s32.totalorder %s75, 3
    %p249 = por %p247, %p248
    %p251 = scmp.ne.s32.totalorder %s234, %s250
    %p252 = scmp.eq.s32.totalorder %s75, 0
    %p253 = por %p251, %p252
    %s254 = ssub.s32 %s69, %s76
    %p255 = scmp.eq.s32.totalorder %s254, 0
    %s257 = sadd.s32 %s256, 1
    %s258 = scalar_select %p255, %s256, %s257
    %p261 = pneg %p255
    %p262 = scmp.eq.s32.totalorder %s69, 3
    %p263 = por %p261, %p262
    %p264 = scmp.ne.s32.totalorder %s256, %s259
    %p265 = scmp.eq.s32.totalorder %s69, 0
    %p266 = por %p264, %p265
    %p267 = scmp.ne.s32.totalorder %s256, %s259
    %p268 = scmp.eq.s32.totalorder %s74, 3
    %p269 = por %p267, %p268
    %p270 = scmp.ne.s32.totalorder %s259, %s260
    %p271 = scmp.eq.s32.totalorder %s74, 0
    %p272 = por %p270, %p271
    %p273 = scmp.ne.s32.totalorder %s259, %s260
    %p274 = scmp.eq.s32.totalorder %s75, 3
    %p275 = por %p273, %p274
    %p277 = scmp.ne.s32.totalorder %s260, %s276
    %p278 = scmp.eq.s32.totalorder %s75, 0
    %p279 = por %p277, %p278
    %s280 = ssub.s32 %s69, %s76
    %p281 = scmp.eq.s32.totalorder %s280, 0
    %s283 = sadd.s32 %s282, 1
    %s284 = scalar_select %p281, %s282, %s283
    %p287 = pneg %p281
    %p288 = scmp.eq.s32.totalorder %s69, 3
    %p289 = por %p287, %p288
    %p290 = scmp.ne.s32.totalorder %s282, %s285
    %p291 = scmp.eq.s32.totalorder %s69, 0
    %p292 = por %p290, %p291
    %p293 = scmp.ne.s32.totalorder %s282, %s285
    %p294 = scmp.eq.s32.totalorder %s74, 3
    %p295 = por %p293, %p294
    %p296 = scmp.ne.s32.totalorder %s285, %s286
    %p297 = scmp.eq.s32.totalorder %s74, 0
    %p298 = por %p296, %p297
    %p299 = scmp.ne.s32.totalorder %s285, %s286
    %p300 = scmp.eq.s32.totalorder %s75, 3
    %p301 = por %p299, %p300
    %p303 = scmp.ne.s32.totalorder %s286, %s302
    %p304 = scmp.eq.s32.totalorder %s75, 0
    %p305 = por %p303, %p304
    %s306 = ssub.s32 %s69, %s76
    %p307 = scmp.eq.s32.totalorder %s306, 0
    %s309 = sadd.s32 %s308, 1
    %s310 = scalar_select %p307, %s308, %s309
    %p313 = pneg %p307
    %p314 = scmp.eq.s32.totalorder %s69, 3
    %p315 = por %p313, %p314
    %p316 = scmp.ne.s32.totalorder %s308, %s311
    %p317 = scmp.eq.s32.totalorder %s69, 0
    %p318 = por %p316, %p317
    %p319 = scmp.ne.s32.totalorder %s308, %s311
    %p320 = scmp.eq.s32.totalorder %s74, 3
    %p321 = por %p319, %p320
    %p322 = scmp.ne.s32.totalorder %s311, %s312
    %p323 = scmp.eq.s32.totalorder %s74, 0
    %p324 = por %p322, %p323
    %p325 = scmp.ne.s32.totalorder %s311, %s312
    %p326 = scmp.eq.s32.totalorder %s75, 3
    %p327 = por %p325, %p326
    %p329 = scmp.ne.s32.totalorder %s312, %s328
    %p330 = scmp.eq.s32.totalorder %s75, 0
    %p331 = por %p329, %p330
    %s332 = ssub.s32 %s69, %s76
    %p333 = scmp.eq.s32.totalorder %s332, 0
    %s335 = sadd.s32 %s334, 1
    %s336 = scalar_select %p333, %s334, %s335
    %p339 = pneg %p333
    %p340 = scmp.eq.s32.totalorder %s69, 3
    %p341 = por %p339, %p340
    %p342 = scmp.ne.s32.totalorder %s334, %s337
    %p343 = scmp.eq.s32.totalorder %s69, 0
    %p344 = por %p342, %p343
    %p345 = scmp.ne.s32.totalorder %s334, %s337
    %p346 = scmp.eq.s32.totalorder %s74, 3
    %p347 = por %p345, %p346
    %p348 = scmp.ne.s32.totalorder %s337, %s338
    %p349 = scmp.eq.s32.totalorder %s74, 0
    %p350 = por %p348, %p349
    %p351 = scmp.ne.s32.totalorder %s337, %s338
    %p352 = scmp.eq.s32.totalorder %s75, 3
    %p353 = por %p351, %p352
    %p355 = scmp.ne.s32.totalorder %s338, %s354
    %p356 = scmp.eq.s32.totalorder %s75, 0
    %p357 = por %p355, %p356
    %s358 = ssub.s32 %s69, %s76
    %p359 = scmp.eq.s32.totalorder %s358, 0
    %s361 = sadd.s32 %s360, 1
    %s362 = scalar_select %p359, %s360, %s361
    %p365 = pneg %p359
    %p366 = scmp.eq.s32.totalorder %s69, 3
    %p367 = por %p365, %p366
    %p368 = scmp.ne.s32.totalorder %s360, %s363
    %p369 = scmp.eq.s32.totalorder %s69, 0
    %p370 = por %p368, %p369
    %p371 = scmp.ne.s32.totalorder %s360, %s363
    %p372 = scmp.eq.s32.totalorder %s74, 3
    %p373 = por %p371, %p372
    %p374 = scmp.ne.s32.totalorder %s363, %s364
    %p375 = scmp.eq.s32.totalorder %s74, 0
    %p376 = por %p374, %p375
    %p377 = scmp.ne.s32.totalorder %s363, %s364
    %p378 = scmp.eq.s32.totalorder %s75, 3
    %p379 = por %p377, %p378
    %p381 = scmp.ne.s32.totalorder %s364, %s380
    %p382 = scmp.eq.s32.totalorder %s75, 0
    %p383 = por %p381, %p382
    %s384 = ssub.s32 %s69, %s76
    %p385 = scmp.eq.s32.totalorder %s384, 0
    %s387 = sadd.s32 %s386, 1
    %s388 = scalar_select %p385, %s386, %s387
    %p391 = pneg %p385
    %p392 = scmp.eq.s32.totalorder %s69, 3
    %p393 = por %p391, %p392
    %p394 = scmp.ne.s32.totalorder %s386, %s389
    %p395 = scmp.eq.s32.totalorder %s69, 0
    %p396 = por %p394, %p395
    %p397 = scmp.ne.s32.totalorder %s386, %s389
    %p398 = scmp.eq.s32.totalorder %s74, 3
    %p399 = por %p397, %p398
    %p400 = scmp.ne.s32.totalorder %s389, %s390
    %p401 = scmp.eq.s32.totalorder %s74, 0
    %p402 = por %p400, %p401
    %p403 = scmp.ne.s32.totalorder %s389, %s390
    %p404 = scmp.eq.s32.totalorder %s75, 3
    %p405 = por %p403, %p404
    %p407 = scmp.ne.s32.totalorder %s390, %s406
    %p408 = scmp.eq.s32.totalorder %s75, 0
    %p409 = por %p407, %p408
    %s411 = sadd.s32 %s410, 1
    %p414 = scmp.eq.s32.totalorder %s69, 3
    %p415 = scmp.ne.s32.totalorder %s410, %s412
    %p416 = scmp.eq.s32.totalorder %s69, 0
    %p417 = por %p415, %p416
    %p418 = scmp.ne.s32.totalorder %s410, %s412
    %p419 = scmp.eq.s32.totalorder %s74, 3
    %p420 = por %p418, %p419
    %p421 = scmp.ne.s32.totalorder %s412, %s413
    %p422 = scmp.eq.s32.totalorder %s74, 0
    %p423 = por %p421, %p422
    %p424 = scmp.ne.s32.totalorder %s412, %s413
    %p425 = scmp.eq.s32.totalorder %s75, 3
    %p426 = por %p424, %p425
    %p428 = scmp.ne.s32.totalorder %s413, %s427
    %p429 = scmp.eq.s32.totalorder %s75, 0
    %p430 = por %p428, %p429
    %s432 = sadd.s32 %s431, 1
    %p435 = scmp.eq.s32.totalorder %s69, 3
    %p436 = scmp.ne.s32.totalorder %s431, %s433
    %p437 = scmp.eq.s32.totalorder %s69, 0
    %p438 = por %p436, %p437
    %p439 = scmp.ne.s32.totalorder %s431, %s433
    %p440 = scmp.eq.s32.totalorder %s74, 3
    %p441 = por %p439, %p440
    %p442 = scmp.ne.s32.totalorder %s433, %s434
    %p443 = scmp.eq.s32.totalorder %s74, 0
    %p444 = por %p442, %p443
    %p445 = scmp.ne.s32.totalorder %s433, %s434
    %p446 = scmp.eq.s32.totalorder %s75, 3
    %p447 = por %p445, %p446
    %p449 = scmp.ne.s32.totalorder %s434, %s448
    %p450 = scmp.eq.s32.totalorder %s75, 0
    %p451 = por %p449, %p450
    %s453 = sadd.s32 %s452, 1
    %p456 = scmp.eq.s32.totalorder %s69, 3
    %p457 = scmp.ne.s32.totalorder %s452, %s454
    %p458 = scmp.eq.s32.totalorder %s69, 0
    %p459 = por %p457, %p458
    %p460 = scmp.ne.s32.totalorder %s452, %s454
    %p461 = scmp.eq.s32.totalorder %s74, 3
    %p462 = por %p460, %p461
    %p463 = scmp.ne.s32.totalorder %s454, %s455
    %p464 = scmp.eq.s32.totalorder %s74, 0
    %p465 = por %p463, %p464
    %p466 = scmp.ne.s32.totalorder %s454, %s455
    %p467 = scmp.eq.s32.totalorder %s75, 3
    %p468 = por %p466, %p467
    %p470 = scmp.ne.s32.totalorder %s455, %s469
    %p471 = scmp.eq.s32.totalorder %s75, 0
    %p472 = por %p470, %p471
    %s474 = sadd.s32 %s473, 1
    %p477 = scmp.eq.s32.totalorder %s69, 3
    %p478 = scmp.ne.s32.totalorder %s473, %s475
    %p479 = scmp.eq.s32.totalorder %s69, 0
    %p480 = por %p478, %p479
    %p481 = scmp.ne.s32.totalorder %s473, %s475
    %p482 = scmp.eq.s32.totalorder %s74, 3
    %p483 = por %p481, %p482
    %p484 = scmp.ne.s32.totalorder %s475, %s476
    %p485 = scmp.eq.s32.totalorder %s74, 0
    %p486 = por %p484, %p485
    %p487 = scmp.ne.s32.totalorder %s475, %s476
    %p488 = scmp.eq.s32.totalorder %s75, 3
    %p489 = por %p487, %p488
    %p491 = scmp.ne.s32.totalorder %s476, %s490
    %p492 = scmp.eq.s32.totalorder %s75, 0
    %p493 = por %p491, %p492
    %s495 = sadd.s32 %s494, 1
    %p498 = scmp.eq.s32.totalorder %s69, 3
    %p499 = scmp.ne.s32.totalorder %s494, %s496
    %p500 = scmp.eq.s32.totalorder %s69, 0
    %p501 = por %p499, %p500
    %p502 = scmp.ne.s32.totalorder %s494, %s496
    %p503 = scmp.eq.s32.totalorder %s74, 3
    %p504 = por %p502, %p503
    %p505 = scmp.ne.s32.totalorder %s496, %s497
    %p506 = scmp.eq.s32.totalorder %s74, 0
    %p507 = por %p505, %p506
    %p508 = scmp.ne.s32.totalorder %s496, %s497
    %p509 = scmp.eq.s32.totalorder %s75, 3
    %p510 = por %p508, %p509
    %p512 = scmp.ne.s32.totalorder %s497, %s511
    %p513 = scmp.eq.s32.totalorder %s75, 0
    %p514 = por %p512, %p513
    %s516 = sadd.s32 %s515, 1
    %p519 = scmp.eq.s32.totalorder %s69, 3
    %p520 = scmp.ne.s32.totalorder %s515, %s517
    %p521 = scmp.eq.s32.totalorder %s69, 0
    %p522 = por %p520, %p521
    %p523 = scmp.ne.s32.totalorder %s515, %s517
    %p524 = scmp.eq.s32.totalorder %s74, 3
    %p525 = por %p523, %p524
    %p526 = scmp.ne.s32.totalorder %s517, %s518
    %p527 = scmp.eq.s32.totalorder %s74, 0
    %p528 = por %p526, %p527
    %p529 = scmp.ne.s32.totalorder %s517, %s518
    %p530 = scmp.eq.s32.totalorder %s75, 3
    %p531 = por %p529, %p530
    %p533 = scmp.ne.s32.totalorder %s518, %s532
    %p534 = scmp.eq.s32.totalorder %s75, 0
    %p535 = por %p533, %p534
    %s537 = sadd.s32 %s536, 1
    %p540 = scmp.eq.s32.totalorder %s69, 3
    %p541 = scmp.ne.s32.totalorder %s536, %s538
    %p542 = scmp.eq.s32.totalorder %s69, 0
    %p543 = por %p541, %p542
    %p544 = scmp.ne.s32.totalorder %s536, %s538
    %p545 = scmp.eq.s32.totalorder %s74, 3
    %p546 = por %p544, %p545
    %p547 = scmp.ne.s32.totalorder %s538, %s539
    %p548 = scmp.eq.s32.totalorder %s74, 0
    %p549 = por %p547, %p548
    %p550 = scmp.ne.s32.totalorder %s538, %s539
    %p551 = scmp.eq.s32.totalorder %s75, 3
    %p552 = por %p550, %p551
    %p554 = scmp.ne.s32.totalorder %s539, %s553
    %p555 = scmp.eq.s32.totalorder %s75, 0
    %p556 = por %p554, %p555
    %s558 = sadd.s32 %s557, 1
    %p561 = scmp.eq.s32.totalorder %s69, 3
    %p562 = scmp.ne.s32.totalorder %s557, %s559
    %p563 = scmp.eq.s32.totalorder %s69, 0
    %p564 = por %p562, %p563
    %p565 = scmp.ne.s32.totalorder %s557, %s559
    %p566 = scmp.eq.s32.totalorder %s74, 3
    %p567 = por %p565, %p566
    %p568 = scmp.ne.s32.totalorder %s559, %s560
    %p569 = scmp.eq.s32.totalorder %s74, 0
    %p570 = por %p568, %p569
    %p571 = scmp.ne.s32.totalorder %s559, %s560
    %p572 = scmp.eq.s32.totalorder %s75, 3
    %p573 = por %p571, %p572
    %p575 = scmp.ne.s32.totalorder %s560, %s574
    %p576 = scmp.eq.s32.totalorder %s75, 0
    %p577 = por %p575, %p576
    %s579 = sadd.s32 %s578, 1
    %p582 = scmp.eq.s32.totalorder %s69, 3
    %p583 = scmp.ne.s32.totalorder %s578, %s580
    %p584 = scmp.eq.s32.totalorder %s69, 0
    %p585 = por %p583, %p584
    %p586 = scmp.ne.s32.totalorder %s578, %s580
    %p587 = scmp.eq.s32.totalorder %s74, 3
    %p588 = por %p586, %p587
    %p589 = scmp.ne.s32.totalorder %s580, %s581
    %p590 = scmp.eq.s32.totalorder %s74, 0
    %p591 = por %p589, %p590
    %p592 = scmp.ne.s32.totalorder %s580, %s581
    %p593 = scmp.eq.s32.totalorder %s75, 3
    %p594 = por %p592, %p593
    %p596 = scmp.ne.s32.totalorder %s581, %s595
    %p597 = scmp.eq.s32.totalorder %s75, 0
    %p598 = por %p596, %p597
    %s600 = sadd.s32 %s599, 1
    %p603 = scmp.eq.s32.totalorder %s69, 3
    %p604 = scmp.ne.s32.totalorder %s599, %s601
    %p605 = scmp.eq.s32.totalorder %s69, 0
    %p606 = por %p604, %p605
    %p607 = scmp.ne.s32.totalorder %s599, %s601
    %p608 = scmp.eq.s32.totalorder %s74, 3
    %p609 = por %p607, %p608
    %p610 = scmp.ne.s32.totalorder %s601, %s602
    %p611 = scmp.eq.s32.totalorder %s74, 0
    %p612 = por %p610, %p611
    %p613 = scmp.ne.s32.totalorder %s601, %s602
    %p614 = scmp.eq.s32.totalorder %s75, 3
    %p615 = por %p613, %p614
    %p617 = scmp.ne.s32.totalorder %s602, %s616
    %p618 = scmp.eq.s32.totalorder %s75, 0
    %p619 = por %p617, %p618
    %s621 = sadd.s32 %s620, 1
    %p624 = scmp.eq.s32.totalorder %s69, 3
    %p625 = scmp.ne.s32.totalorder %s620, %s622
    %p626 = scmp.eq.s32.totalorder %s69, 0
    %p627 = por %p625, %p626
    %p628 = scmp.ne.s32.totalorder %s620, %s622
    %p629 = scmp.eq.s32.totalorder %s74, 3
    %p630 = por %p628, %p629
    %p631 = scmp.ne.s32.totalorder %s622, %s623
    %p632 = scmp.eq.s32.totalorder %s74, 0
    %p633 = por %p631, %p632
    %p634 = scmp.ne.s32.totalorder %s622, %s623
    %p635 = scmp.eq.s32.totalorder %s75, 3
    %p636 = por %p634, %p635
    %p638 = scmp.ne.s32.totalorder %s623, %s637
    %p639 = scmp.eq.s32.totalorder %s75, 0
    %p640 = por %p638, %p639
    %s642 = sadd.s32 %s641, 1
    %p645 = scmp.eq.s32.totalorder %s69, 3
    %p646 = scmp.ne.s32.totalorder %s641, %s643
    %p647 = scmp.eq.s32.totalorder %s69, 0
    %p648 = por %p646, %p647
    %p649 = scmp.ne.s32.totalorder %s641, %s643
    %p650 = scmp.eq.s32.totalorder %s74, 3
    %p651 = por %p649, %p650
    %p652 = scmp.ne.s32.totalorder %s643, %s644
    %p653 = scmp.eq.s32.totalorder %s74, 0
    %p654 = por %p652, %p653
    %p655 = scmp.ne.s32.totalorder %s643, %s644
    %p656 = scmp.eq.s32.totalorder %s75, 3
    %p657 = por %p655, %p656
    %p659 = scmp.ne.s32.totalorder %s644, %s658
    %p660 = scmp.eq.s32.totalorder %s75, 0
    %p661 = por %p659, %p660
    %s663 = sadd.s32 %s662, 1
    %p666 = scmp.eq.s32.totalorder %s69, 3
    %p667 = scmp.ne.s32.totalorder %s662, %s664
    %p668 = scmp.eq.s32.totalorder %s69, 0
    %p669 = por %p667, %p668
    %p670 = scmp.ne.s32.totalorder %s662, %s664
    %p671 = scmp.eq.s32.totalorder %s74, 3
    %p672 = por %p670, %p671
    %p673 = scmp.ne.s32.totalorder %s664, %s665
    %p674 = scmp.eq.s32.totalorder %s74, 0
    %p675 = por %p673, %p674
    %p676 = scmp.ne.s32.totalorder %s664, %s665
    %p677 = scmp.eq.s32.totalorder %s75, 3
    %p678 = por %p676, %p677
    %p680 = scmp.ne.s32.totalorder %s665, %s679
    %p681 = scmp.eq.s32.totalorder %s75, 0
    %p682 = por %p680, %p681
    %s684 = sadd.s32 %s683, 1
    %p687 = scmp.eq.s32.totalorder %s69, 3
    %p688 = scmp.ne.s32.totalorder %s683, %s685
    %p689 = scmp.eq.s32.totalorder %s69, 0
    %p690 = por %p688, %p689
    %p691 = scmp.ne.s32.totalorder %s683, %s685
    %p692 = scmp.eq.s32.totalorder %s74, 3
    %p693 = por %p691, %p692
    %p694 = scmp.ne.s32.totalorder %s685, %s686
    %p695 = scmp.eq.s32.totalorder %s74, 0
    %p696 = por %p694, %p695
    %p697 = scmp.ne.s32.totalorder %s685, %s686
    %p698 = scmp.eq.s32.totalorder %s75, 3
    %p699 = por %p697, %p698
    %p701 = scmp.ne.s32.totalorder %s686, %s700
    %p702 = scmp.eq.s32.totalorder %s75, 0
    %p703 = por %p701, %p702
    %s704 = ssub.s32 %s69, %s76
    %p705 = scmp.eq.s32.totalorder %s704, 0
    %s707 = sadd.s32 %s706, 1
    %s708 = scalar_select %p705, %s706, %s707
    %p711 = pneg %p705
    %p712 = scmp.eq.s32.totalorder %s69, 3
    %p713 = por %p711, %p712
    %p714 = scmp.ne.s32.totalorder %s706, %s709
    %p715 = scmp.eq.s32.totalorder %s69, 0
    %p716 = por %p714, %p715
    %p717 = scmp.ne.s32.totalorder %s706, %s709
    %p718 = scmp.eq.s32.totalorder %s74, 3
    %p719 = por %p717, %p718
    %p720 = scmp.ne.s32.totalorder %s709, %s710
    %p721 = scmp.eq.s32.totalorder %s74, 0
    %p722 = por %p720, %p721
    %p723 = scmp.ne.s32.totalorder %s709, %s710
    %p724 = scmp.eq.s32.totalorder %s75, 3
    %p725 = por %p723, %p724
    %p727 = scmp.ne.s32.totalorder %s710, %s726
    %p728 = scmp.eq.s32.totalorder %s75, 0
    %p729 = por %p727, %p728
    %s730 = ssub.s32 %s69, %s76
    %p731 = scmp.eq.s32.totalorder %s730, 0
    %s733 = sadd.s32 %s732, 1
    %s734 = scalar_select %p731, %s732, %s733
    %p737 = pneg %p731
    %p738 = scmp.eq.s32.totalorder %s69, 3
    %p739 = por %p737, %p738
    %p740 = scmp.ne.s32.totalorder %s732, %s735
    %p741 = scmp.eq.s32.totalorder %s69, 0
    %p742 = por %p740, %p741
    %p743 = scmp.ne.s32.totalorder %s732, %s735
    %p744 = scmp.eq.s32.totalorder %s74, 3
    %p745 = por %p743, %p744
    %p746 = scmp.ne.s32.totalorder %s735, %s736
    %p747 = scmp.eq.s32.totalorder %s74, 0
    %p748 = por %p746, %p747
    %p749 = scmp.ne.s32.totalorder %s735, %s736
    %p750 = scmp.eq.s32.totalorder %s75, 3
    %p751 = por %p749, %p750
    %p753 = scmp.ne.s32.totalorder %s736, %s752
    %p754 = scmp.eq.s32.totalorder %s75, 0
    %p755 = por %p753, %p754
    %s756 = ssub.s32 %s69, %s76
    %p757 = scmp.eq.s32.totalorder %s756, 0
    %s759 = sadd.s32 %s758, 1
    %s760 = scalar_select %p757, %s758, %s759
    %p763 = pneg %p757
    %p764 = scmp.eq.s32.totalorder %s69, 3
    %p765 = por %p763, %p764
    %p766 = scmp.ne.s32.totalorder %s758, %s761
    %p767 = scmp.eq.s32.totalorder %s69, 0
    %p768 = por %p766, %p767
    %p769 = scmp.ne.s32.totalorder %s758, %s761
    %p770 = scmp.eq.s32.totalorder %s74, 3
    %p771 = por %p769, %p770
    %p772 = scmp.ne.s32.totalorder %s761, %s762
    %p773 = scmp.eq.s32.totalorder %s74, 0
    %p774 = por %p772, %p773
    %p775 = scmp.ne.s32.totalorder %s761, %s762
    %p776 = scmp.eq.s32.totalorder %s75, 3
    %p777 = por %p775, %p776
    %p779 = scmp.ne.s32.totalorder %s762, %s778
    %p780 = scmp.eq.s32.totalorder %s75, 0
    %p781 = por %p779, %p780
    %s782 = ssub.s32 %s69, %s76
    %p783 = scmp.eq.s32.totalorder %s782, 0
    %s785 = sadd.s32 %s784, 1
    %s786 = scalar_select %p783, %s784, %s785
    %p789 = pneg %p783
    %p790 = scmp.eq.s32.totalorder %s69, 3
    %p791 = por %p789, %p790
    %p792 = scmp.ne.s32.totalorder %s784, %s787
    %p793 = scmp.eq.s32.totalorder %s69, 0
    %p794 = por %p792, %p793
    %p795 = scmp.ne.s32.totalorder %s784, %s787
    %p796 = scmp.eq.s32.totalorder %s74, 3
    %p797 = por %p795, %p796
    %p798 = scmp.ne.s32.totalorder %s787, %s788
    %p799 = scmp.eq.s32.totalorder %s74, 0
    %p800 = por %p798, %p799
    %p801 = scmp.ne.s32.totalorder %s787, %s788
    %p802 = scmp.eq.s32.totalorder %s75, 3
    %p803 = por %p801, %p802
    %p805 = scmp.ne.s32.totalorder %s788, %s804
    %p806 = scmp.eq.s32.totalorder %s75, 0
    %p807 = por %p805, %p806
    %s808 = ssub.s32 %s69, %s76
    %p809 = scmp.eq.s32.totalorder %s808, 0
    %s811 = sadd.s32 %s810, 1
    %s812 = scalar_select %p809, %s810, %s811
    %p815 = pneg %p809
    %p816 = scmp.eq.s32.totalorder %s69, 3
    %p817 = por %p815, %p816
    %p818 = scmp.ne.s32.totalorder %s810, %s813
    %p819 = scmp.eq.s32.totalorder %s69, 0
    %p820 = por %p818, %p819
    %p821 = scmp.ne.s32.totalorder %s810, %s813
    %p822 = scmp.eq.s32.totalorder %s74, 3
    %p823 = por %p821, %p822
    %p824 = scmp.ne.s32.totalorder %s813, %s814
    %p825 = scmp.eq.s32.totalorder %s74, 0
    %p826 = por %p824, %p825
    %p827 = scmp.ne.s32.totalorder %s813, %s814
    %p828 = scmp.eq.s32.totalorder %s75, 3
    %p829 = por %p827, %p828
    %p831 = scmp.ne.s32.totalorder %s814, %s830
    %p832 = scmp.eq.s32.totalorder %s75, 0
    %p833 = por %p831, %p832
    %p834 = scmp.le.s32.totalorder 1, %s69
    %p835 = scmp.lt.s32.totalorder %s69, 5
    %p836 = pnand %p834, %p835
    %p837 = pneg %p836
    // Predicated region
    $region9: #{grad_splitter_forward.1} parent=5 // pred_check
      _
    $region10: #{grad_splitter_forward.1} parent=5 // pred_check_branch
      %839 = sbr.rel (%p836) target = $region12
    $region11: #{grad_splitter_forward.1} parent=5 // pred_region
      %s840 = ssub.s32 %s69, 1
      // Predicated region
      $region13: #{grad_splitter_forward.1} parent=11 // pred_check
        %p841 = pneg %p90
      $region14: #{grad_splitter_forward.1} parent=11 // pred_check_branch
        %843 = sbr.rel (%p841) target = $region16
      $region15: #{grad_splitter_forward.1} parent=11 // pred_region
        _
      $region16: #{grad_splitter_forward.1} parent=11 // pred_fallthru
        _
      // Predicated region
      $region17: #{grad_splitter_forward.1} parent=11 // pred_check
        %p844 = pneg %p423
      $region18: #{grad_splitter_forward.1} parent=11 // pred_check_branch
        %846 = sbr.rel (%p844) target = $region20
      $region19: #{grad_splitter_forward.1} parent=11 // pred_region
        _
      $region20: #{grad_splitter_forward.1} parent=11 // pred_fallthru
        _
      // Predicated region
      $region21: #{grad_splitter_forward.1} parent=11 // pred_check
        %p847 = pneg %p444
      $region22: #{grad_splitter_forward.1} parent=11 // pred_check_branch
        %849 = sbr.rel (%p847) target = $region24
      $region23: #{grad_splitter_forward.1} parent=11 // pred_region
        _
      $region24: #{grad_splitter_forward.1} parent=11 // pred_fallthru
        _
      // Predicated region
      $region25: #{grad_splitter_forward.1} parent=11 // pred_check
        %p850 = pneg %p465
      $region26: #{grad_splitter_forward.1} parent=11 // pred_check_branch
        %852 = sbr.rel (%p850) target = $region28
      $region27: #{grad_splitter_forward.1} parent=11 // pred_region
        _
      $region28: #{grad_splitter_forward.1} parent=11 // pred_fallthru
        _
      // Predicated region
      $region29: #{grad_splitter_forward.1} parent=11 // pred_check
        %p853 = pneg %p486
      $region30: #{grad_splitter_forward.1} parent=11 // pred_check_branch
        %855 = sbr.rel (%p853) target = $region32
      $region31: #{grad_splitter_forward.1} parent=11 // pred_region
        _
      $region32: #{grad_splitter_forward.1} parent=11 // pred_fallthru
        _
      // Predicated region
      $region33: #{grad_splitter_forward.1} parent=11 // pred_check
        %p856 = pneg %p507
      $region34: #{grad_splitter_forward.1} parent=11 // pred_check_branch
        %858 = sbr.rel (%p856) target = $region36
      $region35: #{grad_splitter_forward.1} parent=11 // pred_region
        _
      $region36: #{grad_splitter_forward.1} parent=11 // pred_fallthru
        _
      // Predicated region
      $region37: #{grad_splitter_forward.1} parent=11 // pred_check
        %p859 = pneg %p528
      $region38: #{grad_splitter_forward.1} parent=11 // pred_check_branch
        %861 = sbr.rel (%p859) target = $region40
      $region39: #{grad_splitter_forward.1} parent=11 // pred_region
        _
      $region40: #{grad_splitter_forward.1} parent=11 // pred_fallthru
        _
      // Predicated region
      $region41: #{grad_splitter_forward.1} parent=11 // pred_check
        %p862 = pneg %p549
      $region42: #{grad_splitter_forward.1} parent=11 // pred_check_branch
        %864 = sbr.rel (%p862) target = $region44
      $region43: #{grad_splitter_forward.1} parent=11 // pred_region
        _
      $region44: #{grad_splitter_forward.1} parent=11 // pred_fallthru
        _
      // Predicated region
      $region45: #{grad_splitter_forward.1} parent=11 // pred_check
        %p865 = pneg %p570
      $region46: #{grad_splitter_forward.1} parent=11 // pred_check_branch
        %867 = sbr.rel (%p865) target = $region48
      $region47: #{grad_splitter_forward.1} parent=11 // pred_region
        _
      $region48: #{grad_splitter_forward.1} parent=11 // pred_fallthru
        _
      // Predicated region
      $region49: #{grad_splitter_forward.1} parent=11 // pred_check
        %p868 = pneg %p591
      $region50: #{grad_splitter_forward.1} parent=11 // pred_check_branch
        %870 = sbr.rel (%p868) target = $region52
      $region51: #{grad_splitter_forward.1} parent=11 // pred_region
        _
      $region52: #{grad_splitter_forward.1} parent=11 // pred_fallthru
        _
      // Predicated region
      $region53: #{grad_splitter_forward.1} parent=11 // pred_check
        %p871 = pneg %p612
      $region54: #{grad_splitter_forward.1} parent=11 // pred_check_branch
        %873 = sbr.rel (%p871) target = $region56
      $region55: #{grad_splitter_forward.1} parent=11 // pred_region
        _
      $region56: #{grad_splitter_forward.1} parent=11 // pred_fallthru
        _
      // Predicated region
      $region57: #{grad_splitter_forward.1} parent=11 // pred_check
        %p874 = pneg %p633
      $region58: #{grad_splitter_forward.1} parent=11 // pred_check_branch
        %876 = sbr.rel (%p874) target = $region60
      $region59: #{grad_splitter_forward.1} parent=11 // pred_region
        _
      $region60: #{grad_splitter_forward.1} parent=11 // pred_fallthru
        _
      // Predicated region
      $region61: #{grad_splitter_forward.1} parent=11 // pred_check
        %p877 = pneg %p654
      $region62: #{grad_splitter_forward.1} parent=11 // pred_check_branch
        %879 = sbr.rel (%p877) target = $region64
      $region63: #{grad_splitter_forward.1} parent=11 // pred_region
        _
      $region64: #{grad_splitter_forward.1} parent=11 // pred_fallthru
        _
      // Predicated region
      $region65: #{grad_splitter_forward.1} parent=11 // pred_check
        %p880 = pneg %p675
      $region66: #{grad_splitter_forward.1} parent=11 // pred_check_branch
        %882 = sbr.rel (%p880) target = $region68
      $region67: #{grad_splitter_forward.1} parent=11 // pred_region
        _
      $region68: #{grad_splitter_forward.1} parent=11 // pred_fallthru
        _
      // Predicated region
      $region69: #{grad_splitter_forward.1} parent=11 // pred_check
        %p883 = pneg %p696
      $region70: #{grad_splitter_forward.1} parent=11 // pred_check_branch
        %885 = sbr.rel (%p883) target = $region72
      $region71: #{grad_splitter_forward.1} parent=11 // pred_region
        _
      $region72: #{grad_splitter_forward.1} parent=11 // pred_fallthru
        _
    $region12: #{grad_splitter_forward.1} parent=5 // pred_fallthru
      _
    %p886 = scmp.lt.s32.totalorder %s69, 4
    // Predicated region
    $region73: #{grad_splitter_forward.1} parent=5 // pred_check
      %p887 = pneg %p886
    $region74: #{grad_splitter_forward.1} parent=5 // pred_check_branch
      %889 = sbr.rel (%p887) target = $region76
    $region75: #{grad_splitter_forward.1} parent=5 // pred_region
      // Predicated region
      $region77: #{grad_splitter_forward.1} parent=75 // pred_check
        %p890 = pneg %p110
      $region78: #{grad_splitter_forward.1} parent=75 // pred_check_branch
        %892 = sbr.rel (%p890) target = $region80
      $region79: #{grad_splitter_forward.1} parent=75 // pred_region
        %p893 = scmp.lt.s32.totalorder %s69, 3
        %s894 = scalar_select %p893, %s69, 3
        %s895 = smul.addr %s894, 42
        %s896 = smul.addr %s895, 8
        %s897 = scalar_lea.vmem %s3, %s896
      $region80: #{grad_splitter_forward.1} parent=75 // pred_fallthru
        _
      // Predicated region
      $region81: #{grad_splitter_forward.1} parent=75 // pred_check
        %p898 = pneg %p136
      $region82: #{grad_splitter_forward.1} parent=75 // pred_check_branch
        %900 = sbr.rel (%p898) target = $region84
      $region83: #{grad_splitter_forward.1} parent=75 // pred_region
        %p901 = scmp.lt.s32.totalorder %s69, 3
        %s902 = scalar_select %p901, %s69, 3
        %s903 = smul.addr %s902, 2
        %s904 = scalar_lea.vmem %s5, %s903
      $region84: #{grad_splitter_forward.1} parent=75 // pred_fallthru
        _
      // Predicated region
      $region85: #{grad_splitter_forward.1} parent=75 // pred_check
        %p905 = pneg %p162
      $region86: #{grad_splitter_forward.1} parent=75 // pred_check_branch
        %907 = sbr.rel (%p905) target = $region88
      $region87: #{grad_splitter_forward.1} parent=75 // pred_region
        %p908 = scmp.lt.s32.totalorder %s69, 3
        %s909 = scalar_select %p908, %s69, 3
        %s910 = smul.addr %s909, 108
        %s911 = smul.addr %s910, 8
        %s912 = scalar_lea.vmem %s7, %s911
      $region88: #{grad_splitter_forward.1} parent=75 // pred_fallthru
        _
      // Predicated region
      $region89: #{grad_splitter_forward.1} parent=75 // pred_check
        %p913 = pneg %p188
      $region90: #{grad_splitter_forward.1} parent=75 // pred_check_branch
        %915 = sbr.rel (%p913) target = $region92
      $region91: #{grad_splitter_forward.1} parent=75 // pred_region
        %p916 = scmp.lt.s32.totalorder %s69, 3
        %s917 = scalar_select %p916, %s69, 3
        %s918 = smul.addr %s917, 2
        %s919 = scalar_lea.vmem %s9, %s918
      $region92: #{grad_splitter_forward.1} parent=75 // pred_fallthru
        _
      // Predicated region
      $region93: #{grad_splitter_forward.1} parent=75 // pred_check
        %p920 = pneg %p214
      $region94: #{grad_splitter_forward.1} parent=75 // pred_check_branch
        %922 = sbr.rel (%p920) target = $region96
      $region95: #{grad_splitter_forward.1} parent=75 // pred_region
        %p923 = scmp.lt.s32.totalorder %s69, 3
        %s924 = scalar_select %p923, %s69, 3
        %s925 = smul.addr %s924, 54
        %s926 = smul.addr %s925, 8
        %s927 = scalar_lea.vmem %s11, %s926
      $region96: #{grad_splitter_forward.1} parent=75 // pred_fallthru
        _
      // Predicated region
      $region97: #{grad_splitter_forward.1} parent=75 // pred_check
        %p928 = pneg %p240
      $region98: #{grad_splitter_forward.1} parent=75 // pred_check_branch
        %930 = sbr.rel (%p928) target = $region100
      $region99: #{grad_splitter_forward.1} parent=75 // pred_region
        %p931 = scmp.lt.s32.totalorder %s69, 3
        %s932 = scalar_select %p931, %s69, 3
        %s933 = scalar_lea.vmem %s13, %s932
      $region100: #{grad_splitter_forward.1} parent=75 // pred_fallthru
        _
      // Predicated region
      $region101: #{grad_splitter_forward.1} parent=75 // pred_check
        %p934 = pneg %p266
      $region102: #{grad_splitter_forward.1} parent=75 // pred_check_branch
        %936 = sbr.rel (%p934) target = $region104
      $region103: #{grad_splitter_forward.1} parent=75 // pred_region
        %p937 = scmp.lt.s32.totalorder %s69, 3
        %s938 = scalar_select %p937, %s69, 3
        %s939 = smul.addr %s938, 30
        %s940 = smul.addr %s939, 8
        %s941 = scalar_lea.vmem %s15, %s940
      $region104: #{grad_splitter_forward.1} parent=75 // pred_fallthru
        _
      // Predicated region
      $region105: #{grad_splitter_forward.1} parent=75 // pred_check
        %p942 = pneg %p292
      $region106: #{grad_splitter_forward.1} parent=75 // pred_check_branch
        %944 = sbr.rel (%p942) target = $region108
      $region107: #{grad_splitter_forward.1} parent=75 // pred_region
        %p945 = scmp.lt.s32.totalorder %s69, 3
        %s946 = scalar_select %p945, %s69, 3
        %s947 = scalar_lea.vmem %s17, %s946
      $region108: #{grad_splitter_forward.1} parent=75 // pred_fallthru
        _
      // Predicated region
      $region109: #{grad_splitter_forward.1} parent=75 // pred_check
        %p948 = pneg %p318
      $region110: #{grad_splitter_forward.1} parent=75 // pred_check_branch
        %950 = sbr.rel (%p948) target = $region112
      $region111: #{grad_splitter_forward.1} parent=75 // pred_region
        %p951 = scmp.lt.s32.totalorder %s69, 3
        %s952 = scalar_select %p951, %s69, 3
        %s953 = smul.addr %s952, 27
        %s954 = smul.addr %s953, 8
        %s955 = scalar_lea.vmem %s19, %s954
      $region112: #{grad_splitter_forward.1} parent=75 // pred_fallthru
        _
      // Predicated region
      $region113: #{grad_splitter_forward.1} parent=75 // pred_check
        %p956 = pneg %p344
      $region114: #{grad_splitter_forward.1} parent=75 // pred_check_branch
        %958 = sbr.rel (%p956) target = $region116
      $region115: #{grad_splitter_forward.1} parent=75 // pred_region
        %p959 = scmp.lt.s32.totalorder %s69, 3
        %s960 = scalar_select %p959, %s69, 3
        %s961 = scalar_lea.vmem %s21, %s960
      $region116: #{grad_splitter_forward.1} parent=75 // pred_fallthru
        _
      // Predicated region
      $region117: #{grad_splitter_forward.1} parent=75 // pred_check
        %p962 = pneg %p370
      $region118: #{grad_splitter_forward.1} parent=75 // pred_check_branch
        %964 = sbr.rel (%p962) target = $region120
      $region119: #{grad_splitter_forward.1} parent=75 // pred_region
        %p965 = scmp.lt.s32.totalorder %s69, 3
        %s966 = scalar_select %p965, %s69, 3
        %s967 = smul.addr %s966, 18
        %s968 = smul.addr %s967, 8
        %s969 = scalar_lea.vmem %s23, %s968
      $region120: #{grad_splitter_forward.1} parent=75 // pred_fallthru
        _
      // Predicated region
      $region121: #{grad_splitter_forward.1} parent=75 // pred_check
        %p970 = pneg %p396
      $region122: #{grad_splitter_forward.1} parent=75 // pred_check_branch
        %972 = sbr.rel (%p970) target = $region124
      $region123: #{grad_splitter_forward.1} parent=75 // pred_region
        %p973 = scmp.lt.s32.totalorder %s69, 3
        %s974 = scalar_select %p973, %s69, 3
        %s975 = scalar_lea.vmem %s25, %s974
      $region124: #{grad_splitter_forward.1} parent=75 // pred_fallthru
        _
      // Predicated region
      $region125: #{grad_splitter_forward.1} parent=75 // pred_check
        %p976 = pneg %p716
      $region126: #{grad_splitter_forward.1} parent=75 // pred_check_branch
        %978 = sbr.rel (%p976) target = $region128
      $region127: #{grad_splitter_forward.1} parent=75 // pred_region
        %p979 = scmp.lt.s32.totalorder %s69, 3
        %s980 = scalar_select %p979, %s69, 3
        %s981 = smul.addr %s980, 4
        %s982 = scalar_lea.vmem %s55, %s981
      $region128: #{grad_splitter_forward.1} parent=75 // pred_fallthru
        _
      // Predicated region
      $region129: #{grad_splitter_forward.1} parent=75 // pred_check
        %p983 = pneg %p742
      $region130: #{grad_splitter_forward.1} parent=75 // pred_check_branch
        %985 = sbr.rel (%p983) target = $region132
      $region131: #{grad_splitter_forward.1} parent=75 // pred_region
        %p986 = scmp.lt.s32.totalorder %s69, 3
        %s987 = scalar_select %p986, %s69, 3
        %s988 = scalar_lea.vmem %s57, %s987
      $region132: #{grad_splitter_forward.1} parent=75 // pred_fallthru
        _
      // Predicated region
      $region133: #{grad_splitter_forward.1} parent=75 // pred_check
        %p989 = pneg %p768
      $region134: #{grad_splitter_forward.1} parent=75 // pred_check_branch
        %991 = sbr.rel (%p989) target = $region136
      $region135: #{grad_splitter_forward.1} parent=75 // pred_region
        %p992 = scmp.lt.s32.totalorder %s69, 3
        %s993 = scalar_select %p992, %s69, 3
        %s994 = smul.addr %s993, 2
        %s995 = smul.addr %s994, 8
        %s996 = scalar_lea.vmem %s59, %s995
      $region136: #{grad_splitter_forward.1} parent=75 // pred_fallthru
        _
      // Predicated region
      $region137: #{grad_splitter_forward.1} parent=75 // pred_check
        %p997 = pneg %p794
      $region138: #{grad_splitter_forward.1} parent=75 // pred_check_branch
        %999 = sbr.rel (%p997) target = $region140
      $region139: #{grad_splitter_forward.1} parent=75 // pred_region
        %p1000 = scmp.lt.s32.totalorder %s69, 3
        %s1001 = scalar_select %p1000, %s69, 3
        %s1002 = scalar_lea.vmem %s61, %s1001
      $region140: #{grad_splitter_forward.1} parent=75 // pred_fallthru
        _
    $region76: #{grad_splitter_forward.1} parent=5 // pred_fallthru
      _
    %p1003 = scmp.le.s32.totalorder 1, %s69
    %p1004 = scmp.lt.s32.totalorder %s69, 5
    %p1005 = pnand %p1003, %p1004
    %p1006 = pneg %p1005
    // Predicated region
    $region141: #{grad_splitter_forward.1} parent=5 // pred_check
      _
    $region142: #{grad_splitter_forward.1} parent=5 // pred_check_branch
      %1008 = sbr.rel (%p1005) target = $region144
    $region143: #{grad_splitter_forward.1} parent=5 // pred_region
      %s1009 = ssub.s32 %s69, 1
      %p1010 = pneg %p90
      %p1011 = pneg %p87
      %p1012 = scmp.lt.s32.totalorder %s74, 3
      %s1013 = scalar_select %p1012, %s74, 3
      %s1014 = smul.addr %s1013, 42
      %s1015 = smul.addr %s1014, 8
      %s1016 = scalar_lea.vmem %s3, %s1015
      %p1017 = pneg %p116
      %p1018 = pneg %p113
      %p1019 = scmp.lt.s32.totalorder %s74, 3
      %s1020 = scalar_select %p1019, %s74, 3
      %s1021 = smul.addr %s1020, 2
      %s1022 = scalar_lea.vmem %s5, %s1021
      %p1023 = pneg %p142
      %p1024 = pneg %p139
      %p1025 = scmp.lt.s32.totalorder %s74, 3
      %s1026 = scalar_select %p1025, %s74, 3
      %s1027 = smul.addr %s1026, 108
      %s1028 = smul.addr %s1027, 8
      %s1029 = scalar_lea.vmem %s7, %s1028
      %p1030 = pneg %p168
      %p1031 = pneg %p165
      %p1032 = scmp.lt.s32.totalorder %s74, 3
      %s1033 = scalar_select %p1032, %s74, 3
      %s1034 = smul.addr %s1033, 2
      %s1035 = scalar_lea.vmem %s9, %s1034
      %p1036 = pneg %p194
      %p1037 = pneg %p191
      %p1038 = scmp.lt.s32.totalorder %s74, 3
      %s1039 = scalar_select %p1038, %s74, 3
      %s1040 = smul.addr %s1039, 54
      %s1041 = smul.addr %s1040, 8
      %s1042 = scalar_lea.vmem %s11, %s1041
      %p1043 = pneg %p220
      %p1044 = pneg %p217
      %p1045 = scmp.lt.s32.totalorder %s74, 3
      %s1046 = scalar_select %p1045, %s74, 3
      %s1047 = scalar_lea.vmem %s13, %s1046
      %p1048 = pneg %p246
      %p1049 = pneg %p243
      %p1050 = scmp.lt.s32.totalorder %s74, 3
      %s1051 = scalar_select %p1050, %s74, 3
      %s1052 = smul.addr %s1051, 30
      %s1053 = smul.addr %s1052, 8
      %s1054 = scalar_lea.vmem %s15, %s1053
      %p1055 = pneg %p272
      %p1056 = pneg %p269
      %p1057 = scmp.lt.s32.totalorder %s74, 3
      %s1058 = scalar_select %p1057, %s74, 3
      %s1059 = scalar_lea.vmem %s17, %s1058
      %p1060 = pneg %p298
      %p1061 = pneg %p295
      %p1062 = scmp.lt.s32.totalorder %s74, 3
      %s1063 = scalar_select %p1062, %s74, 3
      %s1064 = smul.addr %s1063, 27
      %s1065 = smul.addr %s1064, 8
      %s1066 = scalar_lea.vmem %s19, %s1065
      %p1067 = pneg %p324
      %p1068 = pneg %p321
      %p1069 = scmp.lt.s32.totalorder %s74, 3
      %s1070 = scalar_select %p1069, %s74, 3
      %s1071 = scalar_lea.vmem %s21, %s1070
      %p1072 = pneg %p350
      %p1073 = pneg %p347
      %p1074 = scmp.lt.s32.totalorder %s74, 3
      %s1075 = scalar_select %p1074, %s74, 3
      %s1076 = smul.addr %s1075, 18
      %s1077 = smul.addr %s1076, 8
      %s1078 = scalar_lea.vmem %s23, %s1077
      %p1079 = pneg %p376
      %p1080 = pneg %p373
      %p1081 = scmp.lt.s32.totalorder %s74, 3
      %s1082 = scalar_select %p1081, %s74, 3
      %s1083 = scalar_lea.vmem %s25, %s1082
      %p1084 = pneg %p402
      %p1085 = pneg %p399
      %p1086 = pneg %p423
      %p1087 = pneg %p420
      %p1088 = pneg %p444
      %p1089 = pneg %p441
      %p1090 = pneg %p465
      %p1091 = pneg %p462
      %p1092 = pneg %p486
      %p1093 = pneg %p483
      %p1094 = pneg %p507
      %p1095 = pneg %p504
      %p1096 = pneg %p528
      %p1097 = pneg %p525
      %p1098 = pneg %p549
      %p1099 = pneg %p546
      %p1100 = pneg %p570
      %p1101 = pneg %p567
      %p1102 = pneg %p591
      %p1103 = pneg %p588
      %p1104 = pneg %p612
      %p1105 = pneg %p609
      %p1106 = pneg %p633
      %p1107 = pneg %p630
      %p1108 = pneg %p654
      %p1109 = pneg %p651
      %p1110 = pneg %p675
      %p1111 = pneg %p672
      %p1112 = pneg %p696
      %p1113 = pneg %p693
      %p1114 = scmp.lt.s32.totalorder %s74, 3
      %s1115 = scalar_select %p1114, %s74, 3
      %s1116 = smul.addr %s1115, 4
      %s1117 = scalar_lea.vmem %s55, %s1116
      %p1118 = pneg %p722
      %p1119 = pneg %p719
      %p1120 = scmp.lt.s32.totalorder %s74, 3
      %s1121 = scalar_select %p1120, %s74, 3
      %s1122 = scalar_lea.vmem %s57, %s1121
      %p1123 = pneg %p748
      %p1124 = pneg %p745
      %p1125 = scmp.lt.s32.totalorder %s74, 3
      %s1126 = scalar_select %p1125, %s74, 3
      %s1127 = smul.addr %s1126, 2
      %s1128 = smul.addr %s1127, 8
      %s1129 = scalar_lea.vmem %s59, %s1128
      %p1130 = pneg %p774
      %p1131 = pneg %p771
      %p1132 = scmp.lt.s32.totalorder %s74, 3
      %s1133 = scalar_select %p1132, %s74, 3
      %s1134 = scalar_lea.vmem %s61, %s1133
      %p1135 = pneg %p800
      %p1136 = pneg %p797
      %p1137 = pneg %p826
      %p1138 = pneg %p823
      %p1139 = scmp.lt.s32.totalorder %s74, 3
      %s1140 = scalar_select %p1139, %s74, 3
      %s1141 = smul.addr %s1140, 2
      %s1142 = scalar_lea.vmem %s63, %s1141
      %p1143 = scmp.lt.s32.totalorder %s74, 3
      %s1144 = scalar_select %p1143, %s74, 3
      %s1145 = smul.addr %s1144, 42
      %s1146 = smul.addr %s1145, 8
      %s1147 = scalar_lea.vmem %s3, %s1146
      %p1148 = scmp.lt.s32.totalorder %s74, 3
      %s1149 = scalar_select %p1148, %s74, 3
      %s1150 = smul.addr %s1149, 2
      %s1151 = scalar_lea.vmem %s5, %s1150
      %p1152 = scmp.lt.s32.totalorder %s74, 3
      %s1153 = scalar_select %p1152, %s74, 3
      %s1154 = smul.addr %s1153, 108
      %s1155 = smul.addr %s1154, 8
      %s1156 = scalar_lea.vmem %s7, %s1155
      %p1157 = scmp.lt.s32.totalorder %s74, 3
      %s1158 = scalar_select %p1157, %s74, 3
      %s1159 = smul.addr %s1158, 2
      %s1160 = scalar_lea.vmem %s9, %s1159
      %p1161 = scmp.lt.s32.totalorder %s74, 3
      %s1162 = scalar_select %p1161, %s74, 3
      %s1163 = smul.addr %s1162, 54
      %s1164 = smul.addr %s1163, 8
      %s1165 = scalar_lea.vmem %s11, %s1164
      %p1166 = scmp.lt.s32.totalorder %s74, 3
      %s1167 = scalar_select %p1166, %s74, 3
      %s1168 = scalar_lea.vmem %s13, %s1167
      %p1169 = scmp.lt.s32.totalorder %s74, 3
      %s1170 = scalar_select %p1169, %s74, 3
      %s1171 = smul.addr %s1170, 30
      %s1172 = smul.addr %s1171, 8
      %s1173 = scalar_lea.vmem %s15, %s1172
      %p1174 = scmp.lt.s32.totalorder %s74, 3
      %s1175 = scalar_select %p1174, %s74, 3
      %s1176 = scalar_lea.vmem %s17, %s1175
      %p1177 = scmp.lt.s32.totalorder %s74, 3
      %s1178 = scalar_select %p1177, %s74, 3
      %s1179 = smul.addr %s1178, 27
      %s1180 = smul.addr %s1179, 8
      %s1181 = scalar_lea.vmem %s19, %s1180
      %p1182 = scmp.lt.s32.totalorder %s74, 3
      %s1183 = scalar_select %p1182, %s74, 3
      %s1184 = scalar_lea.vmem %s21, %s1183
      %p1185 = scmp.lt.s32.totalorder %s74, 3
      %s1186 = scalar_select %p1185, %s74, 3
      %s1187 = smul.addr %s1186, 18
      %s1188 = smul.addr %s1187, 8
      %s1189 = scalar_lea.vmem %s23, %s1188
      %p1190 = scmp.lt.s32.totalorder %s74, 3
      %s1191 = scalar_select %p1190, %s74, 3
      %s1192 = scalar_lea.vmem %s25, %s1191
      %p1193 = scmp.lt.s32.totalorder %s74, 3
      %s1194 = scalar_select %p1193, %s74, 3
      %s1195 = smul.addr %s1194, 4
      %s1196 = scalar_lea.vmem %s55, %s1195
      %p1197 = scmp.lt.s32.totalorder %s74, 3
      %s1198 = scalar_select %p1197, %s74, 3
      %s1199 = scalar_lea.vmem %s57, %s1198
      %p1200 = scmp.lt.s32.totalorder %s74, 3
      %s1201 = scalar_select %p1200, %s74, 3
      %s1202 = smul.addr %s1201, 2
      %s1203 = smul.addr %s1202, 8
      %s1204 = scalar_lea.vmem %s59, %s1203
      %p1205 = scmp.lt.s32.totalorder %s74, 3
      %s1206 = scalar_select %p1205, %s74, 3
      %s1207 = scalar_lea.vmem %s61, %s1206
      %p1208 = scmp.lt.s32.totalorder %s74, 3
      %s1209 = scalar_select %p1208, %s74, 3
      %s1210 = smul.addr %s1209, 2
      %s1211 = scalar_lea.vmem %s63, %s1210
      %v1212 = vld [vmem:[%s1] sm:$0xff]
      %v1213 = vld [vmem:[%s1 + $0x8] sm:$0xff]
      %v1214 = vld [vmem:[%s1 + $0x10] sm:$0xff]
      %v1215 = vld [vmem:[%s1 + $0x18] sm:$0xff]
      %v1216 = vld [vmem:[%s27] sm:$0xff]
      %v1217 = vld [vmem:[%s27 + $0x8] sm:$0xff]
      %v1218 = vld [vmem:[%s27 + $0x10] sm:$0xff]
      %v1219 = vld [vmem:[%s27 + $0x18] sm:$0xff]
      %1221 = vset.pattern.permute.xlu0 0
      %1222 = vperm.xlu0 %1221, %v1216
      %v1223 = vpop.permute.xlu0 %1222
      %1226 = vset.pattern.permute.xlu0 0
      %1227 = vperm.xlu0 %1226, %v1217
      %v1228 = vpop.permute.xlu0 %1227
      %1231 = vset.pattern.permute.xlu0 0
      %1232 = vperm.xlu0 %1231, %v1218
      %v1233 = vpop.permute.xlu0 %1232
      %1236 = vset.pattern.permute.xlu0 0
      %1237 = vperm.xlu0 %1236, %v1219
      %v1238 = vpop.permute.xlu0 %1237
      %v1240 = vmul.f32 %v1212, %v1223
      %v1241 = vmul.f32 %v1213, %v1228
      %v1242 = vmul.f32 %v1214, %v1233
      %v1243 = vmul.f32 %v1215, %v1238
      %v1244 = vld [vmem:[%s1147] sm:$0xff]
      %v1245 = vld [vmem:[%s1147 + $0x8] sm:$0xff]
      %v1246 = vld [vmem:[%s1147 + $0x10] sm:$0xff]
      %v1247 = vld [vmem:[%s1147 + $0x18] sm:$0xff]
      %v1248 = vld [vmem:[%s1147 + $0x20] sm:$0xff]
      %v1249 = vld [vmem:[%s1147 + $0x28] sm:$0xff]
      %v1250 = vld [vmem:[%s1147 + $0x30] sm:$0xff]
      %v1251 = vld [vmem:[%s1147 + $0x38] sm:$0xff]
      %v1252 = vld [vmem:[%s1147 + $0x40] sm:$0xff]
      %v1253 = vld [vmem:[%s1147 + $0x48] sm:$0xff]
      %v1254 = vld [vmem:[%s1147 + $0x50] sm:$0xff]
      %v1255 = vld [vmem:[%s1147 + $0x58] sm:$0xff]
      %v1256 = vld [vmem:[%s1147 + $0x60] sm:$0x3f]
      %v1257 = vld [vmem:[%s1147 + $0x68] sm:$0x3f]
      %v1258 = vld [vmem:[%s1 + $0x1] sm:$0xff]
      %v1259 = vld [vmem:[%s1 + $0x9] sm:$0xff]
      %v1260 = vld [vmem:[%s1 + $0x11] sm:$0xff]
      %v1261 = vld [vmem:[%s1 + $0x19] sm:$0xff]
      %s1262 = scalar_lea.vmem %s1147, 112
      %v1263 = vld [vmem:[%s1262] sm:$0xff]
      %v1264 = vld [vmem:[%s1262 + $0x8] sm:$0xff]
      %v1265 = vld [vmem:[%s1262 + $0x10] sm:$0xff]
      %v1266 = vld [vmem:[%s1262 + $0x18] sm:$0xff]
      %v1267 = vld [vmem:[%s1262 + $0x20] sm:$0xff]
      %v1268 = vld [vmem:[%s1262 + $0x28] sm:$0xff]
      %v1269 = vld [vmem:[%s1262 + $0x30] sm:$0xff]
      %v1270 = vld [vmem:[%s1262 + $0x38] sm:$0xff]
      %v1271 = vld [vmem:[%s1262 + $0x40] sm:$0xff]
      %v1272 = vld [vmem:[%s1262 + $0x48] sm:$0xff]
      %v1273 = vld [vmem:[%s1262 + $0x50] sm:$0xff]
      %v1274 = vld [vmem:[%s1262 + $0x58] sm:$0xff]
      %v1275 = vld [vmem:[%s1262 + $0x60] sm:$0x3f]
      %v1276 = vld [vmem:[%s1262 + $0x68] sm:$0x3f]
      %vm1277 = vcmask 441344
      %v1279 = vsel %vm1277, %v1258, 0
      %v1282 = vsel %vm1277, %v1259, 0
      %v1285 = vsel %vm1277, %v1260, 0
      %v1288 = vsel %vm1277, %v1261, 0
      %vm1290 = vcmask 1045504
      %v1292 = vsel %vm1290, %v1275, 0
      %v1295 = vsel %vm1290, %v1276, 0
      %1297 = vmatprep.subr.mxu0 %v1264
      %1298 = vmatpush1.msra.mxu0 %v1263
      %1299 = vmatprep.subr.mxu0 %v1266
      %1300 = vmatpush1.msra.mxu0 %v1265
      %1301 = vmatprep.subr.mxu0 %v1268
      %1302 = vmatpush1.msra.mxu0 %v1267
      %1303 = vmatprep.subr.mxu0 %v1270
      %1304 = vmatpush1.msra.mxu0 %v1269
      %1305 = vmatprep.subr.mxu0 %v1272
      %1306 = vmatpush1.msra.mxu0 %v1271
      %1307 = vmatprep.subr.mxu0 %v1274
      %1308 = vmatpush1.msra.mxu0 %v1273
      %1309 = vmatprep.subr.mxu0 %v1295
      %1310 = vmatpush1.msra.mxu0 %v1292
      %1311 = vmatprep.subr.mxu0 0.0
      %1312 = vmatpush1.msra.mxu0 0.0
      %1313 = vmatprep.subr.mxu0 0.0
      %1314 = vmatpush1.msra.mxu0 0.0
      %1315 = vmatprep.subr.mxu0 0.0
      %1316 = vmatpush1.msra.mxu0 0.0
      %1317 = vmatprep.subr.mxu0 0.0
      %1318 = vmatpush1.msra.mxu0 0.0
      %1319 = vmatprep.subr.mxu0 0.0
      %1320 = vmatpush1.msra.mxu0 0.0
      %1321 = vmatprep.subr.mxu0 0.0
      %1322 = vmatpush1.msra.mxu0 0.0
      %1323 = vmatprep.subr.mxu0 0.0
      %1324 = vmatpush1.msra.mxu0 0.0
      %1325 = vmatprep.subr.mxu0 0.0
      %1326 = vmatpush1.msra.mxu0 0.0
      %1327 = vmatprep.subr.mxu0 0.0
      %1328 = vmatpush1.msra.mxu0 0.0
      %1329 = vmatprep.subr.mxu0 0.0
      %1330 = vmatpush1.msra.mxu0 0.0
      %1331 = vmatprep.subr.mxu0 0.0
      %1332 = vmatpush1.msra.mxu0 0.0
      %1333 = vmatprep.subr.mxu0 0.0
      %1334 = vmatpush1.msra.mxu0 0.0
      %1335 = vmatprep.subr.mxu0 0.0
      %1336 = vmatpush1.msra.mxu0 0.0
      %1337 = vmatprep.subr.mxu0 0.0
      %1338 = vmatpush1.msra.mxu0 0.0
      %1339 = vmatprep.subr.mxu0 0.0
      %1340 = vmatpush1.msra.mxu0 0.0
      %1341 = vmatprep.subr.mxu0 0.0
      %1342 = vmatpush1.msra.mxu0 0.0
      %1343 = vmatprep.subr.mxu0 0.0
      %1344 = vmatpush1.msra.mxu0 0.0
      %1345 = vmatprep.subr.mxu0 0.0
      %1346 = vmatpush1.msra.mxu0 0.0
      %1347 = vmatprep.subr.mxu0 0.0
      %1348 = vmatpush1.msra.mxu0 0.0
      %1349 = vmatprep.subr.mxu0 0.0
      %1350 = vmatpush1.msra.mxu0 0.0
      %1351 = vmatprep.subr.mxu0 0.0
      %1352 = vmatpush1.msra.mxu0 0.0
      %1353 = vmatprep.subr.mxu0 0.0
      %1354 = vmatpush1.msra.mxu0 0.0
      %1355 = vmatprep.subr.mxu0 0.0
      %1356 = vmatpush1.msra.mxu0 0.0
      %1357 = vmatprep.subr.mxu0 0.0
      %1358 = vmatpush1.msra.mxu0 0.0
      %1359 = vmatprep.subr.mxu0 0.0
      %1360 = vmatpush1.msra.mxu0 0.0
      %1361 = vmatprep.mubr.f32.mxu0 0.0
      %1362 = vmatmul.mubr.f32.gmra.mrb[0].mxu0 %v1279
      %v1363 = vpop.f32.mrb[0].mxu0
      %v1364 = vadd.f32 0.0, %v1363
      %v1365 = vpop.f32.mrb[0].mxu0
      %v1366 = vadd.f32 0.0, %v1365
      %1367 = vmatprep.mubr.f32.mxu0 0.0
      %1368 = vmatmul.mubr.f32.gmra.mrb[0].mxu0 %v1282
      %v1369 = vpop.f32.mrb[0].mxu0
      %v1370 = vadd.f32 0.0, %v1369
      %v1371 = vpop.f32.mrb[0].mxu0
      %v1372 = vadd.f32 0.0, %v1371
      %1373 = vmatprep.mubr.f32.mxu0 0.0
      %1374 = vmatmul.mubr.f32.gmra.mrb[0].mxu0 %v1285
      %v1375 = vpop.f32.mrb[0].mxu0
      %v1376 = vadd.f32 0.0, %v1375
      %v1377 = vpop.f32.mrb[0].mxu0
      %v1378 = vadd.f32 0.0, %v1377
      %1379 = vmatprep.mubr.f32.mxu0 0.0
      %1380 = vmatmul.mubr.f32.gmra.mrb[0].mxu0 %v1288
      %v1381 = vpop.f32.mrb[0].mxu0
      %v1382 = vadd.f32 0.0, %v1381
      %v1383 = vpop.f32.mrb[0].mxu0
      %v1384 = vadd.f32 0.0, %v1383
      %1385 = vdwg.mxu0
      %v1387 = vsel %vm1277, %v1240, 0
      %v1390 = vsel %vm1277, %v1241, 0
      %v1393 = vsel %vm1277, %v1242, 0
      %v1396 = vsel %vm1277, %v1243, 0
      %v1399 = vsel %vm1290, %v1256, 0
      %v1402 = vsel %vm1290, %v1257, 0
      %1404 = vmatprep.subr.mxu0 %v1245
      %1405 = vmatpush1.msra.mxu0 %v1244
      %1406 = vmatprep.subr.mxu0 %v1247
      %1407 = vmatpush1.msra.mxu0 %v1246
      %1408 = vmatprep.subr.mxu0 %v1249
      %1409 = vmatpush1.msra.mxu0 %v1248
      %1410 = vmatprep.subr.mxu0 %v1251
      %1411 = vmatpush1.msra.mxu0 %v1250
      %1412 = vmatprep.subr.mxu0 %v1253
      %1413 = vmatpush1.msra.mxu0 %v1252
      %1414 = vmatprep.subr.mxu0 %v1255
      %1415 = vmatpush1.msra.mxu0 %v1254
      %1416 = vmatprep.subr.mxu0 %v1402
      %1417 = vmatpush1.msra.mxu0 %v1399
      %1418 = vmatprep.subr.mxu0 0.0
      %1419 = vmatpush1.msra.mxu0 0.0
      %1420 = vmatprep.subr.mxu0 0.0
      %1421 = vmatpush1.msra.mxu0 0.0
      %1422 = vmatprep.subr.mxu0 0.0
      %1423 = vmatpush1.msra.mxu0 0.0
      %1424 = vmatprep.subr.mxu0 0.0
      %1425 = vmatpush1.msra.mxu0 0.0
      %1426 = vmatprep.subr.mxu0 0.0
      %1427 = vmatpush1.msra.mxu0 0.0
      %1428 = vmatprep.subr.mxu0 0.0
      %1429 = vmatpush1.msra.mxu0 0.0
      %1430 = vmatprep.subr.mxu0 0.0
      %1431 = vmatpush1.msra.mxu0 0.0
      %1432 = vmatprep.subr.mxu0 0.0
      %1433 = vmatpush1.msra.mxu0 0.0
      %1434 = vmatprep.subr.mxu0 0.0
      %1435 = vmatpush1.msra.mxu0 0.0
      %1436 = vmatprep.subr.mxu0 0.0
      %1437 = vmatpush1.msra.mxu0 0.0
      %1438 = vmatprep.subr.mxu0 0.0
      %1439 = vmatpush1.msra.mxu0 0.0
      %1440 = vmatprep.subr.mxu0 0.0
      %1441 = vmatpush1.msra.mxu0 0.0
      %1442 = vmatprep.subr.mxu0 0.0
      %1443 = vmatpush1.msra.mxu0 0.0
      %1444 = vmatprep.subr.mxu0 0.0
      %1445 = vmatpush1.msra.mxu0 0.0
      %1446 = vmatprep.subr.mxu0 0.0
      %1447 = vmatpush1.msra.mxu0 0.0
      %1448 = vmatprep.subr.mxu0 0.0
      %1449 = vmatpush1.msra.mxu0 0.0
      %1450 = vmatprep.subr.mxu0 0.0
      %1451 = vmatpush1.msra.mxu0 0.0
      %1452 = vmatprep.subr.mxu0 0.0
      %1453 = vmatpush1.msra.mxu0 0.0
      %1454 = vmatprep.subr.mxu0 0.0
      %1455 = vmatpush1.msra.mxu0 0.0
      %1456 = vmatprep.subr.mxu0 0.0
      %1457 = vmatpush1.msra.mxu0 0.0
      %1458 = vmatprep.subr.mxu0 0.0
      %1459 = vmatpush1.msra.mxu0 0.0
      %1460 = vmatprep.subr.mxu0 0.0
      %1461 = vmatpush1.msra.mxu0 0.0
      %1462 = vmatprep.subr.mxu0 0.0
      %1463 = vmatpush1.msra.mxu0 0.0
      %1464 = vmatprep.subr.mxu0 0.0
      %1465 = vmatpush1.msra.mxu0 0.0
      %1466 = vmatprep.subr.mxu0 0.0
      %1467 = vmatpush1.msra.mxu0 0.0
      %1468 = vmatprep.mubr.f32.mxu0 0.0
      %1469 = vmatmul.mubr.f32.gmra.mrb[0].mxu0 %v1387
      %v1470 = vpop.f32.mrb[0].mxu0
      %v1471 = vadd.f32 %v1364, %v1470
      %v1472 = vpop.f32.mrb[0].mxu0
      %v1473 = vadd.f32 %v1366, %v1472
      %1474 = vmatprep.mubr.f32.mxu0 0.0
      %1475 = vmatmul.mubr.f32.gmra.mrb[0].mxu0 %v1390
      %v1476 = vpop.f32.mrb[0].mxu0
      %v1477 = vadd.f32 %v1370, %v1476
      %v1478 = vpop.f32.mrb[0].mxu0
      %v1479 = vadd.f32 %v1372, %v1478
      %1480 = vmatprep.mubr.f32.mxu0 0.0
      %1481 = vmatmul.mubr.f32.gmra.mrb[0].mxu0 %v1393
      %v1482 = vpop.f32.mrb[0].mxu0
      %v1483 = vadd.f32 %v1376, %v1482
      %v1484 = vpop.f32.mrb[0].mxu0
      %v1485 = vadd.f32 %v1378, %v1484
      %1486 = vmatprep.mubr.f32.mxu0 0.0
      %1487 = vmatmul.mubr.f32.gmra.mrb[0].mxu0 %v1396
      %v1488 = vpop.f32.mrb[0].mxu0
      %v1489 = vadd.f32 %v1382, %v1488
      %v1490 = vpop.f32.mrb[0].mxu0
      %v1491 = vadd.f32 %v1384, %v1490
      %1492 = vdwg.mxu0
      %v1493 = vld [vmem:[%s1 + $0x2] sm:$0xff]
      %v1494 = vld [vmem:[%s1 + $0xa] sm:$0xff]
      %v1495 = vld [vmem:[%s1 + $0x12] sm:$0xff]
      %v1496 = vld [vmem:[%s1 + $0x1a] sm:$0xff]
      %s1497 = scalar_lea.vmem %s27, 32
      %v1498 = vld [vmem:[%s1497] sm:$0xff]
      %v1499 = vld [vmem:[%s1497 + $0x8] sm:$0xff]
      %v1500 = vld [vmem:[%s1497 + $0x10] sm:$0xff]
      %v1501 = vld [vmem:[%s1497 + $0x18] sm:$0xff]
      %1503 = vset.pattern.permute.xlu0 0
      %1504 = vperm.xlu0 %1503, %v1498
      %v1505 = vpop.permute.xlu0 %1504
      %1508 = vset.pattern.permute.xlu0 0
      %1509 = vperm.xlu0 %1508, %v1499
      %v1510 = vpop.permute.xlu0 %1509
      %1513 = vset.pattern.permute.xlu0 0
      %1514 = vperm.xlu0 %1513, %v1500
      %v1515 = vpop.permute.xlu0 %1514
      %1518 = vset.pattern.permute.xlu0 0
      %1519 = vperm.xlu0 %1518, %v1501
      %v1520 = vpop.permute.xlu0 %1519
      %v1522 = vmul.f32 %v1493, %v1505
      %v1523 = vmul.f32 %v1494, %v1510
      %v1524 = vmul.f32 %v1495, %v1515
      %v1525 = vmul.f32 %v1496, %v1520
      %s1526 = scalar_lea.vmem %s1147, 224
      %v1527 = vld [vmem:[%s1526] sm:$0xff]
      %v1528 = vld [vmem:[%s1526 + $0x8] sm:$0xff]
      %v1529 = vld [vmem:[%s1526 + $0x10] sm:$0xff]
      %v1530 = vld [vmem:[%s1526 + $0x18] sm:$0xff]
      %v1531 = vld [vmem:[%s1526 + $0x20] sm:$0xff]
      %v1532 = vld [vmem:[%s1526 + $0x28] sm:$0xff]
      %v1533 = vld [vmem:[%s1526 + $0x30] sm:$0xff]
      %v1534 = vld [vmem:[%s1526 + $0x38] sm:$0xff]
      %v1535 = vld [vmem:[%s1526 + $0x40] sm:$0xff]
      %v1536 = vld [vmem:[%s1526 + $0x48] sm:$0xff]
      %v1537 = vld [vmem:[%s1526 + $0x50] sm:$0xff]
      %v1538 = vld [vmem:[%s1526 + $0x58] sm:$0xff]
      %v1539 = vld [vmem:[%s1526 + $0x60] sm:$0x3f]
      %v1540 = vld [vmem:[%s1526 + $0x68] sm:$0x3f]
      %v1542 = vsel %vm1277, %v1522, 0
      %v1545 = vsel %vm1277, %v1523, 0
      %v1548 = vsel %vm1277, %v1524, 0
      %v1551 = vsel %vm1277, %v1525, 0
      %v1554 = vsel %vm1290, %v1539, 0
      %v1557 = vsel %vm1290, %v1540, 0
      %1559 = vmatprep.subr.mxu0 %v1528
      %1560 = vmatpush1.msra.mxu0 %v1527
      %1561 = vmatprep.subr.mxu0 %v1530
      %1562 = vmatpush1.msra.mxu0 %v1529
      %1563 = vmatprep.subr.mxu0 %v1532
      %1564 = vmatpush1.msra.mxu0 %v1531
      %1565 = vmatprep.subr.mxu0 %v1534
      %1566 = vmatpush1.msra.mxu0 %v1533
      %1567 = vmatprep.subr.mxu0 %v1536
      %1568 = vmatpush1.msra.mxu0 %v1535
      %1569 = vmatprep.subr.mxu0 %v1538
      %1570 = vmatpush1.msra.mxu0 %v1537
      %1571 = vmatprep.subr.mxu0 %v1557
      %1572 = vmatpush1.msra.mxu0 %v1554
      %1573 = vmatprep.subr.mxu0 0.0
      %1574 = vmatpush1.msra.mxu0 0.0
      %1575 = vmatprep.subr.mxu0 0.0
      %1576 = vmatpush1.msra.mxu0 0.0
      %1577 = vmatprep.subr.mxu0 0.0
      %1578 = vmatpush1.msra.mxu0 0.0
      %1579 = vmatprep.subr.mxu0 0.0
      %1580 = vmatpush1.msra.mxu0 0.0
      %1581 = vmatprep.subr.mxu0 0.0
      %1582 = vmatpush1.msra.mxu0 0.0
      %1583 = vmatprep.subr.mxu0 0.0
      %1584 = vmatpush1.msra.mxu0 0.0
      %1585 = vmatprep.subr.mxu0 0.0
      %1586 = vmatpush1.msra.mxu0 0.0
      %1587 = vmatprep.subr.mxu0 0.0
      %1588 = vmatpush1.msra.mxu0 0.0
      %1589 = vmatprep.subr.mxu0 0.0
      %1590 = vmatpush1.msra.mxu0 0.0
      %1591 = vmatprep.subr.mxu0 0.0
      %1592 = vmatpush1.msra.mxu0 0.0
      %1593 = vmatprep.subr.mxu0 0.0
      %1594 = vmatpush1.msra.mxu0 0.0
      %1595 = vmatprep.subr.mxu0 0.0
      %1596 = vmatpush1.msra.mxu0 0.0
      %1597 = vmatprep.subr.mxu0 0.0
      %1598 = vmatpush1.msra.mxu0 0.0
      %1599 = vmatprep.subr.mxu0 0.0
      %1600 = vmatpush1.msra.mxu0 0.0
      %1601 = vmatprep.subr.mxu0 0.0
      %1602 = vmatpush1.msra.mxu0 0.0
      %1603 = vmatprep.subr.mxu0 0.0
      %1604 = vmatpush1.msra.mxu0 0.0
      %1605 = vmatprep.subr.mxu0 0.0
      %1606 = vmatpush1.msra.mxu0 0.0
      %1607 = vmatprep.subr.mxu0 0.0
      %1608 = vmatpush1.msra.mxu0 0.0
      %1609 = vmatprep.subr.mxu0 0.0
      %1610 = vmatpush1.msra.mxu0 0.0
      %1611 = vmatprep.subr.mxu0 0.0
      %1612 = vmatpush1.msra.mxu0 0.0
      %1613 = vmatprep.subr.mxu0 0.0
      %1614 = vmatpush1.msra.mxu0 0.0
      %1615 = vmatprep.subr.mxu0 0.0
      %1616 = vmatpush1.msra.mxu0 0.0
      %1617 = vmatprep.subr.mxu0 0.0
      %1618 = vmatpush1.msra.mxu0 0.0
      %1619 = vmatprep.subr.mxu0 0.0
      %1620 = vmatpush1.msra.mxu0 0.0
      %1621 = vmatprep.subr.mxu0 0.0
      %1622 = vmatpush1.msra.mxu0 0.0
      %1623 = vmatprep.mubr.f32.mxu0 0.0
      %1624 = vmatmul.mubr.f32.gmra.mrb[0].mxu0 %v1542
      %v1625 = vpop.f32.mrb[0].mxu0
      %v1626 = vadd.f32 0.0, %v1625
      %v1627 = vpop.f32.mrb[0].mxu0
      %v1628 = vadd.f32 0.0, %v1627
      %1629 = vmatprep.mubr.f32.mxu0 0.0
      %1630 = vmatmul.mubr.f32.gmra.mrb[0].mxu0 %v1545
      %v1631 = vpop.f32.mrb[0].mxu0
      %v1632 = vadd.f32 0.0, %v1631
      %v1633 = vpop.f32.mrb[0].mxu0
      %v1634 = vadd.f32 0.0, %v1633
      %1635 = vmatprep.mubr.f32.mxu0 0.0
      %1636 = vmatmul.mubr.f32.gmra.mrb[0].mxu0 %v1548
      %v1637 = vpop.f32.mrb[0].mxu0
      %v1638 = vadd.f32 0.0, %v1637
      %v1639 = vpop.f32.mrb[0].mxu0
      %v1640 = vadd.f32 0.0, %v1639
      %1641 = vmatprep.mubr.f32.mxu0 0.0
      %1642 = vmatmul.mubr.f32.gmra.mrb[0].mxu0 %v1551
      %v1643 = vpop.f32.mrb[0].mxu0
      %v1644 = vadd.f32 0.0, %v1643
      %v1645 = vpop.f32.mrb[0].mxu0
      %v1646 = vadd.f32 0.0, %v1645
      %1647 = vdwg.mxu0
      %v1648 = vadd.f32 %v1471, %v1626
      %v1649 = vadd.f32 %v1473, %v1628
      %v1650 = vadd.f32 %v1477, %v1632
      %v1651 = vadd.f32 %v1479, %v1634
      %v1652 = vadd.f32 %v1483, %v1638
      %v1653 = vadd.f32 %v1485, %v1640
      %v1654 = vadd.f32 %v1489, %v1644
      %v1655 = vadd.f32 %v1491, %v1646
      %v1656 = vld [vmem:[%s1151] sm:$0x3]
      %v1658 = vlaneseq
      %v1659 = vshrl.u32 %v1658, 7
      %v1660 = vsub.s32 0, %v1659
      %v1661 = vrot.slane %v1656, %v1660
      %v1662 = vlaneseq
      %v1663 = vshrl.u32 %v1662, 7
      %v1664 = vsub.s32 1, %v1663
      %v1665 = vrot.slane %v1656, %v1664
      %v1668 = vadd.f32 %v1648, %v1661
      %v1669 = vadd.f32 %v1649, %v1665
      %v1670 = vadd.f32 %v1650, %v1661
      %v1671 = vadd.f32 %v1651, %v1665
      %v1672 = vadd.f32 %v1652, %v1661
      %v1673 = vadd.f32 %v1653, %v1665
      %v1674 = vadd.f32 %v1654, %v1661
      %v1675 = vadd.f32 %v1655, %v1665
      %v1676 = vmax.f32 %v1668, 0.0
      %v1677 = vmax.f32 %v1669, 0.0
      %v1678 = vmax.f32 %v1670, 0.0
      %v1679 = vmax.f32 %v1671, 0.0
      %v1680 = vmax.f32 %v1672, 0.0
      %v1681 = vmax.f32 %v1673, 0.0
      %v1682 = vmax.f32 %v1674, 0.0
      %v1683 = vmax.f32 %v1675, 0.0
      %1684 = vst [vmem:[#allocation2] sm:$0xff] 0.0
      %vm1685 = vcmask 130048
      %1686 = vst.msk [vmem:[#allocation2 + $0x8] sm:$0xff] %vm1685, 0.0
      %1687 = vst [vmem:[#allocation2 + $0x10] sm:$0xff] 0.0
      %1688 = vst.msk [vmem:[#allocation2 + $0x18] sm:$0xff] %vm1685, 0.0
      %1689 = vst [vmem:[#allocation2 + $0x20] sm:$0xff] 0.0
      %1690 = vst.msk [vmem:[#allocation2 + $0x28] sm:$0xff] %vm1685, 0.0
      %1691 = vst [vmem:[#allocation2 + $0x30] sm:$0xff] 0.0
      %1692 = vst.msk [vmem:[#allocation2 + $0x38] sm:$0xff] %vm1685, 0.0
      %1693 = vst [vmem:[#allocation2 + $0x40] sm:$0x3] 0.0
      %vm1694 = vcmask 123904
      %1695 = vst.msk [vmem:[#allocation2 + $0x48] sm:$0x3] %vm1694, 0.0
      %vm1704 = vcmask 1040384
      %v1705 = vrot.slane %v1676, 7
      %v1706 = vrot.slane %v1677, 7
      %v1707 = vrot.slane %v1678, 7
      %v1708 = vsel %vm1704, %v1705, %v1707
      %v1709 = vrot.slane %v1679, 7
      %v1710 = vsel %vm1704, %v1706, %v1709
      %v1711 = vrot.slane %v1680, 7
      %v1712 = vsel %vm1704, %v1707, %v1711
      %v1713 = vrot.slane %v1681, 7
      %v1714 = vsel %vm1704, %v1709, %v1713
      %v1715 = vrot.slane %v1682, 7
      %v1716 = vsel %vm1704, %v1711, %v1715
      %v1717 = vrot.slane %v1683, 7
      %v1718 = vsel %vm1704, %v1713, %v1717
      %1729 = vst [vmem:[#allocation2] sm:$0xfe] %v1705
      %vm1730 = vcmask 130049
      %1731 = vst.msk [vmem:[#allocation2 + $0x8] sm:$0xfe] %vm1730, %v1706
      %1732 = vst [vmem:[#allocation2 + $0x10] sm:$0xff] %v1708
      %1733 = vst.msk [vmem:[#allocation2 + $0x18] sm:$0xff] %vm1685, %v1710
      %1734 = vst [vmem:[#allocation2 + $0x20] sm:$0xff] %v1712
      %1735 = vst.msk [vmem:[#allocation2 + $0x28] sm:$0xff] %vm1685, %v1714
      %1736 = vst [vmem:[#allocation2 + $0x30] sm:$0xff] %v1716
      %1737 = vst.msk [vmem:[#allocation2 + $0x38] sm:$0xff] %vm1685, %v1718
      %1738 = vst [vmem:[#allocation2 + $0x40] sm:$0x1] %v1715
      %vm1739 = vcmask 122880
      %1740 = vst.msk [vmem:[#allocation2 + $0x48] sm:$0x1] %vm1739, %v1717
      %v1741 = vld [vmem:[#allocation2] sm:$0xff]
      %v1742 = vld [vmem:[#allocation2 + $0x8] sm:$0xff]
      %v1743 = vld [vmem:[#allocation2 + $0x10] sm:$0xff]
      %v1744 = vld [vmem:[#allocation2 + $0x18] sm:$0xff]
      %v1745 = vld [vmem:[#allocation2 + $0x20] sm:$0xff]
      %v1746 = vld [vmem:[#allocation2 + $0x28] sm:$0xff]
      %v1747 = vld [vmem:[#allocation2 + $0x30] sm:$0xff]
      %v1748 = vld [vmem:[#allocation2 + $0x38] sm:$0xff]
      %v1749 = vld [vmem:[%s27] sm:$0xff]
      %v1750 = vld [vmem:[%s27 + $0x8] sm:$0xff]
      %v1751 = vld [vmem:[%s27 + $0x10] sm:$0xff]
      %v1752 = vld [vmem:[%s27 + $0x18] sm:$0xff]
      %1754 = vset.pattern.permute.xlu0 0
      %1755 = vperm.xlu0 %1754, %v1749
      %v1756 = vpop.permute.xlu0 %1755
      %1759 = vset.pattern.permute.xlu0 0
      %1760 = vperm.xlu0 %1759, %v1750
      %v1761 = vpop.permute.xlu0 %1760
      %1764 = vset.pattern.permute.xlu0 0
      %1765 = vperm.xlu0 %1764, %v1751
      %v1766 = vpop.permute.xlu0 %1765
      %1769 = vset.pattern.permute.xlu0 0
      %1770 = vperm.xlu0 %1769, %v1752
      %v1771 = vpop.permute.xlu0 %1770
      %v1773 = vmul.f32 %v1741, %v1756
      %v1774 = vmul.f32 %v1742, %v1756
      %v1775 = vmul.f32 %v1743, %v1761
      %v1776 = vmul.f32 %v1744, %v1761
      %v1777 = vmul.f32 %v1745, %v1766
      %v1778 = vmul.f32 %v1746, %v1766
      %v1779 = vmul.f32 %v1747, %v1771
      %v1780 = vmul.f32 %v1748, %v1771
      %v1781 = vld [vmem:[%s1156] sm:$0xff]
      %v1782 = vld [vmem:[%s1156 + $0x8] sm:$0xff]
      %v1783 = vld [vmem:[%s1156 + $0x10] sm:$0xff]
      %v1784 = vld [vmem:[%s1156 + $0x18] sm:$0xff]
      %v1785 = vld [vmem:[%s1156 + $0x20] sm:$0xff]
      %v1786 = vld [vmem:[%s1156 + $0x28] sm:$0xff]
      %v1787 = vld [vmem:[%s1156 + $0x30] sm:$0xff]
      %v1788 = vld [vmem:[%s1156 + $0x38] sm:$0xff]
      %v1789 = vld [vmem:[%s1156 + $0x40] sm:$0xff]
      %v1790 = vld [vmem:[%s1156 + $0x48] sm:$0xff]
      %v1791 = vld [vmem:[%s1156 + $0x50] sm:$0xff]
      %v1792 = vld [vmem:[%s1156 + $0x58] sm:$0xff]
      %v1793 = vld [vmem:[%s1156 + $0x60] sm:$0xff]
      %v1794 = vld [vmem:[%s1156 + $0x68] sm:$0xff]
      %v1795 = vld [vmem:[%s1156 + $0x70] sm:$0xff]
      %v1796 = vld [vmem:[%s1156 + $0x78] sm:$0xff]
      %v1797 = vld [vmem:[%s1156 + $0x80] sm:$0xff]
      %v1798 = vld [vmem:[%s1156 + $0x88] sm:$0xff]
      %v1799 = vld [vmem:[%s1156 + $0x90] sm:$0xff]
      %v1800 = vld [vmem:[%s1156 + $0x98] sm:$0xff]
      %v1801 = vld [vmem:[%s1156 + $0xa0] sm:$0xff]
      %v1802 = vld [vmem:[%s1156 + $0xa8] sm:$0xff]
      %v1803 = vld [vmem:[%s1156 + $0xb0] sm:$0xff]
      %v1804 = vld [vmem:[%s1156 + $0xb8] sm:$0xff]
      %v1805 = vld [vmem:[%s1156 + $0xc0] sm:$0xff]
      %v1806 = vld [vmem:[%s1156 + $0xc8] sm:$0xff]
      %v1807 = vld [vmem:[%s1156 + $0xd0] sm:$0xff]
      %v1808 = vld [vmem:[%s1156 + $0xd8] sm:$0xff]
      %v1809 = vld [vmem:[%s1156 + $0xe0] sm:$0xff]
      %v1810 = vld [vmem:[%s1156 + $0xe8] sm:$0xff]
      %v1811 = vld [vmem:[%s1156 + $0xf0] sm:$0xff]
      %v1812 = vld [vmem:[%s1156 + $0xf8] sm:$0xff]
      %v1813 = vld [vmem:[%s1156 + $0x100] sm:$0xff]
      %v1814 = vld [vmem:[%s1156 + $0x108] sm:$0xff]
      %v1815 = vld [vmem:[%s1156 + $0x110] sm:$0xff]
      %v1816 = vld [vmem:[%s1156 + $0x118] sm:$0xff]
      %v1817 = vld [vmem:[#allocation2] sm:$0xfe]
      %v1818 = vld [vmem:[#allocation2 + $0x8] sm:$0xfe]
      %v1819 = vld [vmem:[#allocation2 + $0x10] sm:$0xff]
      %v1820 = vld [vmem:[#allocation2 + $0x18] sm:$0xff]
      %v1821 = vld [vmem:[#allocation2 + $0x20] sm:$0xff]
      %v1822 = vld [vmem:[#allocation2 + $0x28] sm:$0xff]
      %v1823 = vld [vmem:[#allocation2 + $0x30] sm:$0xff]
      %v1824 = vld [vmem:[#allocation2 + $0x38] sm:$0xff]
      %v1825 = vld [vmem:[#allocation2 + $0x40] sm:$0x1]
      %v1826 = vld [vmem:[#allocation2 + $0x48] sm:$0x1]
      %s1827 = scalar_lea.vmem %s1156, 288
      %v1828 = vld [vmem:[%s1827] sm:$0xff]
      %v1829 = vld [vmem:[%s1827 + $0x8] sm:$0xff]
      %v1830 = vld [vmem:[%s1827 + $0x10] sm:$0xff]
      %v1831 = vld [vmem:[%s1827 + $0x18] sm:$0xff]
      %v1832 = vld [vmem:[%s1827 + $0x20] sm:$0xff]
      %v1833 = vld [vmem:[%s1827 + $0x28] sm:$0xff]
      %v1834 = vld [vmem:[%s1827 + $0x30] sm:$0xff]
      %v1835 = vld [vmem:[%s1827 + $0x38] sm:$0xff]
      %v1836 = vld [vmem:[%s1827 + $0x40] sm:$0xff]
      %v1837 = vld [vmem:[%s1827 + $0x48] sm:$0xff]
      %v1838 = vld [vmem:[%s1827 + $0x50] sm:$0xff]
      %v1839 = vld [vmem:[%s1827 + $0x58] sm:$0xff]
      %v1840 = vld [vmem:[%s1827 + $0x60] sm:$0xff]
      %v1841 = vld [vmem:[%s1827 + $0x68] sm:$0xff]
      %v1842 = vld [vmem:[%s1827 + $0x70] sm:$0xff]
      %v1843 = vld [vmem:[%s1827 + $0x78] sm:$0xff]
      %v1844 = vld [vmem:[%s1827 + $0x80] sm:$0xff]
      %v1845 = vld [vmem:[%s1827 + $0x88] sm:$0xff]
      %v1846 = vld [vmem:[%s1827 + $0x90] sm:$0xff]
      %v1847 = vld [vmem:[%s1827 + $0x98] sm:$0xff]
      %v1848 = vld [vmem:[%s1827 + $0xa0] sm:$0xff]
      %v1849 = vld [vmem:[%s1827 + $0xa8] sm:$0xff]
      %v1850 = vld [vmem:[%s1827 + $0xb0] sm:$0xff]
      %v1851 = vld [vmem:[%s1827 + $0xb8] sm:$0xff]
      %v1852 = vld [vmem:[%s1827 + $0xc0] sm:$0xff]
      %v1853 = vld [vmem:[%s1827 + $0xc8] sm:$0xff]
      %v1854 = vld [vmem:[%s1827 + $0xd0] sm:$0xff]
      %v1855 = vld [vmem:[%s1827 + $0xd8] sm:$0xff]
      %v1856 = vld [vmem:[%s1827 + $0xe0] sm:$0xff]
      %v1857 = vld [vmem:[%s1827 + $0xe8] sm:$0xff]
      %v1858 = vld [vmem:[%s1827 + $0xf0] sm:$0xff]
      %v1859 = vld [vmem:[%s1827 + $0xf8] sm:$0xff]
      %v1860 = vld [vmem:[%s1827 + $0x100] sm:$0xff]
      %v1861 = vld [vmem:[%s1827 + $0x108] sm:$0xff]
      %v1862 = vld [vmem:[%s1827 + $0x110] sm:$0xff]
      %v1863 = vld [vmem:[%s1827 + $0x118] sm:$0xff]
      %vm1874 = vcmask 1046528
      %v1875 = vrot.slane %v1817, 1
      %v1876 = vrot.slane %v1819, 1
      %v1877 = vsel %vm1874, %v1875, %v1876
      %v1878 = vrot.slane %v1818, 1
      %v1879 = vrot.slane %v1820, 1
      %v1880 = vsel %vm1874, %v1878, %v1879
      %v1881 = vrot.slane %v1821, 1
      %v1882 = vsel %vm1874, %v1876, %v1881
      %v1883 = vrot.slane %v1822, 1
      %v1884 = vsel %vm1874, %v1879, %v1883
      %v1885 = vrot.slane %v1823, 1
      %v1886 = vsel %vm1874, %v1881, %v1885
      %v1887 = vrot.slane %v1824, 1
      %v1888 = vsel %vm1874, %v1883, %v1887
      %v1889 = vrot.slane %v1825, 1
      %v1890 = vsel %vm1874, %v1885, %v1889
      %v1891 = vrot.slane %v1826, 1
      %v1892 = vsel %vm1874, %v1887, %v1891
      %v1897 = vsel %vm1685, %v1880, 0
      %v1899 = vsel %vm1685, %v1884, 0
      %v1901 = vsel %vm1685, %v1888, 0
      %v1903 = vsel %vm1685, %v1892, 0
      %1905 = vmatprep.subr.mxu0 %v1829
      %1906 = vmatpush1.msra.mxu0 %v1828
      %1907 = vmatprep.subr.mxu0 %v1831
      %1908 = vmatpush1.msra.mxu0 %v1830
      %1909 = vmatprep.subr.mxu0 %v1833
      %1910 = vmatpush1.msra.mxu0 %v1832
      %1911 = vmatprep.subr.mxu0 %v1835
      %1912 = vmatpush1.msra.mxu0 %v1834
      %1913 = vmatprep.subr.mxu0 %v1837
      %1914 = vmatpush1.msra.mxu0 %v1836
      %1915 = vmatprep.subr.mxu0 %v1839
      %1916 = vmatpush1.msra.mxu0 %v1838
      %1917 = vmatprep.subr.mxu0 %v1841
      %1918 = vmatpush1.msra.mxu0 %v1840
      %1919 = vmatprep.subr.mxu0 %v1843
      %1920 = vmatpush1.msra.mxu0 %v1842
      %1921 = vmatprep.subr.mxu0 %v1845
      %1922 = vmatpush1.msra.mxu0 %v1844
      %1923 = vmatprep.subr.mxu0 %v1847
      %1924 = vmatpush1.msra.mxu0 %v1846
      %1925 = vmatprep.subr.mxu0 %v1849
      %1926 = vmatpush1.msra.mxu0 %v1848
      %1927 = vmatprep.subr.mxu0 %v1851
      %1928 = vmatpush1.msra.mxu0 %v1850
      %1929 = vmatprep.subr.mxu0 %v1853
      %1930 = vmatpush1.msra.mxu0 %v1852
      %1931 = vmatprep.subr.mxu0 %v1855
      %1932 = vmatpush1.msra.mxu0 %v1854
      %1933 = vmatprep.subr.mxu0 %v1857
      %1934 = vmatpush1.msra.mxu0 %v1856
      %1935 = vmatprep.subr.mxu0 %v1859
      %1936 = vmatpush1.msra.mxu0 %v1858
      %1937 = vmatprep.subr.mxu0 %v1861
      %1938 = vmatpush1.msra.mxu0 %v1860
      %1939 = vmatprep.subr.mxu0 %v1863
      %1940 = vmatpush1.msra.mxu0 %v1862
      %1941 = vmatprep.subr.mxu0 0.0
      %1942 = vmatpush1.msra.mxu0 0.0
      %1943 = vmatprep.subr.mxu0 0.0
      %1944 = vmatpush1.msra.mxu0 0.0
      %1945 = vmatprep.subr.mxu0 0.0
      %1946 = vmatpush1.msra.mxu0 0.0
      %1947 = vmatprep.subr.mxu0 0.0
      %1948 = vmatpush1.msra.mxu0 0.0
      %1949 = vmatprep.subr.mxu0 0.0
      %1950 = vmatpush1.msra.mxu0 0.0
      %1951 = vmatprep.subr.mxu0 0.0
      %1952 = vmatpush1.msra.mxu0 0.0
      %1953 = vmatprep.subr.mxu0 0.0
      %1954 = vmatpush1.msra.mxu0 0.0
      %1955 = vmatprep.subr.mxu0 0.0
      %1956 = vmatpush1.msra.mxu0 0.0
      %1957 = vmatprep.subr.mxu0 0.0
      %1958 = vmatpush1.msra.mxu0 0.0
      %1959 = vmatprep.subr.mxu0 0.0
      %1960 = vmatpush1.msra.mxu0 0.0
      %1961 = vmatprep.subr.mxu0 0.0
      %1962 = vmatpush1.msra.mxu0 0.0
      %1963 = vmatprep.subr.mxu0 0.0
      %1964 = vmatpush1.msra.mxu0 0.0
      %1965 = vmatprep.subr.mxu0 0.0
      %1966 = vmatpush1.msra.mxu0 0.0
      %1967 = vmatprep.subr.mxu0 0.0
      %1968 = vmatpush1.msra.mxu0 0.0
      %1969 = vmatprep.mubr.f32.mxu0 %v1897
      %1970 = vmatmul.mubr.f32.gmra.mrb[0].mxu0 %v1877
      %v1971 = vpop.f32.mrb[0].mxu0
      %v1972 = vadd.f32 0.0, %v1971
      %v1973 = vpop.f32.mrb[0].mxu0
      %v1974 = vadd.f32 0.0, %v1973
      %1975 = vmatprep.mubr.f32.mxu0 %v1899
      %1976 = vmatmul.mubr.f32.gmra.mrb[0].mxu0 %v1882
      %v1977 = vpop.f32.mrb[0].mxu0
      %v1978 = vadd.f32 0.0, %v1977
      %v1979 = vpop.f32.mrb[0].mxu0
      %v1980 = vadd.f32 0.0, %v1979
      %1981 = vmatprep.mubr.f32.mxu0 %v1901
      %1982 = vmatmul.mubr.f32.gmra.mrb[0].mxu0 %v1886
      %v1983 = vpop.f32.mrb[0].mxu0
      %v1984 = vadd.f32 0.0, %v1983
      %v1985 = vpop.f32.mrb[0].mxu0
      %v1986 = vadd.f32 0.0, %v1985
      %1987 = vmatprep.mubr.f32.mxu0 %v1903
      %1988 = vmatmul.mubr.f32.gmra.mrb[0].mxu0 %v1890
      %v1989 = vpop.f32.mrb[0].mxu0
      %v1990 = vadd.f32 0.0, %v1989
      %v1991 = vpop.f32.mrb[0].mxu0
      %v1992 = vadd.f32 0.0, %v1991
      %1993 = vdwg.mxu0
      %v1995 = vsel %vm1685, %v1774, 0
      %v1998 = vsel %vm1685, %v1776, 0
      %v2001 = vsel %vm1685, %v1778, 0
      %v2004 = vsel %vm1685, %v1780, 0
      %2006 = vmatprep.subr.mxu0 %v1782
      %2007 = vmatpush1.msra.mxu0 %v1781
      %2008 = vmatprep.subr.mxu0 %v1784
      %2009 = vmatpush1.msra.mxu0 %v1783
      %2010 = vmatprep.subr.mxu0 %v1786
      %2011 = vmatpush1.msra.mxu0 %v1785
      %2012 = vmatprep.subr.mxu0 %v1788
      %2013 = vmatpush1.msra.mxu0 %v1787
      %2014 = vmatprep.subr.mxu0 %v1790
      %2015 = vmatpush1.msra.mxu0 %v1789
      %2016 = vmatprep.subr.mxu0 %v1792
      %2017 = vmatpush1.msra.mxu0 %v1791
      %2018 = vmatprep.subr.mxu0 %v1794
      %2019 = vmatpush1.msra.mxu0 %v1793
      %2020 = vmatprep.subr.mxu0 %v1796
      %2021 = vmatpush1.msra.mxu0 %v1795
      %2022 = vmatprep.subr.mxu0 %v1798
      %2023 = vmatpush1.msra.mxu0 %v1797
      %2024 = vmatprep.subr.mxu0 %v1800
      %2025 = vmatpush1.msra.mxu0 %v1799
      %2026 = vmatprep.subr.mxu0 %v1802
      %2027 = vmatpush1.msra.mxu0 %v1801
      %2028 = vmatprep.subr.mxu0 %v1804
      %2029 = vmatpush1.msra.mxu0 %v1803
      %2030 = vmatprep.subr.mxu0 %v1806
      %2031 = vmatpush1.msra.mxu0 %v1805
      %2032 = vmatprep.subr.mxu0 %v1808
      %2033 = vmatpush1.msra.mxu0 %v1807
      %2034 = vmatprep.subr.mxu0 %v1810
      %2035 = vmatpush1.msra.mxu0 %v1809
      %2036 = vmatprep.subr.mxu0 %v1812
      %2037 = vmatpush1.msra.mxu0 %v1811
      %2038 = vmatprep.subr.mxu0 %v1814
      %2039 = vmatpush1.msra.mxu0 %v1813
      %2040 = vmatprep.subr.mxu0 %v1816
      %2041 = vmatpush1.msra.mxu0 %v1815
      %2042 = vmatprep.subr.mxu0 0.0
      %2043 = vmatpush1.msra.mxu0 0.0
      %2044 = vmatprep.subr.mxu0 0.0
      %2045 = vmatpush1.msra.mxu0 0.0
      %2046 = vmatprep.subr.mxu0 0.0
      %2047 = vmatpush1.msra.mxu0 0.0
      %2048 = vmatprep.subr.mxu0 0.0
      %2049 = vmatpush1.msra.mxu0 0.0
      %2050 = vmatprep.subr.mxu0 0.0
      %2051 = vmatpush1.msra.mxu0 0.0
      %2052 = vmatprep.subr.mxu0 0.0
      %2053 = vmatpush1.msra.mxu0 0.0
      %2054 = vmatprep.subr.mxu0 0.0
      %2055 = vmatpush1.msra.mxu0 0.0
      %2056 = vmatprep.subr.mxu0 0.0
      %2057 = vmatpush1.msra.mxu0 0.0
      %2058 = vmatprep.subr.mxu0 0.0
      %2059 = vmatpush1.msra.mxu0 0.0
      %2060 = vmatprep.subr.mxu0 0.0
      %2061 = vmatpush1.msra.mxu0 0.0
      %2062 = vmatprep.subr.mxu0 0.0
      %2063 = vmatpush1.msra.mxu0 0.0
      %2064 = vmatprep.subr.mxu0 0.0
      %2065 = vmatpush1.msra.mxu0 0.0
      %2066 = vmatprep.subr.mxu0 0.0
      %2067 = vmatpush1.msra.mxu0 0.0
      %2068 = vmatprep.subr.mxu0 0.0
      %2069 = vmatpush1.msra.mxu0 0.0
      %2070 = vmatprep.mubr.f32.mxu0 %v1995
      %2071 = vmatmul.mubr.f32.gmra.mrb[0].mxu0 %v1773
      %v2072 = vpop.f32.mrb[0].mxu0
      %v2073 = vadd.f32 %v1972, %v2072
      %v2074 = vpop.f32.mrb[0].mxu0
      %v2075 = vadd.f32 %v1974, %v2074
      %2076 = vmatprep.mubr.f32.mxu0 %v1998
      %2077 = vmatmul.mubr.f32.gmra.mrb[0].mxu0 %v1775
      %v2078 = vpop.f32.mrb[0].mxu0
      %v2079 = vadd.f32 %v1978, %v2078
      %v2080 = vpop.f32.mrb[0].mxu0
      %v2081 = vadd.f32 %v1980, %v2080
      %2082 = vmatprep.mubr.f32.mxu0 %v2001
      %2083 = vmatmul.mubr.f32.gmra.mrb[0].mxu0 %v1777
      %v2084 = vpop.f32.mrb[0].mxu0
      %v2085 = vadd.f32 %v1984, %v2084
      %v2086 = vpop.f32.mrb[0].mxu0
      %v2087 = vadd.f32 %v1986, %v2086
      %2088 = vmatprep.mubr.f32.mxu0 %v2004
      %2089 = vmatmul.mubr.f32.gmra.mrb[0].mxu0 %v1779
      %v2090 = vpop.f32.mrb[0].mxu0
      %v2091 = vadd.f32 %v1990, %v2090
      %v2092 = vpop.f32.mrb[0].mxu0
      %v2093 = vadd.f32 %v1992, %v2092
      %2094 = vdwg.mxu0
      %v2095 = vld [vmem:[#allocation2] sm:$0xfc]
      %v2096 = vld [vmem:[#allocation2 + $0x8] sm:$0xfc]
      %v2097 = vld [vmem:[#allocation2 + $0x40] sm:$0x3]
      %v2098 = vld [vmem:[#allocation2 + $0x48] sm:$0x3]
      %v2099 = vld [vmem:[%s1497] sm:$0xff]
      %v2100 = vld [vmem:[%s1497 + $0x8] sm:$0xff]
      %v2101 = vld [vmem:[%s1497 + $0x10] sm:$0xff]
      %v2102 = vld [vmem:[%s1497 + $0x18] sm:$0xff]
      %2104 = vset.pattern.permute.xlu0 0
      %2105 = vperm.xlu0 %2104, %v2099
      %v2106 = vpop.permute.xlu0 %2105
      %2108 = vset.pattern.permute.xlu0 0
      %2109 = vperm.xlu0 %2108, %v2100
      %v2110 = vpop.permute.xlu0 %2109
      %2112 = vset.pattern.permute.xlu0 0
      %2113 = vperm.xlu0 %2112, %v2101
      %v2114 = vpop.permute.xlu0 %2113
      %2116 = vset.pattern.permute.xlu0 0
      %2117 = vperm.xlu0 %2116, %v2102
      %v2118 = vpop.permute.xlu0 %2117
      %vm2119 = vcmask 1041408
      %v2120 = vrot.slane %v2106, 6
      %v2121 = vrot.slane %v2110, 6
      %v2122 = vsel %vm2119, %v2120, %v2121
      %v2123 = vrot.slane %v2114, 6
      %v2124 = vsel %vm2119, %v2121, %v2123
      %v2125 = vrot.slane %v2118, 6
      %v2126 = vsel %vm2119, %v2123, %v2125
      %v2132 = vmul.f32 %v2095, %v2120
      %v2133 = vmul.f32 %v2096, %v2120
      %v2134 = vmul.f32 %v1819, %v2122
      %v2135 = vmul.f32 %v1820, %v2122
      %v2136 = vmul.f32 %v1821, %v2124
      %v2137 = vmul.f32 %v1822, %v2124
      %v2138 = vmul.f32 %v1823, %v2126
      %v2139 = vmul.f32 %v1824, %v2126
      %v2140 = vmul.f32 %v2097, %v2125
      %v2141 = vmul.f32 %v2098, %v2125
      %s2142 = scalar_lea.vmem %s1156, 576
      %v2143 = vld [vmem:[%s2142] sm:$0xff]
      %v2144 = vld [vmem:[%s2142 + $0x8] sm:$0xff]
      %v2145 = vld [vmem:[%s2142 + $0x10] sm:$0xff]
      %v2146 = vld [vmem:[%s2142 + $0x18] sm:$0xff]
      %v2147 = vld [vmem:[%s2142 + $0x20] sm:$0xff]
      %v2148 = vld [vmem:[%s2142 + $0x28] sm:$0xff]
      %v2149 = vld [vmem:[%s2142 + $0x30] sm:$0xff]
      %v2150 = vld [vmem:[%s2142 + $0x38] sm:$0xff]
      %v2151 = vld [vmem:[%s2142 + $0x40] sm:$0xff]
      %v2152 = vld [vmem:[%s2142 + $0x48] sm:$0xff]
      %v2153 = vld [vmem:[%s2142 + $0x50] sm:$0xff]
      %v2154 = vld [vmem:[%s2142 + $0x58] sm:$0xff]
      %v2155 = vld [vmem:[%s2142 + $0x60] sm:$0xff]
      %v2156 = vld [vmem:[%s2142 + $0x68] sm:$0xff]
      %v2157 = vld [vmem:[%s2142 + $0x70] sm:$0xff]
      %v2158 = vld [vmem:[%s2142 + $0x78] sm:$0xff]
      %v2159 = vld [vmem:[%s2142 + $0x80] sm:$0xff]
      %v2160 = vld [vmem:[%s2142 + $0x88] sm:$0xff]
      %v2161 = vld [vmem:[%s2142 + $0x90] sm:$0xff]
      %v2162 = vld [vmem:[%s2142 + $0x98] sm:$0xff]
      %v2163 = vld [vmem:[%s2142 + $0xa0] sm:$0xff]
      %v2164 = vld [vmem:[%s2142 + $0xa8] sm:$0xff]
      %v2165 = vld [vmem:[%s2142 + $0xb0] sm:$0xff]
      %v2166 = vld [vmem:[%s2142 + $0xb8] sm:$0xff]
      %v2167 = vld [vmem:[%s2142 + $0xc0] sm:$0xff]
      %v2168 = vld [vmem:[%s2142 + $0xc8] sm:$0xff]
      %v2169 = vld [vmem:[%s2142 + $0xd0] sm:$0xff]
      %v2170 = vld [vmem:[%s2142 + $0xd8] sm:$0xff]
      %v2171 = vld [vmem:[%s2142 + $0xe0] sm:$0xff]
      %v2172 = vld [vmem:[%s2142 + $0xe8] sm:$0xff]
      %v2173 = vld [vmem:[%s2142 + $0xf0] sm:$0xff]
      %v2174 = vld [vmem:[%s2142 + $0xf8] sm:$0xff]
      %v2175 = vld [vmem:[%s2142 + $0x100] sm:$0xff]
      %v2176 = vld [vmem:[%s2142 + $0x108] sm:$0xff]
      %v2177 = vld [vmem:[%s2142 + $0x110] sm:$0xff]
      %v2178 = vld [vmem:[%s2142 + $0x118] sm:$0xff]
      %v2189 = vrot.slane %v2132, 2
      %v2190 = vrot.slane %v2134, 2
      %v2191 = vsel %vm1290, %v2189, %v2190
      %v2192 = vrot.slane %v2133, 2
      %v2193 = vrot.slane %v2135, 2
      %v2194 = vsel %vm1290, %v2192, %v2193
      %v2195 = vrot.slane %v2136, 2
      %v2196 = vsel %vm1290, %v2190, %v2195
      %v2197 = vrot.slane %v2137, 2
      %v2198 = vsel %vm1290, %v2193, %v2197
      %v2199 = vrot.slane %v2138, 2
      %v2200 = vsel %vm1290, %v2195, %v2199
      %v2201 = vrot.slane %v2139, 2
      %v2202 = vsel %vm1290, %v2197, %v2201
      %v2203 = vrot.slane %v2140, 2
      %v2204 = vsel %vm1290, %v2199, %v2203
      %v2205 = vrot.slane %v2141, 2
      %v2206 = vsel %vm1290, %v2201, %v2205
      %v2211 = vsel %vm1685, %v2194, 0
      %v2213 = vsel %vm1685, %v2198, 0
      %v2215 = vsel %vm1685, %v2202, 0
      %v2217 = vsel %vm1685, %v2206, 0
      %2219 = vmatprep.subr.mxu0 %v2144
      %2220 = vmatpush1.msra.mxu0 %v2143
      %2221 = vmatprep.subr.mxu0 %v2146
      %2222 = vmatpush1.msra.mxu0 %v2145
      %2223 = vmatprep.subr.mxu0 %v2148
      %2224 = vmatpush1.msra.mxu0 %v2147
      %2225 = vmatprep.subr.mxu0 %v2150
      %2226 = vmatpush1.msra.mxu0 %v2149
      %2227 = vmatprep.subr.mxu0 %v2152
      %2228 = vmatpush1.msra.mxu0 %v2151
      %2229 = vmatprep.subr.mxu0 %v2154
      %2230 = vmatpush1.msra.mxu0 %v2153
      %2231 = vmatprep.subr.mxu0 %v2156
      %2232 = vmatpush1.msra.mxu0 %v2155
      %2233 = vmatprep.subr.mxu0 %v2158
      %2234 = vmatpush1.msra.mxu0 %v2157
      %2235 = vmatprep.subr.mxu0 %v2160
      %2236 = vmatpush1.msra.mxu0 %v2159
      %2237 = vmatprep.subr.mxu0 %v2162
      %2238 = vmatpush1.msra.mxu0 %v2161
      %2239 = vmatprep.subr.mxu0 %v2164
      %2240 = vmatpush1.msra.mxu0 %v2163
      %2241 = vmatprep.subr.mxu0 %v2166
      %2242 = vmatpush1.msra.mxu0 %v2165
      %2243 = vmatprep.subr.mxu0 %v2168
      %2244 = vmatpush1.msra.mxu0 %v2167
      %2245 = vmatprep.subr.mxu0 %v2170
      %2246 = vmatpush1.msra.mxu0 %v2169
      %2247 = vmatprep.subr.mxu0 %v2172
      %2248 = vmatpush1.msra.mxu0 %v2171
      %2249 = vmatprep.subr.mxu0 %v2174
      %2250 = vmatpush1.msra.mxu0 %v2173
      %2251 = vmatprep.subr.mxu0 %v2176
      %2252 = vmatpush1.msra.mxu0 %v2175
      %2253 = vmatprep.subr.mxu0 %v2178
      %2254 = vmatpush1.msra.mxu0 %v2177
      %2255 = vmatprep.subr.mxu0 0.0
      %2256 = vmatpush1.msra.mxu0 0.0
      %2257 = vmatprep.subr.mxu0 0.0
      %2258 = vmatpush1.msra.mxu0 0.0
      %2259 = vmatprep.subr.mxu0 0.0
      %2260 = vmatpush1.msra.mxu0 0.0
      %2261 = vmatprep.subr.mxu0 0.0
      %2262 = vmatpush1.msra.mxu0 0.0
      %2263 = vmatprep.subr.mxu0 0.0
      %2264 = vmatpush1.msra.mxu0 0.0
      %2265 = vmatprep.subr.mxu0 0.0
      %2266 = vmatpush1.msra.mxu0 0.0
      %2267 = vmatprep.subr.mxu0 0.0
      %2268 = vmatpush1.msra.mxu0 0.0
      %2269 = vmatprep.subr.mxu0 0.0
      %2270 = vmatpush1.msra.mxu0 0.0
      %2271 = vmatprep.subr.mxu0 0.0
      %2272 = vmatpush1.msra.mxu0 0.0
      %2273 = vmatprep.subr.mxu0 0.0
      %2274 = vmatpush1.msra.mxu0 0.0
      %2275 = vmatprep.subr.mxu0 0.0
      %2276 = vmatpush1.msra.mxu0 0.0
      %2277 = vmatprep.subr.mxu0 0.0
      %2278 = vmatpush1.msra.mxu0 0.0
      %2279 = vmatprep.subr.mxu0 0.0
      %2280 = vmatpush1.msra.mxu0 0.0
      %2281 = vmatprep.subr.mxu0 0.0
      %2282 = vmatpush1.msra.mxu0 0.0
      %2283 = vmatprep.mubr.f32.mxu0 %v2211
      %2284 = vmatmul.mubr.f32.gmra.mrb[0].mxu0 %v2191
      %v2285 = vpop.f32.mrb[0].mxu0
      %v2286 = vadd.f32 0.0, %v2285
      %v2287 = vpop.f32.mrb[0].mxu0
      %v2288 = vadd.f32 0.0, %v2287
      %2289 = vmatprep.mubr.f32.mxu0 %v2213
      %2290 = vmatmul.mubr.f32.gmra.mrb[0].mxu0 %v2196
      %v2291 = vpop.f32.mrb[0].mxu0
      %v2292 = vadd.f32 0.0, %v2291
      %v2293 = vpop.f32.mrb[0].mxu0
      %v2294 = vadd.f32 0.0, %v2293
      %2295 = vmatprep.mubr.f32.mxu0 %v2215
      %2296 = vmatmul.mubr.f32.gmra.mrb[0].mxu0 %v2200
      %v2297 = vpop.f32.mrb[0].mxu0
      %v2298 = vadd.f32 0.0, %v2297
      %v2299 = vpop.f32.mrb[0].mxu0
      %v2300 = vadd.f32 0.0, %v2299
      %2301 = vmatprep.mubr.f32.mxu0 %v2217
      %2302 = vmatmul.mubr.f32.gmra.mrb[0].mxu0 %v2204
      %v2303 = vpop.f32.mrb[0].mxu0
      %v2304 = vadd.f32 0.0, %v2303
      %v2305 = vpop.f32.mrb[0].mxu0
      %v2306 = vadd.f32 0.0, %v2305
      %2307 = vdwg.mxu0
      %v2308 = vadd.f32 %v2073, %v2286
      %v2309 = vadd.f32 %v2075, %v2288
      %v2310 = vadd.f32 %v2079, %v2292
      %v2311 = vadd.f32 %v2081, %v2294
      %v2312 = vadd.f32 %v2085, %v2298
      %v2313 = vadd.f32 %v2087, %v2300
      %v2314 = vadd.f32 %v2091, %v2304
      %v2315 = vadd.f32 %v2093, %v2306
      %v2316 = vld [vmem:[%s1160] sm:$0x3]
      %v2318 = vlaneseq
      %v2319 = vshrl.u32 %v2318, 7
      %v2320 = vsub.s32 0, %v2319
      %v2321 = vrot.slane %v2316, %v2320
      %v2322 = vlaneseq
      %v2323 = vshrl.u32 %v2322, 7
      %v2324 = vsub.s32 1, %v2323
      %v2325 = vrot.slane %v2316, %v2324
      %v2328 = vadd.f32 %v2308, %v2321
      %v2329 = vadd.f32 %v2309, %v2325
      %v2330 = vadd.f32 %v2310, %v2321
      %v2331 = vadd.f32 %v2311, %v2325
      %v2332 = vadd.f32 %v2312, %v2321
      %v2333 = vadd.f32 %v2313, %v2325
      %v2334 = vadd.f32 %v2314, %v2321
      %v2335 = vadd.f32 %v2315, %v2325
      %v2336 = vmax.f32 %v2328, 0.0
      %v2337 = vmax.f32 %v2329, 0.0
      %v2338 = vmax.f32 %v2330, 0.0
      %v2339 = vmax.f32 %v2331, 0.0
      %v2340 = vmax.f32 %v2332, 0.0
      %v2341 = vmax.f32 %v2333, 0.0
      %v2342 = vmax.f32 %v2334, 0.0
      %v2343 = vmax.f32 %v2335, 0.0
      %2344 = vst [vmem:[#allocation3] sm:$0xff] 0.0
      %2345 = vst.msk [vmem:[#allocation3 + $0x8] sm:$0xff] %vm1685, 0.0
      %2346 = vst [vmem:[#allocation3 + $0x10] sm:$0xff] 0.0
      %2347 = vst.msk [vmem:[#allocation3 + $0x18] sm:$0xff] %vm1685, 0.0
      %2348 = vst [vmem:[#allocation3 + $0x20] sm:$0xff] 0.0
      %2349 = vst.msk [vmem:[#allocation3 + $0x28] sm:$0xff] %vm1685, 0.0
      %2350 = vst [vmem:[#allocation3 + $0x30] sm:$0xff] 0.0
      %2351 = vst.msk [vmem:[#allocation3 + $0x38] sm:$0xff] %vm1685, 0.0
      %2352 = vst [vmem:[#allocation3 + $0x40] sm:$0x3] 0.0
      %2353 = vst.msk [vmem:[#allocation3 + $0x48] sm:$0x3] %vm1694, 0.0
      %v2362 = vrot.slane %v2336, 7
      %v2363 = vrot.slane %v2337, 7
      %v2364 = vrot.slane %v2338, 7
      %v2365 = vsel %vm1704, %v2362, %v2364
      %v2366 = vrot.slane %v2339, 7
      %v2367 = vsel %vm1704, %v2363, %v2366
      %v2368 = vrot.slane %v2340, 7
      %v2369 = vsel %vm1704, %v2364, %v2368
      %v2370 = vrot.slane %v2341, 7
      %v2371 = vsel %vm1704, %v2366, %v2370
      %v2372 = vrot.slane %v2342, 7
      %v2373 = vsel %vm1704, %v2368, %v2372
      %v2374 = vrot.slane %v2343, 7
      %v2375 = vsel %vm1704, %v2370, %v2374
      %2386 = vst [vmem:[#allocation3] sm:$0xfe] %v2362
      %2387 = vst.msk [vmem:[#allocation3 + $0x8] sm:$0xfe] %vm1730, %v2363
      %2388 = vst [vmem:[#allocation3 + $0x10] sm:$0xff] %v2365
      %2389 = vst.msk [vmem:[#allocation3 + $0x18] sm:$0xff] %vm1685, %v2367
      %2390 = vst [vmem:[#allocation3 + $0x20] sm:$0xff] %v2369
      %2391 = vst.msk [vmem:[#allocation3 + $0x28] sm:$0xff] %vm1685, %v2371
      %2392 = vst [vmem:[#allocation3 + $0x30] sm:$0xff] %v2373
      %2393 = vst.msk [vmem:[#allocation3 + $0x38] sm:$0xff] %vm1685, %v2375
      %2394 = vst [vmem:[#allocation3 + $0x40] sm:$0x1] %v2372
      %2395 = vst.msk [vmem:[#allocation3 + $0x48] sm:$0x1] %vm1739, %v2374
      %v2396 = vld [vmem:[#allocation3] sm:$0xff]
      %v2397 = vld [vmem:[#allocation3 + $0x8] sm:$0xff]
      %v2398 = vld [vmem:[#allocation3 + $0x10] sm:$0xff]
      %v2399 = vld [vmem:[#allocation3 + $0x18] sm:$0xff]
      %v2400 = vld [vmem:[#allocation3 + $0x20] sm:$0xff]
      %v2401 = vld [vmem:[#allocation3 + $0x28] sm:$0xff]
      %v2402 = vld [vmem:[#allocation3 + $0x30] sm:$0xff]
      %v2403 = vld [vmem:[#allocation3 + $0x38] sm:$0xff]
      %v2404 = vld [vmem:[%s27] sm:$0xff]
      %v2405 = vld [vmem:[%s27 + $0x8] sm:$0xff]
      %v2406 = vld [vmem:[%s27 + $0x10] sm:$0xff]
      %v2407 = vld [vmem:[%s27 + $0x18] sm:$0xff]
      %2409 = vset.pattern.permute.xlu0 0
      %2410 = vperm.xlu0 %2409, %v2404
      %v2411 = vpop.permute.xlu0 %2410
      %2414 = vset.pattern.permute.xlu0 0
      %2415 = vperm.xlu0 %2414, %v2405
      %v2416 = vpop.permute.xlu0 %2415
      %2419 = vset.pattern.permute.xlu0 0
      %2420 = vperm.xlu0 %2419, %v2406
      %v2421 = vpop.permute.xlu0 %2420
      %2424 = vset.pattern.permute.xlu0 0
      %2425 = vperm.xlu0 %2424, %v2407
      %v2426 = vpop.permute.xlu0 %2425
      %v2428 = vmul.f32 %v2396, %v2411
      %v2429 = vmul.f32 %v2397, %v2411
      %v2430 = vmul.f32 %v2398, %v2416
      %v2431 = vmul.f32 %v2399, %v2416
      %v2432 = vmul.f32 %v2400, %v2421
      %v2433 = vmul.f32 %v2401, %v2421
      %v2434 = vmul.f32 %v2402, %v2426
      %v2435 = vmul.f32 %v2403, %v2426
      %v2436 = vld [vmem:[%s1165] sm:$0xff]
      %v2437 = vld [vmem:[%s1165 + $0x8] sm:$0xff]
      %v2438 = vld [vmem:[%s1165 + $0x10] sm:$0xff]
      %v2439 = vld [vmem:[%s1165 + $0x18] sm:$0xff]
      %v2440 = vld [vmem:[%s1165 + $0x20] sm:$0xff]
      %v2441 = vld [vmem:[%s1165 + $0x28] sm:$0xff]
      %v2442 = vld [vmem:[%s1165 + $0x30] sm:$0xff]
      %v2443 = vld [vmem:[%s1165 + $0x38] sm:$0xff]
      %v2444 = vld [vmem:[%s1165 + $0x40] sm:$0xff]
      %v2445 = vld [vmem:[%s1165 + $0x48] sm:$0xff]
      %v2446 = vld [vmem:[%s1165 + $0x50] sm:$0xff]
      %v2447 = vld [vmem:[%s1165 + $0x58] sm:$0xff]
      %v2448 = vld [vmem:[%s1165 + $0x60] sm:$0xff]
      %v2449 = vld [vmem:[%s1165 + $0x68] sm:$0xff]
      %v2450 = vld [vmem:[%s1165 + $0x70] sm:$0xff]
      %v2451 = vld [vmem:[%s1165 + $0x78] sm:$0xff]
      %v2452 = vld [vmem:[%s1165 + $0x80] sm:$0xff]
      %v2453 = vld [vmem:[%s1165 + $0x88] sm:$0xff]
      %v2454 = vld [vmem:[#allocation3] sm:$0xfe]
      %v2455 = vld [vmem:[#allocation3 + $0x8] sm:$0xfe]
      %v2456 = vld [vmem:[#allocation3 + $0x10] sm:$0xff]
      %v2457 = vld [vmem:[#allocation3 + $0x18] sm:$0xff]
      %v2458 = vld [vmem:[#allocation3 + $0x20] sm:$0xff]
      %v2459 = vld [vmem:[#allocation3 + $0x28] sm:$0xff]
      %v2460 = vld [vmem:[#allocation3 + $0x30] sm:$0xff]
      %v2461 = vld [vmem:[#allocation3 + $0x38] sm:$0xff]
      %v2462 = vld [vmem:[#allocation3 + $0x40] sm:$0x1]
      %v2463 = vld [vmem:[#allocation3 + $0x48] sm:$0x1]
      %s2464 = scalar_lea.vmem %s1165, 144
      %v2465 = vld [vmem:[%s2464] sm:$0xff]
      %v2466 = vld [vmem:[%s2464 + $0x8] sm:$0xff]
      %v2467 = vld [vmem:[%s2464 + $0x10] sm:$0xff]
      %v2468 = vld [vmem:[%s2464 + $0x18] sm:$0xff]
      %v2469 = vld [vmem:[%s2464 + $0x20] sm:$0xff]
      %v2470 = vld [vmem:[%s2464 + $0x28] sm:$0xff]
      %v2471 = vld [vmem:[%s2464 + $0x30] sm:$0xff]
      %v2472 = vld [vmem:[%s2464 + $0x38] sm:$0xff]
      %v2473 = vld [vmem:[%s2464 + $0x40] sm:$0xff]
      %v2474 = vld [vmem:[%s2464 + $0x48] sm:$0xff]
      %v2475 = vld [vmem:[%s2464 + $0x50] sm:$0xff]
      %v2476 = vld [vmem:[%s2464 + $0x58] sm:$0xff]
      %v2477 = vld [vmem:[%s2464 + $0x60] sm:$0xff]
      %v2478 = vld [vmem:[%s2464 + $0x68] sm:$0xff]
      %v2479 = vld [vmem:[%s2464 + $0x70] sm:$0xff]
      %v2480 = vld [vmem:[%s2464 + $0x78] sm:$0xff]
      %v2481 = vld [vmem:[%s2464 + $0x80] sm:$0xff]
      %v2482 = vld [vmem:[%s2464 + $0x88] sm:$0xff]
      %v2493 = vrot.slane %v2454, 1
      %v2494 = vrot.slane %v2456, 1
      %v2495 = vsel %vm1874, %v2493, %v2494
      %v2496 = vrot.slane %v2455, 1
      %v2497 = vrot.slane %v2457, 1
      %v2498 = vsel %vm1874, %v2496, %v2497
      %v2499 = vrot.slane %v2458, 1
      %v2500 = vsel %vm1874, %v2494, %v2499
      %v2501 = vrot.slane %v2459, 1
      %v2502 = vsel %vm1874, %v2497, %v2501
      %v2503 = vrot.slane %v2460, 1
      %v2504 = vsel %vm1874, %v2499, %v2503
      %v2505 = vrot.slane %v2461, 1
      %v2506 = vsel %vm1874, %v2501, %v2505
      %v2507 = vrot.slane %v2462, 1
      %v2508 = vsel %vm1874, %v2503, %v2507
      %v2509 = vrot.slane %v2463, 1
      %v2510 = vsel %vm1874, %v2505, %v2509
      %v2515 = vsel %vm1685, %v2498, 0
      %v2517 = vsel %vm1685, %v2502, 0
      %v2519 = vsel %vm1685, %v2506, 0
      %v2521 = vsel %vm1685, %v2510, 0
      %2523 = vmatprep.subr.mxu0 0.0
      %2524 = vmatpush1.msra.mxu0 %v2465
      %2525 = vmatprep.subr.mxu0 0.0
      %2526 = vmatpush1.msra.mxu0 %v2466
      %2527 = vmatprep.subr.mxu0 0.0
      %2528 = vmatpush1.msra.mxu0 %v2467
      %2529 = vmatprep.subr.mxu0 0.0
      %2530 = vmatpush1.msra.mxu0 %v2468
      %2531 = vmatprep.subr.mxu0 0.0
      %2532 = vmatpush1.msra.mxu0 %v2469
      %2533 = vmatprep.subr.mxu0 0.0
      %2534 = vmatpush1.msra.mxu0 %v2470
      %2535 = vmatprep.subr.mxu0 0.0
      %2536 = vmatpush1.msra.mxu0 %v2471
      %2537 = vmatprep.subr.mxu0 0.0
      %2538 = vmatpush1.msra.mxu0 %v2472
      %2539 = vmatprep.subr.mxu0 0.0
      %2540 = vmatpush1.msra.mxu0 %v2473
      %2541 = vmatprep.subr.mxu0 0.0
      %2542 = vmatpush1.msra.mxu0 %v2474
      %2543 = vmatprep.subr.mxu0 0.0
      %2544 = vmatpush1.msra.mxu0 %v2475
      %2545 = vmatprep.subr.mxu0 0.0
      %2546 = vmatpush1.msra.mxu0 %v2476
      %2547 = vmatprep.subr.mxu0 0.0
      %2548 = vmatpush1.msra.mxu0 %v2477
      %2549 = vmatprep.subr.mxu0 0.0
      %2550 = vmatpush1.msra.mxu0 %v2478
      %2551 = vmatprep.subr.mxu0 0.0
      %2552 = vmatpush1.msra.mxu0 %v2479
      %2553 = vmatprep.subr.mxu0 0.0
      %2554 = vmatpush1.msra.mxu0 %v2480
      %2555 = vmatprep.subr.mxu0 0.0
      %2556 = vmatpush1.msra.mxu0 %v2481
      %2557 = vmatprep.subr.mxu0 0.0
      %2558 = vmatpush1.msra.mxu0 %v2482
      %2559 = vmatprep.subr.mxu0 0.0
      %2560 = vmatpush1.msra.mxu0 0.0
      %2561 = vmatprep.subr.mxu0 0.0
      %2562 = vmatpush1.msra.mxu0 0.0
      %2563 = vmatprep.subr.mxu0 0.0
      %2564 = vmatpush1.msra.mxu0 0.0
      %2565 = vmatprep.subr.mxu0 0.0
      %2566 = vmatpush1.msra.mxu0 0.0
      %2567 = vmatprep.subr.mxu0 0.0
      %2568 = vmatpush1.msra.mxu0 0.0
      %2569 = vmatprep.subr.mxu0 0.0
      %2570 = vmatpush1.msra.mxu0 0.0
      %2571 = vmatprep.subr.mxu0 0.0
      %2572 = vmatpush1.msra.mxu0 0.0
      %2573 = vmatprep.subr.mxu0 0.0
      %2574 = vmatpush1.msra.mxu0 0.0
      %2575 = vmatprep.subr.mxu0 0.0
      %2576 = vmatpush1.msra.mxu0 0.0
      %2577 = vmatprep.subr.mxu0 0.0
      %2578 = vmatpush1.msra.mxu0 0.0
      %2579 = vmatprep.subr.mxu0 0.0
      %2580 = vmatpush1.msra.mxu0 0.0
      %2581 = vmatprep.subr.mxu0 0.0
      %2582 = vmatpush1.msra.mxu0 0.0
      %2583 = vmatprep.subr.mxu0 0.0
      %2584 = vmatpush1.msra.mxu0 0.0
      %2585 = vmatprep.subr.mxu0 0.0
      %2586 = vmatpush1.msra.mxu0 0.0
      %2587 = vmatprep.mubr.f32.mxu0 %v2515
      %2588 = vmatmul.mubr.f32.gmra.mrb[0].mxu0 %v2495
      %v2589 = vpop.f32.mrb[0].mxu0
      %v2590 = vadd.f32 0.0, %v2589
      %v2591 = vpop.f32.mrb[0].mxu0
      %2592 = vmatprep.mubr.f32.mxu0 %v2517
      %2593 = vmatmul.mubr.f32.gmra.mrb[0].mxu0 %v2500
      %v2594 = vpop.f32.mrb[0].mxu0
      %v2595 = vadd.f32 0.0, %v2594
      %v2596 = vpop.f32.mrb[0].mxu0
      %2597 = vmatprep.mubr.f32.mxu0 %v2519
      %2598 = vmatmul.mubr.f32.gmra.mrb[0].mxu0 %v2504
      %v2599 = vpop.f32.mrb[0].mxu0
      %v2600 = vadd.f32 0.0, %v2599
      %v2601 = vpop.f32.mrb[0].mxu0
      %2602 = vmatprep.mubr.f32.mxu0 %v2521
      %2603 = vmatmul.mubr.f32.gmra.mrb[0].mxu0 %v2508
      %v2604 = vpop.f32.mrb[0].mxu0
      %v2605 = vadd.f32 0.0, %v2604
      %v2606 = vpop.f32.mrb[0].mxu0
      %2607 = vdwg.mxu0
      %v2609 = vsel %vm1685, %v2429, 0
      %v2612 = vsel %vm1685, %v2431, 0
      %v2615 = vsel %vm1685, %v2433, 0
      %v2618 = vsel %vm1685, %v2435, 0
      %2620 = vmatprep.subr.mxu0 0.0
      %2621 = vmatpush1.msra.mxu0 %v2436
      %2622 = vmatprep.subr.mxu0 0.0
      %2623 = vmatpush1.msra.mxu0 %v2437
      %2624 = vmatprep.subr.mxu0 0.0
      %2625 = vmatpush1.msra.mxu0 %v2438
      %2626 = vmatprep.subr.mxu0 0.0
      %2627 = vmatpush1.msra.mxu0 %v2439
      %2628 = vmatprep.subr.mxu0 0.0
      %2629 = vmatpush1.msra.mxu0 %v2440
      %2630 = vmatprep.subr.mxu0 0.0
      %2631 = vmatpush1.msra.mxu0 %v2441
      %2632 = vmatprep.subr.mxu0 0.0
      %2633 = vmatpush1.msra.mxu0 %v2442
      %2634 = vmatprep.subr.mxu0 0.0
      %2635 = vmatpush1.msra.mxu0 %v2443
      %2636 = vmatprep.subr.mxu0 0.0
      %2637 = vmatpush1.msra.mxu0 %v2444
      %2638 = vmatprep.subr.mxu0 0.0
      %2639 = vmatpush1.msra.mxu0 %v2445
      %2640 = vmatprep.subr.mxu0 0.0
      %2641 = vmatpush1.msra.mxu0 %v2446
      %2642 = vmatprep.subr.mxu0 0.0
      %2643 = vmatpush1.msra.mxu0 %v2447
      %2644 = vmatprep.subr.mxu0 0.0
      %2645 = vmatpush1.msra.mxu0 %v2448
      %2646 = vmatprep.subr.mxu0 0.0
      %2647 = vmatpush1.msra.mxu0 %v2449
      %2648 = vmatprep.subr.mxu0 0.0
      %2649 = vmatpush1.msra.mxu0 %v2450
      %2650 = vmatprep.subr.mxu0 0.0
      %2651 = vmatpush1.msra.mxu0 %v2451
      %2652 = vmatprep.subr.mxu0 0.0
      %2653 = vmatpush1.msra.mxu0 %v2452
      %2654 = vmatprep.subr.mxu0 0.0
      %2655 = vmatpush1.msra.mxu0 %v2453
      %2656 = vmatprep.subr.mxu0 0.0
      %2657 = vmatpush1.msra.mxu0 0.0
      %2658 = vmatprep.subr.mxu0 0.0
      %2659 = vmatpush1.msra.mxu0 0.0
      %2660 = vmatprep.subr.mxu0 0.0
      %2661 = vmatpush1.msra.mxu0 0.0
      %2662 = vmatprep.subr.mxu0 0.0
      %2663 = vmatpush1.msra.mxu0 0.0
      %2664 = vmatprep.subr.mxu0 0.0
      %2665 = vmatpush1.msra.mxu0 0.0
      %2666 = vmatprep.subr.mxu0 0.0
      %2667 = vmatpush1.msra.mxu0 0.0
      %2668 = vmatprep.subr.mxu0 0.0
      %2669 = vmatpush1.msra.mxu0 0.0
      %2670 = vmatprep.subr.mxu0 0.0
      %2671 = vmatpush1.msra.mxu0 0.0
      %2672 = vmatprep.subr.mxu0 0.0
      %2673 = vmatpush1.msra.mxu0 0.0
      %2674 = vmatprep.subr.mxu0 0.0
      %2675 = vmatpush1.msra.mxu0 0.0
      %2676 = vmatprep.subr.mxu0 0.0
      %2677 = vmatpush1.msra.mxu0 0.0
      %2678 = vmatprep.subr.mxu0 0.0
      %2679 = vmatpush1.msra.mxu0 0.0
      %2680 = vmatprep.subr.mxu0 0.0
      %2681 = vmatpush1.msra.mxu0 0.0
      %2682 = vmatprep.subr.mxu0 0.0
      %2683 = vmatpush1.msra.mxu0 0.0
      %2684 = vmatprep.mubr.f32.mxu0 %v2609
      %2685 = vmatmul.mubr.f32.gmra.mrb[0].mxu0 %v2428
      %v2686 = vpop.f32.mrb[0].mxu0
      %v2687 = vadd.f32 %v2590, %v2686
      %v2688 = vpop.f32.mrb[0].mxu0
      %2689 = vmatprep.mubr.f32.mxu0 %v2612
      %2690 = vmatmul.mubr.f32.gmra.mrb[0].mxu0 %v2430
      %v2691 = vpop.f32.mrb[0].mxu0
      %v2692 = vadd.f32 %v2595, %v2691
      %v2693 = vpop.f32.mrb[0].mxu0
      %2694 = vmatprep.mubr.f32.mxu0 %v2615
      %2695 = vmatmul.mubr.f32.gmra.mrb[0].mxu0 %v2432
      %v2696 = vpop.f32.mrb[0].mxu0
      %v2697 = vadd.f32 %v2600, %v2696
      %v2698 = vpop.f32.mrb[0].mxu0
      %2699 = vmatprep.mubr.f32.mxu0 %v2618
      %2700 = vmatmul.mubr.f32.gmra.mrb[0].mxu0 %v2434
      %v2701 = vpop.f32.mrb[0].mxu0
      %v2702 = vadd.f32 %v2605, %v2701
      %v2703 = vpop.f32.mrb[0].mxu0
      %2704 = vdwg.mxu0
      %v2705 = vld [vmem:[#allocation3] sm:$0xfc]
      %v2706 = vld [vmem:[#allocation3 + $0x8] sm:$0xfc]
      %v2707 = vld [vmem:[#allocation3 + $0x40] sm:$0x3]
      %v2708 = vld [vmem:[#allocation3 + $0x48] sm:$0x3]
      %v2709 = vld [vmem:[%s1497] sm:$0xff]
      %v2710 = vld [vmem:[%s1497 + $0x8] sm:$0xff]
      %v2711 = vld [vmem:[%s1497 + $0x10] sm:$0xff]
      %v2712 = vld [vmem:[%s1497 + $0x18] sm:$0xff]
      %2714 = vset.pattern.permute.xlu0 0
      %2715 = vperm.xlu0 %2714, %v2709
      %v2716 = vpop.permute.xlu0 %2715
      %2718 = vset.pattern.permute.xlu0 0
      %2719 = vperm.xlu0 %2718, %v2710
      %v2720 = vpop.permute.xlu0 %2719
      %2722 = vset.pattern.permute.xlu0 0
      %2723 = vperm.xlu0 %2722, %v2711
      %v2724 = vpop.permute.xlu0 %2723
      %2726 = vset.pattern.permute.xlu0 0
      %2727 = vperm.xlu0 %2726, %v2712
      %v2728 = vpop.permute.xlu0 %2727
      %v2729 = vrot.slane %v2716, 6
      %v2730 = vrot.slane %v2720, 6
      %v2731 = vsel %vm2119, %v2729, %v2730
      %v2732 = vrot.slane %v2724, 6
      %v2733 = vsel %vm2119, %v2730, %v2732
      %v2734 = vrot.slane %v2728, 6
      %v2735 = vsel %vm2119, %v2732, %v2734
      %v2741 = vmul.f32 %v2705, %v2729
      %v2742 = vmul.f32 %v2706, %v2729
      %v2743 = vmul.f32 %v2456, %v2731
      %v2744 = vmul.f32 %v2457, %v2731
      %v2745 = vmul.f32 %v2458, %v2733
      %v2746 = vmul.f32 %v2459, %v2733
      %v2747 = vmul.f32 %v2460, %v2735
      %v2748 = vmul.f32 %v2461, %v2735
      %v2749 = vmul.f32 %v2707, %v2734
      %v2750 = vmul.f32 %v2708, %v2734
      %s2751 = scalar_lea.vmem %s1165, 288
      %v2752 = vld [vmem:[%s2751] sm:$0xff]
      %v2753 = vld [vmem:[%s2751 + $0x8] sm:$0xff]
      %v2754 = vld [vmem:[%s2751 + $0x10] sm:$0xff]
      %v2755 = vld [vmem:[%s2751 + $0x18] sm:$0xff]
      %v2756 = vld [vmem:[%s2751 + $0x20] sm:$0xff]
      %v2757 = vld [vmem:[%s2751 + $0x28] sm:$0xff]
      %v2758 = vld [vmem:[%s2751 + $0x30] sm:$0xff]
      %v2759 = vld [vmem:[%s2751 + $0x38] sm:$0xff]
      %v2760 = vld [vmem:[%s2751 + $0x40] sm:$0xff]
      %v2761 = vld [vmem:[%s2751 + $0x48] sm:$0xff]
      %v2762 = vld [vmem:[%s2751 + $0x50] sm:$0xff]
      %v2763 = vld [vmem:[%s2751 + $0x58] sm:$0xff]
      %v2764 = vld [vmem:[%s2751 + $0x60] sm:$0xff]
      %v2765 = vld [vmem:[%s2751 + $0x68] sm:$0xff]
      %v2766 = vld [vmem:[%s2751 + $0x70] sm:$0xff]
      %v2767 = vld [vmem:[%s2751 + $0x78] sm:$0xff]
      %v2768 = vld [vmem:[%s2751 + $0x80] sm:$0xff]
      %v2769 = vld [vmem:[%s2751 + $0x88] sm:$0xff]
      %v2780 = vrot.slane %v2741, 2
      %v2781 = vrot.slane %v2743, 2
      %v2782 = vsel %vm1290, %v2780, %v2781
      %v2783 = vrot.slane %v2742, 2
      %v2784 = vrot.slane %v2744, 2
      %v2785 = vsel %vm1290, %v2783, %v2784
      %v2786 = vrot.slane %v2745, 2
      %v2787 = vsel %vm1290, %v2781, %v2786
      %v2788 = vrot.slane %v2746, 2
      %v2789 = vsel %vm1290, %v2784, %v2788
      %v2790 = vrot.slane %v2747, 2
      %v2791 = vsel %vm1290, %v2786, %v2790
      %v2792 = vrot.slane %v2748, 2
      %v2793 = vsel %vm1290, %v2788, %v2792
      %v2794 = vrot.slane %v2749, 2
      %v2795 = vsel %vm1290, %v2790, %v2794
      %v2796 = vrot.slane %v2750, 2
      %v2797 = vsel %vm1290, %v2792, %v2796
      %v2802 = vsel %vm1685, %v2785, 0
      %v2804 = vsel %vm1685, %v2789, 0
      %v2806 = vsel %vm1685, %v2793, 0
      %v2808 = vsel %vm1685, %v2797, 0
      %2810 = vmatprep.subr.mxu0 0.0
      %2811 = vmatpush1.msra.mxu0 %v2752
      %2812 = vmatprep.subr.mxu0 0.0
      %2813 = vmatpush1.msra.mxu0 %v2753
      %2814 = vmatprep.subr.mxu0 0.0
      %2815 = vmatpush1.msra.mxu0 %v2754
      %2816 = vmatprep.subr.mxu0 0.0
      %2817 = vmatpush1.msra.mxu0 %v2755
      %2818 = vmatprep.subr.mxu0 0.0
      %2819 = vmatpush1.msra.mxu0 %v2756
      %2820 = vmatprep.subr.mxu0 0.0
      %2821 = vmatpush1.msra.mxu0 %v2757
      %2822 = vmatprep.subr.mxu0 0.0
      %2823 = vmatpush1.msra.mxu0 %v2758
      %2824 = vmatprep.subr.mxu0 0.0
      %2825 = vmatpush1.msra.mxu0 %v2759
      %2826 = vmatprep.subr.mxu0 0.0
      %2827 = vmatpush1.msra.mxu0 %v2760
      %2828 = vmatprep.subr.mxu0 0.0
      %2829 = vmatpush1.msra.mxu0 %v2761
      %2830 = vmatprep.subr.mxu0 0.0
      %2831 = vmatpush1.msra.mxu0 %v2762
      %2832 = vmatprep.subr.mxu0 0.0
      %2833 = vmatpush1.msra.mxu0 %v2763
      %2834 = vmatprep.subr.mxu0 0.0
      %2835 = vmatpush1.msra.mxu0 %v2764
      %2836 = vmatprep.subr.mxu0 0.0
      %2837 = vmatpush1.msra.mxu0 %v2765
      %2838 = vmatprep.subr.mxu0 0.0
      %2839 = vmatpush1.msra.mxu0 %v2766
      %2840 = vmatprep.subr.mxu0 0.0
      %2841 = vmatpush1.msra.mxu0 %v2767
      %2842 = vmatprep.subr.mxu0 0.0
      %2843 = vmatpush1.msra.mxu0 %v2768
      %2844 = vmatprep.subr.mxu0 0.0
      %2845 = vmatpush1.msra.mxu0 %v2769
      %2846 = vmatprep.subr.mxu0 0.0
      %2847 = vmatpush1.msra.mxu0 0.0
      %2848 = vmatprep.subr.mxu0 0.0
      %2849 = vmatpush1.msra.mxu0 0.0
      %2850 = vmatprep.subr.mxu0 0.0
      %2851 = vmatpush1.msra.mxu0 0.0
      %2852 = vmatprep.subr.mxu0 0.0
      %2853 = vmatpush1.msra.mxu0 0.0
      %2854 = vmatprep.subr.mxu0 0.0
      %2855 = vmatpush1.msra.mxu0 0.0
      %2856 = vmatprep.subr.mxu0 0.0
      %2857 = vmatpush1.msra.mxu0 0.0
      %2858 = vmatprep.subr.mxu0 0.0
      %2859 = vmatpush1.msra.mxu0 0.0
      %2860 = vmatprep.subr.mxu0 0.0
      %2861 = vmatpush1.msra.mxu0 0.0
      %2862 = vmatprep.subr.mxu0 0.0
      %2863 = vmatpush1.msra.mxu0 0.0
      %2864 = vmatprep.subr.mxu0 0.0
      %2865 = vmatpush1.msra.mxu0 0.0
      %2866 = vmatprep.subr.mxu0 0.0
      %2867 = vmatpush1.msra.mxu0 0.0
      %2868 = vmatprep.subr.mxu0 0.0
      %2869 = vmatpush1.msra.mxu0 0.0
      %2870 = vmatprep.subr.mxu0 0.0
      %2871 = vmatpush1.msra.mxu0 0.0
      %2872 = vmatprep.subr.mxu0 0.0
      %2873 = vmatpush1.msra.mxu0 0.0
      %2874 = vmatprep.mubr.f32.mxu0 %v2802
      %2875 = vmatmul.mubr.f32.gmra.mrb[0].mxu0 %v2782
      %v2876 = vpop.f32.mrb[0].mxu0
      %v2877 = vadd.f32 0.0, %v2876
      %v2878 = vpop.f32.mrb[0].mxu0
      %2879 = vmatprep.mubr.f32.mxu0 %v2804
      %2880 = vmatmul.mubr.f32.gmra.mrb[0].mxu0 %v2787
      %v2881 = vpop.f32.mrb[0].mxu0
      %v2882 = vadd.f32 0.0, %v2881
      %v2883 = vpop.f32.mrb[0].mxu0
      %2884 = vmatprep.mubr.f32.mxu0 %v2806
      %2885 = vmatmul.mubr.f32.gmra.mrb[0].mxu0 %v2791
      %v2886 = vpop.f32.mrb[0].mxu0
      %v2887 = vadd.f32 0.0, %v2886
      %v2888 = vpop.f32.mrb[0].mxu0
      %2889 = vmatprep.mubr.f32.mxu0 %v2808
      %2890 = vmatmul.mubr.f32.gmra.mrb[0].mxu0 %v2795
      %v2891 = vpop.f32.mrb[0].mxu0
      %v2892 = vadd.f32 0.0, %v2891
      %v2893 = vpop.f32.mrb[0].mxu0
      %2894 = vdwg.mxu0
      %v2895 = vadd.f32 %v2687, %v2877
      %v2896 = vadd.f32 %v2692, %v2882
      %v2897 = vadd.f32 %v2697, %v2887
      %v2898 = vadd.f32 %v2702, %v2892
      %v2899 = vld [vmem:[%s1168] sm:$0x1]
      %v2901 = vlaneseq
      %v2902 = vshrl.u32 %v2901, 7
      %v2903 = vsub.s32 0, %v2902
      %v2904 = vrot.slane %v2899, %v2903
      %v2906 = vadd.f32 %v2895, %v2904
      %v2907 = vadd.f32 %v2896, %v2904
      %v2908 = vadd.f32 %v2897, %v2904
      %v2909 = vadd.f32 %v2898, %v2904
      %v2910 = vmax.f32 %v2906, 0.0
      %v2911 = vmax.f32 %v2907, 0.0
      %v2912 = vmax.f32 %v2908, 0.0
      %v2913 = vmax.f32 %v2909, 0.0
      %v2914 = vld [vmem:[%s35] sm:$0xff]
      %v2915 = vld [vmem:[%s35 + $0x8] sm:$0xff]
      %vm2916 = vcmask 261120
      %v2918 = vsel %vm2916, %v2914, 0
      %v2921 = vsel %vm2916, %v2915, 0
      %2923 = vmatprep.subr.mxu0 0.0
      %2924 = vmatpush1.msra.mxu0 %v2910
      %2925 = vmatprep.subr.mxu0 0.0
      %2926 = vmatpush1.msra.mxu0 %v2911
      %2927 = vmatprep.subr.mxu0 0.0
      %2928 = vmatpush1.msra.mxu0 %v2912
      %2929 = vmatprep.subr.mxu0 0.0
      %2930 = vmatpush1.msra.mxu0 %v2913
      %2931 = vmatprep.subr.mxu0 0.0
      %2932 = vmatpush1.msra.mxu0 0.0
      %2933 = vmatprep.subr.mxu0 0.0
      %2934 = vmatpush1.msra.mxu0 0.0
      %2935 = vmatprep.subr.mxu0 0.0
      %2936 = vmatpush1.msra.mxu0 0.0
      %2937 = vmatprep.subr.mxu0 0.0
      %2938 = vmatpush1.msra.mxu0 0.0
      %2939 = vmatprep.subr.mxu0 0.0
      %2940 = vmatpush1.msra.mxu0 0.0
      %2941 = vmatprep.subr.mxu0 0.0
      %2942 = vmatpush1.msra.mxu0 0.0
      %2943 = vmatprep.subr.mxu0 0.0
      %2944 = vmatpush1.msra.mxu0 0.0
      %2945 = vmatprep.subr.mxu0 0.0
      %2946 = vmatpush1.msra.mxu0 0.0
      %2947 = vmatprep.subr.mxu0 0.0
      %2948 = vmatpush1.msra.mxu0 0.0
      %2949 = vmatprep.subr.mxu0 0.0
      %2950 = vmatpush1.msra.mxu0 0.0
      %2951 = vmatprep.subr.mxu0 0.0
      %2952 = vmatpush1.msra.mxu0 0.0
      %2953 = vmatprep.subr.mxu0 0.0
      %2954 = vmatpush1.msra.mxu0 0.0
      %2955 = vmatprep.subr.mxu0 0.0
      %2956 = vmatpush1.msra.mxu0 0.0
      %2957 = vmatprep.subr.mxu0 0.0
      %2958 = vmatpush1.msra.mxu0 0.0
      %2959 = vmatprep.subr.mxu0 0.0
      %2960 = vmatpush1.msra.mxu0 0.0
      %2961 = vmatprep.subr.mxu0 0.0
      %2962 = vmatpush1.msra.mxu0 0.0
      %2963 = vmatprep.subr.mxu0 0.0
      %2964 = vmatpush1.msra.mxu0 0.0
      %2965 = vmatprep.subr.mxu0 0.0
      %2966 = vmatpush1.msra.mxu0 0.0
      %2967 = vmatprep.subr.mxu0 0.0
      %2968 = vmatpush1.msra.mxu0 0.0
      %2969 = vmatprep.subr.mxu0 0.0
      %2970 = vmatpush1.msra.mxu0 0.0
      %2971 = vmatprep.subr.mxu0 0.0
      %2972 = vmatpush1.msra.mxu0 0.0
      %2973 = vmatprep.subr.mxu0 0.0
      %2974 = vmatpush1.msra.mxu0 0.0
      %2975 = vmatprep.subr.mxu0 0.0
      %2976 = vmatpush1.msra.mxu0 0.0
      %2977 = vmatprep.subr.mxu0 0.0
      %2978 = vmatpush1.msra.mxu0 0.0
      %2979 = vmatprep.subr.mxu0 0.0
      %2980 = vmatpush1.msra.mxu0 0.0
      %2981 = vmatprep.subr.mxu0 0.0
      %2982 = vmatpush1.msra.mxu0 0.0
      %2983 = vmatprep.subr.mxu0 0.0
      %2984 = vmatpush1.msra.mxu0 0.0
      %2985 = vmatprep.subr.mxu0 0.0
      %2986 = vmatpush1.msra.mxu0 0.0
      %2987 = vmatprep.mubr.f32.mxu0 0.0
      %2988 = vmatmul.mubr.f32.gmra.mrb[0].mxu0 %v2918
      %v2989 = vpop.f32.mrb[0].mxu0
      %v2990 = vadd.f32 0.0, %v2989
      %v2991 = vpop.f32.mrb[0].mxu0
      %2992 = vmatprep.mubr.f32.mxu0 0.0
      %2993 = vmatmul.mubr.f32.gmra.mrb[0].mxu0 %v2921
      %v2994 = vpop.f32.mrb[0].mxu0
      %v2995 = vadd.f32 0.0, %v2994
      %v2996 = vpop.f32.mrb[0].mxu0
      %2997 = vdwg.mxu0
      %s2998 = scalar_lea.vmem %s35, 16
      %v2999 = vld [vmem:[%s2998] sm:$0xff]
      %v3000 = vld [vmem:[%s2998 + $0x8] sm:$0xff]
      %v3002 = vsel %vm2916, %v2999, 0
      %v3005 = vsel %vm2916, %v3000, 0
      %3007 = vmatprep.subr.mxu0 0.0
      %3008 = vmatpush1.msra.mxu0 %v2910
      %3009 = vmatprep.subr.mxu0 0.0
      %3010 = vmatpush1.msra.mxu0 %v2911
      %3011 = vmatprep.subr.mxu0 0.0
      %3012 = vmatpush1.msra.mxu0 %v2912
      %3013 = vmatprep.subr.mxu0 0.0
      %3014 = vmatpush1.msra.mxu0 %v2913
      %3015 = vmatprep.subr.mxu0 0.0
      %3016 = vmatpush1.msra.mxu0 0.0
      %3017 = vmatprep.subr.mxu0 0.0
      %3018 = vmatpush1.msra.mxu0 0.0
      %3019 = vmatprep.subr.mxu0 0.0
      %3020 = vmatpush1.msra.mxu0 0.0
      %3021 = vmatprep.subr.mxu0 0.0
      %3022 = vmatpush1.msra.mxu0 0.0
      %3023 = vmatprep.subr.mxu0 0.0
      %3024 = vmatpush1.msra.mxu0 0.0
      %3025 = vmatprep.subr.mxu0 0.0
      %3026 = vmatpush1.msra.mxu0 0.0
      %3027 = vmatprep.subr.mxu0 0.0
      %3028 = vmatpush1.msra.mxu0 0.0
      %3029 = vmatprep.subr.mxu0 0.0
      %3030 = vmatpush1.msra.mxu0 0.0
      %3031 = vmatprep.subr.mxu0 0.0
      %3032 = vmatpush1.msra.mxu0 0.0
      %3033 = vmatprep.subr.mxu0 0.0
      %3034 = vmatpush1.msra.mxu0 0.0
      %3035 = vmatprep.subr.mxu0 0.0
      %3036 = vmatpush1.msra.mxu0 0.0
      %3037 = vmatprep.subr.mxu0 0.0
      %3038 = vmatpush1.msra.mxu0 0.0
      %3039 = vmatprep.subr.mxu0 0.0
      %3040 = vmatpush1.msra.mxu0 0.0
      %3041 = vmatprep.subr.mxu0 0.0
      %3042 = vmatpush1.msra.mxu0 0.0
      %3043 = vmatprep.subr.mxu0 0.0
      %3044 = vmatpush1.msra.mxu0 0.0
      %3045 = vmatprep.subr.mxu0 0.0
      %3046 = vmatpush1.msra.mxu0 0.0
      %3047 = vmatprep.subr.mxu0 0.0
      %3048 = vmatpush1.msra.mxu0 0.0
      %3049 = vmatprep.subr.mxu0 0.0
      %3050 = vmatpush1.msra.mxu0 0.0
      %3051 = vmatprep.subr.mxu0 0.0
      %3052 = vmatpush1.msra.mxu0 0.0
      %3053 = vmatprep.subr.mxu0 0.0
      %3054 = vmatpush1.msra.mxu0 0.0
      %3055 = vmatprep.subr.mxu0 0.0
      %3056 = vmatpush1.msra.mxu0 0.0
      %3057 = vmatprep.subr.mxu0 0.0
      %3058 = vmatpush1.msra.mxu0 0.0
      %3059 = vmatprep.subr.mxu0 0.0
      %3060 = vmatpush1.msra.mxu0 0.0
      %3061 = vmatprep.subr.mxu0 0.0
      %3062 = vmatpush1.msra.mxu0 0.0
      %3063 = vmatprep.subr.mxu0 0.0
      %3064 = vmatpush1.msra.mxu0 0.0
      %3065 = vmatprep.subr.mxu0 0.0
      %3066 = vmatpush1.msra.mxu0 0.0
      %3067 = vmatprep.subr.mxu0 0.0
      %3068 = vmatpush1.msra.mxu0 0.0
      %3069 = vmatprep.subr.mxu0 0.0
      %3070 = vmatpush1.msra.mxu0 0.0
      %3071 = vmatprep.mubr.f32.mxu0 0.0
      %3072 = vmatmul.mubr.f32.gmra.mrb[0].mxu0 %v3002
      %v3073 = vpop.f32.mrb[0].mxu0
      %v3074 = vadd.f32 0.0, %v3073
      %v3075 = vpop.f32.mrb[0].mxu0
      %3076 = vmatprep.mubr.f32.mxu0 0.0
      %3077 = vmatmul.mubr.f32.gmra.mrb[0].mxu0 %v3005
      %v3078 = vpop.f32.mrb[0].mxu0
      %v3079 = vadd.f32 0.0, %v3078
      %v3080 = vpop.f32.mrb[0].mxu0
      %3081 = vdwg.mxu0
      %v3082 = vmax.f32 %v2990, %v3074
      %v3083 = vmax.f32 %v2995, %v3079
      %v3084 = vld [vmem:[%s37] sm:$0xff]
      %v3085 = vld [vmem:[%s37 + $0x8] sm:$0xff]
      %v3086 = vld [vmem:[%s37 + $0x10] sm:$0xff]
      %v3087 = vld [vmem:[%s37 + $0x18] sm:$0xff]
      %v3088 = vld [vmem:[%s37 + $0x20] sm:$0xff]
      %v3089 = vld [vmem:[%s37 + $0x28] sm:$0xff]
      %v3090 = vld [vmem:[%s37 + $0x30] sm:$0xff]
      %v3091 = vld [vmem:[%s37 + $0x38] sm:$0xff]
      %v3092 = vld [vmem:[%s37 + $0x40] sm:$0xff]
      %v3093 = vld [vmem:[%s37 + $0x48] sm:$0xff]
      %v3094 = vld [vmem:[%s37 + $0x50] sm:$0xff]
      %v3095 = vld [vmem:[%s37 + $0x58] sm:$0xff]
      %v3096 = vld [vmem:[%s37 + $0x60] sm:$0xff]
      %v3097 = vld [vmem:[%s37 + $0x68] sm:$0xff]
      %v3098 = vld [vmem:[%s37 + $0x70] sm:$0xff]
      %v3099 = vld [vmem:[%s37 + $0x78] sm:$0xff]
      %3100 = vmatprep.subr.mxu0 0.0
      %3101 = vmatpush1.msra.mxu0 %v3084
      %3102 = vmatprep.subr.mxu0 0.0
      %3103 = vmatpush1.msra.mxu0 %v3085
      %3104 = vmatprep.subr.mxu0 0.0
      %3105 = vmatpush1.msra.mxu0 %v3086
      %3106 = vmatprep.subr.mxu0 0.0
      %3107 = vmatpush1.msra.mxu0 %v3087
      %3108 = vmatprep.subr.mxu0 0.0
      %3109 = vmatpush1.msra.mxu0 %v3088
      %3110 = vmatprep.subr.mxu0 0.0
      %3111 = vmatpush1.msra.mxu0 %v3089
      %3112 = vmatprep.subr.mxu0 0.0
      %3113 = vmatpush1.msra.mxu0 %v3090
      %3114 = vmatprep.subr.mxu0 0.0
      %3115 = vmatpush1.msra.mxu0 %v3091
      %3116 = vmatprep.subr.mxu0 0.0
      %3117 = vmatpush1.msra.mxu0 %v3092
      %3118 = vmatprep.subr.mxu0 0.0
      %3119 = vmatpush1.msra.mxu0 %v3093
      %3120 = vmatprep.subr.mxu0 0.0
      %3121 = vmatpush1.msra.mxu0 %v3094
      %3122 = vmatprep.subr.mxu0 0.0
      %3123 = vmatpush1.msra.mxu0 %v3095
      %3124 = vmatprep.subr.mxu0 0.0
      %3125 = vmatpush1.msra.mxu0 %v3096
      %3126 = vmatprep.subr.mxu0 0.0
      %3127 = vmatpush1.msra.mxu0 %v3097
      %3128 = vmatprep.subr.mxu0 0.0
      %3129 = vmatpush1.msra.mxu0 %v3098
      %3130 = vmatprep.subr.mxu0 0.0
      %3131 = vmatpush1.msra.mxu0 %v3099
      %3132 = vmatprep.subr.mxu0 0.0
      %3133 = vmatpush1.msra.mxu0 0.0
      %3134 = vmatprep.subr.mxu0 0.0
      %3135 = vmatpush1.msra.mxu0 0.0
      %3136 = vmatprep.subr.mxu0 0.0
      %3137 = vmatpush1.msra.mxu0 0.0
      %3138 = vmatprep.subr.mxu0 0.0
      %3139 = vmatpush1.msra.mxu0 0.0
      %3140 = vmatprep.subr.mxu0 0.0
      %3141 = vmatpush1.msra.mxu0 0.0
      %3142 = vmatprep.subr.mxu0 0.0
      %3143 = vmatpush1.msra.mxu0 0.0
      %3144 = vmatprep.subr.mxu0 0.0
      %3145 = vmatpush1.msra.mxu0 0.0
      %3146 = vmatprep.subr.mxu0 0.0
      %3147 = vmatpush1.msra.mxu0 0.0
      %3148 = vmatprep.subr.mxu0 0.0
      %3149 = vmatpush1.msra.mxu0 0.0
      %3150 = vmatprep.subr.mxu0 0.0
      %3151 = vmatpush1.msra.mxu0 0.0
      %3152 = vmatprep.subr.mxu0 0.0
      %3153 = vmatpush1.msra.mxu0 0.0
      %3154 = vmatprep.subr.mxu0 0.0
      %3155 = vmatpush1.msra.mxu0 0.0
      %3156 = vmatprep.subr.mxu0 0.0
      %3157 = vmatpush1.msra.mxu0 0.0
      %3158 = vmatprep.subr.mxu0 0.0
      %3159 = vmatpush1.msra.mxu0 0.0
      %3160 = vmatprep.subr.mxu0 0.0
      %3161 = vmatpush1.msra.mxu0 0.0
      %3162 = vmatprep.subr.mxu0 0.0
      %3163 = vmatpush1.msra.mxu0 0.0
      %3164 = vmatprep.mubr.f32.mxu0 0.0
      %3165 = vmatmul.mubr.f32.gmra.mrb[0].mxu0 %v3082
      %v3166 = vpop.f32.mrb[0].mxu0
      %v3167 = vadd.f32 0.0, %v3166
      %v3168 = vpop.f32.mrb[0].mxu0
      %3169 = vmatprep.mubr.f32.mxu0 0.0
      %3170 = vmatmul.mubr.f32.gmra.mrb[0].mxu0 %v3083
      %v3171 = vpop.f32.mrb[0].mxu0
      %v3172 = vadd.f32 0.0, %v3171
      %v3173 = vpop.f32.mrb[0].mxu0
      %3174 = vdwg.mxu0
      %s3175 = scalar_lea.vmem %s37, 128
      %v3176 = vld [vmem:[%s3175] sm:$0xff]
      %v3177 = vld [vmem:[%s3175 + $0x8] sm:$0xff]
      %v3178 = vld [vmem:[%s3175 + $0x10] sm:$0xff]
      %v3179 = vld [vmem:[%s3175 + $0x18] sm:$0xff]
      %v3180 = vld [vmem:[%s3175 + $0x20] sm:$0xff]
      %v3181 = vld [vmem:[%s3175 + $0x28] sm:$0xff]
      %v3182 = vld [vmem:[%s3175 + $0x30] sm:$0xff]
      %v3183 = vld [vmem:[%s3175 + $0x38] sm:$0xff]
      %v3184 = vld [vmem:[%s3175 + $0x40] sm:$0xff]
      %v3185 = vld [vmem:[%s3175 + $0x48] sm:$0xff]
      %v3186 = vld [vmem:[%s3175 + $0x50] sm:$0xff]
      %v3187 = vld [vmem:[%s3175 + $0x58] sm:$0xff]
      %v3188 = vld [vmem:[%s3175 + $0x60] sm:$0xff]
      %v3189 = vld [vmem:[%s3175 + $0x68] sm:$0xff]
      %v3190 = vld [vmem:[%s3175 + $0x70] sm:$0xff]
      %v3191 = vld [vmem:[%s3175 + $0x78] sm:$0xff]
      %3192 = vmatprep.subr.mxu0 0.0
      %3193 = vmatpush1.msra.mxu0 %v3176
      %3194 = vmatprep.subr.mxu0 0.0
      %3195 = vmatpush1.msra.mxu0 %v3177
      %3196 = vmatprep.subr.mxu0 0.0
      %3197 = vmatpush1.msra.mxu0 %v3178
      %3198 = vmatprep.subr.mxu0 0.0
      %3199 = vmatpush1.msra.mxu0 %v3179
      %3200 = vmatprep.subr.mxu0 0.0
      %3201 = vmatpush1.msra.mxu0 %v3180
      %3202 = vmatprep.subr.mxu0 0.0
      %3203 = vmatpush1.msra.mxu0 %v3181
      %3204 = vmatprep.subr.mxu0 0.0
      %3205 = vmatpush1.msra.mxu0 %v3182
      %3206 = vmatprep.subr.mxu0 0.0
      %3207 = vmatpush1.msra.mxu0 %v3183
      %3208 = vmatprep.subr.mxu0 0.0
      %3209 = vmatpush1.msra.mxu0 %v3184
      %3210 = vmatprep.subr.mxu0 0.0
      %3211 = vmatpush1.msra.mxu0 %v3185
      %3212 = vmatprep.subr.mxu0 0.0
      %3213 = vmatpush1.msra.mxu0 %v3186
      %3214 = vmatprep.subr.mxu0 0.0
      %3215 = vmatpush1.msra.mxu0 %v3187
      %3216 = vmatprep.subr.mxu0 0.0
      %3217 = vmatpush1.msra.mxu0 %v3188
      %3218 = vmatprep.subr.mxu0 0.0
      %3219 = vmatpush1.msra.mxu0 %v3189
      %3220 = vmatprep.subr.mxu0 0.0
      %3221 = vmatpush1.msra.mxu0 %v3190
      %3222 = vmatprep.subr.mxu0 0.0
      %3223 = vmatpush1.msra.mxu0 %v3191
      %3224 = vmatprep.subr.mxu0 0.0
      %3225 = vmatpush1.msra.mxu0 0.0
      %3226 = vmatprep.subr.mxu0 0.0
      %3227 = vmatpush1.msra.mxu0 0.0
      %3228 = vmatprep.subr.mxu0 0.0
      %3229 = vmatpush1.msra.mxu0 0.0
      %3230 = vmatprep.subr.mxu0 0.0
      %3231 = vmatpush1.msra.mxu0 0.0
      %3232 = vmatprep.subr.mxu0 0.0
      %3233 = vmatpush1.msra.mxu0 0.0
      %3234 = vmatprep.subr.mxu0 0.0
      %3235 = vmatpush1.msra.mxu0 0.0
      %3236 = vmatprep.subr.mxu0 0.0
      %3237 = vmatpush1.msra.mxu0 0.0
      %3238 = vmatprep.subr.mxu0 0.0
      %3239 = vmatpush1.msra.mxu0 0.0
      %3240 = vmatprep.subr.mxu0 0.0
      %3241 = vmatpush1.msra.mxu0 0.0
      %3242 = vmatprep.subr.mxu0 0.0
      %3243 = vmatpush1.msra.mxu0 0.0
      %3244 = vmatprep.subr.mxu0 0.0
      %3245 = vmatpush1.msra.mxu0 0.0
      %3246 = vmatprep.subr.mxu0 0.0
      %3247 = vmatpush1.msra.mxu0 0.0
      %3248 = vmatprep.subr.mxu0 0.0
      %3249 = vmatpush1.msra.mxu0 0.0
      %3250 = vmatprep.subr.mxu0 0.0
      %3251 = vmatpush1.msra.mxu0 0.0
      %3252 = vmatprep.subr.mxu0 0.0
      %3253 = vmatpush1.msra.mxu0 0.0
      %3254 = vmatprep.subr.mxu0 0.0
      %3255 = vmatpush1.msra.mxu0 0.0
      %3256 = vmatprep.mubr.f32.mxu0 0.0
      %3257 = vmatmul.mubr.f32.gmra.mrb[0].mxu0 %v3082
      %v3258 = vpop.f32.mrb[0].mxu0
      %v3259 = vadd.f32 0.0, %v3258
      %v3260 = vpop.f32.mrb[0].mxu0
      %3261 = vmatprep.mubr.f32.mxu0 0.0
      %3262 = vmatmul.mubr.f32.gmra.mrb[0].mxu0 %v3083
      %v3263 = vpop.f32.mrb[0].mxu0
      %v3264 = vadd.f32 0.0, %v3263
      %v3265 = vpop.f32.mrb[0].mxu0
      %3266 = vdwg.mxu0
      %v3267 = vmax.f32 %v3167, %v3259
      %v3268 = vmax.f32 %v3172, %v3264
      %vm3269 = vcmask 654336
      %3270 = vst.msk [vmem:[#allocation4] sm:$0xff] %vm3269, 0.0
      %3271 = vst.msk [vmem:[#allocation4 + $0x8] sm:$0xff] %vm3269, 0.0
      %vm3272 = vcmask 648192
      %3273 = vst.msk [vmem:[#allocation4 + $0x10] sm:$0x3] %vm3272, 0.0
      %3274 = vst.msk [vmem:[#allocation4 + $0x1] sm:$0xff] %vm3269, %v3267
      %3275 = vst.msk [vmem:[#allocation4 + $0x9] sm:$0xff] %vm3269, %v3268
      %v3276 = vld [vmem:[#allocation4] sm:$0xff]
      %v3277 = vld [vmem:[#allocation4 + $0x8] sm:$0xff]
      %v3278 = vld [vmem:[%s29] sm:$0xff]
      %v3279 = vld [vmem:[%s29 + $0x8] sm:$0xff]
      %3281 = vset.pattern.permute.xlu0 0
      %3282 = vperm.xlu0 %3281, %v3278
      %v3283 = vpop.permute.xlu0 %3282
      %3286 = vset.pattern.permute.xlu0 0
      %3287 = vperm.xlu0 %3286, %v3279
      %v3288 = vpop.permute.xlu0 %3287
      %v3290 = vmul.f32 %v3276, %v3283
      %v3291 = vmul.f32 %v3277, %v3288
      %v3292 = vld [vmem:[%s1173] sm:$0xff]
      %v3293 = vld [vmem:[%s1173 + $0x8] sm:$0xff]
      %v3294 = vld [vmem:[%s1173 + $0x10] sm:$0xff]
      %v3295 = vld [vmem:[%s1173 + $0x18] sm:$0xff]
      %v3296 = vld [vmem:[%s1173 + $0x20] sm:$0xff]
      %v3297 = vld [vmem:[%s1173 + $0x28] sm:$0xff]
      %v3298 = vld [vmem:[%s1173 + $0x30] sm:$0xff]
      %v3299 = vld [vmem:[%s1173 + $0x38] sm:$0xff]
      %v3300 = vld [vmem:[%s1173 + $0x40] sm:$0xff]
      %v3301 = vld [vmem:[%s1173 + $0x48] sm:$0xff]
      %v3302 = vld [vmem:[#allocation4 + $0x1] sm:$0xff]
      %v3303 = vld [vmem:[#allocation4 + $0x9] sm:$0xff]
      %s3304 = scalar_lea.vmem %s1173, 80
      %v3305 = vld [vmem:[%s3304] sm:$0xff]
      %v3306 = vld [vmem:[%s3304 + $0x8] sm:$0xff]
      %v3307 = vld [vmem:[%s3304 + $0x10] sm:$0xff]
      %v3308 = vld [vmem:[%s3304 + $0x18] sm:$0xff]
      %v3309 = vld [vmem:[%s3304 + $0x20] sm:$0xff]
      %v3310 = vld [vmem:[%s3304 + $0x28] sm:$0xff]
      %v3311 = vld [vmem:[%s3304 + $0x30] sm:$0xff]
      %v3312 = vld [vmem:[%s3304 + $0x38] sm:$0xff]
      %v3313 = vld [vmem:[%s3304 + $0x40] sm:$0xff]
      %v3314 = vld [vmem:[%s3304 + $0x48] sm:$0xff]
      %v3316 = vsel %vm3269, %v3302, 0
      %v3319 = vsel %vm3269, %v3303, 0
      %3321 = vmatprep.subr.mxu0 0.0
      %3322 = vmatpush1.msra.mxu0 %v3305
      %3323 = vmatprep.subr.mxu0 0.0
      %3324 = vmatpush1.msra.mxu0 %v3306
      %3325 = vmatprep.subr.mxu0 0.0
      %3326 = vmatpush1.msra.mxu0 %v3307
      %3327 = vmatprep.subr.mxu0 0.0
      %3328 = vmatpush1.msra.mxu0 %v3308
      %3329 = vmatprep.subr.mxu0 0.0
      %3330 = vmatpush1.msra.mxu0 %v3309
      %3331 = vmatprep.subr.mxu0 0.0
      %3332 = vmatpush1.msra.mxu0 %v3310
      %3333 = vmatprep.subr.mxu0 0.0
      %3334 = vmatpush1.msra.mxu0 %v3311
      %3335 = vmatprep.subr.mxu0 0.0
      %3336 = vmatpush1.msra.mxu0 %v3312
      %3337 = vmatprep.subr.mxu0 0.0
      %3338 = vmatpush1.msra.mxu0 %v3313
      %3339 = vmatprep.subr.mxu0 0.0
      %3340 = vmatpush1.msra.mxu0 %v3314
      %3341 = vmatprep.subr.mxu0 0.0
      %3342 = vmatpush1.msra.mxu0 0.0
      %3343 = vmatprep.subr.mxu0 0.0
      %3344 = vmatpush1.msra.mxu0 0.0
      %3345 = vmatprep.subr.mxu0 0.0
      %3346 = vmatpush1.msra.mxu0 0.0
      %3347 = vmatprep.subr.mxu0 0.0
      %3348 = vmatpush1.msra.mxu0 0.0
      %3349 = vmatprep.subr.mxu0 0.0
      %3350 = vmatpush1.msra.mxu0 0.0
      %3351 = vmatprep.subr.mxu0 0.0
      %3352 = vmatpush1.msra.mxu0 0.0
      %3353 = vmatprep.subr.mxu0 0.0
      %3354 = vmatpush1.msra.mxu0 0.0
      %3355 = vmatprep.subr.mxu0 0.0
      %3356 = vmatpush1.msra.mxu0 0.0
      %3357 = vmatprep.subr.mxu0 0.0
      %3358 = vmatpush1.msra.mxu0 0.0
      %3359 = vmatprep.subr.mxu0 0.0
      %3360 = vmatpush1.msra.mxu0 0.0
      %3361 = vmatprep.subr.mxu0 0.0
      %3362 = vmatpush1.msra.mxu0 0.0
      %3363 = vmatprep.subr.mxu0 0.0
      %3364 = vmatpush1.msra.mxu0 0.0
      %3365 = vmatprep.subr.mxu0 0.0
      %3366 = vmatpush1.msra.mxu0 0.0
      %3367 = vmatprep.subr.mxu0 0.0
      %3368 = vmatpush1.msra.mxu0 0.0
      %3369 = vmatprep.subr.mxu0 0.0
      %3370 = vmatpush1.msra.mxu0 0.0
      %3371 = vmatprep.subr.mxu0 0.0
      %3372 = vmatpush1.msra.mxu0 0.0
      %3373 = vmatprep.subr.mxu0 0.0
      %3374 = vmatpush1.msra.mxu0 0.0
      %3375 = vmatprep.subr.mxu0 0.0
      %3376 = vmatpush1.msra.mxu0 0.0
      %3377 = vmatprep.subr.mxu0 0.0
      %3378 = vmatpush1.msra.mxu0 0.0
      %3379 = vmatprep.subr.mxu0 0.0
      %3380 = vmatpush1.msra.mxu0 0.0
      %3381 = vmatprep.subr.mxu0 0.0
      %3382 = vmatpush1.msra.mxu0 0.0
      %3383 = vmatprep.subr.mxu0 0.0
      %3384 = vmatpush1.msra.mxu0 0.0
      %3385 = vmatprep.mubr.f32.mxu0 0.0
      %3386 = vmatmul.mubr.f32.gmra.mrb[0].mxu0 %v3316
      %v3387 = vpop.f32.mrb[0].mxu0
      %v3388 = vadd.f32 0.0, %v3387
      %v3389 = vpop.f32.mrb[0].mxu0
      %3390 = vmatprep.mubr.f32.mxu0 0.0
      %3391 = vmatmul.mubr.f32.gmra.mrb[0].mxu0 %v3319
      %v3392 = vpop.f32.mrb[0].mxu0
      %v3393 = vadd.f32 0.0, %v3392
      %v3394 = vpop.f32.mrb[0].mxu0
      %3395 = vdwg.mxu0
      %v3397 = vsel %vm3269, %v3290, 0
      %v3400 = vsel %vm3269, %v3291, 0
      %3402 = vmatprep.subr.mxu0 0.0
      %3403 = vmatpush1.msra.mxu0 %v3292
      %3404 = vmatprep.subr.mxu0 0.0
      %3405 = vmatpush1.msra.mxu0 %v3293
      %3406 = vmatprep.subr.mxu0 0.0
      %3407 = vmatpush1.msra.mxu0 %v3294
      %3408 = vmatprep.subr.mxu0 0.0
      %3409 = vmatpush1.msra.mxu0 %v3295
      %3410 = vmatprep.subr.mxu0 0.0
      %3411 = vmatpush1.msra.mxu0 %v3296
      %3412 = vmatprep.subr.mxu0 0.0
      %3413 = vmatpush1.msra.mxu0 %v3297
      %3414 = vmatprep.subr.mxu0 0.0
      %3415 = vmatpush1.msra.mxu0 %v3298
      %3416 = vmatprep.subr.mxu0 0.0
      %3417 = vmatpush1.msra.mxu0 %v3299
      %3418 = vmatprep.subr.mxu0 0.0
      %3419 = vmatpush1.msra.mxu0 %v3300
      %3420 = vmatprep.subr.mxu0 0.0
      %3421 = vmatpush1.msra.mxu0 %v3301
      %3422 = vmatprep.subr.mxu0 0.0
      %3423 = vmatpush1.msra.mxu0 0.0
      %3424 = vmatprep.subr.mxu0 0.0
      %3425 = vmatpush1.msra.mxu0 0.0
      %3426 = vmatprep.subr.mxu0 0.0
      %3427 = vmatpush1.msra.mxu0 0.0
      %3428 = vmatprep.subr.mxu0 0.0
      %3429 = vmatpush1.msra.mxu0 0.0
      %3430 = vmatprep.subr.mxu0 0.0
      %3431 = vmatpush1.msra.mxu0 0.0
      %3432 = vmatprep.subr.mxu0 0.0
      %3433 = vmatpush1.msra.mxu0 0.0
      %3434 = vmatprep.subr.mxu0 0.0
      %3435 = vmatpush1.msra.mxu0 0.0
      %3436 = vmatprep.subr.mxu0 0.0
      %3437 = vmatpush1.msra.mxu0 0.0
      %3438 = vmatprep.subr.mxu0 0.0
      %3439 = vmatpush1.msra.mxu0 0.0
      %3440 = vmatprep.subr.mxu0 0.0
      %3441 = vmatpush1.msra.mxu0 0.0
      %3442 = vmatprep.subr.mxu0 0.0
      %3443 = vmatpush1.msra.mxu0 0.0
      %3444 = vmatprep.subr.mxu0 0.0
      %3445 = vmatpush1.msra.mxu0 0.0
      %3446 = vmatprep.subr.mxu0 0.0
      %3447 = vmatpush1.msra.mxu0 0.0
      %3448 = vmatprep.subr.mxu0 0.0
      %3449 = vmatpush1.msra.mxu0 0.0
      %3450 = vmatprep.subr.mxu0 0.0
      %3451 = vmatpush1.msra.mxu0 0.0
      %3452 = vmatprep.subr.mxu0 0.0
      %3453 = vmatpush1.msra.mxu0 0.0
      %3454 = vmatprep.subr.mxu0 0.0
      %3455 = vmatpush1.msra.mxu0 0.0
      %3456 = vmatprep.subr.mxu0 0.0
      %3457 = vmatpush1.msra.mxu0 0.0
      %3458 = vmatprep.subr.mxu0 0.0
      %3459 = vmatpush1.msra.mxu0 0.0
      %3460 = vmatprep.subr.mxu0 0.0
      %3461 = vmatpush1.msra.mxu0 0.0
      %3462 = vmatprep.subr.mxu0 0.0
      %3463 = vmatpush1.msra.mxu0 0.0
      %3464 = vmatprep.subr.mxu0 0.0
      %3465 = vmatpush1.msra.mxu0 0.0
      %3466 = vmatprep.mubr.f32.mxu0 0.0
      %3467 = vmatmul.mubr.f32.gmra.mrb[0].mxu0 %v3397
      %v3468 = vpop.f32.mrb[0].mxu0
      %v3469 = vadd.f32 %v3388, %v3468
      %v3470 = vpop.f32.mrb[0].mxu0
      %3471 = vmatprep.mubr.f32.mxu0 0.0
      %3472 = vmatmul.mubr.f32.gmra.mrb[0].mxu0 %v3400
      %v3473 = vpop.f32.mrb[0].mxu0
      %v3474 = vadd.f32 %v3393, %v3473
      %v3475 = vpop.f32.mrb[0].mxu0
      %3476 = vdwg.mxu0
      %v3477 = vld [vmem:[#allocation4 + $0x2] sm:$0xff]
      %v3478 = vld [vmem:[#allocation4 + $0xa] sm:$0xff]
      %s3479 = scalar_lea.vmem %s29, 16
      %v3480 = vld [vmem:[%s3479] sm:$0xff]
      %v3481 = vld [vmem:[%s3479 + $0x8] sm:$0xff]
      %3483 = vset.pattern.permute.xlu0 0
      %3484 = vperm.xlu0 %3483, %v3480
      %v3485 = vpop.permute.xlu0 %3484
      %3488 = vset.pattern.permute.xlu0 0
      %3489 = vperm.xlu0 %3488, %v3481
      %v3490 = vpop.permute.xlu0 %3489
      %v3492 = vmul.f32 %v3477, %v3485
      %v3493 = vmul.f32 %v3478, %v3490
      %s3494 = scalar_lea.vmem %s1173, 160
      %v3495 = vld [vmem:[%s3494] sm:$0xff]
      %v3496 = vld [vmem:[%s3494 + $0x8] sm:$0xff]
      %v3497 = vld [vmem:[%s3494 + $0x10] sm:$0xff]
      %v3498 = vld [vmem:[%s3494 + $0x18] sm:$0xff]
      %v3499 = vld [vmem:[%s3494 + $0x20] sm:$0xff]
      %v3500 = vld [vmem:[%s3494 + $0x28] sm:$0xff]
      %v3501 = vld [vmem:[%s3494 + $0x30] sm:$0xff]
      %v3502 = vld [vmem:[%s3494 + $0x38] sm:$0xff]
      %v3503 = vld [vmem:[%s3494 + $0x40] sm:$0xff]
      %v3504 = vld [vmem:[%s3494 + $0x48] sm:$0xff]
      %v3506 = vsel %vm3269, %v3492, 0
      %v3509 = vsel %vm3269, %v3493, 0
      %3511 = vmatprep.subr.mxu0 0.0
      %3512 = vmatpush1.msra.mxu0 %v3495
      %3513 = vmatprep.subr.mxu0 0.0
      %3514 = vmatpush1.msra.mxu0 %v3496
      %3515 = vmatprep.subr.mxu0 0.0
      %3516 = vmatpush1.msra.mxu0 %v3497
      %3517 = vmatprep.subr.mxu0 0.0
      %3518 = vmatpush1.msra.mxu0 %v3498
      %3519 = vmatprep.subr.mxu0 0.0
      %3520 = vmatpush1.msra.mxu0 %v3499
      %3521 = vmatprep.subr.mxu0 0.0
      %3522 = vmatpush1.msra.mxu0 %v3500
      %3523 = vmatprep.subr.mxu0 0.0
      %3524 = vmatpush1.msra.mxu0 %v3501
      %3525 = vmatprep.subr.mxu0 0.0
      %3526 = vmatpush1.msra.mxu0 %v3502
      %3527 = vmatprep.subr.mxu0 0.0
      %3528 = vmatpush1.msra.mxu0 %v3503
      %3529 = vmatprep.subr.mxu0 0.0
      %3530 = vmatpush1.msra.mxu0 %v3504
      %3531 = vmatprep.subr.mxu0 0.0
      %3532 = vmatpush1.msra.mxu0 0.0
      %3533 = vmatprep.subr.mxu0 0.0
      %3534 = vmatpush1.msra.mxu0 0.0
      %3535 = vmatprep.subr.mxu0 0.0
      %3536 = vmatpush1.msra.mxu0 0.0
      %3537 = vmatprep.subr.mxu0 0.0
      %3538 = vmatpush1.msra.mxu0 0.0
      %3539 = vmatprep.subr.mxu0 0.0
      %3540 = vmatpush1.msra.mxu0 0.0
      %3541 = vmatprep.subr.mxu0 0.0
      %3542 = vmatpush1.msra.mxu0 0.0
      %3543 = vmatprep.subr.mxu0 0.0
      %3544 = vmatpush1.msra.mxu0 0.0
      %3545 = vmatprep.subr.mxu0 0.0
      %3546 = vmatpush1.msra.mxu0 0.0
      %3547 = vmatprep.subr.mxu0 0.0
      %3548 = vmatpush1.msra.mxu0 0.0
      %3549 = vmatprep.subr.mxu0 0.0
      %3550 = vmatpush1.msra.mxu0 0.0
      %3551 = vmatprep.subr.mxu0 0.0
      %3552 = vmatpush1.msra.mxu0 0.0
      %3553 = vmatprep.subr.mxu0 0.0
      %3554 = vmatpush1.msra.mxu0 0.0
      %3555 = vmatprep.subr.mxu0 0.0
      %3556 = vmatpush1.msra.mxu0 0.0
      %3557 = vmatprep.subr.mxu0 0.0
      %3558 = vmatpush1.msra.mxu0 0.0
      %3559 = vmatprep.subr.mxu0 0.0
      %3560 = vmatpush1.msra.mxu0 0.0
      %3561 = vmatprep.subr.mxu0 0.0
      %3562 = vmatpush1.msra.mxu0 0.0
      %3563 = vmatprep.subr.mxu0 0.0
      %3564 = vmatpush1.msra.mxu0 0.0
      %3565 = vmatprep.subr.mxu0 0.0
      %3566 = vmatpush1.msra.mxu0 0.0
      %3567 = vmatprep.subr.mxu0 0.0
      %3568 = vmatpush1.msra.mxu0 0.0
      %3569 = vmatprep.subr.mxu0 0.0
      %3570 = vmatpush1.msra.mxu0 0.0
      %3571 = vmatprep.subr.mxu0 0.0
      %3572 = vmatpush1.msra.mxu0 0.0
      %3573 = vmatprep.subr.mxu0 0.0
      %3574 = vmatpush1.msra.mxu0 0.0
      %3575 = vmatprep.mubr.f32.mxu0 0.0
      %3576 = vmatmul.mubr.f32.gmra.mrb[0].mxu0 %v3506
      %v3577 = vpop.f32.mrb[0].mxu0
      %v3578 = vadd.f32 0.0, %v3577
      %v3579 = vpop.f32.mrb[0].mxu0
      %3580 = vmatprep.mubr.f32.mxu0 0.0
      %3581 = vmatmul.mubr.f32.gmra.mrb[0].mxu0 %v3509
      %v3582 = vpop.f32.mrb[0].mxu0
      %v3583 = vadd.f32 0.0, %v3582
      %v3584 = vpop.f32.mrb[0].mxu0
      %3585 = vdwg.mxu0
      %v3586 = vadd.f32 %v3469, %v3578
      %v3587 = vadd.f32 %v3474, %v3583
      %v3588 = vld [vmem:[%s1176] sm:$0x1]
      %v3590 = vlaneseq
      %v3591 = vshrl.u32 %v3590, 7
      %v3592 = vsub.s32 0, %v3591
      %v3593 = vrot.slane %v3588, %v3592
      %v3595 = vadd.f32 %v3586, %v3593
      %v3596 = vadd.f32 %v3587, %v3593
      %v3597 = vmax.f32 %v3595, 0.0
      %v3598 = vmax.f32 %v3596, 0.0
      %v3599 = vld [vmem:[%s39] sm:$0xff]
      %v3601 = vsel %vm1685, %v3599, 0
      %3603 = vmatprep.subr.mxu0 0.0
      %3604 = vmatpush1.msra.mxu0 %v3597
      %3605 = vmatprep.subr.mxu0 0.0
      %3606 = vmatpush1.msra.mxu0 %v3598
      %3607 = vmatprep.subr.mxu0 0.0
      %3608 = vmatpush1.msra.mxu0 0.0
      %3609 = vmatprep.subr.mxu0 0.0
      %3610 = vmatpush1.msra.mxu0 0.0
      %3611 = vmatprep.subr.mxu0 0.0
      %3612 = vmatpush1.msra.mxu0 0.0
      %3613 = vmatprep.subr.mxu0 0.0
      %3614 = vmatpush1.msra.mxu0 0.0
      %3615 = vmatprep.subr.mxu0 0.0
      %3616 = vmatpush1.msra.mxu0 0.0
      %3617 = vmatprep.subr.mxu0 0.0
      %3618 = vmatpush1.msra.mxu0 0.0
      %3619 = vmatprep.subr.mxu0 0.0
      %3620 = vmatpush1.msra.mxu0 0.0
      %3621 = vmatprep.subr.mxu0 0.0
      %3622 = vmatpush1.msra.mxu0 0.0
      %3623 = vmatprep.subr.mxu0 0.0
      %3624 = vmatpush1.msra.mxu0 0.0
      %3625 = vmatprep.subr.mxu0 0.0
      %3626 = vmatpush1.msra.mxu0 0.0
      %3627 = vmatprep.subr.mxu0 0.0
      %3628 = vmatpush1.msra.mxu0 0.0
      %3629 = vmatprep.subr.mxu0 0.0
      %3630 = vmatpush1.msra.mxu0 0.0
      %3631 = vmatprep.subr.mxu0 0.0
      %3632 = vmatpush1.msra.mxu0 0.0
      %3633 = vmatprep.subr.mxu0 0.0
      %3634 = vmatpush1.msra.mxu0 0.0
      %3635 = vmatprep.subr.mxu0 0.0
      %3636 = vmatpush1.msra.mxu0 0.0
      %3637 = vmatprep.subr.mxu0 0.0
      %3638 = vmatpush1.msra.mxu0 0.0
      %3639 = vmatprep.subr.mxu0 0.0
      %3640 = vmatpush1.msra.mxu0 0.0
      %3641 = vmatprep.subr.mxu0 0.0
      %3642 = vmatpush1.msra.mxu0 0.0
      %3643 = vmatprep.subr.mxu0 0.0
      %3644 = vmatpush1.msra.mxu0 0.0
      %3645 = vmatprep.subr.mxu0 0.0
      %3646 = vmatpush1.msra.mxu0 0.0
      %3647 = vmatprep.subr.mxu0 0.0
      %3648 = vmatpush1.msra.mxu0 0.0
      %3649 = vmatprep.subr.mxu0 0.0
      %3650 = vmatpush1.msra.mxu0 0.0
      %3651 = vmatprep.subr.mxu0 0.0
      %3652 = vmatpush1.msra.mxu0 0.0
      %3653 = vmatprep.subr.mxu0 0.0
      %3654 = vmatpush1.msra.mxu0 0.0
      %3655 = vmatprep.subr.mxu0 0.0
      %3656 = vmatpush1.msra.mxu0 0.0
      %3657 = vmatprep.subr.mxu0 0.0
      %3658 = vmatpush1.msra.mxu0 0.0
      %3659 = vmatprep.subr.mxu0 0.0
      %3660 = vmatpush1.msra.mxu0 0.0
      %3661 = vmatprep.subr.mxu0 0.0
      %3662 = vmatpush1.msra.mxu0 0.0
      %3663 = vmatprep.subr.mxu0 0.0
      %3664 = vmatpush1.msra.mxu0 0.0
      %3665 = vmatprep.subr.mxu0 0.0
      %3666 = vmatpush1.msra.mxu0 0.0
      %3667 = vmatprep.mubr.f32.mxu0 0.0
      %3668 = vmatmul.mubr.f32.gmra.mrb[0].mxu0 %v3601
      %v3669 = vpop.f32.mrb[0].mxu0
      %v3670 = vadd.f32 0.0, %v3669
      %v3671 = vpop.f32.mrb[0].mxu0
      %3672 = vdwg.mxu0
      %s3673 = scalar_lea.vmem %s39, 8
      %v3674 = vld [vmem:[%s3673] sm:$0xff]
      %v3676 = vsel %vm1685, %v3674, 0
      %3678 = vmatprep.subr.mxu0 0.0
      %3679 = vmatpush1.msra.mxu0 %v3597
      %3680 = vmatprep.subr.mxu0 0.0
      %3681 = vmatpush1.msra.mxu0 %v3598
      %3682 = vmatprep.subr.mxu0 0.0
      %3683 = vmatpush1.msra.mxu0 0.0
      %3684 = vmatprep.subr.mxu0 0.0
      %3685 = vmatpush1.msra.mxu0 0.0
      %3686 = vmatprep.subr.mxu0 0.0
      %3687 = vmatpush1.msra.mxu0 0.0
      %3688 = vmatprep.subr.mxu0 0.0
      %3689 = vmatpush1.msra.mxu0 0.0
      %3690 = vmatprep.subr.mxu0 0.0
      %3691 = vmatpush1.msra.mxu0 0.0
      %3692 = vmatprep.subr.mxu0 0.0
      %3693 = vmatpush1.msra.mxu0 0.0
      %3694 = vmatprep.subr.mxu0 0.0
      %3695 = vmatpush1.msra.mxu0 0.0
      %3696 = vmatprep.subr.mxu0 0.0
      %3697 = vmatpush1.msra.mxu0 0.0
      %3698 = vmatprep.subr.mxu0 0.0
      %3699 = vmatpush1.msra.mxu0 0.0
      %3700 = vmatprep.subr.mxu0 0.0
      %3701 = vmatpush1.msra.mxu0 0.0
      %3702 = vmatprep.subr.mxu0 0.0
      %3703 = vmatpush1.msra.mxu0 0.0
      %3704 = vmatprep.subr.mxu0 0.0
      %3705 = vmatpush1.msra.mxu0 0.0
      %3706 = vmatprep.subr.mxu0 0.0
      %3707 = vmatpush1.msra.mxu0 0.0
      %3708 = vmatprep.subr.mxu0 0.0
      %3709 = vmatpush1.msra.mxu0 0.0
      %3710 = vmatprep.subr.mxu0 0.0
      %3711 = vmatpush1.msra.mxu0 0.0
      %3712 = vmatprep.subr.mxu0 0.0
      %3713 = vmatpush1.msra.mxu0 0.0
      %3714 = vmatprep.subr.mxu0 0.0
      %3715 = vmatpush1.msra.mxu0 0.0
      %3716 = vmatprep.subr.mxu0 0.0
      %3717 = vmatpush1.msra.mxu0 0.0
      %3718 = vmatprep.subr.mxu0 0.0
      %3719 = vmatpush1.msra.mxu0 0.0
      %3720 = vmatprep.subr.mxu0 0.0
      %3721 = vmatpush1.msra.mxu0 0.0
      %3722 = vmatprep.subr.mxu0 0.0
      %3723 = vmatpush1.msra.mxu0 0.0
      %3724 = vmatprep.subr.mxu0 0.0
      %3725 = vmatpush1.msra.mxu0 0.0
      %3726 = vmatprep.subr.mxu0 0.0
      %3727 = vmatpush1.msra.mxu0 0.0
      %3728 = vmatprep.subr.mxu0 0.0
      %3729 = vmatpush1.msra.mxu0 0.0
      %3730 = vmatprep.subr.mxu0 0.0
      %3731 = vmatpush1.msra.mxu0 0.0
      %3732 = vmatprep.subr.mxu0 0.0
      %3733 = vmatpush1.msra.mxu0 0.0
      %3734 = vmatprep.subr.mxu0 0.0
      %3735 = vmatpush1.msra.mxu0 0.0
      %3736 = vmatprep.subr.mxu0 0.0
      %3737 = vmatpush1.msra.mxu0 0.0
      %3738 = vmatprep.subr.mxu0 0.0
      %3739 = vmatpush1.msra.mxu0 0.0
      %3740 = vmatprep.subr.mxu0 0.0
      %3741 = vmatpush1.msra.mxu0 0.0
      %3742 = vmatprep.mubr.f32.mxu0 0.0
      %3743 = vmatmul.mubr.f32.gmra.mrb[0].mxu0 %v3676
      %v3744 = vpop.f32.mrb[0].mxu0
      %v3745 = vadd.f32 0.0, %v3744
      %v3746 = vpop.f32.mrb[0].mxu0
      %3747 = vdwg.mxu0
      %v3748 = vmax.f32 %v3670, %v3745
      %v3749 = vld [vmem:[%s41] sm:$0xff]
      %v3750 = vld [vmem:[%s41 + $0x8] sm:$0xff]
      %v3751 = vld [vmem:[%s41 + $0x10] sm:$0xff]
      %v3752 = vld [vmem:[%s41 + $0x18] sm:$0xff]
      %v3753 = vld [vmem:[%s41 + $0x20] sm:$0xff]
      %v3754 = vld [vmem:[%s41 + $0x28] sm:$0xff]
      %v3755 = vld [vmem:[%s41 + $0x30] sm:$0xff]
      %v3756 = vld [vmem:[%s41 + $0x38] sm:$0xff]
      %v3757 = vld [vmem:[%s41 + $0x40] sm:$0xff]
      %v3758 = vld [vmem:[%s41 + $0x48] sm:$0xff]
      %v3759 = vld [vmem:[%s41 + $0x50] sm:$0xff]
      %v3760 = vld [vmem:[%s41 + $0x58] sm:$0xff]
      %vm3761 = vcmask 785408
      %v3763 = vsel %vm3761, %v3748, 0
      %3765 = vmatprep.subr.mxu0 0.0
      %3766 = vmatpush1.msra.mxu0 %v3749
      %3767 = vmatprep.subr.mxu0 0.0
      %3768 = vmatpush1.msra.mxu0 %v3750
      %3769 = vmatprep.subr.mxu0 0.0
      %3770 = vmatpush1.msra.mxu0 %v3751
      %3771 = vmatprep.subr.mxu0 0.0
      %3772 = vmatpush1.msra.mxu0 %v3752
      %3773 = vmatprep.subr.mxu0 0.0
      %3774 = vmatpush1.msra.mxu0 %v3753
      %3775 = vmatprep.subr.mxu0 0.0
      %3776 = vmatpush1.msra.mxu0 %v3754
      %3777 = vmatprep.subr.mxu0 0.0
      %3778 = vmatpush1.msra.mxu0 %v3755
      %3779 = vmatprep.subr.mxu0 0.0
      %3780 = vmatpush1.msra.mxu0 %v3756
      %3781 = vmatprep.subr.mxu0 0.0
      %3782 = vmatpush1.msra.mxu0 %v3757
      %3783 = vmatprep.subr.mxu0 0.0
      %3784 = vmatpush1.msra.mxu0 %v3758
      %3785 = vmatprep.subr.mxu0 0.0
      %3786 = vmatpush1.msra.mxu0 %v3759
      %3787 = vmatprep.subr.mxu0 0.0
      %3788 = vmatpush1.msra.mxu0 %v3760
      %3789 = vmatprep.subr.mxu0 0.0
      %3790 = vmatpush1.msra.mxu0 0.0
      %3791 = vmatprep.subr.mxu0 0.0
      %3792 = vmatpush1.msra.mxu0 0.0
      %3793 = vmatprep.subr.mxu0 0.0
      %3794 = vmatpush1.msra.mxu0 0.0
      %3795 = vmatprep.subr.mxu0 0.0
      %3796 = vmatpush1.msra.mxu0 0.0
      %3797 = vmatprep.subr.mxu0 0.0
      %3798 = vmatpush1.msra.mxu0 0.0
      %3799 = vmatprep.subr.mxu0 0.0
      %3800 = vmatpush1.msra.mxu0 0.0
      %3801 = vmatprep.subr.mxu0 0.0
      %3802 = vmatpush1.msra.mxu0 0.0
      %3803 = vmatprep.subr.mxu0 0.0
      %3804 = vmatpush1.msra.mxu0 0.0
      %3805 = vmatprep.subr.mxu0 0.0
      %3806 = vmatpush1.msra.mxu0 0.0
      %3807 = vmatprep.subr.mxu0 0.0
      %3808 = vmatpush1.msra.mxu0 0.0
      %3809 = vmatprep.subr.mxu0 0.0
      %3810 = vmatpush1.msra.mxu0 0.0
      %3811 = vmatprep.subr.mxu0 0.0
      %3812 = vmatpush1.msra.mxu0 0.0
      %3813 = vmatprep.subr.mxu0 0.0
      %3814 = vmatpush1.msra.mxu0 0.0
      %3815 = vmatprep.subr.mxu0 0.0
      %3816 = vmatpush1.msra.mxu0 0.0
      %3817 = vmatprep.subr.mxu0 0.0
      %3818 = vmatpush1.msra.mxu0 0.0
      %3819 = vmatprep.subr.mxu0 0.0
      %3820 = vmatpush1.msra.mxu0 0.0
      %3821 = vmatprep.subr.mxu0 0.0
      %3822 = vmatpush1.msra.mxu0 0.0
      %3823 = vmatprep.subr.mxu0 0.0
      %3824 = vmatpush1.msra.mxu0 0.0
      %3825 = vmatprep.subr.mxu0 0.0
      %3826 = vmatpush1.msra.mxu0 0.0
      %3827 = vmatprep.subr.mxu0 0.0
      %3828 = vmatpush1.msra.mxu0 0.0
      %3829 = vmatprep.mubr.f32.mxu0 0.0
      %3830 = vmatmul.mubr.f32.gmra.mrb[0].mxu0 %v3763
      %v3831 = vpop.f32.mrb[0].mxu0
      %v3832 = vadd.f32 0.0, %v3831
      %v3833 = vpop.f32.mrb[0].mxu0
      %3834 = vdwg.mxu0
      %s3835 = scalar_lea.vmem %s41, 96
      %v3836 = vld [vmem:[%s3835] sm:$0xff]
      %v3837 = vld [vmem:[%s3835 + $0x8] sm:$0xff]
      %v3838 = vld [vmem:[%s3835 + $0x10] sm:$0xff]
      %v3839 = vld [vmem:[%s3835 + $0x18] sm:$0xff]
      %v3840 = vld [vmem:[%s3835 + $0x20] sm:$0xff]
      %v3841 = vld [vmem:[%s3835 + $0x28] sm:$0xff]
      %v3842 = vld [vmem:[%s3835 + $0x30] sm:$0xff]
      %v3843 = vld [vmem:[%s3835 + $0x38] sm:$0xff]
      %v3844 = vld [vmem:[%s3835 + $0x40] sm:$0xff]
      %v3845 = vld [vmem:[%s3835 + $0x48] sm:$0xff]
      %v3846 = vld [vmem:[%s3835 + $0x50] sm:$0xff]
      %v3847 = vld [vmem:[%s3835 + $0x58] sm:$0xff]
      %3848 = vmatprep.subr.mxu0 0.0
      %3849 = vmatpush1.msra.mxu0 %v3836
      %3850 = vmatprep.subr.mxu0 0.0
      %3851 = vmatpush1.msra.mxu0 %v3837
      %3852 = vmatprep.subr.mxu0 0.0
      %3853 = vmatpush1.msra.mxu0 %v3838
      %3854 = vmatprep.subr.mxu0 0.0
      %3855 = vmatpush1.msra.mxu0 %v3839
      %3856 = vmatprep.subr.mxu0 0.0
      %3857 = vmatpush1.msra.mxu0 %v3840
      %3858 = vmatprep.subr.mxu0 0.0
      %3859 = vmatpush1.msra.mxu0 %v3841
      %3860 = vmatprep.subr.mxu0 0.0
      %3861 = vmatpush1.msra.mxu0 %v3842
      %3862 = vmatprep.subr.mxu0 0.0
      %3863 = vmatpush1.msra.mxu0 %v3843
      %3864 = vmatprep.subr.mxu0 0.0
      %3865 = vmatpush1.msra.mxu0 %v3844
      %3866 = vmatprep.subr.mxu0 0.0
      %3867 = vmatpush1.msra.mxu0 %v3845
      %3868 = vmatprep.subr.mxu0 0.0
      %3869 = vmatpush1.msra.mxu0 %v3846
      %3870 = vmatprep.subr.mxu0 0.0
      %3871 = vmatpush1.msra.mxu0 %v3847
      %3872 = vmatprep.subr.mxu0 0.0
      %3873 = vmatpush1.msra.mxu0 0.0
      %3874 = vmatprep.subr.mxu0 0.0
      %3875 = vmatpush1.msra.mxu0 0.0
      %3876 = vmatprep.subr.mxu0 0.0
      %3877 = vmatpush1.msra.mxu0 0.0
      %3878 = vmatprep.subr.mxu0 0.0
      %3879 = vmatpush1.msra.mxu0 0.0
      %3880 = vmatprep.subr.mxu0 0.0
      %3881 = vmatpush1.msra.mxu0 0.0
      %3882 = vmatprep.subr.mxu0 0.0
      %3883 = vmatpush1.msra.mxu0 0.0
      %3884 = vmatprep.subr.mxu0 0.0
      %3885 = vmatpush1.msra.mxu0 0.0
      %3886 = vmatprep.subr.mxu0 0.0
      %3887 = vmatpush1.msra.mxu0 0.0
      %3888 = vmatprep.subr.mxu0 0.0
      %3889 = vmatpush1.msra.mxu0 0.0
      %3890 = vmatprep.subr.mxu0 0.0
      %3891 = vmatpush1.msra.mxu0 0.0
      %3892 = vmatprep.subr.mxu0 0.0
      %3893 = vmatpush1.msra.mxu0 0.0
      %3894 = vmatprep.subr.mxu0 0.0
      %3895 = vmatpush1.msra.mxu0 0.0
      %3896 = vmatprep.subr.mxu0 0.0
      %3897 = vmatpush1.msra.mxu0 0.0
      %3898 = vmatprep.subr.mxu0 0.0
      %3899 = vmatpush1.msra.mxu0 0.0
      %3900 = vmatprep.subr.mxu0 0.0
      %3901 = vmatpush1.msra.mxu0 0.0
      %3902 = vmatprep.subr.mxu0 0.0
      %3903 = vmatpush1.msra.mxu0 0.0
      %3904 = vmatprep.subr.mxu0 0.0
      %3905 = vmatpush1.msra.mxu0 0.0
      %3906 = vmatprep.subr.mxu0 0.0
      %3907 = vmatpush1.msra.mxu0 0.0
      %3908 = vmatprep.subr.mxu0 0.0
      %3909 = vmatpush1.msra.mxu0 0.0
      %3910 = vmatprep.subr.mxu0 0.0
      %3911 = vmatpush1.msra.mxu0 0.0
      %3912 = vmatprep.mubr.f32.mxu0 0.0
      %3913 = vmatmul.mubr.f32.gmra.mrb[0].mxu0 %v3763
      %v3914 = vpop.f32.mrb[0].mxu0
      %v3915 = vadd.f32 0.0, %v3914
      %v3916 = vpop.f32.mrb[0].mxu0
      %3917 = vdwg.mxu0
      %v3918 = vmax.f32 %v3832, %v3915
      %vm3919 = vcmask 588800
      %3920 = vst.msk [vmem:[#allocation5] sm:$0xff] %vm3919, 0.0
      %vm3921 = vcmask 582656
      %3922 = vst.msk [vmem:[#allocation5 + $0x8] sm:$0x3] %vm3921, 0.0
      %3923 = vst.msk [vmem:[#allocation5 + $0x1] sm:$0xff] %vm3919, %v3918
      %v3924 = vld [vmem:[#allocation5] sm:$0xff]
      %v3925 = vld [vmem:[%s31] sm:$0xff]
      %3927 = vset.pattern.permute.xlu0 0
      %3928 = vperm.xlu0 %3927, %v3925
      %v3929 = vpop.permute.xlu0 %3928
      %v3931 = vmul.f32 %v3924, %v3929
      %v3932 = vld [vmem:[%s1181] sm:$0xff]
      %v3933 = vld [vmem:[%s1181 + $0x8] sm:$0xff]
      %v3934 = vld [vmem:[%s1181 + $0x10] sm:$0xff]
      %v3935 = vld [vmem:[%s1181 + $0x18] sm:$0xff]
      %v3936 = vld [vmem:[%s1181 + $0x20] sm:$0xff]
      %v3937 = vld [vmem:[%s1181 + $0x28] sm:$0xff]
      %v3938 = vld [vmem:[%s1181 + $0x30] sm:$0xff]
      %v3939 = vld [vmem:[%s1181 + $0x38] sm:$0xff]
      %v3940 = vld [vmem:[%s1181 + $0x40] sm:$0xff]
      %v3941 = vld [vmem:[#allocation5 + $0x1] sm:$0xff]
      %s3942 = scalar_lea.vmem %s1181, 72
      %v3943 = vld [vmem:[%s3942] sm:$0xff]
      %v3944 = vld [vmem:[%s3942 + $0x8] sm:$0xff]
      %v3945 = vld [vmem:[%s3942 + $0x10] sm:$0xff]
      %v3946 = vld [vmem:[%s3942 + $0x18] sm:$0xff]
      %v3947 = vld [vmem:[%s3942 + $0x20] sm:$0xff]
      %v3948 = vld [vmem:[%s3942 + $0x28] sm:$0xff]
      %v3949 = vld [vmem:[%s3942 + $0x30] sm:$0xff]
      %v3950 = vld [vmem:[%s3942 + $0x38] sm:$0xff]
      %v3951 = vld [vmem:[%s3942 + $0x40] sm:$0xff]
      %v3953 = vsel %vm3919, %v3941, 0
      %3955 = vmatprep.subr.mxu0 0.0
      %3956 = vmatpush1.msra.mxu0 %v3943
      %3957 = vmatprep.subr.mxu0 0.0
      %3958 = vmatpush1.msra.mxu0 %v3944
      %3959 = vmatprep.subr.mxu0 0.0
      %3960 = vmatpush1.msra.mxu0 %v3945
      %3961 = vmatprep.subr.mxu0 0.0
      %3962 = vmatpush1.msra.mxu0 %v3946
      %3963 = vmatprep.subr.mxu0 0.0
      %3964 = vmatpush1.msra.mxu0 %v3947
      %3965 = vmatprep.subr.mxu0 0.0
      %3966 = vmatpush1.msra.mxu0 %v3948
      %3967 = vmatprep.subr.mxu0 0.0
      %3968 = vmatpush1.msra.mxu0 %v3949
      %3969 = vmatprep.subr.mxu0 0.0
      %3970 = vmatpush1.msra.mxu0 %v3950
      %3971 = vmatprep.subr.mxu0 0.0
      %3972 = vmatpush1.msra.mxu0 %v3951
      %3973 = vmatprep.subr.mxu0 0.0
      %3974 = vmatpush1.msra.mxu0 0.0
      %3975 = vmatprep.subr.mxu0 0.0
      %3976 = vmatpush1.msra.mxu0 0.0
      %3977 = vmatprep.subr.mxu0 0.0
      %3978 = vmatpush1.msra.mxu0 0.0
      %3979 = vmatprep.subr.mxu0 0.0
      %3980 = vmatpush1.msra.mxu0 0.0
      %3981 = vmatprep.subr.mxu0 0.0
      %3982 = vmatpush1.msra.mxu0 0.0
      %3983 = vmatprep.subr.mxu0 0.0
      %3984 = vmatpush1.msra.mxu0 0.0
      %3985 = vmatprep.subr.mxu0 0.0
      %3986 = vmatpush1.msra.mxu0 0.0
      %3987 = vmatprep.subr.mxu0 0.0
      %3988 = vmatpush1.msra.mxu0 0.0
      %3989 = vmatprep.subr.mxu0 0.0
      %3990 = vmatpush1.msra.mxu0 0.0
      %3991 = vmatprep.subr.mxu0 0.0
      %3992 = vmatpush1.msra.mxu0 0.0
      %3993 = vmatprep.subr.mxu0 0.0
      %3994 = vmatpush1.msra.mxu0 0.0
      %3995 = vmatprep.subr.mxu0 0.0
      %3996 = vmatpush1.msra.mxu0 0.0
      %3997 = vmatprep.subr.mxu0 0.0
      %3998 = vmatpush1.msra.mxu0 0.0
      %3999 = vmatprep.subr.mxu0 0.0
      %4000 = vmatpush1.msra.mxu0 0.0
      %4001 = vmatprep.subr.mxu0 0.0
      %4002 = vmatpush1.msra.mxu0 0.0
      %4003 = vmatprep.subr.mxu0 0.0
      %4004 = vmatpush1.msra.mxu0 0.0
      %4005 = vmatprep.subr.mxu0 0.0
      %4006 = vmatpush1.msra.mxu0 0.0
      %4007 = vmatprep.subr.mxu0 0.0
      %4008 = vmatpush1.msra.mxu0 0.0
      %4009 = vmatprep.subr.mxu0 0.0
      %4010 = vmatpush1.msra.mxu0 0.0
      %4011 = vmatprep.subr.mxu0 0.0
      %4012 = vmatpush1.msra.mxu0 0.0
      %4013 = vmatprep.subr.mxu0 0.0
      %4014 = vmatpush1.msra.mxu0 0.0
      %4015 = vmatprep.subr.mxu0 0.0
      %4016 = vmatpush1.msra.mxu0 0.0
      %4017 = vmatprep.subr.mxu0 0.0
      %4018 = vmatpush1.msra.mxu0 0.0
      %4019 = vmatprep.mubr.f32.mxu0 0.0
      %4020 = vmatmul.mubr.f32.gmra.mrb[0].mxu0 %v3953
      %v4021 = vpop.f32.mrb[0].mxu0
      %v4022 = vadd.f32 0.0, %v4021
      %v4023 = vpop.f32.mrb[0].mxu0
      %4024 = vdwg.mxu0
      %v4026 = vsel %vm3919, %v3931, 0
      %4028 = vmatprep.subr.mxu0 0.0
      %4029 = vmatpush1.msra.mxu0 %v3932
      %4030 = vmatprep.subr.mxu0 0.0
      %4031 = vmatpush1.msra.mxu0 %v3933
      %4032 = vmatprep.subr.mxu0 0.0
      %4033 = vmatpush1.msra.mxu0 %v3934
      %4034 = vmatprep.subr.mxu0 0.0
      %4035 = vmatpush1.msra.mxu0 %v3935
      %4036 = vmatprep.subr.mxu0 0.0
      %4037 = vmatpush1.msra.mxu0 %v3936
      %4038 = vmatprep.subr.mxu0 0.0
      %4039 = vmatpush1.msra.mxu0 %v3937
      %4040 = vmatprep.subr.mxu0 0.0
      %4041 = vmatpush1.msra.mxu0 %v3938
      %4042 = vmatprep.subr.mxu0 0.0
      %4043 = vmatpush1.msra.mxu0 %v3939
      %4044 = vmatprep.subr.mxu0 0.0
      %4045 = vmatpush1.msra.mxu0 %v3940
      %4046 = vmatprep.subr.mxu0 0.0
      %4047 = vmatpush1.msra.mxu0 0.0
      %4048 = vmatprep.subr.mxu0 0.0
      %4049 = vmatpush1.msra.mxu0 0.0
      %4050 = vmatprep.subr.mxu0 0.0
      %4051 = vmatpush1.msra.mxu0 0.0
      %4052 = vmatprep.subr.mxu0 0.0
      %4053 = vmatpush1.msra.mxu0 0.0
      %4054 = vmatprep.subr.mxu0 0.0
      %4055 = vmatpush1.msra.mxu0 0.0
      %4056 = vmatprep.subr.mxu0 0.0
      %4057 = vmatpush1.msra.mxu0 0.0
      %4058 = vmatprep.subr.mxu0 0.0
      %4059 = vmatpush1.msra.mxu0 0.0
      %4060 = vmatprep.subr.mxu0 0.0
      %4061 = vmatpush1.msra.mxu0 0.0
      %4062 = vmatprep.subr.mxu0 0.0
      %4063 = vmatpush1.msra.mxu0 0.0
      %4064 = vmatprep.subr.mxu0 0.0
      %4065 = vmatpush1.msra.mxu0 0.0
      %4066 = vmatprep.subr.mxu0 0.0
      %4067 = vmatpush1.msra.mxu0 0.0
      %4068 = vmatprep.subr.mxu0 0.0
      %4069 = vmatpush1.msra.mxu0 0.0
      %4070 = vmatprep.subr.mxu0 0.0
      %4071 = vmatpush1.msra.mxu0 0.0
      %4072 = vmatprep.subr.mxu0 0.0
      %4073 = vmatpush1.msra.mxu0 0.0
      %4074 = vmatprep.subr.mxu0 0.0
      %4075 = vmatpush1.msra.mxu0 0.0
      %4076 = vmatprep.subr.mxu0 0.0
      %4077 = vmatpush1.msra.mxu0 0.0
      %4078 = vmatprep.subr.mxu0 0.0
      %4079 = vmatpush1.msra.mxu0 0.0
      %4080 = vmatprep.subr.mxu0 0.0
      %4081 = vmatpush1.msra.mxu0 0.0
      %4082 = vmatprep.subr.mxu0 0.0
      %4083 = vmatpush1.msra.mxu0 0.0
      %4084 = vmatprep.subr.mxu0 0.0
      %4085 = vmatpush1.msra.mxu0 0.0
      %4086 = vmatprep.subr.mxu0 0.0
      %4087 = vmatpush1.msra.mxu0 0.0
      %4088 = vmatprep.subr.mxu0 0.0
      %4089 = vmatpush1.msra.mxu0 0.0
      %4090 = vmatprep.subr.mxu0 0.0
      %4091 = vmatpush1.msra.mxu0 0.0
      %4092 = vmatprep.mubr.f32.mxu0 0.0
      %4093 = vmatmul.mubr.f32.gmra.mrb[0].mxu0 %v4026
      %v4094 = vpop.f32.mrb[0].mxu0
      %v4095 = vadd.f32 %v4022, %v4094
      %v4096 = vpop.f32.mrb[0].mxu0
      %4097 = vdwg.mxu0
      %v4098 = vld [vmem:[#allocation5 + $0x2] sm:$0xff]
      %s4099 = scalar_lea.vmem %s31, 8
      %v4100 = vld [vmem:[%s4099] sm:$0xff]
      %4102 = vset.pattern.permute.xlu0 0
      %4103 = vperm.xlu0 %4102, %v4100
      %v4104 = vpop.permute.xlu0 %4103
      %v4106 = vmul.f32 %v4098, %v4104
      %s4107 = scalar_lea.vmem %s1181, 144
      %v4108 = vld [vmem:[%s4107] sm:$0xff]
      %v4109 = vld [vmem:[%s4107 + $0x8] sm:$0xff]
      %v4110 = vld [vmem:[%s4107 + $0x10] sm:$0xff]
      %v4111 = vld [vmem:[%s4107 + $0x18] sm:$0xff]
      %v4112 = vld [vmem:[%s4107 + $0x20] sm:$0xff]
      %v4113 = vld [vmem:[%s4107 + $0x28] sm:$0xff]
      %v4114 = vld [vmem:[%s4107 + $0x30] sm:$0xff]
      %v4115 = vld [vmem:[%s4107 + $0x38] sm:$0xff]
      %v4116 = vld [vmem:[%s4107 + $0x40] sm:$0xff]
      %v4118 = vsel %vm3919, %v4106, 0
      %4120 = vmatprep.subr.mxu0 0.0
      %4121 = vmatpush1.msra.mxu0 %v4108
      %4122 = vmatprep.subr.mxu0 0.0
      %4123 = vmatpush1.msra.mxu0 %v4109
      %4124 = vmatprep.subr.mxu0 0.0
      %4125 = vmatpush1.msra.mxu0 %v4110
      %4126 = vmatprep.subr.mxu0 0.0
      %4127 = vmatpush1.msra.mxu0 %v4111
      %4128 = vmatprep.subr.mxu0 0.0
      %4129 = vmatpush1.msra.mxu0 %v4112
      %4130 = vmatprep.subr.mxu0 0.0
      %4131 = vmatpush1.msra.mxu0 %v4113
      %4132 = vmatprep.subr.mxu0 0.0
      %4133 = vmatpush1.msra.mxu0 %v4114
      %4134 = vmatprep.subr.mxu0 0.0
      %4135 = vmatpush1.msra.mxu0 %v4115
      %4136 = vmatprep.subr.mxu0 0.0
      %4137 = vmatpush1.msra.mxu0 %v4116
      %4138 = vmatprep.subr.mxu0 0.0
      %4139 = vmatpush1.msra.mxu0 0.0
      %4140 = vmatprep.subr.mxu0 0.0
      %4141 = vmatpush1.msra.mxu0 0.0
      %4142 = vmatprep.subr.mxu0 0.0
      %4143 = vmatpush1.msra.mxu0 0.0
      %4144 = vmatprep.subr.mxu0 0.0
      %4145 = vmatpush1.msra.mxu0 0.0
      %4146 = vmatprep.subr.mxu0 0.0
      %4147 = vmatpush1.msra.mxu0 0.0
      %4148 = vmatprep.subr.mxu0 0.0
      %4149 = vmatpush1.msra.mxu0 0.0
      %4150 = vmatprep.subr.mxu0 0.0
      %4151 = vmatpush1.msra.mxu0 0.0
      %4152 = vmatprep.subr.mxu0 0.0
      %4153 = vmatpush1.msra.mxu0 0.0
      %4154 = vmatprep.subr.mxu0 0.0
      %4155 = vmatpush1.msra.mxu0 0.0
      %4156 = vmatprep.subr.mxu0 0.0
      %4157 = vmatpush1.msra.mxu0 0.0
      %4158 = vmatprep.subr.mxu0 0.0
      %4159 = vmatpush1.msra.mxu0 0.0
      %4160 = vmatprep.subr.mxu0 0.0
      %4161 = vmatpush1.msra.mxu0 0.0
      %4162 = vmatprep.subr.mxu0 0.0
      %4163 = vmatpush1.msra.mxu0 0.0
      %4164 = vmatprep.subr.mxu0 0.0
      %4165 = vmatpush1.msra.mxu0 0.0
      %4166 = vmatprep.subr.mxu0 0.0
      %4167 = vmatpush1.msra.mxu0 0.0
      %4168 = vmatprep.subr.mxu0 0.0
      %4169 = vmatpush1.msra.mxu0 0.0
      %4170 = vmatprep.subr.mxu0 0.0
      %4171 = vmatpush1.msra.mxu0 0.0
      %4172 = vmatprep.subr.mxu0 0.0
      %4173 = vmatpush1.msra.mxu0 0.0
      %4174 = vmatprep.subr.mxu0 0.0
      %4175 = vmatpush1.msra.mxu0 0.0
      %4176 = vmatprep.subr.mxu0 0.0
      %4177 = vmatpush1.msra.mxu0 0.0
      %4178 = vmatprep.subr.mxu0 0.0
      %4179 = vmatpush1.msra.mxu0 0.0
      %4180 = vmatprep.subr.mxu0 0.0
      %4181 = vmatpush1.msra.mxu0 0.0
      %4182 = vmatprep.subr.mxu0 0.0
      %4183 = vmatpush1.msra.mxu0 0.0
      %4184 = vmatprep.mubr.f32.mxu0 0.0
      %4185 = vmatmul.mubr.f32.gmra.mrb[0].mxu0 %v4118
      %v4186 = vpop.f32.mrb[0].mxu0
      %v4187 = vadd.f32 0.0, %v4186
      %v4188 = vpop.f32.mrb[0].mxu0
      %4189 = vdwg.mxu0
      %v4190 = vadd.f32 %v4095, %v4187
      %v4191 = vld [vmem:[%s1184] sm:$0x1]
      %v4193 = vlaneseq
      %v4194 = vshrl.u32 %v4193, 7
      %v4195 = vsub.s32 0, %v4194
      %v4196 = vrot.slane %v4191, %v4195
      %v4198 = vadd.f32 %v4190, %v4196
      %v4199 = vmax.f32 %v4198, 0.0
      %v4200 = vld [vmem:[%s43] sm:$0xf]
      %vm4201 = vcmask 64512
      %v4203 = vsel %vm4201, %v4200, 0
      %4205 = vmatprep.subr.mxu0 0.0
      %4206 = vmatpush1.msra.mxu0 %v4199
      %4207 = vmatprep.subr.mxu0 0.0
      %4208 = vmatpush1.msra.mxu0 0.0
      %4209 = vmatprep.subr.mxu0 0.0
      %4210 = vmatpush1.msra.mxu0 0.0
      %4211 = vmatprep.subr.mxu0 0.0
      %4212 = vmatpush1.msra.mxu0 0.0
      %4213 = vmatprep.subr.mxu0 0.0
      %4214 = vmatpush1.msra.mxu0 0.0
      %4215 = vmatprep.subr.mxu0 0.0
      %4216 = vmatpush1.msra.mxu0 0.0
      %4217 = vmatprep.subr.mxu0 0.0
      %4218 = vmatpush1.msra.mxu0 0.0
      %4219 = vmatprep.subr.mxu0 0.0
      %4220 = vmatpush1.msra.mxu0 0.0
      %4221 = vmatprep.subr.mxu0 0.0
      %4222 = vmatpush1.msra.mxu0 0.0
      %4223 = vmatprep.subr.mxu0 0.0
      %4224 = vmatpush1.msra.mxu0 0.0
      %4225 = vmatprep.subr.mxu0 0.0
      %4226 = vmatpush1.msra.mxu0 0.0
      %4227 = vmatprep.subr.mxu0 0.0
      %4228 = vmatpush1.msra.mxu0 0.0
      %4229 = vmatprep.subr.mxu0 0.0
      %4230 = vmatpush1.msra.mxu0 0.0
      %4231 = vmatprep.subr.mxu0 0.0
      %4232 = vmatpush1.msra.mxu0 0.0
      %4233 = vmatprep.subr.mxu0 0.0
      %4234 = vmatpush1.msra.mxu0 0.0
      %4235 = vmatprep.subr.mxu0 0.0
      %4236 = vmatpush1.msra.mxu0 0.0
      %4237 = vmatprep.subr.mxu0 0.0
      %4238 = vmatpush1.msra.mxu0 0.0
      %4239 = vmatprep.subr.mxu0 0.0
      %4240 = vmatpush1.msra.mxu0 0.0
      %4241 = vmatprep.subr.mxu0 0.0
      %4242 = vmatpush1.msra.mxu0 0.0
      %4243 = vmatprep.subr.mxu0 0.0
      %4244 = vmatpush1.msra.mxu0 0.0
      %4245 = vmatprep.subr.mxu0 0.0
      %4246 = vmatpush1.msra.mxu0 0.0
      %4247 = vmatprep.subr.mxu0 0.0
      %4248 = vmatpush1.msra.mxu0 0.0
      %4249 = vmatprep.subr.mxu0 0.0
      %4250 = vmatpush1.msra.mxu0 0.0
      %4251 = vmatprep.subr.mxu0 0.0
      %4252 = vmatpush1.msra.mxu0 0.0
      %4253 = vmatprep.subr.mxu0 0.0
      %4254 = vmatpush1.msra.mxu0 0.0
      %4255 = vmatprep.subr.mxu0 0.0
      %4256 = vmatpush1.msra.mxu0 0.0
      %4257 = vmatprep.subr.mxu0 0.0
      %4258 = vmatpush1.msra.mxu0 0.0
      %4259 = vmatprep.subr.mxu0 0.0
      %4260 = vmatpush1.msra.mxu0 0.0
      %4261 = vmatprep.subr.mxu0 0.0
      %4262 = vmatpush1.msra.mxu0 0.0
      %4263 = vmatprep.subr.mxu0 0.0
      %4264 = vmatpush1.msra.mxu0 0.0
      %4265 = vmatprep.subr.mxu0 0.0
      %4266 = vmatpush1.msra.mxu0 0.0
      %4267 = vmatprep.subr.mxu0 0.0
      %4268 = vmatpush1.msra.mxu0 0.0
      %4269 = vmatprep.mubr.f32.mxu0 0.0
      %4270 = vmatmul.mubr.f32.gmra.mrb[0].mxu0 %v4203
      %v4271 = vpop.f32.mrb[0].mxu0
      %v4272 = vadd.f32 0.0, %v4271
      %v4273 = vpop.f32.mrb[0].mxu0
      %4274 = vdwg.mxu0
      %s4275 = scalar_lea.vmem %s43, 4
      %v4276 = vld [vmem:[%s4275] sm:$0xf]
      %v4278 = vsel %vm4201, %v4276, 0
      %4280 = vmatprep.subr.mxu0 0.0
      %4281 = vmatpush1.msra.mxu0 %v4199
      %4282 = vmatprep.subr.mxu0 0.0
      %4283 = vmatpush1.msra.mxu0 0.0
      %4284 = vmatprep.subr.mxu0 0.0
      %4285 = vmatpush1.msra.mxu0 0.0
      %4286 = vmatprep.subr.mxu0 0.0
      %4287 = vmatpush1.msra.mxu0 0.0
      %4288 = vmatprep.subr.mxu0 0.0
      %4289 = vmatpush1.msra.mxu0 0.0
      %4290 = vmatprep.subr.mxu0 0.0
      %4291 = vmatpush1.msra.mxu0 0.0
      %4292 = vmatprep.subr.mxu0 0.0
      %4293 = vmatpush1.msra.mxu0 0.0
      %4294 = vmatprep.subr.mxu0 0.0
      %4295 = vmatpush1.msra.mxu0 0.0
      %4296 = vmatprep.subr.mxu0 0.0
      %4297 = vmatpush1.msra.mxu0 0.0
      %4298 = vmatprep.subr.mxu0 0.0
      %4299 = vmatpush1.msra.mxu0 0.0
      %4300 = vmatprep.subr.mxu0 0.0
      %4301 = vmatpush1.msra.mxu0 0.0
      %4302 = vmatprep.subr.mxu0 0.0
      %4303 = vmatpush1.msra.mxu0 0.0
      %4304 = vmatprep.subr.mxu0 0.0
      %4305 = vmatpush1.msra.mxu0 0.0
      %4306 = vmatprep.subr.mxu0 0.0
      %4307 = vmatpush1.msra.mxu0 0.0
      %4308 = vmatprep.subr.mxu0 0.0
      %4309 = vmatpush1.msra.mxu0 0.0
      %4310 = vmatprep.subr.mxu0 0.0
      %4311 = vmatpush1.msra.mxu0 0.0
      %4312 = vmatprep.subr.mxu0 0.0
      %4313 = vmatpush1.msra.mxu0 0.0
      %4314 = vmatprep.subr.mxu0 0.0
      %4315 = vmatpush1.msra.mxu0 0.0
      %4316 = vmatprep.subr.mxu0 0.0
      %4317 = vmatpush1.msra.mxu0 0.0
      %4318 = vmatprep.subr.mxu0 0.0
      %4319 = vmatpush1.msra.mxu0 0.0
      %4320 = vmatprep.subr.mxu0 0.0
      %4321 = vmatpush1.msra.mxu0 0.0
      %4322 = vmatprep.subr.mxu0 0.0
      %4323 = vmatpush1.msra.mxu0 0.0
      %4324 = vmatprep.subr.mxu0 0.0
      %4325 = vmatpush1.msra.mxu0 0.0
      %4326 = vmatprep.subr.mxu0 0.0
      %4327 = vmatpush1.msra.mxu0 0.0
      %4328 = vmatprep.subr.mxu0 0.0
      %4329 = vmatpush1.msra.mxu0 0.0
      %4330 = vmatprep.subr.mxu0 0.0
      %4331 = vmatpush1.msra.mxu0 0.0
      %4332 = vmatprep.subr.mxu0 0.0
      %4333 = vmatpush1.msra.mxu0 0.0
      %4334 = vmatprep.subr.mxu0 0.0
      %4335 = vmatpush1.msra.mxu0 0.0
      %4336 = vmatprep.subr.mxu0 0.0
      %4337 = vmatpush1.msra.mxu0 0.0
      %4338 = vmatprep.subr.mxu0 0.0
      %4339 = vmatpush1.msra.mxu0 0.0
      %4340 = vmatprep.subr.mxu0 0.0
      %4341 = vmatpush1.msra.mxu0 0.0
      %4342 = vmatprep.subr.mxu0 0.0
      %4343 = vmatpush1.msra.mxu0 0.0
      %4344 = vmatprep.mubr.f32.mxu0 0.0
      %4345 = vmatmul.mubr.f32.gmra.mrb[0].mxu0 %v4278
      %v4346 = vpop.f32.mrb[0].mxu0
      %v4347 = vadd.f32 0.0, %v4346
      %v4348 = vpop.f32.mrb[0].mxu0
      %4349 = vdwg.mxu0
      %v4350 = vmax.f32 %v4272, %v4347
      %v4351 = vld [vmem:[%s45] sm:$0xff]
      %v4352 = vld [vmem:[%s45 + $0x8] sm:$0xff]
      %v4353 = vld [vmem:[%s45 + $0x10] sm:$0xff]
      %v4354 = vld [vmem:[%s45 + $0x18] sm:$0xff]
      %v4355 = vld [vmem:[%s45 + $0x20] sm:$0xff]
      %v4356 = vld [vmem:[%s45 + $0x28] sm:$0xff]
      %vm4357 = vcmask 392192
      %v4359 = vsel %vm4357, %v4350, 0
      %4361 = vmatprep.subr.mxu0 0.0
      %4362 = vmatpush1.msra.mxu0 %v4351
      %4363 = vmatprep.subr.mxu0 0.0
      %4364 = vmatpush1.msra.mxu0 %v4352
      %4365 = vmatprep.subr.mxu0 0.0
      %4366 = vmatpush1.msra.mxu0 %v4353
      %4367 = vmatprep.subr.mxu0 0.0
      %4368 = vmatpush1.msra.mxu0 %v4354
      %4369 = vmatprep.subr.mxu0 0.0
      %4370 = vmatpush1.msra.mxu0 %v4355
      %4371 = vmatprep.subr.mxu0 0.0
      %4372 = vmatpush1.msra.mxu0 %v4356
      %4373 = vmatprep.subr.mxu0 0.0
      %4374 = vmatpush1.msra.mxu0 0.0
      %4375 = vmatprep.subr.mxu0 0.0
      %4376 = vmatpush1.msra.mxu0 0.0
      %4377 = vmatprep.subr.mxu0 0.0
      %4378 = vmatpush1.msra.mxu0 0.0
      %4379 = vmatprep.subr.mxu0 0.0
      %4380 = vmatpush1.msra.mxu0 0.0
      %4381 = vmatprep.subr.mxu0 0.0
      %4382 = vmatpush1.msra.mxu0 0.0
      %4383 = vmatprep.subr.mxu0 0.0
      %4384 = vmatpush1.msra.mxu0 0.0
      %4385 = vmatprep.subr.mxu0 0.0
      %4386 = vmatpush1.msra.mxu0 0.0
      %4387 = vmatprep.subr.mxu0 0.0
      %4388 = vmatpush1.msra.mxu0 0.0
      %4389 = vmatprep.subr.mxu0 0.0
      %4390 = vmatpush1.msra.mxu0 0.0
      %4391 = vmatprep.subr.mxu0 0.0
      %4392 = vmatpush1.msra.mxu0 0.0
      %4393 = vmatprep.subr.mxu0 0.0
      %4394 = vmatpush1.msra.mxu0 0.0
      %4395 = vmatprep.subr.mxu0 0.0
      %4396 = vmatpush1.msra.mxu0 0.0
      %4397 = vmatprep.subr.mxu0 0.0
      %4398 = vmatpush1.msra.mxu0 0.0
      %4399 = vmatprep.subr.mxu0 0.0
      %4400 = vmatpush1.msra.mxu0 0.0
      %4401 = vmatprep.subr.mxu0 0.0
      %4402 = vmatpush1.msra.mxu0 0.0
      %4403 = vmatprep.subr.mxu0 0.0
      %4404 = vmatpush1.msra.mxu0 0.0
      %4405 = vmatprep.subr.mxu0 0.0
      %4406 = vmatpush1.msra.mxu0 0.0
      %4407 = vmatprep.subr.mxu0 0.0
      %4408 = vmatpush1.msra.mxu0 0.0
      %4409 = vmatprep.subr.mxu0 0.0
      %4410 = vmatpush1.msra.mxu0 0.0
      %4411 = vmatprep.subr.mxu0 0.0
      %4412 = vmatpush1.msra.mxu0 0.0
      %4413 = vmatprep.subr.mxu0 0.0
      %4414 = vmatpush1.msra.mxu0 0.0
      %4415 = vmatprep.subr.mxu0 0.0
      %4416 = vmatpush1.msra.mxu0 0.0
      %4417 = vmatprep.subr.mxu0 0.0
      %4418 = vmatpush1.msra.mxu0 0.0
      %4419 = vmatprep.subr.mxu0 0.0
      %4420 = vmatpush1.msra.mxu0 0.0
      %4421 = vmatprep.subr.mxu0 0.0
      %4422 = vmatpush1.msra.mxu0 0.0
      %4423 = vmatprep.subr.mxu0 0.0
      %4424 = vmatpush1.msra.mxu0 0.0
      %4425 = vmatprep.mubr.f32.mxu0 0.0
      %4426 = vmatmul.mubr.f32.gmra.mrb[0].mxu0 %v4359
      %v4427 = vpop.f32.mrb[0].mxu0
      %v4428 = vadd.f32 0.0, %v4427
      %v4429 = vpop.f32.mrb[0].mxu0
      %4430 = vdwg.mxu0
      %s4431 = scalar_lea.vmem %s45, 48
      %v4432 = vld [vmem:[%s4431] sm:$0xff]
      %v4433 = vld [vmem:[%s4431 + $0x8] sm:$0xff]
      %v4434 = vld [vmem:[%s4431 + $0x10] sm:$0xff]
      %v4435 = vld [vmem:[%s4431 + $0x18] sm:$0xff]
      %v4436 = vld [vmem:[%s4431 + $0x20] sm:$0xff]
      %v4437 = vld [vmem:[%s4431 + $0x28] sm:$0xff]
      %4438 = vmatprep.subr.mxu0 0.0
      %4439 = vmatpush1.msra.mxu0 %v4432
      %4440 = vmatprep.subr.mxu0 0.0
      %4441 = vmatpush1.msra.mxu0 %v4433
      %4442 = vmatprep.subr.mxu0 0.0
      %4443 = vmatpush1.msra.mxu0 %v4434
      %4444 = vmatprep.subr.mxu0 0.0
      %4445 = vmatpush1.msra.mxu0 %v4435
      %4446 = vmatprep.subr.mxu0 0.0
      %4447 = vmatpush1.msra.mxu0 %v4436
      %4448 = vmatprep.subr.mxu0 0.0
      %4449 = vmatpush1.msra.mxu0 %v4437
      %4450 = vmatprep.subr.mxu0 0.0
      %4451 = vmatpush1.msra.mxu0 0.0
      %4452 = vmatprep.subr.mxu0 0.0
      %4453 = vmatpush1.msra.mxu0 0.0
      %4454 = vmatprep.subr.mxu0 0.0
      %4455 = vmatpush1.msra.mxu0 0.0
      %4456 = vmatprep.subr.mxu0 0.0
      %4457 = vmatpush1.msra.mxu0 0.0
      %4458 = vmatprep.subr.mxu0 0.0
      %4459 = vmatpush1.msra.mxu0 0.0
      %4460 = vmatprep.subr.mxu0 0.0
      %4461 = vmatpush1.msra.mxu0 0.0
      %4462 = vmatprep.subr.mxu0 0.0
      %4463 = vmatpush1.msra.mxu0 0.0
      %4464 = vmatprep.subr.mxu0 0.0
      %4465 = vmatpush1.msra.mxu0 0.0
      %4466 = vmatprep.subr.mxu0 0.0
      %4467 = vmatpush1.msra.mxu0 0.0
      %4468 = vmatprep.subr.mxu0 0.0
      %4469 = vmatpush1.msra.mxu0 0.0
      %4470 = vmatprep.subr.mxu0 0.0
      %4471 = vmatpush1.msra.mxu0 0.0
      %4472 = vmatprep.subr.mxu0 0.0
      %4473 = vmatpush1.msra.mxu0 0.0
      %4474 = vmatprep.subr.mxu0 0.0
      %4475 = vmatpush1.msra.mxu0 0.0
      %4476 = vmatprep.subr.mxu0 0.0
      %4477 = vmatpush1.msra.mxu0 0.0
      %4478 = vmatprep.subr.mxu0 0.0
      %4479 = vmatpush1.msra.mxu0 0.0
      %4480 = vmatprep.subr.mxu0 0.0
      %4481 = vmatpush1.msra.mxu0 0.0
      %4482 = vmatprep.subr.mxu0 0.0
      %4483 = vmatpush1.msra.mxu0 0.0
      %4484 = vmatprep.subr.mxu0 0.0
      %4485 = vmatpush1.msra.mxu0 0.0
      %4486 = vmatprep.subr.mxu0 0.0
      %4487 = vmatpush1.msra.mxu0 0.0
      %4488 = vmatprep.subr.mxu0 0.0
      %4489 = vmatpush1.msra.mxu0 0.0
      %4490 = vmatprep.subr.mxu0 0.0
      %4491 = vmatpush1.msra.mxu0 0.0
      %4492 = vmatprep.subr.mxu0 0.0
      %4493 = vmatpush1.msra.mxu0 0.0
      %4494 = vmatprep.subr.mxu0 0.0
      %4495 = vmatpush1.msra.mxu0 0.0
      %4496 = vmatprep.subr.mxu0 0.0
      %4497 = vmatpush1.msra.mxu0 0.0
      %4498 = vmatprep.subr.mxu0 0.0
      %4499 = vmatpush1.msra.mxu0 0.0
      %4500 = vmatprep.subr.mxu0 0.0
      %4501 = vmatpush1.msra.mxu0 0.0
      %4502 = vmatprep.mubr.f32.mxu0 0.0
      %4503 = vmatmul.mubr.f32.gmra.mrb[0].mxu0 %v4359
      %v4504 = vpop.f32.mrb[0].mxu0
      %v4505 = vadd.f32 0.0, %v4504
      %v4506 = vpop.f32.mrb[0].mxu0
      %4507 = vdwg.mxu0
      %v4508 = vmax.f32 %v4428, %v4505
      %vm4509 = vcmask 390144
      %4510 = vst.msk [vmem:[#allocation6] sm:$0x3f] %vm4509, 0.0
      %vm4511 = vcmask 388096
      %4512 = vst.msk [vmem:[#allocation6 + $0x1] sm:$0xf] %vm4511, %v4508
      %v4513 = vld [vmem:[#allocation6] sm:$0xf]
      %v4514 = vld [vmem:[%s33] sm:$0xf]
      %4516 = vset.pattern.permute.xlu0 0
      %4517 = vperm.xlu0 %4516, %v4514
      %v4518 = vpop.permute.xlu0 %4517
      %v4520 = vmul.f32 %v4513, %v4518
      %v4521 = vld [vmem:[%s1189] sm:$0xff]
      %v4522 = vld [vmem:[%s1189 + $0x8] sm:$0xff]
      %v4523 = vld [vmem:[%s1189 + $0x10] sm:$0xff]
      %v4524 = vld [vmem:[%s1189 + $0x18] sm:$0xff]
      %v4525 = vld [vmem:[%s1189 + $0x20] sm:$0xff]
      %v4526 = vld [vmem:[%s1189 + $0x28] sm:$0xff]
      %v4527 = vld [vmem:[#allocation6 + $0x1] sm:$0xf]
      %s4528 = scalar_lea.vmem %s1189, 48
      %v4529 = vld [vmem:[%s4528] sm:$0xff]
      %v4530 = vld [vmem:[%s4528 + $0x8] sm:$0xff]
      %v4531 = vld [vmem:[%s4528 + $0x10] sm:$0xff]
      %v4532 = vld [vmem:[%s4528 + $0x18] sm:$0xff]
      %v4533 = vld [vmem:[%s4528 + $0x20] sm:$0xff]
      %v4534 = vld [vmem:[%s4528 + $0x28] sm:$0xff]
      %v4536 = vsel %vm4357, %v4527, 0
      %4538 = vmatprep.subr.mxu0 0.0
      %4539 = vmatpush1.msra.mxu0 %v4529
      %4540 = vmatprep.subr.mxu0 0.0
      %4541 = vmatpush1.msra.mxu0 %v4530
      %4542 = vmatprep.subr.mxu0 0.0
      %4543 = vmatpush1.msra.mxu0 %v4531
      %4544 = vmatprep.subr.mxu0 0.0
      %4545 = vmatpush1.msra.mxu0 %v4532
      %4546 = vmatprep.subr.mxu0 0.0
      %4547 = vmatpush1.msra.mxu0 %v4533
      %4548 = vmatprep.subr.mxu0 0.0
      %4549 = vmatpush1.msra.mxu0 %v4534
      %4550 = vmatprep.subr.mxu0 0.0
      %4551 = vmatpush1.msra.mxu0 0.0
      %4552 = vmatprep.subr.mxu0 0.0
      %4553 = vmatpush1.msra.mxu0 0.0
      %4554 = vmatprep.subr.mxu0 0.0
      %4555 = vmatpush1.msra.mxu0 0.0
      %4556 = vmatprep.subr.mxu0 0.0
      %4557 = vmatpush1.msra.mxu0 0.0
      %4558 = vmatprep.subr.mxu0 0.0
      %4559 = vmatpush1.msra.mxu0 0.0
      %4560 = vmatprep.subr.mxu0 0.0
      %4561 = vmatpush1.msra.mxu0 0.0
      %4562 = vmatprep.subr.mxu0 0.0
      %4563 = vmatpush1.msra.mxu0 0.0
      %4564 = vmatprep.subr.mxu0 0.0
      %4565 = vmatpush1.msra.mxu0 0.0
      %4566 = vmatprep.subr.mxu0 0.0
      %4567 = vmatpush1.msra.mxu0 0.0
      %4568 = vmatprep.subr.mxu0 0.0
      %4569 = vmatpush1.msra.mxu0 0.0
      %4570 = vmatprep.subr.mxu0 0.0
      %4571 = vmatpush1.msra.mxu0 0.0
      %4572 = vmatprep.subr.mxu0 0.0
      %4573 = vmatpush1.msra.mxu0 0.0
      %4574 = vmatprep.subr.mxu0 0.0
      %4575 = vmatpush1.msra.mxu0 0.0
      %4576 = vmatprep.subr.mxu0 0.0
      %4577 = vmatpush1.msra.mxu0 0.0
      %4578 = vmatprep.subr.mxu0 0.0
      %4579 = vmatpush1.msra.mxu0 0.0
      %4580 = vmatprep.subr.mxu0 0.0
      %4581 = vmatpush1.msra.mxu0 0.0
      %4582 = vmatprep.subr.mxu0 0.0
      %4583 = vmatpush1.msra.mxu0 0.0
      %4584 = vmatprep.subr.mxu0 0.0
      %4585 = vmatpush1.msra.mxu0 0.0
      %4586 = vmatprep.subr.mxu0 0.0
      %4587 = vmatpush1.msra.mxu0 0.0
      %4588 = vmatprep.subr.mxu0 0.0
      %4589 = vmatpush1.msra.mxu0 0.0
      %4590 = vmatprep.subr.mxu0 0.0
      %4591 = vmatpush1.msra.mxu0 0.0
      %4592 = vmatprep.subr.mxu0 0.0
      %4593 = vmatpush1.msra.mxu0 0.0
      %4594 = vmatprep.subr.mxu0 0.0
      %4595 = vmatpush1.msra.mxu0 0.0
      %4596 = vmatprep.subr.mxu0 0.0
      %4597 = vmatpush1.msra.mxu0 0.0
      %4598 = vmatprep.subr.mxu0 0.0
      %4599 = vmatpush1.msra.mxu0 0.0
      %4600 = vmatprep.subr.mxu0 0.0
      %4601 = vmatpush1.msra.mxu0 0.0
      %4602 = vmatprep.mubr.f32.mxu0 0.0
      %4603 = vmatmul.mubr.f32.gmra.mrb[0].mxu0 %v4536
      %v4604 = vpop.f32.mrb[0].mxu0
      %v4605 = vadd.f32 0.0, %v4604
      %v4606 = vpop.f32.mrb[0].mxu0
      %4607 = vdwg.mxu0
      %v4609 = vsel %vm4357, %v4520, 0
      %4611 = vmatprep.subr.mxu0 0.0
      %4612 = vmatpush1.msra.mxu0 %v4521
      %4613 = vmatprep.subr.mxu0 0.0
      %4614 = vmatpush1.msra.mxu0 %v4522
      %4615 = vmatprep.subr.mxu0 0.0
      %4616 = vmatpush1.msra.mxu0 %v4523
      %4617 = vmatprep.subr.mxu0 0.0
      %4618 = vmatpush1.msra.mxu0 %v4524
      %4619 = vmatprep.subr.mxu0 0.0
      %4620 = vmatpush1.msra.mxu0 %v4525
      %4621 = vmatprep.subr.mxu0 0.0
      %4622 = vmatpush1.msra.mxu0 %v4526
      %4623 = vmatprep.subr.mxu0 0.0
      %4624 = vmatpush1.msra.mxu0 0.0
      %4625 = vmatprep.subr.mxu0 0.0
      %4626 = vmatpush1.msra.mxu0 0.0
      %4627 = vmatprep.subr.mxu0 0.0
      %4628 = vmatpush1.msra.mxu0 0.0
      %4629 = vmatprep.subr.mxu0 0.0
      %4630 = vmatpush1.msra.mxu0 0.0
      %4631 = vmatprep.subr.mxu0 0.0
      %4632 = vmatpush1.msra.mxu0 0.0
      %4633 = vmatprep.subr.mxu0 0.0
      %4634 = vmatpush1.msra.mxu0 0.0
      %4635 = vmatprep.subr.mxu0 0.0
      %4636 = vmatpush1.msra.mxu0 0.0
      %4637 = vmatprep.subr.mxu0 0.0
      %4638 = vmatpush1.msra.mxu0 0.0
      %4639 = vmatprep.subr.mxu0 0.0
      %4640 = vmatpush1.msra.mxu0 0.0
      %4641 = vmatprep.subr.mxu0 0.0
      %4642 = vmatpush1.msra.mxu0 0.0
      %4643 = vmatprep.subr.mxu0 0.0
      %4644 = vmatpush1.msra.mxu0 0.0
      %4645 = vmatprep.subr.mxu0 0.0
      %4646 = vmatpush1.msra.mxu0 0.0
      %4647 = vmatprep.subr.mxu0 0.0
      %4648 = vmatpush1.msra.mxu0 0.0
      %4649 = vmatprep.subr.mxu0 0.0
      %4650 = vmatpush1.msra.mxu0 0.0
      %4651 = vmatprep.subr.mxu0 0.0
      %4652 = vmatpush1.msra.mxu0 0.0
      %4653 = vmatprep.subr.mxu0 0.0
      %4654 = vmatpush1.msra.mxu0 0.0
      %4655 = vmatprep.subr.mxu0 0.0
      %4656 = vmatpush1.msra.mxu0 0.0
      %4657 = vmatprep.subr.mxu0 0.0
      %4658 = vmatpush1.msra.mxu0 0.0
      %4659 = vmatprep.subr.mxu0 0.0
      %4660 = vmatpush1.msra.mxu0 0.0
      %4661 = vmatprep.subr.mxu0 0.0
      %4662 = vmatpush1.msra.mxu0 0.0
      %4663 = vmatprep.subr.mxu0 0.0
      %4664 = vmatpush1.msra.mxu0 0.0
      %4665 = vmatprep.subr.mxu0 0.0
      %4666 = vmatpush1.msra.mxu0 0.0
      %4667 = vmatprep.subr.mxu0 0.0
      %4668 = vmatpush1.msra.mxu0 0.0
      %4669 = vmatprep.subr.mxu0 0.0
      %4670 = vmatpush1.msra.mxu0 0.0
      %4671 = vmatprep.subr.mxu0 0.0
      %4672 = vmatpush1.msra.mxu0 0.0
      %4673 = vmatprep.subr.mxu0 0.0
      %4674 = vmatpush1.msra.mxu0 0.0
      %4675 = vmatprep.mubr.f32.mxu0 0.0
      %4676 = vmatmul.mubr.f32.gmra.mrb[0].mxu0 %v4609
      %v4677 = vpop.f32.mrb[0].mxu0
      %v4678 = vadd.f32 %v4605, %v4677
      %v4679 = vpop.f32.mrb[0].mxu0
      %4680 = vdwg.mxu0
      %v4681 = vld [vmem:[#allocation6 + $0x2] sm:$0xf]
      %s4682 = scalar_lea.vmem %s33, 4
      %v4683 = vld [vmem:[%s4682] sm:$0xf]
      %4685 = vset.pattern.permute.xlu0 0
      %4686 = vperm.xlu0 %4685, %v4683
      %v4687 = vpop.permute.xlu0 %4686
      %v4689 = vmul.f32 %v4681, %v4687
      %s4690 = scalar_lea.vmem %s1189, 96
      %v4691 = vld [vmem:[%s4690] sm:$0xff]
      %v4692 = vld [vmem:[%s4690 + $0x8] sm:$0xff]
      %v4693 = vld [vmem:[%s4690 + $0x10] sm:$0xff]
      %v4694 = vld [vmem:[%s4690 + $0x18] sm:$0xff]
      %v4695 = vld [vmem:[%s4690 + $0x20] sm:$0xff]
      %v4696 = vld [vmem:[%s4690 + $0x28] sm:$0xff]
      %v4698 = vsel %vm4357, %v4689, 0
      %4700 = vmatprep.subr.mxu0 0.0
      %4701 = vmatpush1.msra.mxu0 %v4691
      %4702 = vmatprep.subr.mxu0 0.0
      %4703 = vmatpush1.msra.mxu0 %v4692
      %4704 = vmatprep.subr.mxu0 0.0
      %4705 = vmatpush1.msra.mxu0 %v4693
      %4706 = vmatprep.subr.mxu0 0.0
      %4707 = vmatpush1.msra.mxu0 %v4694
      %4708 = vmatprep.subr.mxu0 0.0
      %4709 = vmatpush1.msra.mxu0 %v4695
      %4710 = vmatprep.subr.mxu0 0.0
      %4711 = vmatpush1.msra.mxu0 %v4696
      %4712 = vmatprep.subr.mxu0 0.0
      %4713 = vmatpush1.msra.mxu0 0.0
      %4714 = vmatprep.subr.mxu0 0.0
      %4715 = vmatpush1.msra.mxu0 0.0
      %4716 = vmatprep.subr.mxu0 0.0
      %4717 = vmatpush1.msra.mxu0 0.0
      %4718 = vmatprep.subr.mxu0 0.0
      %4719 = vmatpush1.msra.mxu0 0.0
      %4720 = vmatprep.subr.mxu0 0.0
      %4721 = vmatpush1.msra.mxu0 0.0
      %4722 = vmatprep.subr.mxu0 0.0
      %4723 = vmatpush1.msra.mxu0 0.0
      %4724 = vmatprep.subr.mxu0 0.0
      %4725 = vmatpush1.msra.mxu0 0.0
      %4726 = vmatprep.subr.mxu0 0.0
      %4727 = vmatpush1.msra.mxu0 0.0
      %4728 = vmatprep.subr.mxu0 0.0
      %4729 = vmatpush1.msra.mxu0 0.0
      %4730 = vmatprep.subr.mxu0 0.0
      %4731 = vmatpush1.msra.mxu0 0.0
      %4732 = vmatprep.subr.mxu0 0.0
      %4733 = vmatpush1.msra.mxu0 0.0
      %4734 = vmatprep.subr.mxu0 0.0
      %4735 = vmatpush1.msra.mxu0 0.0
      %4736 = vmatprep.subr.mxu0 0.0
      %4737 = vmatpush1.msra.mxu0 0.0
      %4738 = vmatprep.subr.mxu0 0.0
      %4739 = vmatpush1.msra.mxu0 0.0
      %4740 = vmatprep.subr.mxu0 0.0
      %4741 = vmatpush1.msra.mxu0 0.0
      %4742 = vmatprep.subr.mxu0 0.0
      %4743 = vmatpush1.msra.mxu0 0.0
      %4744 = vmatprep.subr.mxu0 0.0
      %4745 = vmatpush1.msra.mxu0 0.0
      %4746 = vmatprep.subr.mxu0 0.0
      %4747 = vmatpush1.msra.mxu0 0.0
      %4748 = vmatprep.subr.mxu0 0.0
      %4749 = vmatpush1.msra.mxu0 0.0
      %4750 = vmatprep.subr.mxu0 0.0
      %4751 = vmatpush1.msra.mxu0 0.0
      %4752 = vmatprep.subr.mxu0 0.0
      %4753 = vmatpush1.msra.mxu0 0.0
      %4754 = vmatprep.subr.mxu0 0.0
      %4755 = vmatpush1.msra.mxu0 0.0
      %4756 = vmatprep.subr.mxu0 0.0
      %4757 = vmatpush1.msra.mxu0 0.0
      %4758 = vmatprep.subr.mxu0 0.0
      %4759 = vmatpush1.msra.mxu0 0.0
      %4760 = vmatprep.subr.mxu0 0.0
      %4761 = vmatpush1.msra.mxu0 0.0
      %4762 = vmatprep.subr.mxu0 0.0
      %4763 = vmatpush1.msra.mxu0 0.0
      %4764 = vmatprep.mubr.f32.mxu0 0.0
      %4765 = vmatmul.mubr.f32.gmra.mrb[0].mxu0 %v4698
      %v4766 = vpop.f32.mrb[0].mxu0
      %v4767 = vadd.f32 0.0, %v4766
      %v4768 = vpop.f32.mrb[0].mxu0
      %4769 = vdwg.mxu0
      %v4770 = vadd.f32 %v4678, %v4767
      %v4771 = vld [vmem:[%s1192] sm:$0x1]
      %v4773 = vlaneseq
      %v4774 = vshrl.u32 %v4773, 7
      %v4775 = vsub.s32 0, %v4774
      %v4776 = vrot.slane %v4771, %v4775
      %v4778 = vadd.f32 %v4770, %v4776
      %v4779 = vmax.f32 %v4778, 0.0
      %v4780 = vld [vmem:[%s47] sm:$0x3]
      %vm4781 = vcmask 31744
      %v4783 = vsel %vm4781, %v4780, 0
      %vm4785 = vcmask 1043456
      %v4787 = vsel %vm4785, %v4779, 0
      %4789 = vmatprep.subr.mxu0 0.0
      %4790 = vmatpush1.msra.mxu0 %v4787
      %4791 = vmatprep.subr.mxu0 0.0
      %4792 = vmatpush1.msra.mxu0 0.0
      %4793 = vmatprep.subr.mxu0 0.0
      %4794 = vmatpush1.msra.mxu0 0.0
      %4795 = vmatprep.subr.mxu0 0.0
      %4796 = vmatpush1.msra.mxu0 0.0
      %4797 = vmatprep.subr.mxu0 0.0
      %4798 = vmatpush1.msra.mxu0 0.0
      %4799 = vmatprep.subr.mxu0 0.0
      %4800 = vmatpush1.msra.mxu0 0.0
      %4801 = vmatprep.subr.mxu0 0.0
      %4802 = vmatpush1.msra.mxu0 0.0
      %4803 = vmatprep.subr.mxu0 0.0
      %4804 = vmatpush1.msra.mxu0 0.0
      %4805 = vmatprep.subr.mxu0 0.0
      %4806 = vmatpush1.msra.mxu0 0.0
      %4807 = vmatprep.subr.mxu0 0.0
      %4808 = vmatpush1.msra.mxu0 0.0
      %4809 = vmatprep.subr.mxu0 0.0
      %4810 = vmatpush1.msra.mxu0 0.0
      %4811 = vmatprep.subr.mxu0 0.0
      %4812 = vmatpush1.msra.mxu0 0.0
      %4813 = vmatprep.subr.mxu0 0.0
      %4814 = vmatpush1.msra.mxu0 0.0
      %4815 = vmatprep.subr.mxu0 0.0
      %4816 = vmatpush1.msra.mxu0 0.0
      %4817 = vmatprep.subr.mxu0 0.0
      %4818 = vmatpush1.msra.mxu0 0.0
      %4819 = vmatprep.subr.mxu0 0.0
      %4820 = vmatpush1.msra.mxu0 0.0
      %4821 = vmatprep.subr.mxu0 0.0
      %4822 = vmatpush1.msra.mxu0 0.0
      %4823 = vmatprep.subr.mxu0 0.0
      %4824 = vmatpush1.msra.mxu0 0.0
      %4825 = vmatprep.subr.mxu0 0.0
      %4826 = vmatpush1.msra.mxu0 0.0
      %4827 = vmatprep.subr.mxu0 0.0
      %4828 = vmatpush1.msra.mxu0 0.0
      %4829 = vmatprep.subr.mxu0 0.0
      %4830 = vmatpush1.msra.mxu0 0.0
      %4831 = vmatprep.subr.mxu0 0.0
      %4832 = vmatpush1.msra.mxu0 0.0
      %4833 = vmatprep.subr.mxu0 0.0
      %4834 = vmatpush1.msra.mxu0 0.0
      %4835 = vmatprep.subr.mxu0 0.0
      %4836 = vmatpush1.msra.mxu0 0.0
      %4837 = vmatprep.subr.mxu0 0.0
      %4838 = vmatpush1.msra.mxu0 0.0
      %4839 = vmatprep.subr.mxu0 0.0
      %4840 = vmatpush1.msra.mxu0 0.0
      %4841 = vmatprep.subr.mxu0 0.0
      %4842 = vmatpush1.msra.mxu0 0.0
      %4843 = vmatprep.subr.mxu0 0.0
      %4844 = vmatpush1.msra.mxu0 0.0
      %4845 = vmatprep.subr.mxu0 0.0
      %4846 = vmatpush1.msra.mxu0 0.0
      %4847 = vmatprep.subr.mxu0 0.0
      %4848 = vmatpush1.msra.mxu0 0.0
      %4849 = vmatprep.subr.mxu0 0.0
      %4850 = vmatpush1.msra.mxu0 0.0
      %4851 = vmatprep.subr.mxu0 0.0
      %4852 = vmatpush1.msra.mxu0 0.0
      %4853 = vmatprep.mubr.f32.mxu0 0.0
      %4854 = vmatmul.mubr.f32.gmra.mrb[0].mxu0 %v4783
      %v4855 = vpop.f32.mrb[0].mxu0
      %v4856 = vadd.f32 0.0, %v4855
      %v4857 = vpop.f32.mrb[0].mxu0
      %4858 = vdwg.mxu0
      %v4859 = vld [vmem:[%s49] sm:$0xff]
      %v4860 = vld [vmem:[%s49 + $0x8] sm:$0xff]
      %v4861 = vld [vmem:[%s49 + $0x10] sm:$0xff]
      %vm4862 = vcmask 195584
      %v4864 = vsel %vm4862, %v4856, 0
      %4866 = vmatprep.subr.mxu0 0.0
      %4867 = vmatpush1.msra.mxu0 %v4859
      %4868 = vmatprep.subr.mxu0 0.0
      %4869 = vmatpush1.msra.mxu0 %v4860
      %4870 = vmatprep.subr.mxu0 0.0
      %4871 = vmatpush1.msra.mxu0 %v4861
      %4872 = vmatprep.subr.mxu0 0.0
      %4873 = vmatpush1.msra.mxu0 0.0
      %4874 = vmatprep.subr.mxu0 0.0
      %4875 = vmatpush1.msra.mxu0 0.0
      %4876 = vmatprep.subr.mxu0 0.0
      %4877 = vmatpush1.msra.mxu0 0.0
      %4878 = vmatprep.subr.mxu0 0.0
      %4879 = vmatpush1.msra.mxu0 0.0
      %4880 = vmatprep.subr.mxu0 0.0
      %4881 = vmatpush1.msra.mxu0 0.0
      %4882 = vmatprep.subr.mxu0 0.0
      %4883 = vmatpush1.msra.mxu0 0.0
      %4884 = vmatprep.subr.mxu0 0.0
      %4885 = vmatpush1.msra.mxu0 0.0
      %4886 = vmatprep.subr.mxu0 0.0
      %4887 = vmatpush1.msra.mxu0 0.0
      %4888 = vmatprep.subr.mxu0 0.0
      %4889 = vmatpush1.msra.mxu0 0.0
      %4890 = vmatprep.subr.mxu0 0.0
      %4891 = vmatpush1.msra.mxu0 0.0
      %4892 = vmatprep.subr.mxu0 0.0
      %4893 = vmatpush1.msra.mxu0 0.0
      %4894 = vmatprep.subr.mxu0 0.0
      %4895 = vmatpush1.msra.mxu0 0.0
      %4896 = vmatprep.subr.mxu0 0.0
      %4897 = vmatpush1.msra.mxu0 0.0
      %4898 = vmatprep.subr.mxu0 0.0
      %4899 = vmatpush1.msra.mxu0 0.0
      %4900 = vmatprep.subr.mxu0 0.0
      %4901 = vmatpush1.msra.mxu0 0.0
      %4902 = vmatprep.subr.mxu0 0.0
      %4903 = vmatpush1.msra.mxu0 0.0
      %4904 = vmatprep.subr.mxu0 0.0
      %4905 = vmatpush1.msra.mxu0 0.0
      %4906 = vmatprep.subr.mxu0 0.0
      %4907 = vmatpush1.msra.mxu0 0.0
      %4908 = vmatprep.subr.mxu0 0.0
      %4909 = vmatpush1.msra.mxu0 0.0
      %4910 = vmatprep.subr.mxu0 0.0
      %4911 = vmatpush1.msra.mxu0 0.0
      %4912 = vmatprep.subr.mxu0 0.0
      %4913 = vmatpush1.msra.mxu0 0.0
      %4914 = vmatprep.subr.mxu0 0.0
      %4915 = vmatpush1.msra.mxu0 0.0
      %4916 = vmatprep.subr.mxu0 0.0
      %4917 = vmatpush1.msra.mxu0 0.0
      %4918 = vmatprep.subr.mxu0 0.0
      %4919 = vmatpush1.msra.mxu0 0.0
      %4920 = vmatprep.subr.mxu0 0.0
      %4921 = vmatpush1.msra.mxu0 0.0
      %4922 = vmatprep.subr.mxu0 0.0
      %4923 = vmatpush1.msra.mxu0 0.0
      %4924 = vmatprep.subr.mxu0 0.0
      %4925 = vmatpush1.msra.mxu0 0.0
      %4926 = vmatprep.subr.mxu0 0.0
      %4927 = vmatpush1.msra.mxu0 0.0
      %4928 = vmatprep.subr.mxu0 0.0
      %4929 = vmatpush1.msra.mxu0 0.0
      %4930 = vmatprep.mubr.f32.mxu0 0.0
      %4931 = vmatmul.mubr.f32.gmra.mrb[0].mxu0 %v4864
      %v4932 = vpop.f32.mrb[0].mxu0
      %v4933 = vadd.f32 0.0, %v4932
      %v4934 = vpop.f32.mrb[0].mxu0
      %4935 = vdwg.mxu0
      %v4936 = vld [vmem:[%s51] sm:$0xff]
      %v4937 = vld [vmem:[%s51 + $0x8] sm:$0xf]
      %v4938 = vld [vmem:[%s53] sm:$0x1]
      %v4940 = vlaneseq
      %v4941 = vshrl.u32 %v4940, 7
      %v4942 = vsub.s32 0, %v4941
      %v4943 = vrot.slane %v4938, %v4942
      %vm4945 = vcmask 97280
      %v4947 = vsel %vm4945, %v4933, 0
      %v4950 = vsel %vm4785, %v4937, 0
      %4952 = vmatprep.subr.mxu0 0.0
      %4953 = vmatpush1.msra.mxu0 %v4936
      %4954 = vmatprep.subr.mxu0 0.0
      %4955 = vmatpush1.msra.mxu0 %v4950
      %4956 = vmatprep.subr.mxu0 0.0
      %4957 = vmatpush1.msra.mxu0 0.0
      %4958 = vmatprep.subr.mxu0 0.0
      %4959 = vmatpush1.msra.mxu0 0.0
      %4960 = vmatprep.subr.mxu0 0.0
      %4961 = vmatpush1.msra.mxu0 0.0
      %4962 = vmatprep.subr.mxu0 0.0
      %4963 = vmatpush1.msra.mxu0 0.0
      %4964 = vmatprep.subr.mxu0 0.0
      %4965 = vmatpush1.msra.mxu0 0.0
      %4966 = vmatprep.subr.mxu0 0.0
      %4967 = vmatpush1.msra.mxu0 0.0
      %4968 = vmatprep.subr.mxu0 0.0
      %4969 = vmatpush1.msra.mxu0 0.0
      %4970 = vmatprep.subr.mxu0 0.0
      %4971 = vmatpush1.msra.mxu0 0.0
      %4972 = vmatprep.subr.mxu0 0.0
      %4973 = vmatpush1.msra.mxu0 0.0
      %4974 = vmatprep.subr.mxu0 0.0
      %4975 = vmatpush1.msra.mxu0 0.0
      %4976 = vmatprep.subr.mxu0 0.0
      %4977 = vmatpush1.msra.mxu0 0.0
      %4978 = vmatprep.subr.mxu0 0.0
      %4979 = vmatpush1.msra.mxu0 0.0
      %4980 = vmatprep.subr.mxu0 0.0
      %4981 = vmatpush1.msra.mxu0 0.0
      %4982 = vmatprep.subr.mxu0 0.0
      %4983 = vmatpush1.msra.mxu0 0.0
      %4984 = vmatprep.subr.mxu0 0.0
      %4985 = vmatpush1.msra.mxu0 0.0
      %4986 = vmatprep.subr.mxu0 0.0
      %4987 = vmatpush1.msra.mxu0 0.0
      %4988 = vmatprep.subr.mxu0 0.0
      %4989 = vmatpush1.msra.mxu0 0.0
      %4990 = vmatprep.subr.mxu0 0.0
      %4991 = vmatpush1.msra.mxu0 0.0
      %4992 = vmatprep.subr.mxu0 0.0
      %4993 = vmatpush1.msra.mxu0 0.0
      %4994 = vmatprep.subr.mxu0 0.0
      %4995 = vmatpush1.msra.mxu0 0.0
      %4996 = vmatprep.subr.mxu0 0.0
      %4997 = vmatpush1.msra.mxu0 0.0
      %4998 = vmatprep.subr.mxu0 0.0
      %4999 = vmatpush1.msra.mxu0 0.0
      %5000 = vmatprep.subr.mxu0 0.0
      %5001 = vmatpush1.msra.mxu0 0.0
      %5002 = vmatprep.subr.mxu0 0.0
      %5003 = vmatpush1.msra.mxu0 0.0
      %5004 = vmatprep.subr.mxu0 0.0
      %5005 = vmatpush1.msra.mxu0 0.0
      %5006 = vmatprep.subr.mxu0 0.0
      %5007 = vmatpush1.msra.mxu0 0.0
      %5008 = vmatprep.subr.mxu0 0.0
      %5009 = vmatpush1.msra.mxu0 0.0
      %5010 = vmatprep.subr.mxu0 0.0
      %5011 = vmatpush1.msra.mxu0 0.0
      %5012 = vmatprep.subr.mxu0 0.0
      %5013 = vmatpush1.msra.mxu0 0.0
      %5014 = vmatprep.subr.mxu0 0.0
      %5015 = vmatpush1.msra.mxu0 0.0
      %5016 = vmatprep.mubr.f32.mxu0 0.0
      %5017 = vmatmul.mubr.f32.gmra.mrb[0].mxu0 %v4947
      %v5018 = vpop.f32.mrb[0].mxu0
      %v5019 = vadd.f32 %v4943, %v5018
      %v5020 = vpop.f32.mrb[0].mxu0
      %5021 = vdwg.mxu0
      %v5022 = vmax.f32 %v5019, 0.0
      %v5023 = vld [vmem:[%s1196] sm:$0xf]
      %v5024 = vld [vmem:[%s1199] sm:$0x1]
      %v5026 = vlaneseq
      %v5027 = vshrl.u32 %v5026, 7
      %v5028 = vsub.s32 0, %v5027
      %v5029 = vrot.slane %v5024, %v5028
      %v5032 = vsel %vm4781, %v5022, 0
      %v5035 = vsel %vm4785, %v5023, 0
      %5037 = vmatprep.subr.mxu0 0.0
      %5038 = vmatpush1.msra.mxu0 %v5035
      %5039 = vmatprep.subr.mxu0 0.0
      %5040 = vmatpush1.msra.mxu0 0.0
      %5041 = vmatprep.subr.mxu0 0.0
      %5042 = vmatpush1.msra.mxu0 0.0
      %5043 = vmatprep.subr.mxu0 0.0
      %5044 = vmatpush1.msra.mxu0 0.0
      %5045 = vmatprep.subr.mxu0 0.0
      %5046 = vmatpush1.msra.mxu0 0.0
      %5047 = vmatprep.subr.mxu0 0.0
      %5048 = vmatpush1.msra.mxu0 0.0
      %5049 = vmatprep.subr.mxu0 0.0
      %5050 = vmatpush1.msra.mxu0 0.0
      %5051 = vmatprep.subr.mxu0 0.0
      %5052 = vmatpush1.msra.mxu0 0.0
      %5053 = vmatprep.subr.mxu0 0.0
      %5054 = vmatpush1.msra.mxu0 0.0
      %5055 = vmatprep.subr.mxu0 0.0
      %5056 = vmatpush1.msra.mxu0 0.0
      %5057 = vmatprep.subr.mxu0 0.0
      %5058 = vmatpush1.msra.mxu0 0.0
      %5059 = vmatprep.subr.mxu0 0.0
      %5060 = vmatpush1.msra.mxu0 0.0
      %5061 = vmatprep.subr.mxu0 0.0
      %5062 = vmatpush1.msra.mxu0 0.0
      %5063 = vmatprep.subr.mxu0 0.0
      %5064 = vmatpush1.msra.mxu0 0.0
      %5065 = vmatprep.subr.mxu0 0.0
      %5066 = vmatpush1.msra.mxu0 0.0
      %5067 = vmatprep.subr.mxu0 0.0
      %5068 = vmatpush1.msra.mxu0 0.0
      %5069 = vmatprep.subr.mxu0 0.0
      %5070 = vmatpush1.msra.mxu0 0.0
      %5071 = vmatprep.subr.mxu0 0.0
      %5072 = vmatpush1.msra.mxu0 0.0
      %5073 = vmatprep.subr.mxu0 0.0
      %5074 = vmatpush1.msra.mxu0 0.0
      %5075 = vmatprep.subr.mxu0 0.0
      %5076 = vmatpush1.msra.mxu0 0.0
      %5077 = vmatprep.subr.mxu0 0.0
      %5078 = vmatpush1.msra.mxu0 0.0
      %5079 = vmatprep.subr.mxu0 0.0
      %5080 = vmatpush1.msra.mxu0 0.0
      %5081 = vmatprep.subr.mxu0 0.0
      %5082 = vmatpush1.msra.mxu0 0.0
      %5083 = vmatprep.subr.mxu0 0.0
      %5084 = vmatpush1.msra.mxu0 0.0
      %5085 = vmatprep.subr.mxu0 0.0
      %5086 = vmatpush1.msra.mxu0 0.0
      %5087 = vmatprep.subr.mxu0 0.0
      %5088 = vmatpush1.msra.mxu0 0.0
      %5089 = vmatprep.subr.mxu0 0.0
      %5090 = vmatpush1.msra.mxu0 0.0
      %5091 = vmatprep.subr.mxu0 0.0
      %5092 = vmatpush1.msra.mxu0 0.0
      %5093 = vmatprep.subr.mxu0 0.0
      %5094 = vmatpush1.msra.mxu0 0.0
      %5095 = vmatprep.subr.mxu0 0.0
      %5096 = vmatpush1.msra.mxu0 0.0
      %5097 = vmatprep.subr.mxu0 0.0
      %5098 = vmatpush1.msra.mxu0 0.0
      %5099 = vmatprep.subr.mxu0 0.0
      %5100 = vmatpush1.msra.mxu0 0.0
      %5101 = vmatprep.mubr.f32.mxu0 0.0
      %5102 = vmatmul.mubr.f32.gmra.mrb[0].mxu0 %v5032
      %v5103 = vpop.f32.mrb[0].mxu0
      %v5104 = vadd.f32 %v5029, %v5103
      %v5105 = vpop.f32.mrb[0].mxu0
      %5106 = vdwg.mxu0
      %v5107 = vmax.f32 %v5104, 0.0
      %v5108 = vld [vmem:[%s1204] sm:$0xff]
      %v5109 = vld [vmem:[%s1204 + $0x8] sm:$0x3]
      %v5110 = vld [vmem:[%s1207] sm:$0x1]
      %v5112 = vlaneseq
      %v5113 = vshrl.u32 %v5112, 7
      %v5114 = vsub.s32 0, %v5113
      %v5115 = vrot.slane %v5110, %v5114
      %vm5117 = vcmask 80896
      %v5119 = vsel %vm5117, %v5107, 0
      %v5122 = vsel %vm2119, %v5109, 0
      %5124 = vmatprep.subr.mxu0 0.0
      %5125 = vmatpush1.msra.mxu0 %v5108
      %5126 = vmatprep.subr.mxu0 0.0
      %5127 = vmatpush1.msra.mxu0 %v5122
      %5128 = vmatprep.subr.mxu0 0.0
      %5129 = vmatpush1.msra.mxu0 0.0
      %5130 = vmatprep.subr.mxu0 0.0
      %5131 = vmatpush1.msra.mxu0 0.0
      %5132 = vmatprep.subr.mxu0 0.0
      %5133 = vmatpush1.msra.mxu0 0.0
      %5134 = vmatprep.subr.mxu0 0.0
      %5135 = vmatpush1.msra.mxu0 0.0
      %5136 = vmatprep.subr.mxu0 0.0
      %5137 = vmatpush1.msra.mxu0 0.0
      %5138 = vmatprep.subr.mxu0 0.0
      %5139 = vmatpush1.msra.mxu0 0.0
      %5140 = vmatprep.subr.mxu0 0.0
      %5141 = vmatpush1.msra.mxu0 0.0
      %5142 = vmatprep.subr.mxu0 0.0
      %5143 = vmatpush1.msra.mxu0 0.0
      %5144 = vmatprep.subr.mxu0 0.0
      %5145 = vmatpush1.msra.mxu0 0.0
      %5146 = vmatprep.subr.mxu0 0.0
      %5147 = vmatpush1.msra.mxu0 0.0
      %5148 = vmatprep.subr.mxu0 0.0
      %5149 = vmatpush1.msra.mxu0 0.0
      %5150 = vmatprep.subr.mxu0 0.0
      %5151 = vmatpush1.msra.mxu0 0.0
      %5152 = vmatprep.subr.mxu0 0.0
      %5153 = vmatpush1.msra.mxu0 0.0
      %5154 = vmatprep.subr.mxu0 0.0
      %5155 = vmatpush1.msra.mxu0 0.0
      %5156 = vmatprep.subr.mxu0 0.0
      %5157 = vmatpush1.msra.mxu0 0.0
      %5158 = vmatprep.subr.mxu0 0.0
      %5159 = vmatpush1.msra.mxu0 0.0
      %5160 = vmatprep.subr.mxu0 0.0
      %5161 = vmatpush1.msra.mxu0 0.0
      %5162 = vmatprep.subr.mxu0 0.0
      %5163 = vmatpush1.msra.mxu0 0.0
      %5164 = vmatprep.subr.mxu0 0.0
      %5165 = vmatpush1.msra.mxu0 0.0
      %5166 = vmatprep.subr.mxu0 0.0
      %5167 = vmatpush1.msra.mxu0 0.0
      %5168 = vmatprep.subr.mxu0 0.0
      %5169 = vmatpush1.msra.mxu0 0.0
      %5170 = vmatprep.subr.mxu0 0.0
      %5171 = vmatpush1.msra.mxu0 0.0
      %5172 = vmatprep.subr.mxu0 0.0
      %5173 = vmatpush1.msra.mxu0 0.0
      %5174 = vmatprep.subr.mxu0 0.0
      %5175 = vmatpush1.msra.mxu0 0.0
      %5176 = vmatprep.subr.mxu0 0.0
      %5177 = vmatpush1.msra.mxu0 0.0
      %5178 = vmatprep.subr.mxu0 0.0
      %5179 = vmatpush1.msra.mxu0 0.0
      %5180 = vmatprep.subr.mxu0 0.0
      %5181 = vmatpush1.msra.mxu0 0.0
      %5182 = vmatprep.subr.mxu0 0.0
      %5183 = vmatpush1.msra.mxu0 0.0
      %5184 = vmatprep.subr.mxu0 0.0
      %5185 = vmatpush1.msra.mxu0 0.0
      %5186 = vmatprep.subr.mxu0 0.0
      %5187 = vmatpush1.msra.mxu0 0.0
      %5188 = vmatprep.mubr.f32.mxu0 0.0
      %5189 = vmatmul.mubr.f32.gmra.mrb[0].mxu0 %v5119
      %v5190 = vpop.f32.mrb[0].mxu0
      %v5191 = vadd.f32 %v5115, %v5190
      %v5192 = vpop.f32.mrb[0].mxu0
      %5193 = vdwg.mxu0
      %v5194 = vxor.u32 %v5191, 2147483648
      %v5195 = vmul.f32 %v5194, 1.442695
      %v5196 = vpow.pop %v5195
      %v5197 = vadd.f32 %v5196, 1.0
      %v5198 = vrcp.pop %v5197
      %v5199 = vmul.f32 1.0, %v5198
      %vm5200 = vcmask 1024
      %5201 = vst.msk [vmem:[%s1211] sm:$0x3] %vm5200, %v5199
      %p5202 = scmp.lt.s32.totalorder %s74, 3
      %s5203 = scalar_select %p5202, %s74, 3
      %s5204 = smul.addr %s5203, 2
      %s5205 = scalar_lea.vmem %s63, %s5204
      // Predicated region
      $region145: #{grad_splitter_forward.1} parent=143 // pred_check
        %p5206 = pneg %p823
      $region146: #{grad_splitter_forward.1} parent=143 // pred_check_branch
        %5208 = sbr.rel (%p5206) target = $region148
      $region147: #{grad_splitter_forward.1} parent=143 // pred_region
        _
      $region148: #{grad_splitter_forward.1} parent=143 // pred_fallthru
        _
    $region144: #{grad_splitter_forward.1} parent=5 // pred_fallthru
      _
    %p5209 = scmp.le.s32.totalorder 2, %s69
    // Predicated region
    $region149: #{grad_splitter_forward.1} parent=5 // pred_check
      %p5210 = pneg %p5209
    $region150: #{grad_splitter_forward.1} parent=5 // pred_check_branch
      %5212 = sbr.rel (%p5210) target = $region152
    $region151: #{grad_splitter_forward.1} parent=5 // pred_region
      %s5213 = ssub.s32 %s69, 2
      // Predicated region
      $region153: #{grad_splitter_forward.1} parent=151 // pred_check
        %p5214 = pneg %p829
      $region154: #{grad_splitter_forward.1} parent=151 // pred_check_branch
        %5216 = sbr.rel (%p5214) target = $region156
      $region155: #{grad_splitter_forward.1} parent=151 // pred_region
        %p5217 = scmp.lt.s32.totalorder %s75, 3
        %s5218 = scalar_select %p5217, %s75, 3
        %s5219 = smul.addr %s5218, 2
        %s5220 = scalar_lea.vmem %s63, %s5219
      $region156: #{grad_splitter_forward.1} parent=151 // pred_fallthru
        _
    $region152: #{grad_splitter_forward.1} parent=5 // pred_fallthru
      _
  $region6: #{grad_splitter_forward.1} parent=0 // loop_footer
    %s73 = sadd.s32 1, %s69
  $region7: #{grad_splitter_forward.1} parent=0 // loop_footer_branch
    %68 = sbr.rel target = $region3
  $region8: #{grad_splitter_forward.1} parent=0 // loop_exit
    _

</llo_original>
